<compile_context>
chip_gen: v6e
topology: v6e:2x2x1
jax: 0.10.0
libtpu: 0.0.40
codegen_flags: <defaults>
</compile_context>

<pallas_src>
import jax
import jax.numpy as jnp
from jax import lax
from jax.experimental import pallas as pl
from jax.experimental.pallas import tpu as pltpu


def _make_mgat_kernel(N, num_etypes, vocab_sizes, layer_cfgs):
    """Fused embeddings + multi-layer hetero-GAT kernel.

    layer_cfgs: tuple of (num_heads, d_out) per GAT layer.
    Kernel inputs (all whole-array VMEM refs), in order:
      inputs (N, 3+num_cont), emb tables (V_i, d_i),
      per layer l: Wf_l (Din, EH*D+EH), WLrep_l (EH*N, Din), Bcat_l (1, EH*D),
                   adjA_l (EH*N, N), biasA_l (EH*N, N)
    then out_ref (N, H_last*D_last) and a (N, max EH*D) VMEM scratch.
    """
    E = num_etypes
    n_emb = len(vocab_sizes)
    n_in = 1 + n_emb + 5 * len(layer_cfgs)

    def kernel(*refs):
        in_refs = refs[:n_in]
        out_ref = refs[n_in]
        scr = refs[n_in + 1]

        inputs_ref = in_refs[0]
        emb_refs = in_refs[1:1 + n_emb]
        layer_refs = in_refs[1 + n_emb:]

        # ---- embeddings folded into the kernel: one-hot @ table on the MXU ----
        x = inputs_ref[...]                                       # (N, 3+cont)
        pieces = []
        for c in range(n_emb):
            vocab = vocab_sizes[c]
            idx = x[:, c:c + 1].astype(jnp.int32)                 # (N, 1)
            iota = lax.broadcasted_iota(jnp.int32, (N, vocab), 1)
            onehot = (idx == iota).astype(jnp.float32)            # (N, V)
            pieces.append(jnp.dot(onehot, emb_refs[c][...],
                                  preferred_element_type=jnp.float32))
        pieces.append(x[:, n_emb:])                               # continuous feats
        h = jnp.concatenate(pieces, axis=1)                       # (N, Din0)

        # ---- stacked hetero-GAT layers (attn_drop = feat_drop = 0 -> no-op) ----
        for l, (H, D) in enumerate(layer_cfgs):
            wf_ref, wl_ref, b_ref, adj_ref, bias_ref = layer_refs[5 * l:5 * l + 5]
            EH = E * H
            EHD = EH * D

            # fused fc + attn_r projection for ALL etypes/heads: one MXU matmul
            z_all = jnp.dot(h, wf_ref[...], preferred_element_type=jnp.float32)
            z = z_all[:, :EHD]                                    # (N, EH*D)
            er_cols = z_all[:, EHD:EHD + EH]                      # (N, EH)  er[dst, eh]

            # attn_l term for all heads, already broadcast over dst rows (MXU)
            el_full = lax.dot_general(
                wl_ref[...], h,
                dimension_numbers=(((1,), (1,)), ((), ())),
                preferred_element_type=jnp.float32)               # (EH*N, N)

            # stack er as one (EH*N, 1) column -> a single hoisted lane-broadcast
            er_col = jnp.concatenate(
                [er_cols[:, i:i + 1] for i in range(EH)], axis=0)  # (EH*N, 1)

            # batched masked edge-softmax over all etypes*heads (unnormalized)
            logits = el_full + er_col
            logits = jnp.where(logits > 0, logits, 0.2 * logits)  # leaky_relu 0.2
            scores = logits + bias_ref[...]                       # -1e30 off-edge
            m = jnp.max(scores, axis=1, keepdims=True)
            p = jnp.exp(scores - m) * adj_ref[...]                # 0/1 adj keeps
                                                                  # zero-in-degree at 0

            # every head's neighbor aggregation + softmax denominators in one
            # MXU matmul (ones column); normalization deferred to a small scale.
            z_aug = jnp.concatenate([z, jnp.ones((N, 1), jnp.float32)], axis=1)
            agg = jnp.dot(p, z_aug, preferred_element_type=jnp.float32)  # (EH*N, EHD+1)
            inv = pl.reciprocal(jnp.maximum(agg[:, EHD:EHD + 1], 1e-20),
                                approx=True)
            agg_n = agg[:, :EHD] * inv

            # scatter per-(etype,head) diagonal blocks into one lane-dense
            # (N, EH*D) slab via lane-offset scratch writes (no lane concat).
            for eh in range(EH):
                scr[:, eh * D:(eh + 1) * D] = (
                    agg_n[eh * N:(eh + 1) * N, eh * D:(eh + 1) * D])

            slab = scr[:, :EHD] + b_ref[...]                      # DGL bias
            slab = jnp.where(slab > 0, slab, 0.01 * slab)         # activation

            # HeteroGraphConv 'mean' over etypes (+ implicit flatten(1))
            HD = H * D
            acc = slab[:, 0:HD]
            for e in range(1, E):
                acc = acc + slab[:, e * HD:(e + 1) * HD]
            h = acc * jnp.float32(1.0 / E)

        out_ref[...] = h

    return kernel


def _fuse_layer_params(params_per_etype, adjs, N):
    """Fold per-etype GATConv params into MXU-friendly fused constants."""
    E = len(params_per_etype)
    H, din, D = params_per_etype[0][0].shape
    Wz, Wr, Wl, B = [], [], [], []
    for (w, al, ar, b) in params_per_etype:
        # (H, Din, D) -> (Din, H*D): z[:, h*D:(h+1)*D] == h @ w[h]
        Wz.append(jnp.transpose(w, (1, 0, 2)).reshape(din, H * D))
        # attention projections are linear in h -> fold attn into fc weights
        Wr.append(jnp.einsum('hid,hd->ih', w, ar[:, 0, :]))       # (Din, H)
        Wl.append(jnp.einsum('hid,hd->ih', w, al[:, 0, :]))       # (Din, H)
        B.append(b[:, 0, :].reshape(1, H * D))
    Wf = jnp.concatenate(Wz + Wr, axis=1)                         # (Din, EH*D+EH)
    WL = jnp.concatenate(Wl, axis=1)                              # (Din, EH)
    WLrep = jnp.repeat(WL.T, N, axis=0)                           # (EH*N, Din)
    Bcat = jnp.concatenate(B, axis=1)                             # (1, EH*D)
    adjA = jnp.concatenate(
        [adjs[e] for e in range(E) for _ in range(H)], axis=0)    # (EH*N, N)
    biasA = (adjA - 1.0) * 1e30
    return (H, D), [Wf, WLrep, Bcat, adjA, biasA]


@jax.jit
def m_gat_forward(inputs, emb_tables, adjs, layer_params):
    """Mirrors M_GAT_orig.forward; everything runs in one fused Pallas call."""
    N = inputs.shape[0]
    E = len(adjs)
    vocab_sizes = tuple(int(t.shape[0]) for t in emb_tables)
    num_cont = inputs.shape[1] - len(vocab_sizes)

    flat = []
    layer_cfgs = []
    for params in layer_params:
        cfg, arrs = _fuse_layer_params(params, adjs, N)
        layer_cfgs.append(cfg)
        flat.extend(arrs)
    layer_cfgs = tuple(layer_cfgs)

    out_dim = layer_cfgs[-1][0] * layer_cfgs[-1][1]
    scr_width = max(E * H * D for (H, D) in layer_cfgs)
    args = [inputs] + list(emb_tables) + flat

    # advisory cost estimate
    flops, transcendentals = 0, 0
    din = sum(int(t.shape[1]) for t in emb_tables) + num_cont
    for (H, D) in layer_cfgs:
        EH, EHD = E * H, E * H * D
        flops += 2 * N * din * (EHD + EH)          # fused projection
        flops += 2 * EH * N * N * din              # attn_l slab
        flops += 2 * EH * N * N * (EHD + 1)        # aggregation + denominators
        flops += 8 * EH * N * N                    # softmax elementwise
        transcendentals += EH * N * N + EH * N
        din = H * D
    bytes_accessed = (sum(int(a.size) * a.dtype.itemsize for a in args)
                      + N * out_dim * 4)

    kernel = _make_mgat_kernel(N, E, vocab_sizes, layer_cfgs)
    return pl.pallas_call(
        kernel,
        out_shape=jax.ShapeDtypeStruct((N, out_dim), jnp.float32),
        in_specs=[pl.BlockSpec(memory_space=pltpu.MemorySpace.VMEM)] * len(args),
        out_specs=pl.BlockSpec(memory_space=pltpu.MemorySpace.VMEM),
        scratch_shapes=[pltpu.VMEM((N, scr_width), jnp.float32)],
        cost_estimate=pl.CostEstimate(
            flops=int(flops),
            transcendentals=int(transcendentals),
            bytes_accessed=int(bytes_accessed)),
    )(*args)


def init_gat_params(key, num_etypes, num_heads, din, dout):
    params = []
    for _ in range(num_etypes):
        key, k1, k2, k3 = jax.random.split(key, 4)
        w = 0.1 * jax.random.normal(k1, (num_heads, din, dout), jnp.float32)
        al = 0.1 * jax.random.normal(k2, (num_heads, 1, dout), jnp.float32)
        ar = 0.1 * jax.random.normal(k3, (num_heads, 1, dout), jnp.float32)
        b = jnp.zeros((num_heads, 1, dout), jnp.float32)
        params.append((w, al, ar, b))
    return key, params


if __name__ == "__main__":
    key = jax.random.PRNGKey(0)

    # ---- problem sizes (small, consistent with the module) ----
    N = 64                        # number of 'conn' nodes
    num_extra = 3                 # continuous features beyond 3 categorical cols
    etypes = ["flows_to", "replies_to"]
    num_heads = 3
    gnn_dims = [8 + 3 + 6 + num_extra, 16, 16]    # [20, 16, 16]
    output_dim = 8

    # ---- synthetic inputs: (N, 6) = 3 categorical index cols + 3 continuous ----
    key, k0, k1, k2, kc, ka = jax.random.split(key, 6)
    conn_state = jax.random.randint(k0, (N,), 0, 14)
    proto = jax.random.randint(k1, (N,), 0, 5)
    service = jax.random.randint(k2, (N,), 0, 10)
    cont = jax.random.normal(kc, (N, num_extra), jnp.float32)
    inputs = jnp.concatenate(
        [conn_state[:, None].astype(jnp.float32),
         proto[:, None].astype(jnp.float32),
         service[:, None].astype(jnp.float32),
         cont], axis=1)                                          # (N, 6)

    # dense adjacency per edge type, adj[dst, src]
    adjs = []
    for _ in etypes:
        ka, k = jax.random.split(ka)
        adjs.append(jax.random.bernoulli(k, 0.15, (N, N)).astype(jnp.float32))

    # ---- deterministic parameters (matching __init__ shapes) ----
    key, ke0, ke1, ke2 = jax.random.split(key, 4)
    emb_tables = (
        jax.random.normal(ke0, (14, 8), jnp.float32),            # Embedding(14, 8)
        jax.random.normal(ke1, (5, 3), jnp.float32),             # Embedding(5, 3)
        jax.random.normal(ke2, (10, 6), jnp.float32),            # Embedding(10, 6)
    )

    layer_params = []
    key, p = init_gat_params(key, len(etypes), num_heads, gnn_dims[0], gnn_dims[1])
    layer_params.append(p)                                       # GATConv(20 -> 16, H=3)
    key, p = init_gat_params(key, len(etypes), num_heads,
                             gnn_dims[1] * num_heads, gnn_dims[2])
    layer_params.append(p)                                       # GATConv(48 -> 16, H=3)
    key, p = init_gat_params(key, len(etypes), 1,
                             gnn_dims[-1] * num_heads, output_dim)
    layer_params.append(p)                                       # output GATConv(48 -> 8, H=1)

    # ---- forward (mirrors M_GAT_orig.forward) ----
    h = m_gat_forward(inputs, emb_tables, adjs, layer_params)
    h = jax.block_until_ready(h)
    assert h.shape == (N, output_dim)
    print("KERNEL_OK")
</pallas_src>

<mosaic_0001>
module attributes {stable_mosaic.version = 11 : i64} {
  func.func @kernel(%arg0: memref<64x6xf32, #tpu.memory_space<vmem>>, %arg1: memref<14x8xf32, #tpu.memory_space<vmem>>, %arg2: memref<5x3xf32, #tpu.memory_space<vmem>>, %arg3: memref<10x6xf32, #tpu.memory_space<vmem>>, %arg4: memref<20x102xf32, #tpu.memory_space<vmem>>, %arg5: memref<384x20xf32, #tpu.memory_space<vmem>>, %arg6: memref<1x96xf32, #tpu.memory_space<vmem>>, %arg7: memref<384x64xf32, #tpu.memory_space<vmem>>, %arg8: memref<384x64xf32, #tpu.memory_space<vmem>>, %arg9: memref<48x102xf32, #tpu.memory_space<vmem>>, %arg10: memref<384x48xf32, #tpu.memory_space<vmem>>, %arg11: memref<1x96xf32, #tpu.memory_space<vmem>>, %arg12: memref<384x64xf32, #tpu.memory_space<vmem>>, %arg13: memref<384x64xf32, #tpu.memory_space<vmem>>, %arg14: memref<48x18xf32, #tpu.memory_space<vmem>>, %arg15: memref<128x48xf32, #tpu.memory_space<vmem>>, %arg16: memref<1x16xf32, #tpu.memory_space<vmem>>, %arg17: memref<128x64xf32, #tpu.memory_space<vmem>>, %arg18: memref<128x64xf32, #tpu.memory_space<vmem>>, %arg19: memref<64x8xf32, #tpu.memory_space<vmem>>, %arg20: memref<64x96xf32, #tpu.memory_space<vmem>>) attributes {dimension_semantics = [], scalar_prefetch = 0 : i64, scratch_operands = 1 : i64, tpu.core_type = #tpu.core_type<tc>} {
    %c0 = arith.constant 0 : index
    %c0_0 = arith.constant 0 : index
    %0 = vector.load %arg0[%c0, %c0_0] : memref<64x6xf32, #tpu.memory_space<vmem>>, vector<64x6xf32>
    %1 = vector.extract_strided_slice %0 {offsets = [0, 0], sizes = [64, 1], strides = [1, 1]} : vector<64x6xf32> to vector<64x1xf32>
    %2 = arith.fptosi %1 : vector<64x1xf32> to vector<64x1xi32>
    %3 = tpu.iota {dimensions = array<i32: 1>} : vector<64x14xi32>
    %4 = vector.broadcast %2 : vector<64x1xi32> to vector<64x14xi32>
    %5 = arith.cmpi eq, %4, %3 : vector<64x14xi32>
    %6 = arith.extui %5 : vector<64x14xi1> to vector<64x14xi32>
    %7 = arith.sitofp %6 : vector<64x14xi32> to vector<64x14xf32>
    %c0_1 = arith.constant 0 : index
    %c0_2 = arith.constant 0 : index
    %8 = vector.load %arg1[%c0_1, %c0_2] : memref<14x8xf32, #tpu.memory_space<vmem>>, vector<14x8xf32>
    %cst = arith.constant dense<0.000000e+00> : vector<64x8xf32>
    %9 = tpu.matmul %7, %8, %cst {dimension_numbers = #tpu.dot_dimension_numbers<[1], [0], [0], [1], [0, 0, 1, 1], [], []>} : vector<64x14xf32>, vector<14x8xf32>, vector<64x8xf32> -> vector<64x8xf32>
    %10 = vector.extract_strided_slice %0 {offsets = [0, 1], sizes = [64, 1], strides = [1, 1]} : vector<64x6xf32> to vector<64x1xf32>
    %11 = arith.fptosi %10 : vector<64x1xf32> to vector<64x1xi32>
    %12 = tpu.iota {dimensions = array<i32: 1>} : vector<64x5xi32>
    %13 = vector.broadcast %11 : vector<64x1xi32> to vector<64x5xi32>
    %14 = arith.cmpi eq, %13, %12 : vector<64x5xi32>
    %15 = arith.extui %14 : vector<64x5xi1> to vector<64x5xi32>
    %16 = arith.sitofp %15 : vector<64x5xi32> to vector<64x5xf32>
    %c0_3 = arith.constant 0 : index
    %c0_4 = arith.constant 0 : index
    %17 = vector.load %arg2[%c0_3, %c0_4] : memref<5x3xf32, #tpu.memory_space<vmem>>, vector<5x3xf32>
    %cst_5 = arith.constant dense<0.000000e+00> : vector<64x3xf32>
    %18 = tpu.matmul %16, %17, %cst_5 {dimension_numbers = #tpu.dot_dimension_numbers<[1], [0], [0], [1], [0, 0, 1, 1], [], []>} : vector<64x5xf32>, vector<5x3xf32>, vector<64x3xf32> -> vector<64x3xf32>
    %19 = vector.extract_strided_slice %0 {offsets = [0, 2], sizes = [64, 1], strides = [1, 1]} : vector<64x6xf32> to vector<64x1xf32>
    %20 = arith.fptosi %19 : vector<64x1xf32> to vector<64x1xi32>
    %21 = tpu.iota {dimensions = array<i32: 1>} : vector<64x10xi32>
    %22 = vector.broadcast %20 : vector<64x1xi32> to vector<64x10xi32>
    %23 = arith.cmpi eq, %22, %21 : vector<64x10xi32>
    %24 = arith.extui %23 : vector<64x10xi1> to vector<64x10xi32>
    %25 = arith.sitofp %24 : vector<64x10xi32> to vector<64x10xf32>
    %c0_6 = arith.constant 0 : index
    %c0_7 = arith.constant 0 : index
    %26 = vector.load %arg3[%c0_6, %c0_7] : memref<10x6xf32, #tpu.memory_space<vmem>>, vector<10x6xf32>
    %cst_8 = arith.constant dense<0.000000e+00> : vector<64x6xf32>
    %27 = tpu.matmul %25, %26, %cst_8 {dimension_numbers = #tpu.dot_dimension_numbers<[1], [0], [0], [1], [0, 0, 1, 1], [], []>} : vector<64x10xf32>, vector<10x6xf32>, vector<64x6xf32> -> vector<64x6xf32>
    %28 = vector.extract_strided_slice %0 {offsets = [0, 3], sizes = [64, 3], strides = [1, 1]} : vector<64x6xf32> to vector<64x3xf32>
    %29 = tpu.concatenate %9, %18, %27, %28 in 1 : vector<64x8xf32>, vector<64x3xf32>, vector<64x6xf32>, vector<64x3xf32> -> vector<64x20xf32>
    %c0_9 = arith.constant 0 : index
    %c0_10 = arith.constant 0 : index
    %30 = vector.load %arg4[%c0_9, %c0_10] : memref<20x102xf32, #tpu.memory_space<vmem>>, vector<20x102xf32>
    %cst_11 = arith.constant dense<0.000000e+00> : vector<64x102xf32>
    %31 = tpu.matmul %29, %30, %cst_11 {dimension_numbers = #tpu.dot_dimension_numbers<[1], [0], [0], [1], [0, 0, 1, 1], [], []>} : vector<64x20xf32>, vector<20x102xf32>, vector<64x102xf32> -> vector<64x102xf32>
    %32 = vector.extract_strided_slice %31 {offsets = [0, 0], sizes = [64, 96], strides = [1, 1]} : vector<64x102xf32> to vector<64x96xf32>
    %33 = vector.extract_strided_slice %31 {offsets = [0, 96], sizes = [64, 6], strides = [1, 1]} : vector<64x102xf32> to vector<64x6xf32>
    %c0_12 = arith.constant 0 : index
    %c0_13 = arith.constant 0 : index
    %34 = vector.load %arg5[%c0_12, %c0_13] : memref<384x20xf32, #tpu.memory_space<vmem>>, vector<384x20xf32>
    %cst_14 = arith.constant dense<0.000000e+00> : vector<384x64xf32>
    %35 = tpu.matmul %34, %29, %cst_14 {dimension_numbers = #tpu.dot_dimension_numbers<[1], [1], [0], [0], [0, 0, 1, 0], [], []>} : vector<384x20xf32>, vector<64x20xf32>, vector<384x64xf32> -> vector<384x64xf32>
    %36 = vector.extract_strided_slice %33 {offsets = [0, 0], sizes = [64, 1], strides = [1, 1]} : vector<64x6xf32> to vector<64x1xf32>
    %37 = vector.extract_strided_slice %33 {offsets = [0, 1], sizes = [64, 1], strides = [1, 1]} : vector<64x6xf32> to vector<64x1xf32>
    %38 = vector.extract_strided_slice %33 {offsets = [0, 2], sizes = [64, 1], strides = [1, 1]} : vector<64x6xf32> to vector<64x1xf32>
    %39 = vector.extract_strided_slice %33 {offsets = [0, 3], sizes = [64, 1], strides = [1, 1]} : vector<64x6xf32> to vector<64x1xf32>
    %40 = vector.extract_strided_slice %33 {offsets = [0, 4], sizes = [64, 1], strides = [1, 1]} : vector<64x6xf32> to vector<64x1xf32>
    %41 = vector.extract_strided_slice %33 {offsets = [0, 5], sizes = [64, 1], strides = [1, 1]} : vector<64x6xf32> to vector<64x1xf32>
    %42 = tpu.concatenate %36, %37, %38, %39, %40, %41 in 0 : vector<64x1xf32>, vector<64x1xf32>, vector<64x1xf32>, vector<64x1xf32>, vector<64x1xf32>, vector<64x1xf32> -> vector<384x1xf32>
    %43 = vector.broadcast %42 : vector<384x1xf32> to vector<384x64xf32>
    %44 = arith.addf %35, %43 : vector<384x64xf32>
    %cst_15 = arith.constant 0.000000e+00 : f32
    %45 = vector.broadcast %cst_15 : f32 to vector<384x64xf32>
    %46 = arith.cmpf ogt, %44, %45 : vector<384x64xf32>
    %cst_16 = arith.constant 2.000000e-01 : f32
    %47 = vector.broadcast %cst_16 : f32 to vector<384x64xf32>
    %48 = arith.mulf %47, %44 : vector<384x64xf32>
    %49 = arith.select %46, %44, %48 : vector<384x64xi1>, vector<384x64xf32>
    %c0_17 = arith.constant 0 : index
    %c0_18 = arith.constant 0 : index
    %50 = vector.load %arg8[%c0_17, %c0_18] : memref<384x64xf32, #tpu.memory_space<vmem>>, vector<384x64xf32>
    %51 = arith.addf %49, %50 : vector<384x64xf32>
    %cst_19 = arith.constant dense<0xFF800000> : vector<384xf32>
    %52 = vector.multi_reduction <maximumf>, %51, %cst_19 [1] : vector<384x64xf32> to vector<384xf32>
    %53 = vector.shape_cast %52 : vector<384xf32> to vector<384x1xf32>
    %54 = vector.broadcast %53 : vector<384x1xf32> to vector<384x64xf32>
    %55 = arith.subf %51, %54 : vector<384x64xf32>
    %56 = math.exp %55 : vector<384x64xf32>
    %c0_20 = arith.constant 0 : index
    %c0_21 = arith.constant 0 : index
    %57 = vector.load %arg7[%c0_20, %c0_21] : memref<384x64xf32, #tpu.memory_space<vmem>>, vector<384x64xf32>
    %58 = arith.mulf %56, %57 : vector<384x64xf32>
    %cst_22 = arith.constant 1.000000e+00 : f32
    %59 = vector.broadcast %cst_22 : f32 to vector<64x1xf32>
    %60 = tpu.concatenate %32, %59 in 1 : vector<64x96xf32>, vector<64x1xf32> -> vector<64x97xf32>
    %cst_23 = arith.constant dense<0.000000e+00> : vector<384x97xf32>
    %61 = tpu.matmul %58, %60, %cst_23 {dimension_numbers = #tpu.dot_dimension_numbers<[1], [0], [0], [1], [0, 0, 1, 1], [], []>} : vector<384x64xf32>, vector<64x97xf32>, vector<384x97xf32> -> vector<384x97xf32>
    %62 = vector.extract_strided_slice %61 {offsets = [0, 96], sizes = [384, 1], strides = [1, 1]} : vector<384x97xf32> to vector<384x1xf32>
    %cst_24 = arith.constant 9.99999968E-21 : f32
    %63 = vector.broadcast %cst_24 : f32 to vector<384x1xf32>
    %64 = arith.maximumf %62, %63 : vector<384x1xf32>
    %65 = tpu.reciprocal %64 {approx = true} : vector<384x1xf32> -> vector<384x1xf32>
    %66 = vector.extract_strided_slice %61 {offsets = [0, 0], sizes = [384, 96], strides = [1, 1]} : vector<384x97xf32> to vector<384x96xf32>
    %67 = vector.broadcast %65 : vector<384x1xf32> to vector<384x96xf32>
    %68 = arith.mulf %66, %67 : vector<384x96xf32>
    %69 = vector.extract_strided_slice %68 {offsets = [0, 0], sizes = [64, 16], strides = [1, 1]} : vector<384x96xf32> to vector<64x16xf32>
    %c0_25 = arith.constant 0 : index
    %c0_26 = arith.constant 0 : index
    %70 = vector.load %arg20[%c0_25, %c0_26] : memref<64x96xf32, #tpu.memory_space<vmem>>, vector<64x16xf32>
    tpu.vector_store %arg20[%c0_25, %c0_26], %69 {strides = array<i32>} : memref<64x96xf32, #tpu.memory_space<vmem>>, vector<64x16xf32>,
    %71 = vector.extract_strided_slice %68 {offsets = [64, 16], sizes = [64, 16], strides = [1, 1]} : vector<384x96xf32> to vector<64x16xf32>
    %c0_27 = arith.constant 0 : index
    %c16 = arith.constant 16 : index
    %72 = vector.load %arg20[%c0_27, %c16] : memref<64x96xf32, #tpu.memory_space<vmem>>, vector<64x16xf32>
    tpu.vector_store %arg20[%c0_27, %c16], %71 {strides = array<i32>} : memref<64x96xf32, #tpu.memory_space<vmem>>, vector<64x16xf32>,
    %73 = vector.extract_strided_slice %68 {offsets = [128, 32], sizes = [64, 16], strides = [1, 1]} : vector<384x96xf32> to vector<64x16xf32>
    %c0_28 = arith.constant 0 : index
    %c32 = arith.constant 32 : index
    %74 = vector.load %arg20[%c0_28, %c32] : memref<64x96xf32, #tpu.memory_space<vmem>>, vector<64x16xf32>
    tpu.vector_store %arg20[%c0_28, %c32], %73 {strides = array<i32>} : memref<64x96xf32, #tpu.memory_space<vmem>>, vector<64x16xf32>,
    %75 = vector.extract_strided_slice %68 {offsets = [192, 48], sizes = [64, 16], strides = [1, 1]} : vector<384x96xf32> to vector<64x16xf32>
    %c0_29 = arith.constant 0 : index
    %c48 = arith.constant 48 : index
    %76 = vector.load %arg20[%c0_29, %c48] : memref<64x96xf32, #tpu.memory_space<vmem>>, vector<64x16xf32>
    tpu.vector_store %arg20[%c0_29, %c48], %75 {strides = array<i32>} : memref<64x96xf32, #tpu.memory_space<vmem>>, vector<64x16xf32>,
    %77 = vector.extract_strided_slice %68 {offsets = [256, 64], sizes = [64, 16], strides = [1, 1]} : vector<384x96xf32> to vector<64x16xf32>
    %c0_30 = arith.constant 0 : index
    %c64 = arith.constant 64 : index
    %78 = vector.load %arg20[%c0_30, %c64] : memref<64x96xf32, #tpu.memory_space<vmem>>, vector<64x16xf32>
    tpu.vector_store %arg20[%c0_30, %c64], %77 {strides = array<i32>} : memref<64x96xf32, #tpu.memory_space<vmem>>, vector<64x16xf32>,
    %79 = vector.extract_strided_slice %68 {offsets = [320, 80], sizes = [64, 16], strides = [1, 1]} : vector<384x96xf32> to vector<64x16xf32>
    %c0_31 = arith.constant 0 : index
    %c80 = arith.constant 80 : index
    %80 = vector.load %arg20[%c0_31, %c80] : memref<64x96xf32, #tpu.memory_space<vmem>>, vector<64x16xf32>
    tpu.vector_store %arg20[%c0_31, %c80], %79 {strides = array<i32>} : memref<64x96xf32, #tpu.memory_space<vmem>>, vector<64x16xf32>,
    %c0_32 = arith.constant 0 : index
    %c0_33 = arith.constant 0 : index
    %81 = vector.load %arg20[%c0_32, %c0_33] : memref<64x96xf32, #tpu.memory_space<vmem>>, vector<64x96xf32>
    %c0_34 = arith.constant 0 : index
    %c0_35 = arith.constant 0 : index
    %82 = vector.load %arg6[%c0_34, %c0_35] : memref<1x96xf32, #tpu.memory_space<vmem>>, vector<1x96xf32>
    %83 = vector.broadcast %82 : vector<1x96xf32> to vector<64x96xf32>
    %84 = arith.addf %81, %83 : vector<64x96xf32>
    %cst_36 = arith.constant 0.000000e+00 : f32
    %85 = vector.broadcast %cst_36 : f32 to vector<64x96xf32>
    %86 = arith.cmpf ogt, %84, %85 : vector<64x96xf32>
    %cst_37 = arith.constant 0.00999999977 : f32
    %87 = vector.broadcast %cst_37 : f32 to vector<64x96xf32>
    %88 = arith.mulf %87, %84 : vector<64x96xf32>
    %89 = arith.select %86, %84, %88 : vector<64x96xi1>, vector<64x96xf32>
    %90 = vector.extract_strided_slice %89 {offsets = [0, 0], sizes = [64, 48], strides = [1, 1]} : vector<64x96xf32> to vector<64x48xf32>
    %91 = vector.extract_strided_slice %89 {offsets = [0, 48], sizes = [64, 48], strides = [1, 1]} : vector<64x96xf32> to vector<64x48xf32>
    %92 = arith.addf %90, %91 : vector<64x48xf32>
    %cst_38 = arith.constant 5.000000e-01 : f32
    %93 = vector.broadcast %cst_38 : f32 to vector<64x48xf32>
    %94 = arith.mulf %92, %93 : vector<64x48xf32>
    %c0_39 = arith.constant 0 : index
    %c0_40 = arith.constant 0 : index
    %95 = vector.load %arg9[%c0_39, %c0_40] : memref<48x102xf32, #tpu.memory_space<vmem>>, vector<48x102xf32>
    %cst_41 = arith.constant dense<0.000000e+00> : vector<64x102xf32>
    %96 = tpu.matmul %94, %95, %cst_41 {dimension_numbers = #tpu.dot_dimension_numbers<[1], [0], [0], [1], [0, 0, 1, 1], [], []>} : vector<64x48xf32>, vector<48x102xf32>, vector<64x102xf32> -> vector<64x102xf32>
    %97 = vector.extract_strided_slice %96 {offsets = [0, 0], sizes = [64, 96], strides = [1, 1]} : vector<64x102xf32> to vector<64x96xf32>
    %98 = vector.extract_strided_slice %96 {offsets = [0, 96], sizes = [64, 6], strides = [1, 1]} : vector<64x102xf32> to vector<64x6xf32>
    %c0_42 = arith.constant 0 : index
    %c0_43 = arith.constant 0 : index
    %99 = vector.load %arg10[%c0_42, %c0_43] : memref<384x48xf32, #tpu.memory_space<vmem>>, vector<384x48xf32>
    %cst_44 = arith.constant dense<0.000000e+00> : vector<384x64xf32>
    %100 = tpu.matmul %99, %94, %cst_44 {dimension_numbers = #tpu.dot_dimension_numbers<[1], [1], [0], [0], [0, 0, 1, 0], [], []>} : vector<384x48xf32>, vector<64x48xf32>, vector<384x64xf32> -> vector<384x64xf32>
    %101 = vector.extract_strided_slice %98 {offsets = [0, 0], sizes = [64, 1], strides = [1, 1]} : vector<64x6xf32> to vector<64x1xf32>
    %102 = vector.extract_strided_slice %98 {offsets = [0, 1], sizes = [64, 1], strides = [1, 1]} : vector<64x6xf32> to vector<64x1xf32>
    %103 = vector.extract_strided_slice %98 {offsets = [0, 2], sizes = [64, 1], strides = [1, 1]} : vector<64x6xf32> to vector<64x1xf32>
    %104 = vector.extract_strided_slice %98 {offsets = [0, 3], sizes = [64, 1], strides = [1, 1]} : vector<64x6xf32> to vector<64x1xf32>
    %105 = vector.extract_strided_slice %98 {offsets = [0, 4], sizes = [64, 1], strides = [1, 1]} : vector<64x6xf32> to vector<64x1xf32>
    %106 = vector.extract_strided_slice %98 {offsets = [0, 5], sizes = [64, 1], strides = [1, 1]} : vector<64x6xf32> to vector<64x1xf32>
    %107 = tpu.concatenate %101, %102, %103, %104, %105, %106 in 0 : vector<64x1xf32>, vector<64x1xf32>, vector<64x1xf32>, vector<64x1xf32>, vector<64x1xf32>, vector<64x1xf32> -> vector<384x1xf32>
    %108 = vector.broadcast %107 : vector<384x1xf32> to vector<384x64xf32>
    %109 = arith.addf %100, %108 : vector<384x64xf32>
    %cst_45 = arith.constant 0.000000e+00 : f32
    %110 = vector.broadcast %cst_45 : f32 to vector<384x64xf32>
    %111 = arith.cmpf ogt, %109, %110 : vector<384x64xf32>
    %cst_46 = arith.constant 2.000000e-01 : f32
    %112 = vector.broadcast %cst_46 : f32 to vector<384x64xf32>
    %113 = arith.mulf %112, %109 : vector<384x64xf32>
    %114 = arith.select %111, %109, %113 : vector<384x64xi1>, vector<384x64xf32>
    %c0_47 = arith.constant 0 : index
    %c0_48 = arith.constant 0 : index
    %115 = vector.load %arg13[%c0_47, %c0_48] : memref<384x64xf32, #tpu.memory_space<vmem>>, vector<384x64xf32>
    %116 = arith.addf %114, %115 : vector<384x64xf32>
    %cst_49 = arith.constant dense<0xFF800000> : vector<384xf32>
    %117 = vector.multi_reduction <maximumf>, %116, %cst_49 [1] : vector<384x64xf32> to vector<384xf32>
    %118 = vector.shape_cast %117 : vector<384xf32> to vector<384x1xf32>
    %119 = vector.broadcast %118 : vector<384x1xf32> to vector<384x64xf32>
    %120 = arith.subf %116, %119 : vector<384x64xf32>
    %121 = math.exp %120 : vector<384x64xf32>
    %c0_50 = arith.constant 0 : index
    %c0_51 = arith.constant 0 : index
    %122 = vector.load %arg12[%c0_50, %c0_51] : memref<384x64xf32, #tpu.memory_space<vmem>>, vector<384x64xf32>
    %123 = arith.mulf %121, %122 : vector<384x64xf32>
    %cst_52 = arith.constant 1.000000e+00 : f32
    %124 = vector.broadcast %cst_52 : f32 to vector<64x1xf32>
    %125 = tpu.concatenate %97, %124 in 1 : vector<64x96xf32>, vector<64x1xf32> -> vector<64x97xf32>
    %cst_53 = arith.constant dense<0.000000e+00> : vector<384x97xf32>
    %126 = tpu.matmul %123, %125, %cst_53 {dimension_numbers = #tpu.dot_dimension_numbers<[1], [0], [0], [1], [0, 0, 1, 1], [], []>} : vector<384x64xf32>, vector<64x97xf32>, vector<384x97xf32> -> vector<384x97xf32>
    %127 = vector.extract_strided_slice %126 {offsets = [0, 96], sizes = [384, 1], strides = [1, 1]} : vector<384x97xf32> to vector<384x1xf32>
    %cst_54 = arith.constant 9.99999968E-21 : f32
    %128 = vector.broadcast %cst_54 : f32 to vector<384x1xf32>
    %129 = arith.maximumf %127, %128 : vector<384x1xf32>
    %130 = tpu.reciprocal %129 {approx = true} : vector<384x1xf32> -> vector<384x1xf32>
    %131 = vector.extract_strided_slice %126 {offsets = [0, 0], sizes = [384, 96], strides = [1, 1]} : vector<384x97xf32> to vector<384x96xf32>
    %132 = vector.broadcast %130 : vector<384x1xf32> to vector<384x96xf32>
    %133 = arith.mulf %131, %132 : vector<384x96xf32>
    %134 = vector.extract_strided_slice %133 {offsets = [0, 0], sizes = [64, 16], strides = [1, 1]} : vector<384x96xf32> to vector<64x16xf32>
    %c0_55 = arith.constant 0 : index
    %c0_56 = arith.constant 0 : index
    %135 = vector.load %arg20[%c0_55, %c0_56] : memref<64x96xf32, #tpu.memory_space<vmem>>, vector<64x16xf32>
    tpu.vector_store %arg20[%c0_55, %c0_56], %134 {strides = array<i32>} : memref<64x96xf32, #tpu.memory_space<vmem>>, vector<64x16xf32>,
    %136 = vector.extract_strided_slice %133 {offsets = [64, 16], sizes = [64, 16], strides = [1, 1]} : vector<384x96xf32> to vector<64x16xf32>
    %c0_57 = arith.constant 0 : index
    %c16_58 = arith.constant 16 : index
    %137 = vector.load %arg20[%c0_57, %c16_58] : memref<64x96xf32, #tpu.memory_space<vmem>>, vector<64x16xf32>
    tpu.vector_store %arg20[%c0_57, %c16_58], %136 {strides = array<i32>} : memref<64x96xf32, #tpu.memory_space<vmem>>, vector<64x16xf32>,
    %138 = vector.extract_strided_slice %133 {offsets = [128, 32], sizes = [64, 16], strides = [1, 1]} : vector<384x96xf32> to vector<64x16xf32>
    %c0_59 = arith.constant 0 : index
    %c32_60 = arith.constant 32 : index
    %139 = vector.load %arg20[%c0_59, %c32_60] : memref<64x96xf32, #tpu.memory_space<vmem>>, vector<64x16xf32>
    tpu.vector_store %arg20[%c0_59, %c32_60], %138 {strides = array<i32>} : memref<64x96xf32, #tpu.memory_space<vmem>>, vector<64x16xf32>,
    %140 = vector.extract_strided_slice %133 {offsets = [192, 48], sizes = [64, 16], strides = [1, 1]} : vector<384x96xf32> to vector<64x16xf32>
    %c0_61 = arith.constant 0 : index
    %c48_62 = arith.constant 48 : index
    %141 = vector.load %arg20[%c0_61, %c48_62] : memref<64x96xf32, #tpu.memory_space<vmem>>, vector<64x16xf32>
    tpu.vector_store %arg20[%c0_61, %c48_62], %140 {strides = array<i32>} : memref<64x96xf32, #tpu.memory_space<vmem>>, vector<64x16xf32>,
    %142 = vector.extract_strided_slice %133 {offsets = [256, 64], sizes = [64, 16], strides = [1, 1]} : vector<384x96xf32> to vector<64x16xf32>
    %c0_63 = arith.constant 0 : index
    %c64_64 = arith.constant 64 : index
    %143 = vector.load %arg20[%c0_63, %c64_64] : memref<64x96xf32, #tpu.memory_space<vmem>>, vector<64x16xf32>
    tpu.vector_store %arg20[%c0_63, %c64_64], %142 {strides = array<i32>} : memref<64x96xf32, #tpu.memory_space<vmem>>, vector<64x16xf32>,
    %144 = vector.extract_strided_slice %133 {offsets = [320, 80], sizes = [64, 16], strides = [1, 1]} : vector<384x96xf32> to vector<64x16xf32>
    %c0_65 = arith.constant 0 : index
    %c80_66 = arith.constant 80 : index
    %145 = vector.load %arg20[%c0_65, %c80_66] : memref<64x96xf32, #tpu.memory_space<vmem>>, vector<64x16xf32>
    tpu.vector_store %arg20[%c0_65, %c80_66], %144 {strides = array<i32>} : memref<64x96xf32, #tpu.memory_space<vmem>>, vector<64x16xf32>,
    %c0_67 = arith.constant 0 : index
    %c0_68 = arith.constant 0 : index
    %146 = vector.load %arg20[%c0_67, %c0_68] : memref<64x96xf32, #tpu.memory_space<vmem>>, vector<64x96xf32>
    %c0_69 = arith.constant 0 : index
    %c0_70 = arith.constant 0 : index
    %147 = vector.load %arg11[%c0_69, %c0_70] : memref<1x96xf32, #tpu.memory_space<vmem>>, vector<1x96xf32>
    %148 = vector.broadcast %147 : vector<1x96xf32> to vector<64x96xf32>
    %149 = arith.addf %146, %148 : vector<64x96xf32>
    %cst_71 = arith.constant 0.000000e+00 : f32
    %150 = vector.broadcast %cst_71 : f32 to vector<64x96xf32>
    %151 = arith.cmpf ogt, %149, %150 : vector<64x96xf32>
    %cst_72 = arith.constant 0.00999999977 : f32
    %152 = vector.broadcast %cst_72 : f32 to vector<64x96xf32>
    %153 = arith.mulf %152, %149 : vector<64x96xf32>
    %154 = arith.select %151, %149, %153 : vector<64x96xi1>, vector<64x96xf32>
    %155 = vector.extract_strided_slice %154 {offsets = [0, 0], sizes = [64, 48], strides = [1, 1]} : vector<64x96xf32> to vector<64x48xf32>
    %156 = vector.extract_strided_slice %154 {offsets = [0, 48], sizes = [64, 48], strides = [1, 1]} : vector<64x96xf32> to vector<64x48xf32>
    %157 = arith.addf %155, %156 : vector<64x48xf32>
    %cst_73 = arith.constant 5.000000e-01 : f32
    %158 = vector.broadcast %cst_73 : f32 to vector<64x48xf32>
    %159 = arith.mulf %157, %158 : vector<64x48xf32>
    %c0_74 = arith.constant 0 : index
    %c0_75 = arith.constant 0 : index
    %160 = vector.load %arg14[%c0_74, %c0_75] : memref<48x18xf32, #tpu.memory_space<vmem>>, vector<48x18xf32>
    %cst_76 = arith.constant dense<0.000000e+00> : vector<64x18xf32>
    %161 = tpu.matmul %159, %160, %cst_76 {dimension_numbers = #tpu.dot_dimension_numbers<[1], [0], [0], [1], [0, 0, 1, 1], [], []>} : vector<64x48xf32>, vector<48x18xf32>, vector<64x18xf32> -> vector<64x18xf32>
    %162 = vector.extract_strided_slice %161 {offsets = [0, 0], sizes = [64, 16], strides = [1, 1]} : vector<64x18xf32> to vector<64x16xf32>
    %163 = vector.extract_strided_slice %161 {offsets = [0, 16], sizes = [64, 2], strides = [1, 1]} : vector<64x18xf32> to vector<64x2xf32>
    %c0_77 = arith.constant 0 : index
    %c0_78 = arith.constant 0 : index
    %164 = vector.load %arg15[%c0_77, %c0_78] : memref<128x48xf32, #tpu.memory_space<vmem>>, vector<128x48xf32>
    %cst_79 = arith.constant dense<0.000000e+00> : vector<128x64xf32>
    %165 = tpu.matmul %164, %159, %cst_79 {dimension_numbers = #tpu.dot_dimension_numbers<[1], [1], [0], [0], [0, 0, 1, 0], [], []>} : vector<128x48xf32>, vector<64x48xf32>, vector<128x64xf32> -> vector<128x64xf32>
    %166 = vector.extract_strided_slice %163 {offsets = [0, 0], sizes = [64, 1], strides = [1, 1]} : vector<64x2xf32> to vector<64x1xf32>
    %167 = vector.extract_strided_slice %163 {offsets = [0, 1], sizes = [64, 1], strides = [1, 1]} : vector<64x2xf32> to vector<64x1xf32>
    %168 = tpu.concatenate %166, %167 in 0 : vector<64x1xf32>, vector<64x1xf32> -> vector<128x1xf32>
    %169 = vector.broadcast %168 : vector<128x1xf32> to vector<128x64xf32>
    %170 = arith.addf %165, %169 : vector<128x64xf32>
    %cst_80 = arith.constant 0.000000e+00 : f32
    %171 = vector.broadcast %cst_80 : f32 to vector<128x64xf32>
    %172 = arith.cmpf ogt, %170, %171 : vector<128x64xf32>
    %cst_81 = arith.constant 2.000000e-01 : f32
    %173 = vector.broadcast %cst_81 : f32 to vector<128x64xf32>
    %174 = arith.mulf %173, %170 : vector<128x64xf32>
    %175 = arith.select %172, %170, %174 : vector<128x64xi1>, vector<128x64xf32>
    %c0_82 = arith.constant 0 : index
    %c0_83 = arith.constant 0 : index
    %176 = vector.load %arg18[%c0_82, %c0_83] : memref<128x64xf32, #tpu.memory_space<vmem>>, vector<128x64xf32>
    %177 = arith.addf %175, %176 : vector<128x64xf32>
    %cst_84 = arith.constant dense<0xFF800000> : vector<128xf32>
    %178 = vector.multi_reduction <maximumf>, %177, %cst_84 [1] : vector<128x64xf32> to vector<128xf32>
    %179 = vector.shape_cast %178 : vector<128xf32> to vector<128x1xf32>
    %180 = vector.broadcast %179 : vector<128x1xf32> to vector<128x64xf32>
    %181 = arith.subf %177, %180 : vector<128x64xf32>
    %182 = math.exp %181 : vector<128x64xf32>
    %c0_85 = arith.constant 0 : index
    %c0_86 = arith.constant 0 : index
    %183 = vector.load %arg17[%c0_85, %c0_86] : memref<128x64xf32, #tpu.memory_space<vmem>>, vector<128x64xf32>
    %184 = arith.mulf %182, %183 : vector<128x64xf32>
    %cst_87 = arith.constant 1.000000e+00 : f32
    %185 = vector.broadcast %cst_87 : f32 to vector<64x1xf32>
    %186 = tpu.concatenate %162, %185 in 1 : vector<64x16xf32>, vector<64x1xf32> -> vector<64x17xf32>
    %cst_88 = arith.constant dense<0.000000e+00> : vector<128x17xf32>
    %187 = tpu.matmul %184, %186, %cst_88 {dimension_numbers = #tpu.dot_dimension_numbers<[1], [0], [0], [1], [0, 0, 1, 1], [], []>} : vector<128x64xf32>, vector<64x17xf32>, vector<128x17xf32> -> vector<128x17xf32>
    %188 = vector.extract_strided_slice %187 {offsets = [0, 16], sizes = [128, 1], strides = [1, 1]} : vector<128x17xf32> to vector<128x1xf32>
    %cst_89 = arith.constant 9.99999968E-21 : f32
    %189 = vector.broadcast %cst_89 : f32 to vector<128x1xf32>
    %190 = arith.maximumf %188, %189 : vector<128x1xf32>
    %191 = tpu.reciprocal %190 {approx = true} : vector<128x1xf32> -> vector<128x1xf32>
    %192 = vector.extract_strided_slice %187 {offsets = [0, 0], sizes = [128, 16], strides = [1, 1]} : vector<128x17xf32> to vector<128x16xf32>
    %193 = vector.broadcast %191 : vector<128x1xf32> to vector<128x16xf32>
    %194 = arith.mulf %192, %193 : vector<128x16xf32>
    %195 = vector.extract_strided_slice %194 {offsets = [0, 0], sizes = [64, 8], strides = [1, 1]} : vector<128x16xf32> to vector<64x8xf32>
    %c0_90 = arith.constant 0 : index
    %c0_91 = arith.constant 0 : index
    %196 = vector.load %arg20[%c0_90, %c0_91] : memref<64x96xf32, #tpu.memory_space<vmem>>, vector<64x8xf32>
    tpu.vector_store %arg20[%c0_90, %c0_91], %195 {strides = array<i32>} : memref<64x96xf32, #tpu.memory_space<vmem>>, vector<64x8xf32>,
    %197 = vector.extract_strided_slice %194 {offsets = [64, 8], sizes = [64, 8], strides = [1, 1]} : vector<128x16xf32> to vector<64x8xf32>
    %c0_92 = arith.constant 0 : index
    %c8 = arith.constant 8 : index
    %198 = vector.load %arg20[%c0_92, %c8] : memref<64x96xf32, #tpu.memory_space<vmem>>, vector<64x8xf32>
    tpu.vector_store %arg20[%c0_92, %c8], %197 {strides = array<i32>} : memref<64x96xf32, #tpu.memory_space<vmem>>, vector<64x8xf32>,
    %c0_93 = arith.constant 0 : index
    %c0_94 = arith.constant 0 : index
    %199 = vector.load %arg20[%c0_93, %c0_94] : memref<64x96xf32, #tpu.memory_space<vmem>>, vector<64x16xf32>
    %c0_95 = arith.constant 0 : index
    %c0_96 = arith.constant 0 : index
    %200 = vector.load %arg16[%c0_95, %c0_96] : memref<1x16xf32, #tpu.memory_space<vmem>>, vector<1x16xf32>
    %201 = vector.broadcast %200 : vector<1x16xf32> to vector<64x16xf32>
    %202 = arith.addf %199, %201 : vector<64x16xf32>
    %cst_97 = arith.constant 0.000000e+00 : f32
    %203 = vector.broadcast %cst_97 : f32 to vector<64x16xf32>
    %204 = arith.cmpf ogt, %202, %203 : vector<64x16xf32>
    %cst_98 = arith.constant 0.00999999977 : f32
    %205 = vector.broadcast %cst_98 : f32 to vector<64x16xf32>
    %206 = arith.mulf %205, %202 : vector<64x16xf32>
    %207 = arith.select %204, %202, %206 : vector<64x16xi1>, vector<64x16xf32>
    %208 = vector.extract_strided_slice %207 {offsets = [0, 0], sizes = [64, 8], strides = [1, 1]} : vector<64x16xf32> to vector<64x8xf32>
    %209 = vector.extract_strided_slice %207 {offsets = [0, 8], sizes = [64, 8], strides = [1, 1]} : vector<64x16xf32> to vector<64x8xf32>
    %210 = arith.addf %208, %209 : vector<64x8xf32>
    %cst_99 = arith.constant 5.000000e-01 : f32
    %211 = vector.broadcast %cst_99 : f32 to vector<64x8xf32>
    %212 = arith.mulf %210, %211 : vector<64x8xf32>
    %c0_100 = arith.constant 0 : index
    %c0_101 = arith.constant 0 : index
    %213 = vector.load %arg19[%c0_100, %c0_101] : memref<64x8xf32, #tpu.memory_space<vmem>>, vector<64x8xf32>
    tpu.vector_store %arg19[%c0_100, %c0_101], %212 {strides = array<i32>} : memref<64x8xf32, #tpu.memory_space<vmem>>, vector<64x8xf32>,
    return
  }
}

</mosaic_0001>

<llo_original>
// kernel: squeeze.20
$region0: #{squeeze.20}
  %s0 = inlined_call_operand.vmem [shape: f32[3,16], index: 0, kind: input, shape index: {}]
  %s1 = inlined_call_operand.vmem [shape: f32[1,48], index: 1, kind: output, shape index: {}]
  $region1: #{squeeze.20} parent=0
    #allocation0 [shape = 'u8[4096]{0}', space=vmem, size = 0x1000, scoped, tag = 'scoped mem for output reshape']
    #allocation1 [shape = 'u8[4096]{0}', space=vmem, size = 0x1000, scoped, tag = 'scoped mem for input reshape']
    %s3 = sshll.u32 1, 4
    %s4 = ssub.s32 %s3, 1
    %v5 = vld [vmem:[%s0] sm:%s4]
    %6 = vst [vmem:[#allocation1] sm:%s4] %v5
    %v7 = vld [vmem:[#allocation1] sm:$0x1]
    %vm8 = vcmask 130048
    %9 = vst.msk [vmem:[#allocation0] sm:$0x1] %vm8, %v7
    %s10 = scalar_lea.vmem [#allocation1], 2
    %v11 = vld [vmem:[%s10] sm:$0x1]
    %12 = vrot.lane.b32.xlu0 %v11, 32
    %v13 = vpop.permute.xlu0 %12
    %vm14 = vcmask 392448
    %15 = vst.msk [vmem:[#allocation0] sm:$0x1] %vm14, %v13
    %s16 = scalar_lea.vmem [#allocation1], 1
    %v17 = vld [vmem:[%s16] sm:$0x1]
    %18 = vrot.lane.b32.xlu0 %v17, 16
    %v19 = vpop.permute.xlu0 %18
    %vm20 = vcmask 261248
    %21 = vst.msk [vmem:[#allocation0] sm:$0x1] %vm20, %v19
    %s23 = sshll.u32 1, 1
    %s24 = ssub.s32 %s23, 1
    %v26 = vld [vmem:[#allocation0] sm:%s24]
    %s27 = sshll.u32 1, 1
    %s28 = ssub.s32 %s27, 1
    %29 = vst [vmem:[%s1] sm:%s28] %v26

// kernel: m_gat_forward.1
$region0: #{m_gat_forward.1}
  #allocation0 [shape = 'u32[]', space=smem, size = 0x4, offset = 0x4, fixed_abs, tag = 'smem constant byte address 0x4 - core index']
  #allocation1 [shape = 'u32[144,128]{1,0:T(1,128)}', space=vmem, size = 0x12000, scoped, tag = 'internal scratch']
  #allocation2 [shape = 'f32[64,96]{1,0:T(8,128)}', space=vmem, size = 0x8000, scoped, tag = 'scratch operand']
  %s0 = inlined_call_operand.vmem [shape: f32[64,6], index: 0, kind: input, shape index: {}]
  %s1 = inlined_call_operand.vmem [shape: f32[14,8], index: 1, kind: input, shape index: {}]
  %s2 = inlined_call_operand.vmem [shape: f32[5,3], index: 2, kind: input, shape index: {}]
  %s3 = inlined_call_operand.vmem [shape: f32[10,6], index: 3, kind: input, shape index: {}]
  %s4 = inlined_call_operand.vmem [shape: f32[20,102], index: 4, kind: input, shape index: {}]
  %s5 = inlined_call_operand.vmem [shape: f32[384,20], index: 5, kind: input, shape index: {}]
  %s6 = inlined_call_operand.vmem [shape: f32[1,96], index: 6, kind: input, shape index: {}]
  %s7 = inlined_call_operand.vmem [shape: f32[384,64], index: 7, kind: input, shape index: {}, may-alias: {7,12}]
  %s8 = inlined_call_operand.vmem [shape: f32[384,64], index: 8, kind: input, shape index: {}, may-alias: {8,13}]
  %s9 = inlined_call_operand.vmem [shape: f32[48,102], index: 9, kind: input, shape index: {}]
  %s10 = inlined_call_operand.vmem [shape: f32[384,48], index: 10, kind: input, shape index: {}]
  %s11 = inlined_call_operand.vmem [shape: f32[1,96], index: 11, kind: input, shape index: {}]
  %s12 = inlined_call_operand.vmem [shape: f32[384,64], index: 12, kind: input, shape index: {}, may-alias: {7,12}]
  %s13 = inlined_call_operand.vmem [shape: f32[384,64], index: 13, kind: input, shape index: {}, may-alias: {8,13}]
  %s14 = inlined_call_operand.vmem [shape: f32[48,18], index: 14, kind: input, shape index: {}]
  %s15 = inlined_call_operand.vmem [shape: f32[128,48], index: 15, kind: input, shape index: {}]
  %s16 = inlined_call_operand.vmem [shape: f32[1,16], index: 16, kind: input, shape index: {}]
  %s17 = inlined_call_operand.vmem [shape: f32[128,64], index: 17, kind: input, shape index: {}]
  %s18 = inlined_call_operand.vmem [shape: f32[128,64], index: 18, kind: input, shape index: {}]
  %s19 = inlined_call_operand.vmem [shape: f32[64,8], index: 19, kind: output, shape index: {}]
  %s20 = sld [smem:[#allocation0]]
  $region86: #{m_gat_forward.1} parent=0
    _
  %s22 = ssub.s32 1, %s20
  %s23 = scalar_select 0, %s22, %s20
  // Predicated region
  $region2: #{m_gat_forward.1} parent=0 // pred_check
    _
  $region3: #{m_gat_forward.1} parent=0 // pred_check_branch
    %25 = sbr.rel (0) target = $region5
  $region4: #{m_gat_forward.1} parent=0 // pred_region
    _
  $region5: #{m_gat_forward.1} parent=0 // pred_fallthru
    _
  // Predicated region
  $region6: #{m_gat_forward.1} parent=0 // pred_check
    _
  $region7: #{m_gat_forward.1} parent=0 // pred_check_branch
    %27 = sbr.rel (0) target = $region9
  $region8: #{m_gat_forward.1} parent=0 // pred_region
    _
  $region9: #{m_gat_forward.1} parent=0 // pred_fallthru
    _
  // Predicated region
  $region10: #{m_gat_forward.1} parent=0 // pred_check
    _
  $region11: #{m_gat_forward.1} parent=0 // pred_check_branch
    %29 = sbr.rel (0) target = $region13
  $region12: #{m_gat_forward.1} parent=0 // pred_region
    _
  $region13: #{m_gat_forward.1} parent=0 // pred_fallthru
    _
  // Predicated region
  $region14: #{m_gat_forward.1} parent=0 // pred_check
    _
  $region15: #{m_gat_forward.1} parent=0 // pred_check_branch
    %31 = sbr.rel (0) target = $region17
  $region16: #{m_gat_forward.1} parent=0 // pred_region
    _
  $region17: #{m_gat_forward.1} parent=0 // pred_fallthru
    _
  // Predicated region
  $region18: #{m_gat_forward.1} parent=0 // pred_check
    _
  $region19: #{m_gat_forward.1} parent=0 // pred_check_branch
    %33 = sbr.rel (0) target = $region21
  $region20: #{m_gat_forward.1} parent=0 // pred_region
    _
  $region21: #{m_gat_forward.1} parent=0 // pred_fallthru
    _
  // Predicated region
  $region22: #{m_gat_forward.1} parent=0 // pred_check
    _
  $region23: #{m_gat_forward.1} parent=0 // pred_check_branch
    %35 = sbr.rel (0) target = $region25
  $region24: #{m_gat_forward.1} parent=0 // pred_region
    _
  $region25: #{m_gat_forward.1} parent=0 // pred_fallthru
    _
  // Predicated region
  $region26: #{m_gat_forward.1} parent=0 // pred_check
    _
  $region27: #{m_gat_forward.1} parent=0 // pred_check_branch
    %37 = sbr.rel (0) target = $region29
  $region28: #{m_gat_forward.1} parent=0 // pred_region
    _
  $region29: #{m_gat_forward.1} parent=0 // pred_fallthru
    _
  // Predicated region
  $region30: #{m_gat_forward.1} parent=0 // pred_check
    _
  $region31: #{m_gat_forward.1} parent=0 // pred_check_branch
    %39 = sbr.rel (0) target = $region33
  $region32: #{m_gat_forward.1} parent=0 // pred_region
    _
  $region33: #{m_gat_forward.1} parent=0 // pred_fallthru
    _
  // Predicated region
  $region34: #{m_gat_forward.1} parent=0 // pred_check
    _
  $region35: #{m_gat_forward.1} parent=0 // pred_check_branch
    %41 = sbr.rel (0) target = $region37
  $region36: #{m_gat_forward.1} parent=0 // pred_region
    _
  $region37: #{m_gat_forward.1} parent=0 // pred_fallthru
    _
  // Predicated region
  $region38: #{m_gat_forward.1} parent=0 // pred_check
    _
  $region39: #{m_gat_forward.1} parent=0 // pred_check_branch
    %43 = sbr.rel (0) target = $region41
  $region40: #{m_gat_forward.1} parent=0 // pred_region
    _
  $region41: #{m_gat_forward.1} parent=0 // pred_fallthru
    _
  // Predicated region
  $region42: #{m_gat_forward.1} parent=0 // pred_check
    _
  $region43: #{m_gat_forward.1} parent=0 // pred_check_branch
    %45 = sbr.rel (0) target = $region45
  $region44: #{m_gat_forward.1} parent=0 // pred_region
    _
  $region45: #{m_gat_forward.1} parent=0 // pred_fallthru
    _
  // Predicated region
  $region46: #{m_gat_forward.1} parent=0 // pred_check
    _
  $region47: #{m_gat_forward.1} parent=0 // pred_check_branch
    %47 = sbr.rel (0) target = $region49
  $region48: #{m_gat_forward.1} parent=0 // pred_region
    _
  $region49: #{m_gat_forward.1} parent=0 // pred_fallthru
    _
  // Predicated region
  $region50: #{m_gat_forward.1} parent=0 // pred_check
    _
  $region51: #{m_gat_forward.1} parent=0 // pred_check_branch
    %49 = sbr.rel (0) target = $region53
  $region52: #{m_gat_forward.1} parent=0 // pred_region
    _
  $region53: #{m_gat_forward.1} parent=0 // pred_fallthru
    _
  // Predicated region
  $region54: #{m_gat_forward.1} parent=0 // pred_check
    _
  $region55: #{m_gat_forward.1} parent=0 // pred_check_branch
    %51 = sbr.rel (0) target = $region57
  $region56: #{m_gat_forward.1} parent=0 // pred_region
    _
  $region57: #{m_gat_forward.1} parent=0 // pred_fallthru
    _
  // Predicated region
  $region58: #{m_gat_forward.1} parent=0 // pred_check
    _
  $region59: #{m_gat_forward.1} parent=0 // pred_check_branch
    %53 = sbr.rel (0) target = $region61
  $region60: #{m_gat_forward.1} parent=0 // pred_region
    _
  $region61: #{m_gat_forward.1} parent=0 // pred_fallthru
    _
  // Predicated region
  $region62: #{m_gat_forward.1} parent=0 // pred_check
    _
  $region63: #{m_gat_forward.1} parent=0 // pred_check_branch
    %55 = sbr.rel (0) target = $region65
  $region64: #{m_gat_forward.1} parent=0 // pred_region
    _
  $region65: #{m_gat_forward.1} parent=0 // pred_fallthru
    _
  // Predicated region
  $region66: #{m_gat_forward.1} parent=0 // pred_check
    _
  $region67: #{m_gat_forward.1} parent=0 // pred_check_branch
    %57 = sbr.rel (0) target = $region69
  $region68: #{m_gat_forward.1} parent=0 // pred_region
    _
  $region69: #{m_gat_forward.1} parent=0 // pred_fallthru
    _
  // Predicated region
  $region70: #{m_gat_forward.1} parent=0 // pred_check
    _
  $region71: #{m_gat_forward.1} parent=0 // pred_check_branch
    %59 = sbr.rel (0) target = $region73
  $region72: #{m_gat_forward.1} parent=0 // pred_region
    _
  $region73: #{m_gat_forward.1} parent=0 // pred_fallthru
    _
  // Predicated region
  $region74: #{m_gat_forward.1} parent=0 // pred_check
    _
  $region75: #{m_gat_forward.1} parent=0 // pred_check_branch
    %61 = sbr.rel (0) target = $region77
  $region76: #{m_gat_forward.1} parent=0 // pred_region
    _
  $region77: #{m_gat_forward.1} parent=0 // pred_fallthru
    _
  %v62 = vld [vmem:[%s0] sm:$0xff]
  %v63 = vld [vmem:[%s0 + $0x8] sm:$0xff]
  %v64 = vld [vmem:[%s0 + $0x10] sm:$0xff]
  %v65 = vld [vmem:[%s0 + $0x18] sm:$0xff]
  %v66 = vld [vmem:[%s0 + $0x20] sm:$0xff]
  %v67 = vld [vmem:[%s0 + $0x28] sm:$0xff]
  %v68 = vld [vmem:[%s0 + $0x30] sm:$0xff]
  %v69 = vld [vmem:[%s0 + $0x38] sm:$0xff]
  %v70 = vcvt.f32.s32.to.zero.pseudo %v62
  %v71 = vcvt.f32.s32.to.zero.pseudo %v63
  %v72 = vcvt.f32.s32.to.zero.pseudo %v64
  %v73 = vcvt.f32.s32.to.zero.pseudo %v65
  %v74 = vcvt.f32.s32.to.zero.pseudo %v66
  %v75 = vcvt.f32.s32.to.zero.pseudo %v67
  %v76 = vcvt.f32.s32.to.zero.pseudo %v68
  %v77 = vcvt.f32.s32.to.zero.pseudo %v69
  %v78 = vlaneseq
  %v79 = vand.u32 %v78, 127
  %80 = vset.pattern.permute.xlu0 0
  %81 = vperm.xlu0 %80, %v70
  %v82 = vpop.permute.xlu0 %81
  %83 = vset.pattern.permute.xlu0 0
  %84 = vperm.xlu0 %83, %v71
  %v85 = vpop.permute.xlu0 %84
  %86 = vset.pattern.permute.xlu0 0
  %87 = vperm.xlu0 %86, %v72
  %v88 = vpop.permute.xlu0 %87
  %89 = vset.pattern.permute.xlu0 0
  %90 = vperm.xlu0 %89, %v73
  %v91 = vpop.permute.xlu0 %90
  %92 = vset.pattern.permute.xlu0 0
  %93 = vperm.xlu0 %92, %v74
  %v94 = vpop.permute.xlu0 %93
  %95 = vset.pattern.permute.xlu0 0
  %96 = vperm.xlu0 %95, %v75
  %v97 = vpop.permute.xlu0 %96
  %98 = vset.pattern.permute.xlu0 0
  %99 = vperm.xlu0 %98, %v76
  %v100 = vpop.permute.xlu0 %99
  %101 = vset.pattern.permute.xlu0 0
  %102 = vperm.xlu0 %101, %v77
  %v103 = vpop.permute.xlu0 %102
  %vm104 = vcmp.eq.s32.totalorder %v82, %v79
  %vm105 = vcmp.eq.s32.totalorder %v85, %v79
  %vm106 = vcmp.eq.s32.totalorder %v88, %v79
  %vm107 = vcmp.eq.s32.totalorder %v91, %v79
  %vm108 = vcmp.eq.s32.totalorder %v94, %v79
  %vm109 = vcmp.eq.s32.totalorder %v97, %v79
  %vm110 = vcmp.eq.s32.totalorder %v100, %v79
  %vm111 = vcmp.eq.s32.totalorder %v103, %v79
  %v112 = vsel %vm104, 1, 0
  %v113 = vsel %vm105, 1, 0
  %v114 = vsel %vm106, 1, 0
  %v115 = vsel %vm107, 1, 0
  %v116 = vsel %vm108, 1, 0
  %v117 = vsel %vm109, 1, 0
  %v118 = vsel %vm110, 1, 0
  %v119 = vsel %vm111, 1, 0
  %v120 = vcvt.s32.f32 %v112
  %v121 = vcvt.s32.f32 %v113
  %v122 = vcvt.s32.f32 %v114
  %v123 = vcvt.s32.f32 %v115
  %v124 = vcvt.s32.f32 %v116
  %v125 = vcvt.s32.f32 %v117
  %v126 = vcvt.s32.f32 %v118
  %v127 = vcvt.s32.f32 %v119
  %v128 = vld [vmem:[%s1] sm:$0xff]
  %v129 = vld [vmem:[%s1 + $0x8] sm:$0x3f]
  %vm130 = vcmask 113664
  %v132 = vsel %vm130, %v120, 0
  %v135 = vsel %vm130, %v121, 0
  %v138 = vsel %vm130, %v122, 0
  %v141 = vsel %vm130, %v123, 0
  %v144 = vsel %vm130, %v124, 0
  %v147 = vsel %vm130, %v125, 0
  %v150 = vsel %vm130, %v126, 0
  %v153 = vsel %vm130, %v127, 0
  %vm155 = vcmask 1045504
  %v157 = vsel %vm155, %v129, 0
  %159 = vmatprep.subr.mxu0 0.0
  %160 = vmatpush1.msra.mxu0 0.0
  %161 = vmatprep.subr.mxu0 0.0
  %162 = vmatpush1.msra.mxu0 0.0
  %163 = vmatprep.subr.mxu0 0.0
  %164 = vmatpush1.msra.mxu0 0.0
  %165 = vmatprep.subr.mxu0 0.0
  %166 = vmatpush1.msra.mxu0 0.0
  %167 = vmatprep.subr.mxu0 0.0
  %168 = vmatpush1.msra.mxu0 0.0
  %169 = vmatprep.subr.mxu0 0.0
  %170 = vmatpush1.msra.mxu0 0.0
  %171 = vmatprep.subr.mxu0 0.0
  %172 = vmatpush1.msra.mxu0 0.0
  %173 = vmatprep.subr.mxu0 0.0
  %174 = vmatpush1.msra.mxu0 0.0
  %175 = vmatprep.subr.mxu0 0.0
  %176 = vmatpush1.msra.mxu0 0.0
  %177 = vmatprep.subr.mxu0 0.0
  %178 = vmatpush1.msra.mxu0 0.0
  %179 = vmatprep.subr.mxu0 0.0
  %180 = vmatpush1.msra.mxu0 0.0
  %181 = vmatprep.subr.mxu0 0.0
  %182 = vmatpush1.msra.mxu0 0.0
  %183 = vmatprep.subr.mxu0 0.0
  %184 = vmatpush1.msra.mxu0 0.0
  %185 = vmatprep.subr.mxu0 0.0
  %186 = vmatpush1.msra.mxu0 0.0
  %187 = vmatprep.subr.mxu0 0.0
  %188 = vmatpush1.msra.mxu0 %v157
  %189 = vmatprep.subr.mxu0 0.0
  %190 = vmatpush1.msra.mxu0 %v128
  %191 = vmatprep.subr.mxu0 0.0
  %192 = vmatpush2.msra.mxu0 0.0
  %193 = vmatprep.subr.mxu0 0.0
  %194 = vmatpush2.msra.mxu0 0.0
  %195 = vmatprep.subr.mxu0 0.0
  %196 = vmatpush2.msra.mxu0 0.0
  %197 = vmatprep.subr.mxu0 0.0
  %198 = vmatpush2.msra.mxu0 0.0
  %199 = vmatprep.subr.mxu0 0.0
  %200 = vmatpush2.msra.mxu0 0.0
  %201 = vmatprep.subr.mxu0 0.0
  %202 = vmatpush2.msra.mxu0 0.0
  %203 = vmatprep.subr.mxu0 0.0
  %204 = vmatpush2.msra.mxu0 0.0
  %205 = vmatprep.subr.mxu0 0.0
  %206 = vmatpush2.msra.mxu0 0.0
  %207 = vmatprep.subr.mxu0 0.0
  %208 = vmatpush2.msra.mxu0 0.0
  %209 = vmatprep.subr.mxu0 0.0
  %210 = vmatpush2.msra.mxu0 0.0
  %211 = vmatprep.subr.mxu0 0.0
  %212 = vmatpush2.msra.mxu0 0.0
  %213 = vmatprep.subr.mxu0 0.0
  %214 = vmatpush2.msra.mxu0 0.0
  %215 = vmatprep.subr.mxu0 0.0
  %216 = vmatpush2.msra.mxu0 0.0
  %217 = vmatprep.subr.mxu0 0.0
  %218 = vmatpush2.msra.mxu0 0.0
  %219 = vmatprep.subr.mxu0 0.0
  %220 = vmatpush2.msra.mxu0 0.0
  %221 = vmatprep.subr.mxu0 0.0
  %222 = vmatpush2.msra.mxu0 0.0
  %223 = vmatprep.mubr.f32.mxu0 0.0
  %224 = vmatmul.mubr.f32.gmra.mxu0 %v132
  %v225 = vpop.f32.mrf.mxu0
  %v226 = vadd.f32 0.0, %v225
  %v227 = vpop.f32.mrf.mxu0
  %228 = vmatprep.mubr.f32.mxu0 0.0
  %229 = vmatmul.mubr.f32.gmra.mxu0 %v135
  %v230 = vpop.f32.mrf.mxu0
  %v231 = vadd.f32 0.0, %v230
  %v232 = vpop.f32.mrf.mxu0
  %233 = vmatprep.mubr.f32.mxu0 0.0
  %234 = vmatmul.mubr.f32.gmra.mxu0 %v138
  %v235 = vpop.f32.mrf.mxu0
  %v236 = vadd.f32 0.0, %v235
  %v237 = vpop.f32.mrf.mxu0
  %238 = vmatprep.mubr.f32.mxu0 0.0
  %239 = vmatmul.mubr.f32.gmra.mxu0 %v141
  %v240 = vpop.f32.mrf.mxu0
  %v241 = vadd.f32 0.0, %v240
  %v242 = vpop.f32.mrf.mxu0
  %243 = vmatprep.mubr.f32.mxu0 0.0
  %244 = vmatmul.mubr.f32.gmra.mxu0 %v144
  %v245 = vpop.f32.mrf.mxu0
  %v246 = vadd.f32 0.0, %v245
  %v247 = vpop.f32.mrf.mxu0
  %248 = vmatprep.mubr.f32.mxu0 0.0
  %249 = vmatmul.mubr.f32.gmra.mxu0 %v147
  %v250 = vpop.f32.mrf.mxu0
  %v251 = vadd.f32 0.0, %v250
  %v252 = vpop.f32.mrf.mxu0
  %253 = vmatprep.mubr.f32.mxu0 0.0
  %254 = vmatmul.mubr.f32.gmra.mxu0 %v150
  %v255 = vpop.f32.mrf.mxu0
  %v256 = vadd.f32 0.0, %v255
  %v257 = vpop.f32.mrf.mxu0
  %258 = vmatprep.mubr.f32.mxu0 0.0
  %259 = vmatmul.mubr.f32.gmra.mxu0 %v153
  %v260 = vpop.f32.mrf.mxu0
  %v261 = vadd.f32 0.0, %v260
  %v262 = vpop.f32.mrf.mxu0
  %263 = vdwg.mxu0
  %264 = vset.pattern.permute.xlu0 1
  %265 = vperm.xlu0 %264, %v70
  %v266 = vpop.permute.xlu0 %265
  %267 = vset.pattern.permute.xlu0 1
  %268 = vperm.xlu0 %267, %v71
  %v269 = vpop.permute.xlu0 %268
  %270 = vset.pattern.permute.xlu0 1
  %271 = vperm.xlu0 %270, %v72
  %v272 = vpop.permute.xlu0 %271
  %273 = vset.pattern.permute.xlu0 1
  %274 = vperm.xlu0 %273, %v73
  %v275 = vpop.permute.xlu0 %274
  %276 = vset.pattern.permute.xlu0 1
  %277 = vperm.xlu0 %276, %v74
  %v278 = vpop.permute.xlu0 %277
  %279 = vset.pattern.permute.xlu0 1
  %280 = vperm.xlu0 %279, %v75
  %v281 = vpop.permute.xlu0 %280
  %282 = vset.pattern.permute.xlu0 1
  %283 = vperm.xlu0 %282, %v76
  %v284 = vpop.permute.xlu0 %283
  %285 = vset.pattern.permute.xlu0 1
  %286 = vperm.xlu0 %285, %v77
  %v287 = vpop.permute.xlu0 %286
  %vm288 = vcmp.eq.s32.totalorder %v266, %v79
  %vm289 = vcmp.eq.s32.totalorder %v269, %v79
  %vm290 = vcmp.eq.s32.totalorder %v272, %v79
  %vm291 = vcmp.eq.s32.totalorder %v275, %v79
  %vm292 = vcmp.eq.s32.totalorder %v278, %v79
  %vm293 = vcmp.eq.s32.totalorder %v281, %v79
  %vm294 = vcmp.eq.s32.totalorder %v284, %v79
  %vm295 = vcmp.eq.s32.totalorder %v287, %v79
  %v296 = vsel %vm288, 1, 0
  %v297 = vsel %vm289, 1, 0
  %v298 = vsel %vm290, 1, 0
  %v299 = vsel %vm291, 1, 0
  %v300 = vsel %vm292, 1, 0
  %v301 = vsel %vm293, 1, 0
  %v302 = vsel %vm294, 1, 0
  %v303 = vsel %vm295, 1, 0
  %v304 = vcvt.s32.f32 %v296
  %v305 = vcvt.s32.f32 %v297
  %v306 = vcvt.s32.f32 %v298
  %v307 = vcvt.s32.f32 %v299
  %v308 = vcvt.s32.f32 %v300
  %v309 = vcvt.s32.f32 %v301
  %v310 = vcvt.s32.f32 %v302
  %v311 = vcvt.s32.f32 %v303
  %v312 = vld [vmem:[%s2] sm:$0x1f]
  %vm313 = vcmask 39936
  %v315 = vsel %vm313, %v304, 0
  %v318 = vsel %vm313, %v305, 0
  %v321 = vsel %vm313, %v306, 0
  %v324 = vsel %vm313, %v307, 0
  %v327 = vsel %vm313, %v308, 0
  %v330 = vsel %vm313, %v309, 0
  %v333 = vsel %vm313, %v310, 0
  %v336 = vsel %vm313, %v311, 0
  %vm338 = vcmask 1044480
  %v340 = vsel %vm338, %v312, 0
  %342 = vmatprep.subr.mxu0 0.0
  %343 = vmatpush1.msra.mxu0 0.0
  %344 = vmatprep.subr.mxu0 0.0
  %345 = vmatpush1.msra.mxu0 0.0
  %346 = vmatprep.subr.mxu0 0.0
  %347 = vmatpush1.msra.mxu0 0.0
  %348 = vmatprep.subr.mxu0 0.0
  %349 = vmatpush1.msra.mxu0 0.0
  %350 = vmatprep.subr.mxu0 0.0
  %351 = vmatpush1.msra.mxu0 0.0
  %352 = vmatprep.subr.mxu0 0.0
  %353 = vmatpush1.msra.mxu0 0.0
  %354 = vmatprep.subr.mxu0 0.0
  %355 = vmatpush1.msra.mxu0 0.0
  %356 = vmatprep.subr.mxu0 0.0
  %357 = vmatpush1.msra.mxu0 0.0
  %358 = vmatprep.subr.mxu0 0.0
  %359 = vmatpush1.msra.mxu0 0.0
  %360 = vmatprep.subr.mxu0 0.0
  %361 = vmatpush1.msra.mxu0 0.0
  %362 = vmatprep.subr.mxu0 0.0
  %363 = vmatpush1.msra.mxu0 0.0
  %364 = vmatprep.subr.mxu0 0.0
  %365 = vmatpush1.msra.mxu0 0.0
  %366 = vmatprep.subr.mxu0 0.0
  %367 = vmatpush1.msra.mxu0 0.0
  %368 = vmatprep.subr.mxu0 0.0
  %369 = vmatpush1.msra.mxu0 0.0
  %370 = vmatprep.subr.mxu0 0.0
  %371 = vmatpush1.msra.mxu0 0.0
  %372 = vmatprep.subr.mxu0 0.0
  %373 = vmatpush1.msra.mxu0 %v340
  %374 = vmatprep.subr.mxu0 0.0
  %375 = vmatpush2.msra.mxu0 0.0
  %376 = vmatprep.subr.mxu0 0.0
  %377 = vmatpush2.msra.mxu0 0.0
  %378 = vmatprep.subr.mxu0 0.0
  %379 = vmatpush2.msra.mxu0 0.0
  %380 = vmatprep.subr.mxu0 0.0
  %381 = vmatpush2.msra.mxu0 0.0
  %382 = vmatprep.subr.mxu0 0.0
  %383 = vmatpush2.msra.mxu0 0.0
  %384 = vmatprep.subr.mxu0 0.0
  %385 = vmatpush2.msra.mxu0 0.0
  %386 = vmatprep.subr.mxu0 0.0
  %387 = vmatpush2.msra.mxu0 0.0
  %388 = vmatprep.subr.mxu0 0.0
  %389 = vmatpush2.msra.mxu0 0.0
  %390 = vmatprep.subr.mxu0 0.0
  %391 = vmatpush2.msra.mxu0 0.0
  %392 = vmatprep.subr.mxu0 0.0
  %393 = vmatpush2.msra.mxu0 0.0
  %394 = vmatprep.subr.mxu0 0.0
  %395 = vmatpush2.msra.mxu0 0.0
  %396 = vmatprep.subr.mxu0 0.0
  %397 = vmatpush2.msra.mxu0 0.0
  %398 = vmatprep.subr.mxu0 0.0
  %399 = vmatpush2.msra.mxu0 0.0
  %400 = vmatprep.subr.mxu0 0.0
  %401 = vmatpush2.msra.mxu0 0.0
  %402 = vmatprep.subr.mxu0 0.0
  %403 = vmatpush2.msra.mxu0 0.0
  %404 = vmatprep.subr.mxu0 0.0
  %405 = vmatpush2.msra.mxu0 0.0
  %406 = vmatprep.mubr.f32.mxu0 0.0
  %407 = vmatmul.mubr.f32.gmra.mxu0 %v315
  %v408 = vpop.f32.mrf.mxu0
  %v409 = vadd.f32 0.0, %v408
  %v410 = vpop.f32.mrf.mxu0
  %411 = vmatprep.mubr.f32.mxu0 0.0
  %412 = vmatmul.mubr.f32.gmra.mxu0 %v318
  %v413 = vpop.f32.mrf.mxu0
  %v414 = vadd.f32 0.0, %v413
  %v415 = vpop.f32.mrf.mxu0
  %416 = vmatprep.mubr.f32.mxu0 0.0
  %417 = vmatmul.mubr.f32.gmra.mxu0 %v321
  %v418 = vpop.f32.mrf.mxu0
  %v419 = vadd.f32 0.0, %v418
  %v420 = vpop.f32.mrf.mxu0
  %421 = vmatprep.mubr.f32.mxu0 0.0
  %422 = vmatmul.mubr.f32.gmra.mxu0 %v324
  %v423 = vpop.f32.mrf.mxu0
  %v424 = vadd.f32 0.0, %v423
  %v425 = vpop.f32.mrf.mxu0
  %426 = vmatprep.mubr.f32.mxu0 0.0
  %427 = vmatmul.mubr.f32.gmra.mxu0 %v327
  %v428 = vpop.f32.mrf.mxu0
  %v429 = vadd.f32 0.0, %v428
  %v430 = vpop.f32.mrf.mxu0
  %431 = vmatprep.mubr.f32.mxu0 0.0
  %432 = vmatmul.mubr.f32.gmra.mxu0 %v330
  %v433 = vpop.f32.mrf.mxu0
  %v434 = vadd.f32 0.0, %v433
  %v435 = vpop.f32.mrf.mxu0
  %436 = vmatprep.mubr.f32.mxu0 0.0
  %437 = vmatmul.mubr.f32.gmra.mxu0 %v333
  %v438 = vpop.f32.mrf.mxu0
  %v439 = vadd.f32 0.0, %v438
  %v440 = vpop.f32.mrf.mxu0
  %441 = vmatprep.mubr.f32.mxu0 0.0
  %442 = vmatmul.mubr.f32.gmra.mxu0 %v336
  %v443 = vpop.f32.mrf.mxu0
  %v444 = vadd.f32 0.0, %v443
  %v445 = vpop.f32.mrf.mxu0
  %446 = vdwg.mxu0
  %447 = vset.pattern.permute.xlu0 2
  %448 = vperm.xlu0 %447, %v70
  %v449 = vpop.permute.xlu0 %448
  %450 = vset.pattern.permute.xlu0 2
  %451 = vperm.xlu0 %450, %v71
  %v452 = vpop.permute.xlu0 %451
  %453 = vset.pattern.permute.xlu0 2
  %454 = vperm.xlu0 %453, %v72
  %v455 = vpop.permute.xlu0 %454
  %456 = vset.pattern.permute.xlu0 2
  %457 = vperm.xlu0 %456, %v73
  %v458 = vpop.permute.xlu0 %457
  %459 = vset.pattern.permute.xlu0 2
  %460 = vperm.xlu0 %459, %v74
  %v461 = vpop.permute.xlu0 %460
  %462 = vset.pattern.permute.xlu0 2
  %463 = vperm.xlu0 %462, %v75
  %v464 = vpop.permute.xlu0 %463
  %465 = vset.pattern.permute.xlu0 2
  %466 = vperm.xlu0 %465, %v76
  %v467 = vpop.permute.xlu0 %466
  %468 = vset.pattern.permute.xlu0 2
  %469 = vperm.xlu0 %468, %v77
  %v470 = vpop.permute.xlu0 %469
  %vm471 = vcmp.eq.s32.totalorder %v449, %v79
  %vm472 = vcmp.eq.s32.totalorder %v452, %v79
  %vm473 = vcmp.eq.s32.totalorder %v455, %v79
  %vm474 = vcmp.eq.s32.totalorder %v458, %v79
  %vm475 = vcmp.eq.s32.totalorder %v461, %v79
  %vm476 = vcmp.eq.s32.totalorder %v464, %v79
  %vm477 = vcmp.eq.s32.totalorder %v467, %v79
  %vm478 = vcmp.eq.s32.totalorder %v470, %v79
  %v479 = vsel %vm471, 1, 0
  %v480 = vsel %vm472, 1, 0
  %v481 = vsel %vm473, 1, 0
  %v482 = vsel %vm474, 1, 0
  %v483 = vsel %vm475, 1, 0
  %v484 = vsel %vm476, 1, 0
  %v485 = vsel %vm477, 1, 0
  %v486 = vsel %vm478, 1, 0
  %v487 = vcvt.s32.f32 %v479
  %v488 = vcvt.s32.f32 %v480
  %v489 = vcvt.s32.f32 %v481
  %v490 = vcvt.s32.f32 %v482
  %v491 = vcvt.s32.f32 %v483
  %v492 = vcvt.s32.f32 %v484
  %v493 = vcvt.s32.f32 %v485
  %v494 = vcvt.s32.f32 %v486
  %v495 = vld [vmem:[%s3] sm:$0xff]
  %v496 = vld [vmem:[%s3 + $0x8] sm:$0x3]
  %vm497 = vcmask 80896
  %v499 = vsel %vm497, %v487, 0
  %v502 = vsel %vm497, %v488, 0
  %v505 = vsel %vm497, %v489, 0
  %v508 = vsel %vm497, %v490, 0
  %v511 = vsel %vm497, %v491, 0
  %v514 = vsel %vm497, %v492, 0
  %v517 = vsel %vm497, %v493, 0
  %v520 = vsel %vm497, %v494, 0
  %vm522 = vcmask 1041408
  %v524 = vsel %vm522, %v496, 0
  %526 = vmatprep.subr.mxu0 0.0
  %527 = vmatpush1.msra.mxu0 0.0
  %528 = vmatprep.subr.mxu0 0.0
  %529 = vmatpush1.msra.mxu0 0.0
  %530 = vmatprep.subr.mxu0 0.0
  %531 = vmatpush1.msra.mxu0 0.0
  %532 = vmatprep.subr.mxu0 0.0
  %533 = vmatpush1.msra.mxu0 0.0
  %534 = vmatprep.subr.mxu0 0.0
  %535 = vmatpush1.msra.mxu0 0.0
  %536 = vmatprep.subr.mxu0 0.0
  %537 = vmatpush1.msra.mxu0 0.0
  %538 = vmatprep.subr.mxu0 0.0
  %539 = vmatpush1.msra.mxu0 0.0
  %540 = vmatprep.subr.mxu0 0.0
  %541 = vmatpush1.msra.mxu0 0.0
  %542 = vmatprep.subr.mxu0 0.0
  %543 = vmatpush1.msra.mxu0 0.0
  %544 = vmatprep.subr.mxu0 0.0
  %545 = vmatpush1.msra.mxu0 0.0
  %546 = vmatprep.subr.mxu0 0.0
  %547 = vmatpush1.msra.mxu0 0.0
  %548 = vmatprep.subr.mxu0 0.0
  %549 = vmatpush1.msra.mxu0 0.0
  %550 = vmatprep.subr.mxu0 0.0
  %551 = vmatpush1.msra.mxu0 0.0
  %552 = vmatprep.subr.mxu0 0.0
  %553 = vmatpush1.msra.mxu0 0.0
  %554 = vmatprep.subr.mxu0 0.0
  %555 = vmatpush1.msra.mxu0 %v524
  %556 = vmatprep.subr.mxu0 0.0
  %557 = vmatpush1.msra.mxu0 %v495
  %558 = vmatprep.subr.mxu0 0.0
  %559 = vmatpush2.msra.mxu0 0.0
  %560 = vmatprep.subr.mxu0 0.0
  %561 = vmatpush2.msra.mxu0 0.0
  %562 = vmatprep.subr.mxu0 0.0
  %563 = vmatpush2.msra.mxu0 0.0
  %564 = vmatprep.subr.mxu0 0.0
  %565 = vmatpush2.msra.mxu0 0.0
  %566 = vmatprep.subr.mxu0 0.0
  %567 = vmatpush2.msra.mxu0 0.0
  %568 = vmatprep.subr.mxu0 0.0
  %569 = vmatpush2.msra.mxu0 0.0
  %570 = vmatprep.subr.mxu0 0.0
  %571 = vmatpush2.msra.mxu0 0.0
  %572 = vmatprep.subr.mxu0 0.0
  %573 = vmatpush2.msra.mxu0 0.0
  %574 = vmatprep.subr.mxu0 0.0
  %575 = vmatpush2.msra.mxu0 0.0
  %576 = vmatprep.subr.mxu0 0.0
  %577 = vmatpush2.msra.mxu0 0.0
  %578 = vmatprep.subr.mxu0 0.0
  %579 = vmatpush2.msra.mxu0 0.0
  %580 = vmatprep.subr.mxu0 0.0
  %581 = vmatpush2.msra.mxu0 0.0
  %582 = vmatprep.subr.mxu0 0.0
  %583 = vmatpush2.msra.mxu0 0.0
  %584 = vmatprep.subr.mxu0 0.0
  %585 = vmatpush2.msra.mxu0 0.0
  %586 = vmatprep.subr.mxu0 0.0
  %587 = vmatpush2.msra.mxu0 0.0
  %588 = vmatprep.subr.mxu0 0.0
  %589 = vmatpush2.msra.mxu0 0.0
  %590 = vmatprep.mubr.f32.mxu0 0.0
  %591 = vmatmul.mubr.f32.gmra.mxu0 %v499
  %v592 = vpop.f32.mrf.mxu0
  %v593 = vadd.f32 0.0, %v592
  %v594 = vpop.f32.mrf.mxu0
  %595 = vmatprep.mubr.f32.mxu0 0.0
  %596 = vmatmul.mubr.f32.gmra.mxu0 %v502
  %v597 = vpop.f32.mrf.mxu0
  %v598 = vadd.f32 0.0, %v597
  %v599 = vpop.f32.mrf.mxu0
  %600 = vmatprep.mubr.f32.mxu0 0.0
  %601 = vmatmul.mubr.f32.gmra.mxu0 %v505
  %v602 = vpop.f32.mrf.mxu0
  %v603 = vadd.f32 0.0, %v602
  %v604 = vpop.f32.mrf.mxu0
  %605 = vmatprep.mubr.f32.mxu0 0.0
  %606 = vmatmul.mubr.f32.gmra.mxu0 %v508
  %v607 = vpop.f32.mrf.mxu0
  %v608 = vadd.f32 0.0, %v607
  %v609 = vpop.f32.mrf.mxu0
  %610 = vmatprep.mubr.f32.mxu0 0.0
  %611 = vmatmul.mubr.f32.gmra.mxu0 %v511
  %v612 = vpop.f32.mrf.mxu0
  %v613 = vadd.f32 0.0, %v612
  %v614 = vpop.f32.mrf.mxu0
  %615 = vmatprep.mubr.f32.mxu0 0.0
  %616 = vmatmul.mubr.f32.gmra.mxu0 %v514
  %v617 = vpop.f32.mrf.mxu0
  %v618 = vadd.f32 0.0, %v617
  %v619 = vpop.f32.mrf.mxu0
  %620 = vmatprep.mubr.f32.mxu0 0.0
  %621 = vmatmul.mubr.f32.gmra.mxu0 %v517
  %v622 = vpop.f32.mrf.mxu0
  %v623 = vadd.f32 0.0, %v622
  %v624 = vpop.f32.mrf.mxu0
  %625 = vmatprep.mubr.f32.mxu0 0.0
  %626 = vmatmul.mubr.f32.gmra.mxu0 %v520
  %v627 = vpop.f32.mrf.mxu0
  %v628 = vadd.f32 0.0, %v627
  %v629 = vpop.f32.mrf.mxu0
  %630 = vdwg.mxu0
  %639 = vrot.lane.b32.xlu0 %v409, 8
  %v640 = vpop.permute.xlu0 %639
  %641 = vrot.lane.b32.xlu0 %v414, 8
  %v642 = vpop.permute.xlu0 %641
  %643 = vrot.lane.b32.xlu0 %v419, 8
  %v644 = vpop.permute.xlu0 %643
  %645 = vrot.lane.b32.xlu0 %v424, 8
  %v646 = vpop.permute.xlu0 %645
  %647 = vrot.lane.b32.xlu0 %v429, 8
  %v648 = vpop.permute.xlu0 %647
  %649 = vrot.lane.b32.xlu0 %v434, 8
  %v650 = vpop.permute.xlu0 %649
  %651 = vrot.lane.b32.xlu0 %v439, 8
  %v652 = vpop.permute.xlu0 %651
  %653 = vrot.lane.b32.xlu0 %v444, 8
  %v654 = vpop.permute.xlu0 %653
  %671 = vrot.lane.b32.xlu0 %v593, 11
  %v672 = vpop.permute.xlu0 %671
  %673 = vrot.lane.b32.xlu0 %v598, 11
  %v674 = vpop.permute.xlu0 %673
  %675 = vrot.lane.b32.xlu0 %v603, 11
  %v676 = vpop.permute.xlu0 %675
  %677 = vrot.lane.b32.xlu0 %v608, 11
  %v678 = vpop.permute.xlu0 %677
  %679 = vrot.lane.b32.xlu0 %v613, 11
  %v680 = vpop.permute.xlu0 %679
  %681 = vrot.lane.b32.xlu0 %v618, 11
  %v682 = vpop.permute.xlu0 %681
  %683 = vrot.lane.b32.xlu0 %v623, 11
  %v684 = vpop.permute.xlu0 %683
  %685 = vrot.lane.b32.xlu0 %v628, 11
  %v686 = vpop.permute.xlu0 %685
  %703 = vrot.lane.b32.xlu0 %v62, 14
  %v704 = vpop.permute.xlu0 %703
  %705 = vrot.lane.b32.xlu0 %v63, 14
  %v706 = vpop.permute.xlu0 %705
  %707 = vrot.lane.b32.xlu0 %v64, 14
  %v708 = vpop.permute.xlu0 %707
  %709 = vrot.lane.b32.xlu0 %v65, 14
  %v710 = vpop.permute.xlu0 %709
  %711 = vrot.lane.b32.xlu0 %v66, 14
  %v712 = vpop.permute.xlu0 %711
  %713 = vrot.lane.b32.xlu0 %v67, 14
  %v714 = vpop.permute.xlu0 %713
  %715 = vrot.lane.b32.xlu0 %v68, 14
  %v716 = vpop.permute.xlu0 %715
  %717 = vrot.lane.b32.xlu0 %v69, 14
  %v718 = vpop.permute.xlu0 %717
  %vm727 = vcmask 64512
  %v728 = vsel %vm727, %v226, %v640
  %v729 = vsel %vm727, %v231, %v642
  %v730 = vsel %vm727, %v236, %v644
  %v731 = vsel %vm727, %v241, %v646
  %v732 = vsel %vm727, %v246, %v648
  %v733 = vsel %vm727, %v251, %v650
  %v734 = vsel %vm727, %v256, %v652
  %v735 = vsel %vm727, %v261, %v654
  %vm736 = vcmask 89088
  %v737 = vsel %vm736, %v728, %v672
  %v738 = vsel %vm736, %v729, %v674
  %v739 = vsel %vm736, %v730, %v676
  %v740 = vsel %vm736, %v731, %v678
  %v741 = vsel %vm736, %v732, %v680
  %v742 = vsel %vm736, %v733, %v682
  %v743 = vsel %vm736, %v734, %v684
  %v744 = vsel %vm736, %v735, %v686
  %vm745 = vcmask 138240
  %v746 = vsel %vm745, %v737, %v704
  %v747 = vsel %vm745, %v738, %v706
  %v748 = vsel %vm745, %v739, %v708
  %v749 = vsel %vm745, %v740, %v710
  %v750 = vsel %vm745, %v741, %v712
  %v751 = vsel %vm745, %v742, %v714
  %v752 = vsel %vm745, %v743, %v716
  %v753 = vsel %vm745, %v744, %v718
  %v754 = vld [vmem:[%s4] sm:$0xff]
  %v755 = vld [vmem:[%s4 + $0x8] sm:$0xff]
  %v756 = vld [vmem:[%s4 + $0x10] sm:$0xf]
  %vm757 = vcmask 162816
  %v759 = vsel %vm757, %v746, 0
  %v762 = vsel %vm757, %v747, 0
  %v765 = vsel %vm757, %v748, 0
  %v768 = vsel %vm757, %v749, 0
  %v771 = vsel %vm757, %v750, 0
  %v774 = vsel %vm757, %v751, 0
  %v777 = vsel %vm757, %v752, 0
  %v780 = vsel %vm757, %v753, 0
  %vm782 = vcmask 1043456
  %v784 = vsel %vm782, %v756, 0
  %786 = vmatprep.subr.mxu0 0.0
  %787 = vmatpush1.msra.mxu0 0.0
  %788 = vmatprep.subr.mxu0 0.0
  %789 = vmatpush1.msra.mxu0 0.0
  %790 = vmatprep.subr.mxu0 0.0
  %791 = vmatpush1.msra.mxu0 0.0
  %792 = vmatprep.subr.mxu0 0.0
  %793 = vmatpush1.msra.mxu0 0.0
  %794 = vmatprep.subr.mxu0 0.0
  %795 = vmatpush1.msra.mxu0 0.0
  %796 = vmatprep.subr.mxu0 0.0
  %797 = vmatpush1.msra.mxu0 0.0
  %798 = vmatprep.subr.mxu0 0.0
  %799 = vmatpush1.msra.mxu0 0.0
  %800 = vmatprep.subr.mxu0 0.0
  %801 = vmatpush1.msra.mxu0 0.0
  %802 = vmatprep.subr.mxu0 0.0
  %803 = vmatpush1.msra.mxu0 0.0
  %804 = vmatprep.subr.mxu0 0.0
  %805 = vmatpush1.msra.mxu0 0.0
  %806 = vmatprep.subr.mxu0 0.0
  %807 = vmatpush1.msra.mxu0 0.0
  %808 = vmatprep.subr.mxu0 0.0
  %809 = vmatpush1.msra.mxu0 0.0
  %810 = vmatprep.subr.mxu0 0.0
  %811 = vmatpush1.msra.mxu0 0.0
  %812 = vmatprep.subr.mxu0 0.0
  %813 = vmatpush1.msra.mxu0 %v784
  %814 = vmatprep.subr.mxu0 0.0
  %815 = vmatpush1.msra.mxu0 %v755
  %816 = vmatprep.subr.mxu0 0.0
  %817 = vmatpush1.msra.mxu0 %v754
  %818 = vmatprep.subr.mxu0 0.0
  %819 = vmatpush2.msra.mxu0 0.0
  %820 = vmatprep.subr.mxu0 0.0
  %821 = vmatpush2.msra.mxu0 0.0
  %822 = vmatprep.subr.mxu0 0.0
  %823 = vmatpush2.msra.mxu0 0.0
  %824 = vmatprep.subr.mxu0 0.0
  %825 = vmatpush2.msra.mxu0 0.0
  %826 = vmatprep.subr.mxu0 0.0
  %827 = vmatpush2.msra.mxu0 0.0
  %828 = vmatprep.subr.mxu0 0.0
  %829 = vmatpush2.msra.mxu0 0.0
  %830 = vmatprep.subr.mxu0 0.0
  %831 = vmatpush2.msra.mxu0 0.0
  %832 = vmatprep.subr.mxu0 0.0
  %833 = vmatpush2.msra.mxu0 0.0
  %834 = vmatprep.subr.mxu0 0.0
  %835 = vmatpush2.msra.mxu0 0.0
  %836 = vmatprep.subr.mxu0 0.0
  %837 = vmatpush2.msra.mxu0 0.0
  %838 = vmatprep.subr.mxu0 0.0
  %839 = vmatpush2.msra.mxu0 0.0
  %840 = vmatprep.subr.mxu0 0.0
  %841 = vmatpush2.msra.mxu0 0.0
  %842 = vmatprep.subr.mxu0 0.0
  %843 = vmatpush2.msra.mxu0 0.0
  %844 = vmatprep.subr.mxu0 0.0
  %845 = vmatpush2.msra.mxu0 0.0
  %846 = vmatprep.subr.mxu0 0.0
  %847 = vmatpush2.msra.mxu0 0.0
  %848 = vmatprep.subr.mxu0 0.0
  %849 = vmatpush2.msra.mxu0 0.0
  %850 = vmatprep.mubr.f32.mxu0 0.0
  %851 = vmatmul.mubr.f32.gmra.mxu0 %v759
  %v852 = vpop.f32.mrf.mxu0
  %v853 = vadd.f32 0.0, %v852
  %v854 = vpop.f32.mrf.mxu0
  %855 = vmatprep.mubr.f32.mxu0 0.0
  %856 = vmatmul.mubr.f32.gmra.mxu0 %v762
  %v857 = vpop.f32.mrf.mxu0
  %v858 = vadd.f32 0.0, %v857
  %v859 = vpop.f32.mrf.mxu0
  %860 = vmatprep.mubr.f32.mxu0 0.0
  %861 = vmatmul.mubr.f32.gmra.mxu0 %v765
  %v862 = vpop.f32.mrf.mxu0
  %v863 = vadd.f32 0.0, %v862
  %v864 = vpop.f32.mrf.mxu0
  %865 = vmatprep.mubr.f32.mxu0 0.0
  %866 = vmatmul.mubr.f32.gmra.mxu0 %v768
  %v867 = vpop.f32.mrf.mxu0
  %v868 = vadd.f32 0.0, %v867
  %v869 = vpop.f32.mrf.mxu0
  %870 = vmatprep.mubr.f32.mxu0 0.0
  %871 = vmatmul.mubr.f32.gmra.mxu0 %v771
  %v872 = vpop.f32.mrf.mxu0
  %v873 = vadd.f32 0.0, %v872
  %v874 = vpop.f32.mrf.mxu0
  %875 = vmatprep.mubr.f32.mxu0 0.0
  %876 = vmatmul.mubr.f32.gmra.mxu0 %v774
  %v877 = vpop.f32.mrf.mxu0
  %v878 = vadd.f32 0.0, %v877
  %v879 = vpop.f32.mrf.mxu0
  %880 = vmatprep.mubr.f32.mxu0 0.0
  %881 = vmatmul.mubr.f32.gmra.mxu0 %v777
  %v882 = vpop.f32.mrf.mxu0
  %v883 = vadd.f32 0.0, %v882
  %v884 = vpop.f32.mrf.mxu0
  %885 = vmatprep.mubr.f32.mxu0 0.0
  %886 = vmatmul.mubr.f32.gmra.mxu0 %v780
  %v887 = vpop.f32.mrf.mxu0
  %v888 = vadd.f32 0.0, %v887
  %v889 = vpop.f32.mrf.mxu0
  %890 = vdwg.mxu0
  %v891 = vld [vmem:[%s5] sm:$0xff]
  %v892 = vld [vmem:[%s5 + $0x8] sm:$0xff]
  %v893 = vld [vmem:[%s5 + $0x10] sm:$0xff]
  %v894 = vld [vmem:[%s5 + $0x18] sm:$0xff]
  %v895 = vld [vmem:[%s5 + $0x20] sm:$0xff]
  %v896 = vld [vmem:[%s5 + $0x28] sm:$0xff]
  %v897 = vld [vmem:[%s5 + $0x30] sm:$0xff]
  %v898 = vld [vmem:[%s5 + $0x38] sm:$0xff]
  %v899 = vld [vmem:[%s5 + $0x40] sm:$0xff]
  %v900 = vld [vmem:[%s5 + $0x48] sm:$0xff]
  %v901 = vld [vmem:[%s5 + $0x50] sm:$0xff]
  %v902 = vld [vmem:[%s5 + $0x58] sm:$0xff]
  %v903 = vld [vmem:[%s5 + $0x60] sm:$0xff]
  %v904 = vld [vmem:[%s5 + $0x68] sm:$0xff]
  %v905 = vld [vmem:[%s5 + $0x70] sm:$0xff]
  %v906 = vld [vmem:[%s5 + $0x78] sm:$0xff]
  %v907 = vld [vmem:[%s5 + $0x80] sm:$0xff]
  %v908 = vld [vmem:[%s5 + $0x88] sm:$0xff]
  %v909 = vld [vmem:[%s5 + $0x90] sm:$0xff]
  %v910 = vld [vmem:[%s5 + $0x98] sm:$0xff]
  %v911 = vld [vmem:[%s5 + $0xa0] sm:$0xff]
  %v912 = vld [vmem:[%s5 + $0xa8] sm:$0xff]
  %v913 = vld [vmem:[%s5 + $0xb0] sm:$0xff]
  %v914 = vld [vmem:[%s5 + $0xb8] sm:$0xff]
  %v915 = vld [vmem:[%s5 + $0xc0] sm:$0xff]
  %v916 = vld [vmem:[%s5 + $0xc8] sm:$0xff]
  %v917 = vld [vmem:[%s5 + $0xd0] sm:$0xff]
  %v918 = vld [vmem:[%s5 + $0xd8] sm:$0xff]
  %v919 = vld [vmem:[%s5 + $0xe0] sm:$0xff]
  %v920 = vld [vmem:[%s5 + $0xe8] sm:$0xff]
  %v921 = vld [vmem:[%s5 + $0xf0] sm:$0xff]
  %v922 = vld [vmem:[%s5 + $0xf8] sm:$0xff]
  %v923 = vld [vmem:[%s5 + $0x100] sm:$0xff]
  %v924 = vld [vmem:[%s5 + $0x108] sm:$0xff]
  %v925 = vld [vmem:[%s5 + $0x110] sm:$0xff]
  %v926 = vld [vmem:[%s5 + $0x118] sm:$0xff]
  %v927 = vld [vmem:[%s5 + $0x120] sm:$0xff]
  %v928 = vld [vmem:[%s5 + $0x128] sm:$0xff]
  %v929 = vld [vmem:[%s5 + $0x130] sm:$0xff]
  %v930 = vld [vmem:[%s5 + $0x138] sm:$0xff]
  %v931 = vld [vmem:[%s5 + $0x140] sm:$0xff]
  %v932 = vld [vmem:[%s5 + $0x148] sm:$0xff]
  %v933 = vld [vmem:[%s5 + $0x150] sm:$0xff]
  %v934 = vld [vmem:[%s5 + $0x158] sm:$0xff]
  %v935 = vld [vmem:[%s5 + $0x160] sm:$0xff]
  %v936 = vld [vmem:[%s5 + $0x168] sm:$0xff]
  %v937 = vld [vmem:[%s5 + $0x170] sm:$0xff]
  %v938 = vld [vmem:[%s5 + $0x178] sm:$0xff]
  %947 = vrot.lane.b32.xlu0 %v853, 127
  %v948 = vpop.permute.xlu0 %947
  %949 = vrot.lane.b32.xlu0 %v858, 127
  %v950 = vpop.permute.xlu0 %949
  %951 = vrot.lane.b32.xlu0 %v863, 127
  %v952 = vpop.permute.xlu0 %951
  %953 = vrot.lane.b32.xlu0 %v868, 127
  %v954 = vpop.permute.xlu0 %953
  %955 = vrot.lane.b32.xlu0 %v873, 127
  %v956 = vpop.permute.xlu0 %955
  %957 = vrot.lane.b32.xlu0 %v878, 127
  %v958 = vpop.permute.xlu0 %957
  %959 = vrot.lane.b32.xlu0 %v883, 127
  %v960 = vpop.permute.xlu0 %959
  %961 = vrot.lane.b32.xlu0 %v888, 127
  %v962 = vpop.permute.xlu0 %961
  %963 = vrot.lane.b32.xlu0 %v853, 126
  %v964 = vpop.permute.xlu0 %963
  %965 = vrot.lane.b32.xlu0 %v858, 126
  %v966 = vpop.permute.xlu0 %965
  %967 = vrot.lane.b32.xlu0 %v863, 126
  %v968 = vpop.permute.xlu0 %967
  %969 = vrot.lane.b32.xlu0 %v868, 126
  %v970 = vpop.permute.xlu0 %969
  %971 = vrot.lane.b32.xlu0 %v873, 126
  %v972 = vpop.permute.xlu0 %971
  %973 = vrot.lane.b32.xlu0 %v878, 126
  %v974 = vpop.permute.xlu0 %973
  %975 = vrot.lane.b32.xlu0 %v883, 126
  %v976 = vpop.permute.xlu0 %975
  %977 = vrot.lane.b32.xlu0 %v888, 126
  %v978 = vpop.permute.xlu0 %977
  %979 = vrot.lane.b32.xlu0 %v853, 125
  %v980 = vpop.permute.xlu0 %979
  %981 = vrot.lane.b32.xlu0 %v858, 125
  %v982 = vpop.permute.xlu0 %981
  %983 = vrot.lane.b32.xlu0 %v863, 125
  %v984 = vpop.permute.xlu0 %983
  %985 = vrot.lane.b32.xlu0 %v868, 125
  %v986 = vpop.permute.xlu0 %985
  %987 = vrot.lane.b32.xlu0 %v873, 125
  %v988 = vpop.permute.xlu0 %987
  %989 = vrot.lane.b32.xlu0 %v878, 125
  %v990 = vpop.permute.xlu0 %989
  %991 = vrot.lane.b32.xlu0 %v883, 125
  %v992 = vpop.permute.xlu0 %991
  %993 = vrot.lane.b32.xlu0 %v888, 125
  %v994 = vpop.permute.xlu0 %993
  %995 = vrot.lane.b32.xlu0 %v853, 124
  %v996 = vpop.permute.xlu0 %995
  %997 = vrot.lane.b32.xlu0 %v858, 124
  %v998 = vpop.permute.xlu0 %997
  %999 = vrot.lane.b32.xlu0 %v863, 124
  %v1000 = vpop.permute.xlu0 %999
  %1001 = vrot.lane.b32.xlu0 %v868, 124
  %v1002 = vpop.permute.xlu0 %1001
  %1003 = vrot.lane.b32.xlu0 %v873, 124
  %v1004 = vpop.permute.xlu0 %1003
  %1005 = vrot.lane.b32.xlu0 %v878, 124
  %v1006 = vpop.permute.xlu0 %1005
  %1007 = vrot.lane.b32.xlu0 %v883, 124
  %v1008 = vpop.permute.xlu0 %1007
  %1009 = vrot.lane.b32.xlu0 %v888, 124
  %v1010 = vpop.permute.xlu0 %1009
  %1011 = vrot.lane.b32.xlu0 %v853, 123
  %v1012 = vpop.permute.xlu0 %1011
  %1013 = vrot.lane.b32.xlu0 %v858, 123
  %v1014 = vpop.permute.xlu0 %1013
  %1015 = vrot.lane.b32.xlu0 %v863, 123
  %v1016 = vpop.permute.xlu0 %1015
  %1017 = vrot.lane.b32.xlu0 %v868, 123
  %v1018 = vpop.permute.xlu0 %1017
  %1019 = vrot.lane.b32.xlu0 %v873, 123
  %v1020 = vpop.permute.xlu0 %1019
  %1021 = vrot.lane.b32.xlu0 %v878, 123
  %v1022 = vpop.permute.xlu0 %1021
  %1023 = vrot.lane.b32.xlu0 %v883, 123
  %v1024 = vpop.permute.xlu0 %1023
  %1025 = vrot.lane.b32.xlu0 %v888, 123
  %v1026 = vpop.permute.xlu0 %1025
  %1027 = vset.pattern.permute.xlu0 96
  %1028 = vperm.xlu0 %1027, %v853
  %v1029 = vpop.permute.xlu0 %1028
  %1031 = vset.pattern.permute.xlu0 96
  %1032 = vperm.xlu0 %1031, %v858
  %v1033 = vpop.permute.xlu0 %1032
  %1035 = vset.pattern.permute.xlu0 96
  %1036 = vperm.xlu0 %1035, %v863
  %v1037 = vpop.permute.xlu0 %1036
  %1039 = vset.pattern.permute.xlu0 96
  %1040 = vperm.xlu0 %1039, %v868
  %v1041 = vpop.permute.xlu0 %1040
  %1043 = vset.pattern.permute.xlu0 96
  %1044 = vperm.xlu0 %1043, %v873
  %v1045 = vpop.permute.xlu0 %1044
  %1047 = vset.pattern.permute.xlu0 96
  %1048 = vperm.xlu0 %1047, %v878
  %v1049 = vpop.permute.xlu0 %1048
  %1051 = vset.pattern.permute.xlu0 96
  %1052 = vperm.xlu0 %1051, %v883
  %v1053 = vpop.permute.xlu0 %1052
  %1055 = vset.pattern.permute.xlu0 96
  %1056 = vperm.xlu0 %1055, %v888
  %v1057 = vpop.permute.xlu0 %1056
  %1059 = vset.pattern.permute.xlu0 96
  %1060 = vperm.xlu0 %1059, %v948
  %v1061 = vpop.permute.xlu0 %1060
  %1063 = vset.pattern.permute.xlu0 96
  %1064 = vperm.xlu0 %1063, %v950
  %v1065 = vpop.permute.xlu0 %1064
  %1067 = vset.pattern.permute.xlu0 96
  %1068 = vperm.xlu0 %1067, %v952
  %v1069 = vpop.permute.xlu0 %1068
  %1071 = vset.pattern.permute.xlu0 96
  %1072 = vperm.xlu0 %1071, %v954
  %v1073 = vpop.permute.xlu0 %1072
  %1075 = vset.pattern.permute.xlu0 96
  %1076 = vperm.xlu0 %1075, %v956
  %v1077 = vpop.permute.xlu0 %1076
  %1079 = vset.pattern.permute.xlu0 96
  %1080 = vperm.xlu0 %1079, %v958
  %v1081 = vpop.permute.xlu0 %1080
  %1083 = vset.pattern.permute.xlu0 96
  %1084 = vperm.xlu0 %1083, %v960
  %v1085 = vpop.permute.xlu0 %1084
  %1087 = vset.pattern.permute.xlu0 96
  %1088 = vperm.xlu0 %1087, %v962
  %v1089 = vpop.permute.xlu0 %1088
  %1091 = vset.pattern.permute.xlu0 96
  %1092 = vperm.xlu0 %1091, %v964
  %v1093 = vpop.permute.xlu0 %1092
  %1095 = vset.pattern.permute.xlu0 96
  %1096 = vperm.xlu0 %1095, %v966
  %v1097 = vpop.permute.xlu0 %1096
  %1099 = vset.pattern.permute.xlu0 96
  %1100 = vperm.xlu0 %1099, %v968
  %v1101 = vpop.permute.xlu0 %1100
  %1103 = vset.pattern.permute.xlu0 96
  %1104 = vperm.xlu0 %1103, %v970
  %v1105 = vpop.permute.xlu0 %1104
  %1107 = vset.pattern.permute.xlu0 96
  %1108 = vperm.xlu0 %1107, %v972
  %v1109 = vpop.permute.xlu0 %1108
  %1111 = vset.pattern.permute.xlu0 96
  %1112 = vperm.xlu0 %1111, %v974
  %v1113 = vpop.permute.xlu0 %1112
  %1115 = vset.pattern.permute.xlu0 96
  %1116 = vperm.xlu0 %1115, %v976
  %v1117 = vpop.permute.xlu0 %1116
  %1119 = vset.pattern.permute.xlu0 96
  %1120 = vperm.xlu0 %1119, %v978
  %v1121 = vpop.permute.xlu0 %1120
  %1123 = vset.pattern.permute.xlu0 96
  %1124 = vperm.xlu0 %1123, %v980
  %v1125 = vpop.permute.xlu0 %1124
  %1127 = vset.pattern.permute.xlu0 96
  %1128 = vperm.xlu0 %1127, %v982
  %v1129 = vpop.permute.xlu0 %1128
  %1131 = vset.pattern.permute.xlu0 96
  %1132 = vperm.xlu0 %1131, %v984
  %v1133 = vpop.permute.xlu0 %1132
  %1135 = vset.pattern.permute.xlu0 96
  %1136 = vperm.xlu0 %1135, %v986
  %v1137 = vpop.permute.xlu0 %1136
  %1139 = vset.pattern.permute.xlu0 96
  %1140 = vperm.xlu0 %1139, %v988
  %v1141 = vpop.permute.xlu0 %1140
  %1143 = vset.pattern.permute.xlu0 96
  %1144 = vperm.xlu0 %1143, %v990
  %v1145 = vpop.permute.xlu0 %1144
  %1147 = vset.pattern.permute.xlu0 96
  %1148 = vperm.xlu0 %1147, %v992
  %v1149 = vpop.permute.xlu0 %1148
  %1151 = vset.pattern.permute.xlu0 96
  %1152 = vperm.xlu0 %1151, %v994
  %v1153 = vpop.permute.xlu0 %1152
  %1155 = vset.pattern.permute.xlu0 96
  %1156 = vperm.xlu0 %1155, %v996
  %v1157 = vpop.permute.xlu0 %1156
  %1159 = vset.pattern.permute.xlu0 96
  %1160 = vperm.xlu0 %1159, %v998
  %v1161 = vpop.permute.xlu0 %1160
  %1163 = vset.pattern.permute.xlu0 96
  %1164 = vperm.xlu0 %1163, %v1000
  %v1165 = vpop.permute.xlu0 %1164
  %1167 = vset.pattern.permute.xlu0 96
  %1168 = vperm.xlu0 %1167, %v1002
  %v1169 = vpop.permute.xlu0 %1168
  %1171 = vset.pattern.permute.xlu0 96
  %1172 = vperm.xlu0 %1171, %v1004
  %v1173 = vpop.permute.xlu0 %1172
  %1175 = vset.pattern.permute.xlu0 96
  %1176 = vperm.xlu0 %1175, %v1006
  %v1177 = vpop.permute.xlu0 %1176
  %1179 = vset.pattern.permute.xlu0 96
  %1180 = vperm.xlu0 %1179, %v1008
  %v1181 = vpop.permute.xlu0 %1180
  %1183 = vset.pattern.permute.xlu0 96
  %1184 = vperm.xlu0 %1183, %v1010
  %v1185 = vpop.permute.xlu0 %1184
  %1187 = vset.pattern.permute.xlu0 96
  %1188 = vperm.xlu0 %1187, %v1012
  %v1189 = vpop.permute.xlu0 %1188
  %1191 = vset.pattern.permute.xlu0 96
  %1192 = vperm.xlu0 %1191, %v1014
  %v1193 = vpop.permute.xlu0 %1192
  %1195 = vset.pattern.permute.xlu0 96
  %1196 = vperm.xlu0 %1195, %v1016
  %v1197 = vpop.permute.xlu0 %1196
  %1199 = vset.pattern.permute.xlu0 96
  %1200 = vperm.xlu0 %1199, %v1018
  %v1201 = vpop.permute.xlu0 %1200
  %1203 = vset.pattern.permute.xlu0 96
  %1204 = vperm.xlu0 %1203, %v1020
  %v1205 = vpop.permute.xlu0 %1204
  %1207 = vset.pattern.permute.xlu0 96
  %1208 = vperm.xlu0 %1207, %v1022
  %v1209 = vpop.permute.xlu0 %1208
  %1211 = vset.pattern.permute.xlu0 96
  %1212 = vperm.xlu0 %1211, %v1024
  %v1213 = vpop.permute.xlu0 %1212
  %1215 = vset.pattern.permute.xlu0 96
  %1216 = vperm.xlu0 %1215, %v1026
  %v1217 = vpop.permute.xlu0 %1216
  %v1220 = vsel %vm757, %v891, 0
  %v1223 = vsel %vm757, %v892, 0
  %v1226 = vsel %vm757, %v893, 0
  %v1229 = vsel %vm757, %v894, 0
  %v1232 = vsel %vm757, %v895, 0
  %v1235 = vsel %vm757, %v896, 0
  %v1238 = vsel %vm757, %v897, 0
  %v1241 = vsel %vm757, %v898, 0
  %v1244 = vsel %vm757, %v899, 0
  %v1247 = vsel %vm757, %v900, 0
  %v1250 = vsel %vm757, %v901, 0
  %v1253 = vsel %vm757, %v902, 0
  %v1256 = vsel %vm757, %v903, 0
  %v1259 = vsel %vm757, %v904, 0
  %v1262 = vsel %vm757, %v905, 0
  %v1265 = vsel %vm757, %v906, 0
  %v1268 = vsel %vm757, %v907, 0
  %v1271 = vsel %vm757, %v908, 0
  %v1274 = vsel %vm757, %v909, 0
  %v1277 = vsel %vm757, %v910, 0
  %v1280 = vsel %vm757, %v911, 0
  %v1283 = vsel %vm757, %v912, 0
  %v1286 = vsel %vm757, %v913, 0
  %v1289 = vsel %vm757, %v914, 0
  %v1292 = vsel %vm757, %v915, 0
  %v1295 = vsel %vm757, %v916, 0
  %v1298 = vsel %vm757, %v917, 0
  %v1301 = vsel %vm757, %v918, 0
  %v1304 = vsel %vm757, %v919, 0
  %v1307 = vsel %vm757, %v920, 0
  %v1310 = vsel %vm757, %v921, 0
  %v1313 = vsel %vm757, %v922, 0
  %v1316 = vsel %vm757, %v923, 0
  %v1319 = vsel %vm757, %v924, 0
  %v1322 = vsel %vm757, %v925, 0
  %v1325 = vsel %vm757, %v926, 0
  %v1328 = vsel %vm757, %v927, 0
  %v1331 = vsel %vm757, %v928, 0
  %v1334 = vsel %vm757, %v929, 0
  %v1337 = vsel %vm757, %v930, 0
  %v1340 = vsel %vm757, %v931, 0
  %v1343 = vsel %vm757, %v932, 0
  %v1346 = vsel %vm757, %v933, 0
  %v1349 = vsel %vm757, %v934, 0
  %v1352 = vsel %vm757, %v935, 0
  %v1355 = vsel %vm757, %v936, 0
  %v1358 = vsel %vm757, %v937, 0
  %v1361 = vsel %vm757, %v938, 0
  %1363 = vmatprep.subr.mxu0 0.0
  %1364 = vmatpush1.xpose.msra.mxu0 0.0
  %1365 = vmatprep.subr.mxu0 0.0
  %1366 = vmatpush1.xpose.msra.mxu0 0.0
  %1367 = vmatprep.subr.mxu0 0.0
  %1368 = vmatpush1.xpose.msra.mxu0 0.0
  %1369 = vmatprep.subr.mxu0 0.0
  %1370 = vmatpush1.xpose.msra.mxu0 0.0
  %1371 = vmatprep.subr.mxu0 0.0
  %1372 = vmatpush1.xpose.msra.mxu0 0.0
  %1373 = vmatprep.subr.mxu0 0.0
  %1374 = vmatpush1.xpose.msra.mxu0 0.0
  %1375 = vmatprep.subr.mxu0 0.0
  %1376 = vmatpush1.xpose.msra.mxu0 0.0
  %1377 = vmatprep.subr.mxu0 0.0
  %1378 = vmatpush1.xpose.msra.mxu0 0.0
  %1379 = vmatprep.subr.mxu0 0.0
  %1380 = vmatpush1.xpose.msra.mxu0 %v780
  %1381 = vmatprep.subr.mxu0 0.0
  %1382 = vmatpush1.xpose.msra.mxu0 %v777
  %1383 = vmatprep.subr.mxu0 0.0
  %1384 = vmatpush1.xpose.msra.mxu0 %v774
  %1385 = vmatprep.subr.mxu0 0.0
  %1386 = vmatpush1.xpose.msra.mxu0 %v771
  %1387 = vmatprep.subr.mxu0 0.0
  %1388 = vmatpush1.xpose.msra.mxu0 %v768
  %1389 = vmatprep.subr.mxu0 0.0
  %1390 = vmatpush1.xpose.msra.mxu0 %v765
  %1391 = vmatprep.subr.mxu0 0.0
  %1392 = vmatpush1.xpose.msra.mxu0 %v762
  %1393 = vmatprep.subr.mxu0 0.0
  %1394 = vmatpush1.xpose.msra.mxu0 %v759
  %1395 = vmatprep.subr.mxu0 0.0
  %1396 = vmatpush2.xpose.msra.mxu0 0.0
  %1397 = vmatprep.subr.mxu0 0.0
  %1398 = vmatpush2.xpose.msra.mxu0 0.0
  %1399 = vmatprep.subr.mxu0 0.0
  %1400 = vmatpush2.xpose.msra.mxu0 0.0
  %1401 = vmatprep.subr.mxu0 0.0
  %1402 = vmatpush2.xpose.msra.mxu0 0.0
  %1403 = vmatprep.subr.mxu0 0.0
  %1404 = vmatpush2.xpose.msra.mxu0 0.0
  %1405 = vmatprep.subr.mxu0 0.0
  %1406 = vmatpush2.xpose.msra.mxu0 0.0
  %1407 = vmatprep.subr.mxu0 0.0
  %1408 = vmatpush2.xpose.msra.mxu0 0.0
  %1409 = vmatprep.subr.mxu0 0.0
  %1410 = vmatpush2.xpose.msra.mxu0 0.0
  %1411 = vmatprep.subr.mxu0 0.0
  %1412 = vmatpush2.xpose.msra.mxu0 0.0
  %1413 = vmatprep.subr.mxu0 0.0
  %1414 = vmatpush2.xpose.msra.mxu0 0.0
  %1415 = vmatprep.subr.mxu0 0.0
  %1416 = vmatpush2.xpose.msra.mxu0 0.0
  %1417 = vmatprep.subr.mxu0 0.0
  %1418 = vmatpush2.xpose.msra.mxu0 0.0
  %1419 = vmatprep.subr.mxu0 0.0
  %1420 = vmatpush2.xpose.msra.mxu0 0.0
  %1421 = vmatprep.subr.mxu0 0.0
  %1422 = vmatpush2.xpose.msra.mxu0 0.0
  %1423 = vmatprep.subr.mxu0 0.0
  %1424 = vmatpush2.xpose.msra.mxu0 0.0
  %1425 = vmatprep.subr.mxu0 0.0
  %1426 = vmatpush2.xpose.msra.mxu0 0.0
  %1427 = vmatprep.mubr.f32.mxu0 0.0
  %1428 = vmatmul.mubr.f32.gmra.mxu0 %v1220
  %v1429 = vpop.f32.mrf.mxu0
  %v1430 = vadd.f32 %v1029, %v1429
  %v1431 = vpop.f32.mrf.mxu0
  %1432 = vmatprep.mubr.f32.mxu0 0.0
  %1433 = vmatmul.mubr.f32.gmra.mxu0 %v1223
  %v1434 = vpop.f32.mrf.mxu0
  %v1435 = vadd.f32 %v1033, %v1434
  %v1436 = vpop.f32.mrf.mxu0
  %1437 = vmatprep.mubr.f32.mxu0 0.0
  %1438 = vmatmul.mubr.f32.gmra.mxu0 %v1226
  %v1439 = vpop.f32.mrf.mxu0
  %v1440 = vadd.f32 %v1037, %v1439
  %v1441 = vpop.f32.mrf.mxu0
  %1442 = vmatprep.mubr.f32.mxu0 0.0
  %1443 = vmatmul.mubr.f32.gmra.mxu0 %v1229
  %v1444 = vpop.f32.mrf.mxu0
  %v1445 = vadd.f32 %v1041, %v1444
  %v1446 = vpop.f32.mrf.mxu0
  %1447 = vmatprep.mubr.f32.mxu0 0.0
  %1448 = vmatmul.mubr.f32.gmra.mxu0 %v1232
  %v1449 = vpop.f32.mrf.mxu0
  %v1450 = vadd.f32 %v1045, %v1449
  %v1451 = vpop.f32.mrf.mxu0
  %1452 = vmatprep.mubr.f32.mxu0 0.0
  %1453 = vmatmul.mubr.f32.gmra.mxu0 %v1235
  %v1454 = vpop.f32.mrf.mxu0
  %v1455 = vadd.f32 %v1049, %v1454
  %v1456 = vpop.f32.mrf.mxu0
  %1457 = vmatprep.mubr.f32.mxu0 0.0
  %1458 = vmatmul.mubr.f32.gmra.mxu0 %v1238
  %v1459 = vpop.f32.mrf.mxu0
  %v1460 = vadd.f32 %v1053, %v1459
  %v1461 = vpop.f32.mrf.mxu0
  %1462 = vmatprep.mubr.f32.mxu0 0.0
  %1463 = vmatmul.mubr.f32.gmra.mxu0 %v1241
  %v1464 = vpop.f32.mrf.mxu0
  %v1465 = vadd.f32 %v1057, %v1464
  %v1466 = vpop.f32.mrf.mxu0
  %1467 = vmatprep.mubr.f32.mxu0 0.0
  %1468 = vmatmul.mubr.f32.gmra.mxu0 %v1244
  %v1469 = vpop.f32.mrf.mxu0
  %v1470 = vadd.f32 %v1061, %v1469
  %v1471 = vpop.f32.mrf.mxu0
  %1472 = vmatprep.mubr.f32.mxu0 0.0
  %1473 = vmatmul.mubr.f32.gmra.mxu0 %v1247
  %v1474 = vpop.f32.mrf.mxu0
  %v1475 = vadd.f32 %v1065, %v1474
  %v1476 = vpop.f32.mrf.mxu0
  %1477 = vmatprep.mubr.f32.mxu0 0.0
  %1478 = vmatmul.mubr.f32.gmra.mxu0 %v1250
  %v1479 = vpop.f32.mrf.mxu0
  %v1480 = vadd.f32 %v1069, %v1479
  %v1481 = vpop.f32.mrf.mxu0
  %1482 = vmatprep.mubr.f32.mxu0 0.0
  %1483 = vmatmul.mubr.f32.gmra.mxu0 %v1253
  %v1484 = vpop.f32.mrf.mxu0
  %v1485 = vadd.f32 %v1073, %v1484
  %v1486 = vpop.f32.mrf.mxu0
  %1487 = vmatprep.mubr.f32.mxu0 0.0
  %1488 = vmatmul.mubr.f32.gmra.mxu0 %v1256
  %v1489 = vpop.f32.mrf.mxu0
  %v1490 = vadd.f32 %v1077, %v1489
  %v1491 = vpop.f32.mrf.mxu0
  %1492 = vmatprep.mubr.f32.mxu0 0.0
  %1493 = vmatmul.mubr.f32.gmra.mxu0 %v1259
  %v1494 = vpop.f32.mrf.mxu0
  %v1495 = vadd.f32 %v1081, %v1494
  %v1496 = vpop.f32.mrf.mxu0
  %1497 = vmatprep.mubr.f32.mxu0 0.0
  %1498 = vmatmul.mubr.f32.gmra.mxu0 %v1262
  %v1499 = vpop.f32.mrf.mxu0
  %v1500 = vadd.f32 %v1085, %v1499
  %v1501 = vpop.f32.mrf.mxu0
  %1502 = vmatprep.mubr.f32.mxu0 0.0
  %1503 = vmatmul.mubr.f32.gmra.mxu0 %v1265
  %v1504 = vpop.f32.mrf.mxu0
  %v1505 = vadd.f32 %v1089, %v1504
  %v1506 = vpop.f32.mrf.mxu0
  %1507 = vmatprep.mubr.f32.mxu0 0.0
  %1508 = vmatmul.mubr.f32.gmra.mxu0 %v1268
  %v1509 = vpop.f32.mrf.mxu0
  %v1510 = vadd.f32 %v1093, %v1509
  %v1511 = vpop.f32.mrf.mxu0
  %1512 = vmatprep.mubr.f32.mxu0 0.0
  %1513 = vmatmul.mubr.f32.gmra.mxu0 %v1271
  %v1514 = vpop.f32.mrf.mxu0
  %v1515 = vadd.f32 %v1097, %v1514
  %v1516 = vpop.f32.mrf.mxu0
  %1517 = vmatprep.mubr.f32.mxu0 0.0
  %1518 = vmatmul.mubr.f32.gmra.mxu0 %v1274
  %v1519 = vpop.f32.mrf.mxu0
  %v1520 = vadd.f32 %v1101, %v1519
  %v1521 = vpop.f32.mrf.mxu0
  %1522 = vmatprep.mubr.f32.mxu0 0.0
  %1523 = vmatmul.mubr.f32.gmra.mxu0 %v1277
  %v1524 = vpop.f32.mrf.mxu0
  %v1525 = vadd.f32 %v1105, %v1524
  %v1526 = vpop.f32.mrf.mxu0
  %1527 = vmatprep.mubr.f32.mxu0 0.0
  %1528 = vmatmul.mubr.f32.gmra.mxu0 %v1280
  %v1529 = vpop.f32.mrf.mxu0
  %v1530 = vadd.f32 %v1109, %v1529
  %v1531 = vpop.f32.mrf.mxu0
  %1532 = vmatprep.mubr.f32.mxu0 0.0
  %1533 = vmatmul.mubr.f32.gmra.mxu0 %v1283
  %v1534 = vpop.f32.mrf.mxu0
  %v1535 = vadd.f32 %v1113, %v1534
  %v1536 = vpop.f32.mrf.mxu0
  %1537 = vmatprep.mubr.f32.mxu0 0.0
  %1538 = vmatmul.mubr.f32.gmra.mxu0 %v1286
  %v1539 = vpop.f32.mrf.mxu0
  %v1540 = vadd.f32 %v1117, %v1539
  %v1541 = vpop.f32.mrf.mxu0
  %1542 = vmatprep.mubr.f32.mxu0 0.0
  %1543 = vmatmul.mubr.f32.gmra.mxu0 %v1289
  %v1544 = vpop.f32.mrf.mxu0
  %v1545 = vadd.f32 %v1121, %v1544
  %v1546 = vpop.f32.mrf.mxu0
  %1547 = vmatprep.mubr.f32.mxu0 0.0
  %1548 = vmatmul.mubr.f32.gmra.mxu0 %v1292
  %v1549 = vpop.f32.mrf.mxu0
  %v1550 = vadd.f32 %v1125, %v1549
  %v1551 = vpop.f32.mrf.mxu0
  %1552 = vmatprep.mubr.f32.mxu0 0.0
  %1553 = vmatmul.mubr.f32.gmra.mxu0 %v1295
  %v1554 = vpop.f32.mrf.mxu0
  %v1555 = vadd.f32 %v1129, %v1554
  %v1556 = vpop.f32.mrf.mxu0
  %1557 = vmatprep.mubr.f32.mxu0 0.0
  %1558 = vmatmul.mubr.f32.gmra.mxu0 %v1298
  %v1559 = vpop.f32.mrf.mxu0
  %v1560 = vadd.f32 %v1133, %v1559
  %v1561 = vpop.f32.mrf.mxu0
  %1562 = vmatprep.mubr.f32.mxu0 0.0
  %1563 = vmatmul.mubr.f32.gmra.mxu0 %v1301
  %v1564 = vpop.f32.mrf.mxu0
  %v1565 = vadd.f32 %v1137, %v1564
  %v1566 = vpop.f32.mrf.mxu0
  %1567 = vmatprep.mubr.f32.mxu0 0.0
  %1568 = vmatmul.mubr.f32.gmra.mxu0 %v1304
  %v1569 = vpop.f32.mrf.mxu0
  %v1570 = vadd.f32 %v1141, %v1569
  %v1571 = vpop.f32.mrf.mxu0
  %1572 = vmatprep.mubr.f32.mxu0 0.0
  %1573 = vmatmul.mubr.f32.gmra.mxu0 %v1307
  %v1574 = vpop.f32.mrf.mxu0
  %v1575 = vadd.f32 %v1145, %v1574
  %v1576 = vpop.f32.mrf.mxu0
  %1577 = vmatprep.mubr.f32.mxu0 0.0
  %1578 = vmatmul.mubr.f32.gmra.mxu0 %v1310
  %v1579 = vpop.f32.mrf.mxu0
  %v1580 = vadd.f32 %v1149, %v1579
  %v1581 = vpop.f32.mrf.mxu0
  %1582 = vmatprep.mubr.f32.mxu0 0.0
  %1583 = vmatmul.mubr.f32.gmra.mxu0 %v1313
  %v1584 = vpop.f32.mrf.mxu0
  %v1585 = vadd.f32 %v1153, %v1584
  %v1586 = vpop.f32.mrf.mxu0
  %1587 = vmatprep.mubr.f32.mxu0 0.0
  %1588 = vmatmul.mubr.f32.gmra.mxu0 %v1316
  %v1589 = vpop.f32.mrf.mxu0
  %v1590 = vadd.f32 %v1157, %v1589
  %v1591 = vpop.f32.mrf.mxu0
  %1592 = vmatprep.mubr.f32.mxu0 0.0
  %1593 = vmatmul.mubr.f32.gmra.mxu0 %v1319
  %v1594 = vpop.f32.mrf.mxu0
  %v1595 = vadd.f32 %v1161, %v1594
  %v1596 = vpop.f32.mrf.mxu0
  %1597 = vmatprep.mubr.f32.mxu0 0.0
  %1598 = vmatmul.mubr.f32.gmra.mxu0 %v1322
  %v1599 = vpop.f32.mrf.mxu0
  %v1600 = vadd.f32 %v1165, %v1599
  %v1601 = vpop.f32.mrf.mxu0
  %1602 = vmatprep.mubr.f32.mxu0 0.0
  %1603 = vmatmul.mubr.f32.gmra.mxu0 %v1325
  %v1604 = vpop.f32.mrf.mxu0
  %v1605 = vadd.f32 %v1169, %v1604
  %v1606 = vpop.f32.mrf.mxu0
  %1607 = vmatprep.mubr.f32.mxu0 0.0
  %1608 = vmatmul.mubr.f32.gmra.mxu0 %v1328
  %v1609 = vpop.f32.mrf.mxu0
  %v1610 = vadd.f32 %v1173, %v1609
  %v1611 = vpop.f32.mrf.mxu0
  %1612 = vmatprep.mubr.f32.mxu0 0.0
  %1613 = vmatmul.mubr.f32.gmra.mxu0 %v1331
  %v1614 = vpop.f32.mrf.mxu0
  %v1615 = vadd.f32 %v1177, %v1614
  %v1616 = vpop.f32.mrf.mxu0
  %1617 = vmatprep.mubr.f32.mxu0 0.0
  %1618 = vmatmul.mubr.f32.gmra.mxu0 %v1334
  %v1619 = vpop.f32.mrf.mxu0
  %v1620 = vadd.f32 %v1181, %v1619
  %v1621 = vpop.f32.mrf.mxu0
  %1622 = vmatprep.mubr.f32.mxu0 0.0
  %1623 = vmatmul.mubr.f32.gmra.mxu0 %v1337
  %v1624 = vpop.f32.mrf.mxu0
  %v1625 = vadd.f32 %v1185, %v1624
  %v1626 = vpop.f32.mrf.mxu0
  %1627 = vmatprep.mubr.f32.mxu0 0.0
  %1628 = vmatmul.mubr.f32.gmra.mxu0 %v1340
  %v1629 = vpop.f32.mrf.mxu0
  %v1630 = vadd.f32 %v1189, %v1629
  %v1631 = vpop.f32.mrf.mxu0
  %1632 = vmatprep.mubr.f32.mxu0 0.0
  %1633 = vmatmul.mubr.f32.gmra.mxu0 %v1343
  %v1634 = vpop.f32.mrf.mxu0
  %v1635 = vadd.f32 %v1193, %v1634
  %v1636 = vpop.f32.mrf.mxu0
  %1637 = vmatprep.mubr.f32.mxu0 0.0
  %1638 = vmatmul.mubr.f32.gmra.mxu0 %v1346
  %v1639 = vpop.f32.mrf.mxu0
  %v1640 = vadd.f32 %v1197, %v1639
  %v1641 = vpop.f32.mrf.mxu0
  %1642 = vmatprep.mubr.f32.mxu0 0.0
  %1643 = vmatmul.mubr.f32.gmra.mxu0 %v1349
  %v1644 = vpop.f32.mrf.mxu0
  %v1645 = vadd.f32 %v1201, %v1644
  %v1646 = vpop.f32.mrf.mxu0
  %1647 = vmatprep.mubr.f32.mxu0 0.0
  %1648 = vmatmul.mubr.f32.gmra.mxu0 %v1352
  %v1649 = vpop.f32.mrf.mxu0
  %v1650 = vadd.f32 %v1205, %v1649
  %v1651 = vpop.f32.mrf.mxu0
  %1652 = vmatprep.mubr.f32.mxu0 0.0
  %1653 = vmatmul.mubr.f32.gmra.mxu0 %v1355
  %v1654 = vpop.f32.mrf.mxu0
  %v1655 = vadd.f32 %v1209, %v1654
  %v1656 = vpop.f32.mrf.mxu0
  %1657 = vmatprep.mubr.f32.mxu0 0.0
  %1658 = vmatmul.mubr.f32.gmra.mxu0 %v1358
  %v1659 = vpop.f32.mrf.mxu0
  %v1660 = vadd.f32 %v1213, %v1659
  %v1661 = vpop.f32.mrf.mxu0
  %1662 = vmatprep.mubr.f32.mxu0 0.0
  %1663 = vmatmul.mubr.f32.gmra.mxu0 %v1361
  %v1664 = vpop.f32.mrf.mxu0
  %v1665 = vadd.f32 %v1217, %v1664
  %v1666 = vpop.f32.mrf.mxu0
  %1667 = vdwg.mxu0
  %vm1668 = vcmp.gt.f32.partialorder %v1430, 0.0
  %vm1669 = vcmp.gt.f32.partialorder %v1435, 0.0
  %vm1670 = vcmp.gt.f32.partialorder %v1440, 0.0
  %vm1671 = vcmp.gt.f32.partialorder %v1445, 0.0
  %vm1672 = vcmp.gt.f32.partialorder %v1450, 0.0
  %vm1673 = vcmp.gt.f32.partialorder %v1455, 0.0
  %vm1674 = vcmp.gt.f32.partialorder %v1460, 0.0
  %vm1675 = vcmp.gt.f32.partialorder %v1465, 0.0
  %vm1676 = vcmp.gt.f32.partialorder %v1470, 0.0
  %vm1677 = vcmp.gt.f32.partialorder %v1475, 0.0
  %vm1678 = vcmp.gt.f32.partialorder %v1480, 0.0
  %vm1679 = vcmp.gt.f32.partialorder %v1485, 0.0
  %vm1680 = vcmp.gt.f32.partialorder %v1490, 0.0
  %vm1681 = vcmp.gt.f32.partialorder %v1495, 0.0
  %vm1682 = vcmp.gt.f32.partialorder %v1500, 0.0
  %vm1683 = vcmp.gt.f32.partialorder %v1505, 0.0
  %vm1684 = vcmp.gt.f32.partialorder %v1510, 0.0
  %vm1685 = vcmp.gt.f32.partialorder %v1515, 0.0
  %vm1686 = vcmp.gt.f32.partialorder %v1520, 0.0
  %vm1687 = vcmp.gt.f32.partialorder %v1525, 0.0
  %vm1688 = vcmp.gt.f32.partialorder %v1530, 0.0
  %vm1689 = vcmp.gt.f32.partialorder %v1535, 0.0
  %vm1690 = vcmp.gt.f32.partialorder %v1540, 0.0
  %vm1691 = vcmp.gt.f32.partialorder %v1545, 0.0
  %vm1692 = vcmp.gt.f32.partialorder %v1550, 0.0
  %vm1693 = vcmp.gt.f32.partialorder %v1555, 0.0
  %vm1694 = vcmp.gt.f32.partialorder %v1560, 0.0
  %vm1695 = vcmp.gt.f32.partialorder %v1565, 0.0
  %vm1696 = vcmp.gt.f32.partialorder %v1570, 0.0
  %vm1697 = vcmp.gt.f32.partialorder %v1575, 0.0
  %vm1698 = vcmp.gt.f32.partialorder %v1580, 0.0
  %vm1699 = vcmp.gt.f32.partialorder %v1585, 0.0
  %vm1700 = vcmp.gt.f32.partialorder %v1590, 0.0
  %vm1701 = vcmp.gt.f32.partialorder %v1595, 0.0
  %vm1702 = vcmp.gt.f32.partialorder %v1600, 0.0
  %vm1703 = vcmp.gt.f32.partialorder %v1605, 0.0
  %vm1704 = vcmp.gt.f32.partialorder %v1610, 0.0
  %vm1705 = vcmp.gt.f32.partialorder %v1615, 0.0
  %vm1706 = vcmp.gt.f32.partialorder %v1620, 0.0
  %vm1707 = vcmp.gt.f32.partialorder %v1625, 0.0
  %vm1708 = vcmp.gt.f32.partialorder %v1630, 0.0
  %vm1709 = vcmp.gt.f32.partialorder %v1635, 0.0
  %vm1710 = vcmp.gt.f32.partialorder %v1640, 0.0
  %vm1711 = vcmp.gt.f32.partialorder %v1645, 0.0
  %vm1712 = vcmp.gt.f32.partialorder %v1650, 0.0
  %vm1713 = vcmp.gt.f32.partialorder %v1655, 0.0
  %vm1714 = vcmp.gt.f32.partialorder %v1660, 0.0
  %vm1715 = vcmp.gt.f32.partialorder %v1665, 0.0
  %v1716 = vmul.f32 %v1430, 0.2
  %v1717 = vmul.f32 %v1435, 0.2
  %v1718 = vmul.f32 %v1440, 0.2
  %v1719 = vmul.f32 %v1445, 0.2
  %v1720 = vmul.f32 %v1450, 0.2
  %v1721 = vmul.f32 %v1455, 0.2
  %v1722 = vmul.f32 %v1460, 0.2
  %v1723 = vmul.f32 %v1465, 0.2
  %v1724 = vmul.f32 %v1470, 0.2
  %v1725 = vmul.f32 %v1475, 0.2
  %v1726 = vmul.f32 %v1480, 0.2
  %v1727 = vmul.f32 %v1485, 0.2
  %v1728 = vmul.f32 %v1490, 0.2
  %v1729 = vmul.f32 %v1495, 0.2
  %v1730 = vmul.f32 %v1500, 0.2
  %v1731 = vmul.f32 %v1505, 0.2
  %v1732 = vmul.f32 %v1510, 0.2
  %v1733 = vmul.f32 %v1515, 0.2
  %v1734 = vmul.f32 %v1520, 0.2
  %v1735 = vmul.f32 %v1525, 0.2
  %v1736 = vmul.f32 %v1530, 0.2
  %v1737 = vmul.f32 %v1535, 0.2
  %v1738 = vmul.f32 %v1540, 0.2
  %v1739 = vmul.f32 %v1545, 0.2
  %v1740 = vmul.f32 %v1550, 0.2
  %v1741 = vmul.f32 %v1555, 0.2
  %v1742 = vmul.f32 %v1560, 0.2
  %v1743 = vmul.f32 %v1565, 0.2
  %v1744 = vmul.f32 %v1570, 0.2
  %v1745 = vmul.f32 %v1575, 0.2
  %v1746 = vmul.f32 %v1580, 0.2
  %v1747 = vmul.f32 %v1585, 0.2
  %v1748 = vmul.f32 %v1590, 0.2
  %v1749 = vmul.f32 %v1595, 0.2
  %v1750 = vmul.f32 %v1600, 0.2
  %v1751 = vmul.f32 %v1605, 0.2
  %v1752 = vmul.f32 %v1610, 0.2
  %v1753 = vmul.f32 %v1615, 0.2
  %v1754 = vmul.f32 %v1620, 0.2
  %v1755 = vmul.f32 %v1625, 0.2
  %v1756 = vmul.f32 %v1630, 0.2
  %v1757 = vmul.f32 %v1635, 0.2
  %v1758 = vmul.f32 %v1640, 0.2
  %v1759 = vmul.f32 %v1645, 0.2
  %v1760 = vmul.f32 %v1650, 0.2
  %v1761 = vmul.f32 %v1655, 0.2
  %v1762 = vmul.f32 %v1660, 0.2
  %v1763 = vmul.f32 %v1665, 0.2
  %v1764 = vsel %vm1668, %v1430, %v1716
  %v1765 = vsel %vm1669, %v1435, %v1717
  %v1766 = vsel %vm1670, %v1440, %v1718
  %v1767 = vsel %vm1671, %v1445, %v1719
  %v1768 = vsel %vm1672, %v1450, %v1720
  %v1769 = vsel %vm1673, %v1455, %v1721
  %v1770 = vsel %vm1674, %v1460, %v1722
  %v1771 = vsel %vm1675, %v1465, %v1723
  %v1772 = vsel %vm1676, %v1470, %v1724
  %v1773 = vsel %vm1677, %v1475, %v1725
  %v1774 = vsel %vm1678, %v1480, %v1726
  %v1775 = vsel %vm1679, %v1485, %v1727
  %v1776 = vsel %vm1680, %v1490, %v1728
  %v1777 = vsel %vm1681, %v1495, %v1729
  %v1778 = vsel %vm1682, %v1500, %v1730
  %v1779 = vsel %vm1683, %v1505, %v1731
  %v1780 = vsel %vm1684, %v1510, %v1732
  %v1781 = vsel %vm1685, %v1515, %v1733
  %v1782 = vsel %vm1686, %v1520, %v1734
  %v1783 = vsel %vm1687, %v1525, %v1735
  %v1784 = vsel %vm1688, %v1530, %v1736
  %v1785 = vsel %vm1689, %v1535, %v1737
  %v1786 = vsel %vm1690, %v1540, %v1738
  %v1787 = vsel %vm1691, %v1545, %v1739
  %v1788 = vsel %vm1692, %v1550, %v1740
  %v1789 = vsel %vm1693, %v1555, %v1741
  %v1790 = vsel %vm1694, %v1560, %v1742
  %v1791 = vsel %vm1695, %v1565, %v1743
  %v1792 = vsel %vm1696, %v1570, %v1744
  %v1793 = vsel %vm1697, %v1575, %v1745
  %v1794 = vsel %vm1698, %v1580, %v1746
  %v1795 = vsel %vm1699, %v1585, %v1747
  %v1796 = vsel %vm1700, %v1590, %v1748
  %v1797 = vsel %vm1701, %v1595, %v1749
  %v1798 = vsel %vm1702, %v1600, %v1750
  %v1799 = vsel %vm1703, %v1605, %v1751
  %v1800 = vsel %vm1704, %v1610, %v1752
  %v1801 = vsel %vm1705, %v1615, %v1753
  %v1802 = vsel %vm1706, %v1620, %v1754
  %v1803 = vsel %vm1707, %v1625, %v1755
  %v1804 = vsel %vm1708, %v1630, %v1756
  %v1805 = vsel %vm1709, %v1635, %v1757
  %v1806 = vsel %vm1710, %v1640, %v1758
  %v1807 = vsel %vm1711, %v1645, %v1759
  %v1808 = vsel %vm1712, %v1650, %v1760
  %v1809 = vsel %vm1713, %v1655, %v1761
  %v1810 = vsel %vm1714, %v1660, %v1762
  %v1811 = vsel %vm1715, %v1665, %v1763
  %v1812 = vld [vmem:[%s8] sm:$0xff]
  %v1813 = vld [vmem:[%s8 + $0x8] sm:$0xff]
  %v1814 = vld [vmem:[%s8 + $0x10] sm:$0xff]
  %v1815 = vld [vmem:[%s8 + $0x18] sm:$0xff]
  %v1816 = vld [vmem:[%s8 + $0x20] sm:$0xff]
  %v1817 = vld [vmem:[%s8 + $0x28] sm:$0xff]
  %v1818 = vld [vmem:[%s8 + $0x30] sm:$0xff]
  %v1819 = vld [vmem:[%s8 + $0x38] sm:$0xff]
  %v1820 = vld [vmem:[%s8 + $0x40] sm:$0xff]
  %v1821 = vld [vmem:[%s8 + $0x48] sm:$0xff]
  %v1822 = vld [vmem:[%s8 + $0x50] sm:$0xff]
  %v1823 = vld [vmem:[%s8 + $0x58] sm:$0xff]
  %v1824 = vld [vmem:[%s8 + $0x60] sm:$0xff]
  %v1825 = vld [vmem:[%s8 + $0x68] sm:$0xff]
  %v1826 = vld [vmem:[%s8 + $0x70] sm:$0xff]
  %v1827 = vld [vmem:[%s8 + $0x78] sm:$0xff]
  %v1828 = vld [vmem:[%s8 + $0x80] sm:$0xff]
  %v1829 = vld [vmem:[%s8 + $0x88] sm:$0xff]
  %v1830 = vld [vmem:[%s8 + $0x90] sm:$0xff]
  %v1831 = vld [vmem:[%s8 + $0x98] sm:$0xff]
  %v1832 = vld [vmem:[%s8 + $0xa0] sm:$0xff]
  %v1833 = vld [vmem:[%s8 + $0xa8] sm:$0xff]
  %v1834 = vld [vmem:[%s8 + $0xb0] sm:$0xff]
  %v1835 = vld [vmem:[%s8 + $0xb8] sm:$0xff]
  %v1836 = vld [vmem:[%s8 + $0xc0] sm:$0xff]
  %v1837 = vld [vmem:[%s8 + $0xc8] sm:$0xff]
  %v1838 = vld [vmem:[%s8 + $0xd0] sm:$0xff]
  %v1839 = vld [vmem:[%s8 + $0xd8] sm:$0xff]
  %v1840 = vld [vmem:[%s8 + $0xe0] sm:$0xff]
  %v1841 = vld [vmem:[%s8 + $0xe8] sm:$0xff]
  %v1842 = vld [vmem:[%s8 + $0xf0] sm:$0xff]
  %v1843 = vld [vmem:[%s8 + $0xf8] sm:$0xff]
  %v1844 = vld [vmem:[%s8 + $0x100] sm:$0xff]
  %v1845 = vld [vmem:[%s8 + $0x108] sm:$0xff]
  %v1846 = vld [vmem:[%s8 + $0x110] sm:$0xff]
  %v1847 = vld [vmem:[%s8 + $0x118] sm:$0xff]
  %v1848 = vld [vmem:[%s8 + $0x120] sm:$0xff]
  %v1849 = vld [vmem:[%s8 + $0x128] sm:$0xff]
  %v1850 = vld [vmem:[%s8 + $0x130] sm:$0xff]
  %v1851 = vld [vmem:[%s8 + $0x138] sm:$0xff]
  %v1852 = vld [vmem:[%s8 + $0x140] sm:$0xff]
  %v1853 = vld [vmem:[%s8 + $0x148] sm:$0xff]
  %v1854 = vld [vmem:[%s8 + $0x150] sm:$0xff]
  %v1855 = vld [vmem:[%s8 + $0x158] sm:$0xff]
  %v1856 = vld [vmem:[%s8 + $0x160] sm:$0xff]
  %v1857 = vld [vmem:[%s8 + $0x168] sm:$0xff]
  %v1858 = vld [vmem:[%s8 + $0x170] sm:$0xff]
  %v1859 = vld [vmem:[%s8 + $0x178] sm:$0xff]
  %v1860 = vadd.f32 %v1764, %v1812
  %v1861 = vadd.f32 %v1765, %v1813
  %v1862 = vadd.f32 %v1766, %v1814
  %v1863 = vadd.f32 %v1767, %v1815
  %v1864 = vadd.f32 %v1768, %v1816
  %v1865 = vadd.f32 %v1769, %v1817
  %v1866 = vadd.f32 %v1770, %v1818
  %v1867 = vadd.f32 %v1771, %v1819
  %v1868 = vadd.f32 %v1772, %v1820
  %v1869 = vadd.f32 %v1773, %v1821
  %v1870 = vadd.f32 %v1774, %v1822
  %v1871 = vadd.f32 %v1775, %v1823
  %v1872 = vadd.f32 %v1776, %v1824
  %v1873 = vadd.f32 %v1777, %v1825
  %v1874 = vadd.f32 %v1778, %v1826
  %v1875 = vadd.f32 %v1779, %v1827
  %v1876 = vadd.f32 %v1780, %v1828
  %v1877 = vadd.f32 %v1781, %v1829
  %v1878 = vadd.f32 %v1782, %v1830
  %v1879 = vadd.f32 %v1783, %v1831
  %v1880 = vadd.f32 %v1784, %v1832
  %v1881 = vadd.f32 %v1785, %v1833
  %v1882 = vadd.f32 %v1786, %v1834
  %v1883 = vadd.f32 %v1787, %v1835
  %v1884 = vadd.f32 %v1788, %v1836
  %v1885 = vadd.f32 %v1789, %v1837
  %v1886 = vadd.f32 %v1790, %v1838
  %v1887 = vadd.f32 %v1791, %v1839
  %v1888 = vadd.f32 %v1792, %v1840
  %v1889 = vadd.f32 %v1793, %v1841
  %v1890 = vadd.f32 %v1794, %v1842
  %v1891 = vadd.f32 %v1795, %v1843
  %v1892 = vadd.f32 %v1796, %v1844
  %v1893 = vadd.f32 %v1797, %v1845
  %v1894 = vadd.f32 %v1798, %v1846
  %v1895 = vadd.f32 %v1799, %v1847
  %v1896 = vadd.f32 %v1800, %v1848
  %v1897 = vadd.f32 %v1801, %v1849
  %v1898 = vadd.f32 %v1802, %v1850
  %v1899 = vadd.f32 %v1803, %v1851
  %v1900 = vadd.f32 %v1804, %v1852
  %v1901 = vadd.f32 %v1805, %v1853
  %v1902 = vadd.f32 %v1806, %v1854
  %v1903 = vadd.f32 %v1807, %v1855
  %v1904 = vadd.f32 %v1808, %v1856
  %v1905 = vadd.f32 %v1809, %v1857
  %v1906 = vadd.f32 %v1810, %v1858
  %v1907 = vadd.f32 %v1811, %v1859
  %vm1908 = vcmask 523264
  %v1909 = vsel %vm1908, %v1860, -inf
  %1910 = vmax.xlane.f32.xlu0 %v1909
  %v1911 = vpop.xlane.xlu0 %1910
  %v1912 = vsel %vm1908, %v1861, -inf
  %1913 = vmax.xlane.f32.xlu0 %v1912
  %v1914 = vpop.xlane.xlu0 %1913
  %v1915 = vsel %vm1908, %v1862, -inf
  %1916 = vmax.xlane.f32.xlu0 %v1915
  %v1917 = vpop.xlane.xlu0 %1916
  %v1918 = vsel %vm1908, %v1863, -inf
  %1919 = vmax.xlane.f32.xlu0 %v1918
  %v1920 = vpop.xlane.xlu0 %1919
  %v1921 = vsel %vm1908, %v1864, -inf
  %1922 = vmax.xlane.f32.xlu0 %v1921
  %v1923 = vpop.xlane.xlu0 %1922
  %v1924 = vsel %vm1908, %v1865, -inf
  %1925 = vmax.xlane.f32.xlu0 %v1924
  %v1926 = vpop.xlane.xlu0 %1925
  %v1927 = vsel %vm1908, %v1866, -inf
  %1928 = vmax.xlane.f32.xlu0 %v1927
  %v1929 = vpop.xlane.xlu0 %1928
  %v1930 = vsel %vm1908, %v1867, -inf
  %1931 = vmax.xlane.f32.xlu0 %v1930
  %v1932 = vpop.xlane.xlu0 %1931
  %v1933 = vsel %vm1908, %v1868, -inf
  %1934 = vmax.xlane.f32.xlu0 %v1933
  %v1935 = vpop.xlane.xlu0 %1934
  %v1936 = vsel %vm1908, %v1869, -inf
  %1937 = vmax.xlane.f32.xlu0 %v1936
  %v1938 = vpop.xlane.xlu0 %1937
  %v1939 = vsel %vm1908, %v1870, -inf
  %1940 = vmax.xlane.f32.xlu0 %v1939
  %v1941 = vpop.xlane.xlu0 %1940
  %v1942 = vsel %vm1908, %v1871, -inf
  %1943 = vmax.xlane.f32.xlu0 %v1942
  %v1944 = vpop.xlane.xlu0 %1943
  %v1945 = vsel %vm1908, %v1872, -inf
  %1946 = vmax.xlane.f32.xlu0 %v1945
  %v1947 = vpop.xlane.xlu0 %1946
  %v1948 = vsel %vm1908, %v1873, -inf
  %1949 = vmax.xlane.f32.xlu0 %v1948
  %v1950 = vpop.xlane.xlu0 %1949
  %v1951 = vsel %vm1908, %v1874, -inf
  %1952 = vmax.xlane.f32.xlu0 %v1951
  %v1953 = vpop.xlane.xlu0 %1952
  %v1954 = vsel %vm1908, %v1875, -inf
  %1955 = vmax.xlane.f32.xlu0 %v1954
  %v1956 = vpop.xlane.xlu0 %1955
  %v1957 = vsel %vm1908, %v1876, -inf
  %1958 = vmax.xlane.f32.xlu0 %v1957
  %v1959 = vpop.xlane.xlu0 %1958
  %v1960 = vsel %vm1908, %v1877, -inf
  %1961 = vmax.xlane.f32.xlu0 %v1960
  %v1962 = vpop.xlane.xlu0 %1961
  %v1963 = vsel %vm1908, %v1878, -inf
  %1964 = vmax.xlane.f32.xlu0 %v1963
  %v1965 = vpop.xlane.xlu0 %1964
  %v1966 = vsel %vm1908, %v1879, -inf
  %1967 = vmax.xlane.f32.xlu0 %v1966
  %v1968 = vpop.xlane.xlu0 %1967
  %v1969 = vsel %vm1908, %v1880, -inf
  %1970 = vmax.xlane.f32.xlu0 %v1969
  %v1971 = vpop.xlane.xlu0 %1970
  %v1972 = vsel %vm1908, %v1881, -inf
  %1973 = vmax.xlane.f32.xlu0 %v1972
  %v1974 = vpop.xlane.xlu0 %1973
  %v1975 = vsel %vm1908, %v1882, -inf
  %1976 = vmax.xlane.f32.xlu0 %v1975
  %v1977 = vpop.xlane.xlu0 %1976
  %v1978 = vsel %vm1908, %v1883, -inf
  %1979 = vmax.xlane.f32.xlu0 %v1978
  %v1980 = vpop.xlane.xlu0 %1979
  %v1981 = vsel %vm1908, %v1884, -inf
  %1982 = vmax.xlane.f32.xlu0 %v1981
  %v1983 = vpop.xlane.xlu0 %1982
  %v1984 = vsel %vm1908, %v1885, -inf
  %1985 = vmax.xlane.f32.xlu0 %v1984
  %v1986 = vpop.xlane.xlu0 %1985
  %v1987 = vsel %vm1908, %v1886, -inf
  %1988 = vmax.xlane.f32.xlu0 %v1987
  %v1989 = vpop.xlane.xlu0 %1988
  %v1990 = vsel %vm1908, %v1887, -inf
  %1991 = vmax.xlane.f32.xlu0 %v1990
  %v1992 = vpop.xlane.xlu0 %1991
  %v1993 = vsel %vm1908, %v1888, -inf
  %1994 = vmax.xlane.f32.xlu0 %v1993
  %v1995 = vpop.xlane.xlu0 %1994
  %v1996 = vsel %vm1908, %v1889, -inf
  %1997 = vmax.xlane.f32.xlu0 %v1996
  %v1998 = vpop.xlane.xlu0 %1997
  %v1999 = vsel %vm1908, %v1890, -inf
  %2000 = vmax.xlane.f32.xlu0 %v1999
  %v2001 = vpop.xlane.xlu0 %2000
  %v2002 = vsel %vm1908, %v1891, -inf
  %2003 = vmax.xlane.f32.xlu0 %v2002
  %v2004 = vpop.xlane.xlu0 %2003
  %v2005 = vsel %vm1908, %v1892, -inf
  %2006 = vmax.xlane.f32.xlu0 %v2005
  %v2007 = vpop.xlane.xlu0 %2006
  %v2008 = vsel %vm1908, %v1893, -inf
  %2009 = vmax.xlane.f32.xlu0 %v2008
  %v2010 = vpop.xlane.xlu0 %2009
  %v2011 = vsel %vm1908, %v1894, -inf
  %2012 = vmax.xlane.f32.xlu0 %v2011
  %v2013 = vpop.xlane.xlu0 %2012
  %v2014 = vsel %vm1908, %v1895, -inf
  %2015 = vmax.xlane.f32.xlu0 %v2014
  %v2016 = vpop.xlane.xlu0 %2015
  %v2017 = vsel %vm1908, %v1896, -inf
  %2018 = vmax.xlane.f32.xlu0 %v2017
  %v2019 = vpop.xlane.xlu0 %2018
  %v2020 = vsel %vm1908, %v1897, -inf
  %2021 = vmax.xlane.f32.xlu0 %v2020
  %v2022 = vpop.xlane.xlu0 %2021
  %v2023 = vsel %vm1908, %v1898, -inf
  %2024 = vmax.xlane.f32.xlu0 %v2023
  %v2025 = vpop.xlane.xlu0 %2024
  %v2026 = vsel %vm1908, %v1899, -inf
  %2027 = vmax.xlane.f32.xlu0 %v2026
  %v2028 = vpop.xlane.xlu0 %2027
  %v2029 = vsel %vm1908, %v1900, -inf
  %2030 = vmax.xlane.f32.xlu0 %v2029
  %v2031 = vpop.xlane.xlu0 %2030
  %v2032 = vsel %vm1908, %v1901, -inf
  %2033 = vmax.xlane.f32.xlu0 %v2032
  %v2034 = vpop.xlane.xlu0 %2033
  %v2035 = vsel %vm1908, %v1902, -inf
  %2036 = vmax.xlane.f32.xlu0 %v2035
  %v2037 = vpop.xlane.xlu0 %2036
  %v2038 = vsel %vm1908, %v1903, -inf
  %2039 = vmax.xlane.f32.xlu0 %v2038
  %v2040 = vpop.xlane.xlu0 %2039
  %v2041 = vsel %vm1908, %v1904, -inf
  %2042 = vmax.xlane.f32.xlu0 %v2041
  %v2043 = vpop.xlane.xlu0 %2042
  %v2044 = vsel %vm1908, %v1905, -inf
  %2045 = vmax.xlane.f32.xlu0 %v2044
  %v2046 = vpop.xlane.xlu0 %2045
  %v2047 = vsel %vm1908, %v1906, -inf
  %2048 = vmax.xlane.f32.xlu0 %v2047
  %v2049 = vpop.xlane.xlu0 %2048
  %v2050 = vsel %vm1908, %v1907, -inf
  %2051 = vmax.xlane.f32.xlu0 %v2050
  %v2052 = vpop.xlane.xlu0 %2051
  %v2053 = vsub.f32 %v1860, %v1911
  %v2054 = vsub.f32 %v1861, %v1914
  %v2055 = vsub.f32 %v1862, %v1917
  %v2056 = vsub.f32 %v1863, %v1920
  %v2057 = vsub.f32 %v1864, %v1923
  %v2058 = vsub.f32 %v1865, %v1926
  %v2059 = vsub.f32 %v1866, %v1929
  %v2060 = vsub.f32 %v1867, %v1932
  %v2061 = vsub.f32 %v1868, %v1935
  %v2062 = vsub.f32 %v1869, %v1938
  %v2063 = vsub.f32 %v1870, %v1941
  %v2064 = vsub.f32 %v1871, %v1944
  %v2065 = vsub.f32 %v1872, %v1947
  %v2066 = vsub.f32 %v1873, %v1950
  %v2067 = vsub.f32 %v1874, %v1953
  %v2068 = vsub.f32 %v1875, %v1956
  %v2069 = vsub.f32 %v1876, %v1959
  %v2070 = vsub.f32 %v1877, %v1962
  %v2071 = vsub.f32 %v1878, %v1965
  %v2072 = vsub.f32 %v1879, %v1968
  %v2073 = vsub.f32 %v1880, %v1971
  %v2074 = vsub.f32 %v1881, %v1974
  %v2075 = vsub.f32 %v1882, %v1977
  %v2076 = vsub.f32 %v1883, %v1980
  %v2077 = vsub.f32 %v1884, %v1983
  %v2078 = vsub.f32 %v1885, %v1986
  %v2079 = vsub.f32 %v1886, %v1989
  %v2080 = vsub.f32 %v1887, %v1992
  %v2081 = vsub.f32 %v1888, %v1995
  %v2082 = vsub.f32 %v1889, %v1998
  %v2083 = vsub.f32 %v1890, %v2001
  %v2084 = vsub.f32 %v1891, %v2004
  %v2085 = vsub.f32 %v1892, %v2007
  %v2086 = vsub.f32 %v1893, %v2010
  %v2087 = vsub.f32 %v1894, %v2013
  %v2088 = vsub.f32 %v1895, %v2016
  %v2089 = vsub.f32 %v1896, %v2019
  %v2090 = vsub.f32 %v1897, %v2022
  %v2091 = vsub.f32 %v1898, %v2025
  %v2092 = vsub.f32 %v1899, %v2028
  %v2093 = vsub.f32 %v1900, %v2031
  %v2094 = vsub.f32 %v1901, %v2034
  %v2095 = vsub.f32 %v1902, %v2037
  %v2096 = vsub.f32 %v1903, %v2040
  %v2097 = vsub.f32 %v1904, %v2043
  %v2098 = vsub.f32 %v1905, %v2046
  %v2099 = vsub.f32 %v1906, %v2049
  %v2100 = vsub.f32 %v1907, %v2052
  %v2101 = vmul.f32 %v2053, 1.442695
  %v2102 = vpow.pop %v2101
  %v2103 = vmul.f32 %v2054, 1.442695
  %v2104 = vpow.pop %v2103
  %v2105 = vmul.f32 %v2055, 1.442695
  %v2106 = vpow.pop %v2105
  %v2107 = vmul.f32 %v2056, 1.442695
  %v2108 = vpow.pop %v2107
  %v2109 = vmul.f32 %v2057, 1.442695
  %v2110 = vpow.pop %v2109
  %v2111 = vmul.f32 %v2058, 1.442695
  %v2112 = vpow.pop %v2111
  %v2113 = vmul.f32 %v2059, 1.442695
  %v2114 = vpow.pop %v2113
  %v2115 = vmul.f32 %v2060, 1.442695
  %v2116 = vpow.pop %v2115
  %v2117 = vmul.f32 %v2061, 1.442695
  %v2118 = vpow.pop %v2117
  %v2119 = vmul.f32 %v2062, 1.442695
  %v2120 = vpow.pop %v2119
  %v2121 = vmul.f32 %v2063, 1.442695
  %v2122 = vpow.pop %v2121
  %v2123 = vmul.f32 %v2064, 1.442695
  %v2124 = vpow.pop %v2123
  %v2125 = vmul.f32 %v2065, 1.442695
  %v2126 = vpow.pop %v2125
  %v2127 = vmul.f32 %v2066, 1.442695
  %v2128 = vpow.pop %v2127
  %v2129 = vmul.f32 %v2067, 1.442695
  %v2130 = vpow.pop %v2129
  %v2131 = vmul.f32 %v2068, 1.442695
  %v2132 = vpow.pop %v2131
  %v2133 = vmul.f32 %v2069, 1.442695
  %v2134 = vpow.pop %v2133
  %v2135 = vmul.f32 %v2070, 1.442695
  %v2136 = vpow.pop %v2135
  %v2137 = vmul.f32 %v2071, 1.442695
  %v2138 = vpow.pop %v2137
  %v2139 = vmul.f32 %v2072, 1.442695
  %v2140 = vpow.pop %v2139
  %v2141 = vmul.f32 %v2073, 1.442695
  %v2142 = vpow.pop %v2141
  %v2143 = vmul.f32 %v2074, 1.442695
  %v2144 = vpow.pop %v2143
  %v2145 = vmul.f32 %v2075, 1.442695
  %v2146 = vpow.pop %v2145
  %v2147 = vmul.f32 %v2076, 1.442695
  %v2148 = vpow.pop %v2147
  %v2149 = vmul.f32 %v2077, 1.442695
  %v2150 = vpow.pop %v2149
  %v2151 = vmul.f32 %v2078, 1.442695
  %v2152 = vpow.pop %v2151
  %v2153 = vmul.f32 %v2079, 1.442695
  %v2154 = vpow.pop %v2153
  %v2155 = vmul.f32 %v2080, 1.442695
  %v2156 = vpow.pop %v2155
  %v2157 = vmul.f32 %v2081, 1.442695
  %v2158 = vpow.pop %v2157
  %v2159 = vmul.f32 %v2082, 1.442695
  %v2160 = vpow.pop %v2159
  %v2161 = vmul.f32 %v2083, 1.442695
  %v2162 = vpow.pop %v2161
  %v2163 = vmul.f32 %v2084, 1.442695
  %v2164 = vpow.pop %v2163
  %v2165 = vmul.f32 %v2085, 1.442695
  %v2166 = vpow.pop %v2165
  %v2167 = vmul.f32 %v2086, 1.442695
  %v2168 = vpow.pop %v2167
  %v2169 = vmul.f32 %v2087, 1.442695
  %v2170 = vpow.pop %v2169
  %v2171 = vmul.f32 %v2088, 1.442695
  %v2172 = vpow.pop %v2171
  %v2173 = vmul.f32 %v2089, 1.442695
  %v2174 = vpow.pop %v2173
  %v2175 = vmul.f32 %v2090, 1.442695
  %v2176 = vpow.pop %v2175
  %v2177 = vmul.f32 %v2091, 1.442695
  %v2178 = vpow.pop %v2177
  %v2179 = vmul.f32 %v2092, 1.442695
  %v2180 = vpow.pop %v2179
  %v2181 = vmul.f32 %v2093, 1.442695
  %v2182 = vpow.pop %v2181
  %v2183 = vmul.f32 %v2094, 1.442695
  %v2184 = vpow.pop %v2183
  %v2185 = vmul.f32 %v2095, 1.442695
  %v2186 = vpow.pop %v2185
  %v2187 = vmul.f32 %v2096, 1.442695
  %v2188 = vpow.pop %v2187
  %v2189 = vmul.f32 %v2097, 1.442695
  %v2190 = vpow.pop %v2189
  %v2191 = vmul.f32 %v2098, 1.442695
  %v2192 = vpow.pop %v2191
  %v2193 = vmul.f32 %v2099, 1.442695
  %v2194 = vpow.pop %v2193
  %v2195 = vmul.f32 %v2100, 1.442695
  %v2196 = vpow.pop %v2195
  %v2197 = vld [vmem:[%s7] sm:$0xff]
  %v2198 = vld [vmem:[%s7 + $0x8] sm:$0xff]
  %v2199 = vld [vmem:[%s7 + $0x10] sm:$0xff]
  %v2200 = vld [vmem:[%s7 + $0x18] sm:$0xff]
  %v2201 = vld [vmem:[%s7 + $0x20] sm:$0xff]
  %v2202 = vld [vmem:[%s7 + $0x28] sm:$0xff]
  %v2203 = vld [vmem:[%s7 + $0x30] sm:$0xff]
  %v2204 = vld [vmem:[%s7 + $0x38] sm:$0xff]
  %v2205 = vld [vmem:[%s7 + $0x40] sm:$0xff]
  %v2206 = vld [vmem:[%s7 + $0x48] sm:$0xff]
  %v2207 = vld [vmem:[%s7 + $0x50] sm:$0xff]
  %v2208 = vld [vmem:[%s7 + $0x58] sm:$0xff]
  %v2209 = vld [vmem:[%s7 + $0x60] sm:$0xff]
  %v2210 = vld [vmem:[%s7 + $0x68] sm:$0xff]
  %v2211 = vld [vmem:[%s7 + $0x70] sm:$0xff]
  %v2212 = vld [vmem:[%s7 + $0x78] sm:$0xff]
  %v2213 = vld [vmem:[%s7 + $0x80] sm:$0xff]
  %v2214 = vld [vmem:[%s7 + $0x88] sm:$0xff]
  %v2215 = vld [vmem:[%s7 + $0x90] sm:$0xff]
  %v2216 = vld [vmem:[%s7 + $0x98] sm:$0xff]
  %v2217 = vld [vmem:[%s7 + $0xa0] sm:$0xff]
  %v2218 = vld [vmem:[%s7 + $0xa8] sm:$0xff]
  %v2219 = vld [vmem:[%s7 + $0xb0] sm:$0xff]
  %v2220 = vld [vmem:[%s7 + $0xb8] sm:$0xff]
  %v2221 = vld [vmem:[%s7 + $0xc0] sm:$0xff]
  %v2222 = vld [vmem:[%s7 + $0xc8] sm:$0xff]
  %v2223 = vld [vmem:[%s7 + $0xd0] sm:$0xff]
  %v2224 = vld [vmem:[%s7 + $0xd8] sm:$0xff]
  %v2225 = vld [vmem:[%s7 + $0xe0] sm:$0xff]
  %v2226 = vld [vmem:[%s7 + $0xe8] sm:$0xff]
  %v2227 = vld [vmem:[%s7 + $0xf0] sm:$0xff]
  %v2228 = vld [vmem:[%s7 + $0xf8] sm:$0xff]
  %v2229 = vld [vmem:[%s7 + $0x100] sm:$0xff]
  %v2230 = vld [vmem:[%s7 + $0x108] sm:$0xff]
  %v2231 = vld [vmem:[%s7 + $0x110] sm:$0xff]
  %v2232 = vld [vmem:[%s7 + $0x118] sm:$0xff]
  %v2233 = vld [vmem:[%s7 + $0x120] sm:$0xff]
  %v2234 = vld [vmem:[%s7 + $0x128] sm:$0xff]
  %v2235 = vld [vmem:[%s7 + $0x130] sm:$0xff]
  %v2236 = vld [vmem:[%s7 + $0x138] sm:$0xff]
  %v2237 = vld [vmem:[%s7 + $0x140] sm:$0xff]
  %v2238 = vld [vmem:[%s7 + $0x148] sm:$0xff]
  %v2239 = vld [vmem:[%s7 + $0x150] sm:$0xff]
  %v2240 = vld [vmem:[%s7 + $0x158] sm:$0xff]
  %v2241 = vld [vmem:[%s7 + $0x160] sm:$0xff]
  %v2242 = vld [vmem:[%s7 + $0x168] sm:$0xff]
  %v2243 = vld [vmem:[%s7 + $0x170] sm:$0xff]
  %v2244 = vld [vmem:[%s7 + $0x178] sm:$0xff]
  %v2245 = vmul.f32 %v2102, %v2197
  %v2246 = vmul.f32 %v2104, %v2198
  %v2247 = vmul.f32 %v2106, %v2199
  %v2248 = vmul.f32 %v2108, %v2200
  %v2249 = vmul.f32 %v2110, %v2201
  %v2250 = vmul.f32 %v2112, %v2202
  %v2251 = vmul.f32 %v2114, %v2203
  %v2252 = vmul.f32 %v2116, %v2204
  %v2253 = vmul.f32 %v2118, %v2205
  %v2254 = vmul.f32 %v2120, %v2206
  %v2255 = vmul.f32 %v2122, %v2207
  %v2256 = vmul.f32 %v2124, %v2208
  %v2257 = vmul.f32 %v2126, %v2209
  %v2258 = vmul.f32 %v2128, %v2210
  %v2259 = vmul.f32 %v2130, %v2211
  %v2260 = vmul.f32 %v2132, %v2212
  %v2261 = vmul.f32 %v2134, %v2213
  %v2262 = vmul.f32 %v2136, %v2214
  %v2263 = vmul.f32 %v2138, %v2215
  %v2264 = vmul.f32 %v2140, %v2216
  %v2265 = vmul.f32 %v2142, %v2217
  %v2266 = vmul.f32 %v2144, %v2218
  %v2267 = vmul.f32 %v2146, %v2219
  %v2268 = vmul.f32 %v2148, %v2220
  %v2269 = vmul.f32 %v2150, %v2221
  %v2270 = vmul.f32 %v2152, %v2222
  %v2271 = vmul.f32 %v2154, %v2223
  %v2272 = vmul.f32 %v2156, %v2224
  %v2273 = vmul.f32 %v2158, %v2225
  %v2274 = vmul.f32 %v2160, %v2226
  %v2275 = vmul.f32 %v2162, %v2227
  %v2276 = vmul.f32 %v2164, %v2228
  %v2277 = vmul.f32 %v2166, %v2229
  %v2278 = vmul.f32 %v2168, %v2230
  %v2279 = vmul.f32 %v2170, %v2231
  %v2280 = vmul.f32 %v2172, %v2232
  %v2281 = vmul.f32 %v2174, %v2233
  %v2282 = vmul.f32 %v2176, %v2234
  %v2283 = vmul.f32 %v2178, %v2235
  %v2284 = vmul.f32 %v2180, %v2236
  %v2285 = vmul.f32 %v2182, %v2237
  %v2286 = vmul.f32 %v2184, %v2238
  %v2287 = vmul.f32 %v2186, %v2239
  %v2288 = vmul.f32 %v2188, %v2240
  %v2289 = vmul.f32 %v2190, %v2241
  %v2290 = vmul.f32 %v2192, %v2242
  %v2291 = vmul.f32 %v2194, %v2243
  %v2292 = vmul.f32 %v2196, %v2244
  %vm2293 = vcmask 785408
  %v2294 = vsel %vm2293, %v853, 1.0
  %v2295 = vsel %vm2293, %v858, 1.0
  %v2296 = vsel %vm2293, %v863, 1.0
  %v2297 = vsel %vm2293, %v868, 1.0
  %v2298 = vsel %vm2293, %v873, 1.0
  %v2299 = vsel %vm2293, %v878, 1.0
  %v2300 = vsel %vm2293, %v883, 1.0
  %v2301 = vsel %vm2293, %v888, 1.0
  %v2303 = vsel %vm1908, %v2245, 0
  %v2306 = vsel %vm1908, %v2246, 0
  %v2309 = vsel %vm1908, %v2247, 0
  %v2312 = vsel %vm1908, %v2248, 0
  %v2315 = vsel %vm1908, %v2249, 0
  %v2318 = vsel %vm1908, %v2250, 0
  %v2321 = vsel %vm1908, %v2251, 0
  %v2324 = vsel %vm1908, %v2252, 0
  %v2327 = vsel %vm1908, %v2253, 0
  %v2330 = vsel %vm1908, %v2254, 0
  %v2333 = vsel %vm1908, %v2255, 0
  %v2336 = vsel %vm1908, %v2256, 0
  %v2339 = vsel %vm1908, %v2257, 0
  %v2342 = vsel %vm1908, %v2258, 0
  %v2345 = vsel %vm1908, %v2259, 0
  %v2348 = vsel %vm1908, %v2260, 0
  %v2351 = vsel %vm1908, %v2261, 0
  %v2354 = vsel %vm1908, %v2262, 0
  %v2357 = vsel %vm1908, %v2263, 0
  %v2360 = vsel %vm1908, %v2264, 0
  %v2363 = vsel %vm1908, %v2265, 0
  %v2366 = vsel %vm1908, %v2266, 0
  %v2369 = vsel %vm1908, %v2267, 0
  %v2372 = vsel %vm1908, %v2268, 0
  %v2375 = vsel %vm1908, %v2269, 0
  %v2378 = vsel %vm1908, %v2270, 0
  %v2381 = vsel %vm1908, %v2271, 0
  %v2384 = vsel %vm1908, %v2272, 0
  %v2387 = vsel %vm1908, %v2273, 0
  %v2390 = vsel %vm1908, %v2274, 0
  %v2393 = vsel %vm1908, %v2275, 0
  %v2396 = vsel %vm1908, %v2276, 0
  %v2399 = vsel %vm1908, %v2277, 0
  %v2402 = vsel %vm1908, %v2278, 0
  %v2405 = vsel %vm1908, %v2279, 0
  %v2408 = vsel %vm1908, %v2280, 0
  %v2411 = vsel %vm1908, %v2281, 0
  %v2414 = vsel %vm1908, %v2282, 0
  %v2417 = vsel %vm1908, %v2283, 0
  %v2420 = vsel %vm1908, %v2284, 0
  %v2423 = vsel %vm1908, %v2285, 0
  %v2426 = vsel %vm1908, %v2286, 0
  %v2429 = vsel %vm1908, %v2287, 0
  %v2432 = vsel %vm1908, %v2288, 0
  %v2435 = vsel %vm1908, %v2289, 0
  %v2438 = vsel %vm1908, %v2290, 0
  %v2441 = vsel %vm1908, %v2291, 0
  %v2444 = vsel %vm1908, %v2292, 0
  %2446 = vmatprep.subr.mxu0 0.0
  %2447 = vmatpush1.msra.mxu0 0.0
  %2448 = vmatprep.subr.mxu0 0.0
  %2449 = vmatpush1.msra.mxu0 0.0
  %2450 = vmatprep.subr.mxu0 0.0
  %2451 = vmatpush1.msra.mxu0 0.0
  %2452 = vmatprep.subr.mxu0 0.0
  %2453 = vmatpush1.msra.mxu0 0.0
  %2454 = vmatprep.subr.mxu0 0.0
  %2455 = vmatpush1.msra.mxu0 0.0
  %2456 = vmatprep.subr.mxu0 0.0
  %2457 = vmatpush1.msra.mxu0 0.0
  %2458 = vmatprep.subr.mxu0 0.0
  %2459 = vmatpush1.msra.mxu0 0.0
  %2460 = vmatprep.subr.mxu0 0.0
  %2461 = vmatpush1.msra.mxu0 0.0
  %2462 = vmatprep.subr.mxu0 0.0
  %2463 = vmatpush1.msra.mxu0 %v2301
  %2464 = vmatprep.subr.mxu0 0.0
  %2465 = vmatpush1.msra.mxu0 %v2300
  %2466 = vmatprep.subr.mxu0 0.0
  %2467 = vmatpush1.msra.mxu0 %v2299
  %2468 = vmatprep.subr.mxu0 0.0
  %2469 = vmatpush1.msra.mxu0 %v2298
  %2470 = vmatprep.subr.mxu0 0.0
  %2471 = vmatpush1.msra.mxu0 %v2297
  %2472 = vmatprep.subr.mxu0 0.0
  %2473 = vmatpush1.msra.mxu0 %v2296
  %2474 = vmatprep.subr.mxu0 0.0
  %2475 = vmatpush1.msra.mxu0 %v2295
  %2476 = vmatprep.subr.mxu0 0.0
  %2477 = vmatpush1.msra.mxu0 %v2294
  %2478 = vmatprep.subr.mxu0 0.0
  %2479 = vmatpush2.msra.mxu0 0.0
  %2480 = vmatprep.subr.mxu0 0.0
  %2481 = vmatpush2.msra.mxu0 0.0
  %2482 = vmatprep.subr.mxu0 0.0
  %2483 = vmatpush2.msra.mxu0 0.0
  %2484 = vmatprep.subr.mxu0 0.0
  %2485 = vmatpush2.msra.mxu0 0.0
  %2486 = vmatprep.subr.mxu0 0.0
  %2487 = vmatpush2.msra.mxu0 0.0
  %2488 = vmatprep.subr.mxu0 0.0
  %2489 = vmatpush2.msra.mxu0 0.0
  %2490 = vmatprep.subr.mxu0 0.0
  %2491 = vmatpush2.msra.mxu0 0.0
  %2492 = vmatprep.subr.mxu0 0.0
  %2493 = vmatpush2.msra.mxu0 0.0
  %2494 = vmatprep.subr.mxu0 0.0
  %2495 = vmatpush2.msra.mxu0 0.0
  %2496 = vmatprep.subr.mxu0 0.0
  %2497 = vmatpush2.msra.mxu0 0.0
  %2498 = vmatprep.subr.mxu0 0.0
  %2499 = vmatpush2.msra.mxu0 0.0
  %2500 = vmatprep.subr.mxu0 0.0
  %2501 = vmatpush2.msra.mxu0 0.0
  %2502 = vmatprep.subr.mxu0 0.0
  %2503 = vmatpush2.msra.mxu0 0.0
  %2504 = vmatprep.subr.mxu0 0.0
  %2505 = vmatpush2.msra.mxu0 0.0
  %2506 = vmatprep.subr.mxu0 0.0
  %2507 = vmatpush2.msra.mxu0 0.0
  %2508 = vmatprep.subr.mxu0 0.0
  %2509 = vmatpush2.msra.mxu0 0.0
  %2510 = vmatprep.mubr.f32.mxu0 0.0
  %2511 = vmatmul.mubr.f32.gmra.mxu0 %v2303
  %v2512 = vpop.f32.mrf.mxu0
  %v2513 = vadd.f32 0.0, %v2512
  %v2514 = vpop.f32.mrf.mxu0
  %2515 = vmatprep.mubr.f32.mxu0 0.0
  %2516 = vmatmul.mubr.f32.gmra.mxu0 %v2306
  %v2517 = vpop.f32.mrf.mxu0
  %v2518 = vadd.f32 0.0, %v2517
  %v2519 = vpop.f32.mrf.mxu0
  %2520 = vmatprep.mubr.f32.mxu0 0.0
  %2521 = vmatmul.mubr.f32.gmra.mxu0 %v2309
  %v2522 = vpop.f32.mrf.mxu0
  %v2523 = vadd.f32 0.0, %v2522
  %v2524 = vpop.f32.mrf.mxu0
  %2525 = vmatprep.mubr.f32.mxu0 0.0
  %2526 = vmatmul.mubr.f32.gmra.mxu0 %v2312
  %v2527 = vpop.f32.mrf.mxu0
  %v2528 = vadd.f32 0.0, %v2527
  %v2529 = vpop.f32.mrf.mxu0
  %2530 = vmatprep.mubr.f32.mxu0 0.0
  %2531 = vmatmul.mubr.f32.gmra.mxu0 %v2315
  %v2532 = vpop.f32.mrf.mxu0
  %v2533 = vadd.f32 0.0, %v2532
  %v2534 = vpop.f32.mrf.mxu0
  %2535 = vmatprep.mubr.f32.mxu0 0.0
  %2536 = vmatmul.mubr.f32.gmra.mxu0 %v2318
  %v2537 = vpop.f32.mrf.mxu0
  %v2538 = vadd.f32 0.0, %v2537
  %v2539 = vpop.f32.mrf.mxu0
  %2540 = vmatprep.mubr.f32.mxu0 0.0
  %2541 = vmatmul.mubr.f32.gmra.mxu0 %v2321
  %v2542 = vpop.f32.mrf.mxu0
  %v2543 = vadd.f32 0.0, %v2542
  %v2544 = vpop.f32.mrf.mxu0
  %2545 = vmatprep.mubr.f32.mxu0 0.0
  %2546 = vmatmul.mubr.f32.gmra.mxu0 %v2324
  %v2547 = vpop.f32.mrf.mxu0
  %v2548 = vadd.f32 0.0, %v2547
  %v2549 = vpop.f32.mrf.mxu0
  %2550 = vmatprep.mubr.f32.mxu0 0.0
  %2551 = vmatmul.mubr.f32.gmra.mxu0 %v2327
  %v2552 = vpop.f32.mrf.mxu0
  %v2553 = vadd.f32 0.0, %v2552
  %v2554 = vpop.f32.mrf.mxu0
  %2555 = vmatprep.mubr.f32.mxu0 0.0
  %2556 = vmatmul.mubr.f32.gmra.mxu0 %v2330
  %v2557 = vpop.f32.mrf.mxu0
  %v2558 = vadd.f32 0.0, %v2557
  %v2559 = vpop.f32.mrf.mxu0
  %2560 = vmatprep.mubr.f32.mxu0 0.0
  %2561 = vmatmul.mubr.f32.gmra.mxu0 %v2333
  %v2562 = vpop.f32.mrf.mxu0
  %v2563 = vadd.f32 0.0, %v2562
  %v2564 = vpop.f32.mrf.mxu0
  %2565 = vmatprep.mubr.f32.mxu0 0.0
  %2566 = vmatmul.mubr.f32.gmra.mxu0 %v2336
  %v2567 = vpop.f32.mrf.mxu0
  %v2568 = vadd.f32 0.0, %v2567
  %v2569 = vpop.f32.mrf.mxu0
  %2570 = vmatprep.mubr.f32.mxu0 0.0
  %2571 = vmatmul.mubr.f32.gmra.mxu0 %v2339
  %v2572 = vpop.f32.mrf.mxu0
  %v2573 = vadd.f32 0.0, %v2572
  %v2574 = vpop.f32.mrf.mxu0
  %2575 = vmatprep.mubr.f32.mxu0 0.0
  %2576 = vmatmul.mubr.f32.gmra.mxu0 %v2342
  %v2577 = vpop.f32.mrf.mxu0
  %v2578 = vadd.f32 0.0, %v2577
  %v2579 = vpop.f32.mrf.mxu0
  %2580 = vmatprep.mubr.f32.mxu0 0.0
  %2581 = vmatmul.mubr.f32.gmra.mxu0 %v2345
  %v2582 = vpop.f32.mrf.mxu0
  %v2583 = vadd.f32 0.0, %v2582
  %v2584 = vpop.f32.mrf.mxu0
  %2585 = vmatprep.mubr.f32.mxu0 0.0
  %2586 = vmatmul.mubr.f32.gmra.mxu0 %v2348
  %v2587 = vpop.f32.mrf.mxu0
  %v2588 = vadd.f32 0.0, %v2587
  %v2589 = vpop.f32.mrf.mxu0
  %2590 = vmatprep.mubr.f32.mxu0 0.0
  %2591 = vmatmul.mubr.f32.gmra.mxu0 %v2351
  %v2592 = vpop.f32.mrf.mxu0
  %v2593 = vadd.f32 0.0, %v2592
  %v2594 = vpop.f32.mrf.mxu0
  %2595 = vmatprep.mubr.f32.mxu0 0.0
  %2596 = vmatmul.mubr.f32.gmra.mxu0 %v2354
  %v2597 = vpop.f32.mrf.mxu0
  %v2598 = vadd.f32 0.0, %v2597
  %v2599 = vpop.f32.mrf.mxu0
  %2600 = vmatprep.mubr.f32.mxu0 0.0
  %2601 = vmatmul.mubr.f32.gmra.mxu0 %v2357
  %v2602 = vpop.f32.mrf.mxu0
  %v2603 = vadd.f32 0.0, %v2602
  %v2604 = vpop.f32.mrf.mxu0
  %2605 = vmatprep.mubr.f32.mxu0 0.0
  %2606 = vmatmul.mubr.f32.gmra.mxu0 %v2360
  %v2607 = vpop.f32.mrf.mxu0
  %v2608 = vadd.f32 0.0, %v2607
  %v2609 = vpop.f32.mrf.mxu0
  %2610 = vmatprep.mubr.f32.mxu0 0.0
  %2611 = vmatmul.mubr.f32.gmra.mxu0 %v2363
  %v2612 = vpop.f32.mrf.mxu0
  %v2613 = vadd.f32 0.0, %v2612
  %v2614 = vpop.f32.mrf.mxu0
  %2615 = vmatprep.mubr.f32.mxu0 0.0
  %2616 = vmatmul.mubr.f32.gmra.mxu0 %v2366
  %v2617 = vpop.f32.mrf.mxu0
  %v2618 = vadd.f32 0.0, %v2617
  %v2619 = vpop.f32.mrf.mxu0
  %2620 = vmatprep.mubr.f32.mxu0 0.0
  %2621 = vmatmul.mubr.f32.gmra.mxu0 %v2369
  %v2622 = vpop.f32.mrf.mxu0
  %v2623 = vadd.f32 0.0, %v2622
  %v2624 = vpop.f32.mrf.mxu0
  %2625 = vmatprep.mubr.f32.mxu0 0.0
  %2626 = vmatmul.mubr.f32.gmra.mxu0 %v2372
  %v2627 = vpop.f32.mrf.mxu0
  %v2628 = vadd.f32 0.0, %v2627
  %v2629 = vpop.f32.mrf.mxu0
  %2630 = vmatprep.mubr.f32.mxu0 0.0
  %2631 = vmatmul.mubr.f32.gmra.mxu0 %v2375
  %v2632 = vpop.f32.mrf.mxu0
  %v2633 = vadd.f32 0.0, %v2632
  %v2634 = vpop.f32.mrf.mxu0
  %2635 = vmatprep.mubr.f32.mxu0 0.0
  %2636 = vmatmul.mubr.f32.gmra.mxu0 %v2378
  %v2637 = vpop.f32.mrf.mxu0
  %v2638 = vadd.f32 0.0, %v2637
  %v2639 = vpop.f32.mrf.mxu0
  %2640 = vmatprep.mubr.f32.mxu0 0.0
  %2641 = vmatmul.mubr.f32.gmra.mxu0 %v2381
  %v2642 = vpop.f32.mrf.mxu0
  %v2643 = vadd.f32 0.0, %v2642
  %v2644 = vpop.f32.mrf.mxu0
  %2645 = vmatprep.mubr.f32.mxu0 0.0
  %2646 = vmatmul.mubr.f32.gmra.mxu0 %v2384
  %v2647 = vpop.f32.mrf.mxu0
  %v2648 = vadd.f32 0.0, %v2647
  %v2649 = vpop.f32.mrf.mxu0
  %2650 = vmatprep.mubr.f32.mxu0 0.0
  %2651 = vmatmul.mubr.f32.gmra.mxu0 %v2387
  %v2652 = vpop.f32.mrf.mxu0
  %v2653 = vadd.f32 0.0, %v2652
  %v2654 = vpop.f32.mrf.mxu0
  %2655 = vmatprep.mubr.f32.mxu0 0.0
  %2656 = vmatmul.mubr.f32.gmra.mxu0 %v2390
  %v2657 = vpop.f32.mrf.mxu0
  %v2658 = vadd.f32 0.0, %v2657
  %v2659 = vpop.f32.mrf.mxu0
  %2660 = vmatprep.mubr.f32.mxu0 0.0
  %2661 = vmatmul.mubr.f32.gmra.mxu0 %v2393
  %v2662 = vpop.f32.mrf.mxu0
  %v2663 = vadd.f32 0.0, %v2662
  %v2664 = vpop.f32.mrf.mxu0
  %2665 = vmatprep.mubr.f32.mxu0 0.0
  %2666 = vmatmul.mubr.f32.gmra.mxu0 %v2396
  %v2667 = vpop.f32.mrf.mxu0
  %v2668 = vadd.f32 0.0, %v2667
  %v2669 = vpop.f32.mrf.mxu0
  %2670 = vmatprep.mubr.f32.mxu0 0.0
  %2671 = vmatmul.mubr.f32.gmra.mxu0 %v2399
  %v2672 = vpop.f32.mrf.mxu0
  %v2673 = vadd.f32 0.0, %v2672
  %v2674 = vpop.f32.mrf.mxu0
  %2675 = vmatprep.mubr.f32.mxu0 0.0
  %2676 = vmatmul.mubr.f32.gmra.mxu0 %v2402
  %v2677 = vpop.f32.mrf.mxu0
  %v2678 = vadd.f32 0.0, %v2677
  %v2679 = vpop.f32.mrf.mxu0
  %2680 = vmatprep.mubr.f32.mxu0 0.0
  %2681 = vmatmul.mubr.f32.gmra.mxu0 %v2405
  %v2682 = vpop.f32.mrf.mxu0
  %v2683 = vadd.f32 0.0, %v2682
  %v2684 = vpop.f32.mrf.mxu0
  %2685 = vmatprep.mubr.f32.mxu0 0.0
  %2686 = vmatmul.mubr.f32.gmra.mxu0 %v2408
  %v2687 = vpop.f32.mrf.mxu0
  %v2688 = vadd.f32 0.0, %v2687
  %v2689 = vpop.f32.mrf.mxu0
  %2690 = vmatprep.mubr.f32.mxu0 0.0
  %2691 = vmatmul.mubr.f32.gmra.mxu0 %v2411
  %v2692 = vpop.f32.mrf.mxu0
  %v2693 = vadd.f32 0.0, %v2692
  %v2694 = vpop.f32.mrf.mxu0
  %2695 = vmatprep.mubr.f32.mxu0 0.0
  %2696 = vmatmul.mubr.f32.gmra.mxu0 %v2414
  %v2697 = vpop.f32.mrf.mxu0
  %v2698 = vadd.f32 0.0, %v2697
  %v2699 = vpop.f32.mrf.mxu0
  %2700 = vmatprep.mubr.f32.mxu0 0.0
  %2701 = vmatmul.mubr.f32.gmra.mxu0 %v2417
  %v2702 = vpop.f32.mrf.mxu0
  %v2703 = vadd.f32 0.0, %v2702
  %v2704 = vpop.f32.mrf.mxu0
  %2705 = vmatprep.mubr.f32.mxu0 0.0
  %2706 = vmatmul.mubr.f32.gmra.mxu0 %v2420
  %v2707 = vpop.f32.mrf.mxu0
  %v2708 = vadd.f32 0.0, %v2707
  %v2709 = vpop.f32.mrf.mxu0
  %2710 = vmatprep.mubr.f32.mxu0 0.0
  %2711 = vmatmul.mubr.f32.gmra.mxu0 %v2423
  %v2712 = vpop.f32.mrf.mxu0
  %v2713 = vadd.f32 0.0, %v2712
  %v2714 = vpop.f32.mrf.mxu0
  %2715 = vmatprep.mubr.f32.mxu0 0.0
  %2716 = vmatmul.mubr.f32.gmra.mxu0 %v2426
  %v2717 = vpop.f32.mrf.mxu0
  %v2718 = vadd.f32 0.0, %v2717
  %v2719 = vpop.f32.mrf.mxu0
  %2720 = vmatprep.mubr.f32.mxu0 0.0
  %2721 = vmatmul.mubr.f32.gmra.mxu0 %v2429
  %v2722 = vpop.f32.mrf.mxu0
  %v2723 = vadd.f32 0.0, %v2722
  %v2724 = vpop.f32.mrf.mxu0
  %2725 = vmatprep.mubr.f32.mxu0 0.0
  %2726 = vmatmul.mubr.f32.gmra.mxu0 %v2432
  %v2727 = vpop.f32.mrf.mxu0
  %v2728 = vadd.f32 0.0, %v2727
  %v2729 = vpop.f32.mrf.mxu0
  %2730 = vmatprep.mubr.f32.mxu0 0.0
  %2731 = vmatmul.mubr.f32.gmra.mxu0 %v2435
  %v2732 = vpop.f32.mrf.mxu0
  %v2733 = vadd.f32 0.0, %v2732
  %v2734 = vpop.f32.mrf.mxu0
  %2735 = vmatprep.mubr.f32.mxu0 0.0
  %2736 = vmatmul.mubr.f32.gmra.mxu0 %v2438
  %v2737 = vpop.f32.mrf.mxu0
  %v2738 = vadd.f32 0.0, %v2737
  %v2739 = vpop.f32.mrf.mxu0
  %2740 = vmatprep.mubr.f32.mxu0 0.0
  %2741 = vmatmul.mubr.f32.gmra.mxu0 %v2441
  %v2742 = vpop.f32.mrf.mxu0
  %v2743 = vadd.f32 0.0, %v2742
  %v2744 = vpop.f32.mrf.mxu0
  %2745 = vmatprep.mubr.f32.mxu0 0.0
  %2746 = vmatmul.mubr.f32.gmra.mxu0 %v2444
  %v2747 = vpop.f32.mrf.mxu0
  %v2748 = vadd.f32 0.0, %v2747
  %v2749 = vpop.f32.mrf.mxu0
  %2750 = vdwg.mxu0
  %v2751 = vmax.f32 %v2513, 1e-20
  %v2752 = vmax.f32 %v2518, 1e-20
  %v2753 = vmax.f32 %v2523, 1e-20
  %v2754 = vmax.f32 %v2528, 1e-20
  %v2755 = vmax.f32 %v2533, 1e-20
  %v2756 = vmax.f32 %v2538, 1e-20
  %v2757 = vmax.f32 %v2543, 1e-20
  %v2758 = vmax.f32 %v2548, 1e-20
  %v2759 = vmax.f32 %v2553, 1e-20
  %v2760 = vmax.f32 %v2558, 1e-20
  %v2761 = vmax.f32 %v2563, 1e-20
  %v2762 = vmax.f32 %v2568, 1e-20
  %v2763 = vmax.f32 %v2573, 1e-20
  %v2764 = vmax.f32 %v2578, 1e-20
  %v2765 = vmax.f32 %v2583, 1e-20
  %v2766 = vmax.f32 %v2588, 1e-20
  %v2767 = vmax.f32 %v2593, 1e-20
  %v2768 = vmax.f32 %v2598, 1e-20
  %v2769 = vmax.f32 %v2603, 1e-20
  %v2770 = vmax.f32 %v2608, 1e-20
  %v2771 = vmax.f32 %v2613, 1e-20
  %v2772 = vmax.f32 %v2618, 1e-20
  %v2773 = vmax.f32 %v2623, 1e-20
  %v2774 = vmax.f32 %v2628, 1e-20
  %v2775 = vmax.f32 %v2633, 1e-20
  %v2776 = vmax.f32 %v2638, 1e-20
  %v2777 = vmax.f32 %v2643, 1e-20
  %v2778 = vmax.f32 %v2648, 1e-20
  %v2779 = vmax.f32 %v2653, 1e-20
  %v2780 = vmax.f32 %v2658, 1e-20
  %v2781 = vmax.f32 %v2663, 1e-20
  %v2782 = vmax.f32 %v2668, 1e-20
  %v2783 = vmax.f32 %v2673, 1e-20
  %v2784 = vmax.f32 %v2678, 1e-20
  %v2785 = vmax.f32 %v2683, 1e-20
  %v2786 = vmax.f32 %v2688, 1e-20
  %v2787 = vmax.f32 %v2693, 1e-20
  %v2788 = vmax.f32 %v2698, 1e-20
  %v2789 = vmax.f32 %v2703, 1e-20
  %v2790 = vmax.f32 %v2708, 1e-20
  %v2791 = vmax.f32 %v2713, 1e-20
  %v2792 = vmax.f32 %v2718, 1e-20
  %v2793 = vmax.f32 %v2723, 1e-20
  %v2794 = vmax.f32 %v2728, 1e-20
  %v2795 = vmax.f32 %v2733, 1e-20
  %v2796 = vmax.f32 %v2738, 1e-20
  %v2797 = vmax.f32 %v2743, 1e-20
  %v2798 = vmax.f32 %v2748, 1e-20
  %v2799 = vrcp.pop %v2751
  %v2800 = vrcp.pop %v2752
  %v2801 = vrcp.pop %v2753
  %v2802 = vrcp.pop %v2754
  %v2803 = vrcp.pop %v2755
  %v2804 = vrcp.pop %v2756
  %v2805 = vrcp.pop %v2757
  %v2806 = vrcp.pop %v2758
  %v2807 = vrcp.pop %v2759
  %v2808 = vrcp.pop %v2760
  %v2809 = vrcp.pop %v2761
  %v2810 = vrcp.pop %v2762
  %v2811 = vrcp.pop %v2763
  %v2812 = vrcp.pop %v2764
  %v2813 = vrcp.pop %v2765
  %v2814 = vrcp.pop %v2766
  %v2815 = vrcp.pop %v2767
  %v2816 = vrcp.pop %v2768
  %v2817 = vrcp.pop %v2769
  %v2818 = vrcp.pop %v2770
  %v2819 = vrcp.pop %v2771
  %v2820 = vrcp.pop %v2772
  %v2821 = vrcp.pop %v2773
  %v2822 = vrcp.pop %v2774
  %v2823 = vrcp.pop %v2775
  %v2824 = vrcp.pop %v2776
  %v2825 = vrcp.pop %v2777
  %v2826 = vrcp.pop %v2778
  %v2827 = vrcp.pop %v2779
  %v2828 = vrcp.pop %v2780
  %v2829 = vrcp.pop %v2781
  %v2830 = vrcp.pop %v2782
  %v2831 = vrcp.pop %v2783
  %v2832 = vrcp.pop %v2784
  %v2833 = vrcp.pop %v2785
  %v2834 = vrcp.pop %v2786
  %v2835 = vrcp.pop %v2787
  %v2836 = vrcp.pop %v2788
  %v2837 = vrcp.pop %v2789
  %v2838 = vrcp.pop %v2790
  %v2839 = vrcp.pop %v2791
  %v2840 = vrcp.pop %v2792
  %v2841 = vrcp.pop %v2793
  %v2842 = vrcp.pop %v2794
  %v2843 = vrcp.pop %v2795
  %v2844 = vrcp.pop %v2796
  %v2845 = vrcp.pop %v2797
  %v2846 = vrcp.pop %v2798
  %2848 = vset.pattern.permute.xlu0 96
  %2849 = vperm.xlu0 %2848, %v2799
  %v2850 = vpop.permute.xlu0 %2849
  %2853 = vset.pattern.permute.xlu0 96
  %2854 = vperm.xlu0 %2853, %v2800
  %v2855 = vpop.permute.xlu0 %2854
  %2858 = vset.pattern.permute.xlu0 96
  %2859 = vperm.xlu0 %2858, %v2801
  %v2860 = vpop.permute.xlu0 %2859
  %2863 = vset.pattern.permute.xlu0 96
  %2864 = vperm.xlu0 %2863, %v2802
  %v2865 = vpop.permute.xlu0 %2864
  %2868 = vset.pattern.permute.xlu0 96
  %2869 = vperm.xlu0 %2868, %v2803
  %v2870 = vpop.permute.xlu0 %2869
  %2873 = vset.pattern.permute.xlu0 96
  %2874 = vperm.xlu0 %2873, %v2804
  %v2875 = vpop.permute.xlu0 %2874
  %2878 = vset.pattern.permute.xlu0 96
  %2879 = vperm.xlu0 %2878, %v2805
  %v2880 = vpop.permute.xlu0 %2879
  %2883 = vset.pattern.permute.xlu0 96
  %2884 = vperm.xlu0 %2883, %v2806
  %v2885 = vpop.permute.xlu0 %2884
  %2888 = vset.pattern.permute.xlu0 96
  %2889 = vperm.xlu0 %2888, %v2807
  %v2890 = vpop.permute.xlu0 %2889
  %2893 = vset.pattern.permute.xlu0 96
  %2894 = vperm.xlu0 %2893, %v2808
  %v2895 = vpop.permute.xlu0 %2894
  %2898 = vset.pattern.permute.xlu0 96
  %2899 = vperm.xlu0 %2898, %v2809
  %v2900 = vpop.permute.xlu0 %2899
  %2903 = vset.pattern.permute.xlu0 96
  %2904 = vperm.xlu0 %2903, %v2810
  %v2905 = vpop.permute.xlu0 %2904
  %2908 = vset.pattern.permute.xlu0 96
  %2909 = vperm.xlu0 %2908, %v2811
  %v2910 = vpop.permute.xlu0 %2909
  %2913 = vset.pattern.permute.xlu0 96
  %2914 = vperm.xlu0 %2913, %v2812
  %v2915 = vpop.permute.xlu0 %2914
  %2918 = vset.pattern.permute.xlu0 96
  %2919 = vperm.xlu0 %2918, %v2813
  %v2920 = vpop.permute.xlu0 %2919
  %2923 = vset.pattern.permute.xlu0 96
  %2924 = vperm.xlu0 %2923, %v2814
  %v2925 = vpop.permute.xlu0 %2924
  %2928 = vset.pattern.permute.xlu0 96
  %2929 = vperm.xlu0 %2928, %v2815
  %v2930 = vpop.permute.xlu0 %2929
  %2933 = vset.pattern.permute.xlu0 96
  %2934 = vperm.xlu0 %2933, %v2816
  %v2935 = vpop.permute.xlu0 %2934
  %2938 = vset.pattern.permute.xlu0 96
  %2939 = vperm.xlu0 %2938, %v2817
  %v2940 = vpop.permute.xlu0 %2939
  %2943 = vset.pattern.permute.xlu0 96
  %2944 = vperm.xlu0 %2943, %v2818
  %v2945 = vpop.permute.xlu0 %2944
  %2948 = vset.pattern.permute.xlu0 96
  %2949 = vperm.xlu0 %2948, %v2819
  %v2950 = vpop.permute.xlu0 %2949
  %2953 = vset.pattern.permute.xlu0 96
  %2954 = vperm.xlu0 %2953, %v2820
  %v2955 = vpop.permute.xlu0 %2954
  %2958 = vset.pattern.permute.xlu0 96
  %2959 = vperm.xlu0 %2958, %v2821
  %v2960 = vpop.permute.xlu0 %2959
  %2963 = vset.pattern.permute.xlu0 96
  %2964 = vperm.xlu0 %2963, %v2822
  %v2965 = vpop.permute.xlu0 %2964
  %2968 = vset.pattern.permute.xlu0 96
  %2969 = vperm.xlu0 %2968, %v2823
  %v2970 = vpop.permute.xlu0 %2969
  %2973 = vset.pattern.permute.xlu0 96
  %2974 = vperm.xlu0 %2973, %v2824
  %v2975 = vpop.permute.xlu0 %2974
  %2978 = vset.pattern.permute.xlu0 96
  %2979 = vperm.xlu0 %2978, %v2825
  %v2980 = vpop.permute.xlu0 %2979
  %2983 = vset.pattern.permute.xlu0 96
  %2984 = vperm.xlu0 %2983, %v2826
  %v2985 = vpop.permute.xlu0 %2984
  %2988 = vset.pattern.permute.xlu0 96
  %2989 = vperm.xlu0 %2988, %v2827
  %v2990 = vpop.permute.xlu0 %2989
  %2993 = vset.pattern.permute.xlu0 96
  %2994 = vperm.xlu0 %2993, %v2828
  %v2995 = vpop.permute.xlu0 %2994
  %2998 = vset.pattern.permute.xlu0 96
  %2999 = vperm.xlu0 %2998, %v2829
  %v3000 = vpop.permute.xlu0 %2999
  %3003 = vset.pattern.permute.xlu0 96
  %3004 = vperm.xlu0 %3003, %v2830
  %v3005 = vpop.permute.xlu0 %3004
  %3008 = vset.pattern.permute.xlu0 96
  %3009 = vperm.xlu0 %3008, %v2831
  %v3010 = vpop.permute.xlu0 %3009
  %3013 = vset.pattern.permute.xlu0 96
  %3014 = vperm.xlu0 %3013, %v2832
  %v3015 = vpop.permute.xlu0 %3014
  %3018 = vset.pattern.permute.xlu0 96
  %3019 = vperm.xlu0 %3018, %v2833
  %v3020 = vpop.permute.xlu0 %3019
  %3023 = vset.pattern.permute.xlu0 96
  %3024 = vperm.xlu0 %3023, %v2834
  %v3025 = vpop.permute.xlu0 %3024
  %3028 = vset.pattern.permute.xlu0 96
  %3029 = vperm.xlu0 %3028, %v2835
  %v3030 = vpop.permute.xlu0 %3029
  %3033 = vset.pattern.permute.xlu0 96
  %3034 = vperm.xlu0 %3033, %v2836
  %v3035 = vpop.permute.xlu0 %3034
  %3038 = vset.pattern.permute.xlu0 96
  %3039 = vperm.xlu0 %3038, %v2837
  %v3040 = vpop.permute.xlu0 %3039
  %3043 = vset.pattern.permute.xlu0 96
  %3044 = vperm.xlu0 %3043, %v2838
  %v3045 = vpop.permute.xlu0 %3044
  %3048 = vset.pattern.permute.xlu0 96
  %3049 = vperm.xlu0 %3048, %v2839
  %v3050 = vpop.permute.xlu0 %3049
  %3053 = vset.pattern.permute.xlu0 96
  %3054 = vperm.xlu0 %3053, %v2840
  %v3055 = vpop.permute.xlu0 %3054
  %3058 = vset.pattern.permute.xlu0 96
  %3059 = vperm.xlu0 %3058, %v2841
  %v3060 = vpop.permute.xlu0 %3059
  %3063 = vset.pattern.permute.xlu0 96
  %3064 = vperm.xlu0 %3063, %v2842
  %v3065 = vpop.permute.xlu0 %3064
  %3068 = vset.pattern.permute.xlu0 96
  %3069 = vperm.xlu0 %3068, %v2843
  %v3070 = vpop.permute.xlu0 %3069
  %3073 = vset.pattern.permute.xlu0 96
  %3074 = vperm.xlu0 %3073, %v2844
  %v3075 = vpop.permute.xlu0 %3074
  %3078 = vset.pattern.permute.xlu0 96
  %3079 = vperm.xlu0 %3078, %v2845
  %v3080 = vpop.permute.xlu0 %3079
  %3083 = vset.pattern.permute.xlu0 96
  %3084 = vperm.xlu0 %3083, %v2846
  %v3085 = vpop.permute.xlu0 %3084
  %v3087 = vmul.f32 %v2513, %v2850
  %v3088 = vmul.f32 %v2518, %v2855
  %v3089 = vmul.f32 %v2523, %v2860
  %v3090 = vmul.f32 %v2528, %v2865
  %v3091 = vmul.f32 %v2533, %v2870
  %v3092 = vmul.f32 %v2538, %v2875
  %v3093 = vmul.f32 %v2543, %v2880
  %v3094 = vmul.f32 %v2548, %v2885
  %v3095 = vmul.f32 %v2553, %v2890
  %v3096 = vmul.f32 %v2558, %v2895
  %v3097 = vmul.f32 %v2563, %v2900
  %v3098 = vmul.f32 %v2568, %v2905
  %v3099 = vmul.f32 %v2573, %v2910
  %v3100 = vmul.f32 %v2578, %v2915
  %v3101 = vmul.f32 %v2583, %v2920
  %v3102 = vmul.f32 %v2588, %v2925
  %v3103 = vmul.f32 %v2593, %v2930
  %v3104 = vmul.f32 %v2598, %v2935
  %v3105 = vmul.f32 %v2603, %v2940
  %v3106 = vmul.f32 %v2608, %v2945
  %v3107 = vmul.f32 %v2613, %v2950
  %v3108 = vmul.f32 %v2618, %v2955
  %v3109 = vmul.f32 %v2623, %v2960
  %v3110 = vmul.f32 %v2628, %v2965
  %v3111 = vmul.f32 %v2633, %v2970
  %v3112 = vmul.f32 %v2638, %v2975
  %v3113 = vmul.f32 %v2643, %v2980
  %v3114 = vmul.f32 %v2648, %v2985
  %v3115 = vmul.f32 %v2653, %v2990
  %v3116 = vmul.f32 %v2658, %v2995
  %v3117 = vmul.f32 %v2663, %v3000
  %v3118 = vmul.f32 %v2668, %v3005
  %v3119 = vmul.f32 %v2673, %v3010
  %v3120 = vmul.f32 %v2678, %v3015
  %v3121 = vmul.f32 %v2683, %v3020
  %v3122 = vmul.f32 %v2688, %v3025
  %v3123 = vmul.f32 %v2693, %v3030
  %v3124 = vmul.f32 %v2698, %v3035
  %v3125 = vmul.f32 %v2703, %v3040
  %v3126 = vmul.f32 %v2708, %v3045
  %v3127 = vmul.f32 %v2713, %v3050
  %v3128 = vmul.f32 %v2718, %v3055
  %v3129 = vmul.f32 %v2723, %v3060
  %v3130 = vmul.f32 %v2728, %v3065
  %v3131 = vmul.f32 %v2733, %v3070
  %v3132 = vmul.f32 %v2738, %v3075
  %v3133 = vmul.f32 %v2743, %v3080
  %v3134 = vmul.f32 %v2748, %v3085
  %vm3135 = vcmask 130048
  %3136 = vst.msk [vmem:[#allocation2] sm:$0xff] %vm3135, %v3087
  %3137 = vst.msk [vmem:[#allocation2 + $0x8] sm:$0xff] %vm3135, %v3088
  %3138 = vst.msk [vmem:[#allocation2 + $0x10] sm:$0xff] %vm3135, %v3089
  %3139 = vst.msk [vmem:[#allocation2 + $0x18] sm:$0xff] %vm3135, %v3090
  %3140 = vst.msk [vmem:[#allocation2 + $0x20] sm:$0xff] %vm3135, %v3091
  %3141 = vst.msk [vmem:[#allocation2 + $0x28] sm:$0xff] %vm3135, %v3092
  %3142 = vst.msk [vmem:[#allocation2 + $0x30] sm:$0xff] %vm3135, %v3093
  %3143 = vst.msk [vmem:[#allocation2 + $0x38] sm:$0xff] %vm3135, %v3094
  %vm3144 = vcmask 261248
  %3145 = vst.msk [vmem:[#allocation2] sm:$0xff] %vm3144, %v3095
  %3146 = vst.msk [vmem:[#allocation2 + $0x8] sm:$0xff] %vm3144, %v3096
  %3147 = vst.msk [vmem:[#allocation2 + $0x10] sm:$0xff] %vm3144, %v3097
  %3148 = vst.msk [vmem:[#allocation2 + $0x18] sm:$0xff] %vm3144, %v3098
  %3149 = vst.msk [vmem:[#allocation2 + $0x20] sm:$0xff] %vm3144, %v3099
  %3150 = vst.msk [vmem:[#allocation2 + $0x28] sm:$0xff] %vm3144, %v3100
  %3151 = vst.msk [vmem:[#allocation2 + $0x30] sm:$0xff] %vm3144, %v3101
  %3152 = vst.msk [vmem:[#allocation2 + $0x38] sm:$0xff] %vm3144, %v3102
  %vm3153 = vcmask 392448
  %3154 = vst.msk [vmem:[#allocation2] sm:$0xff] %vm3153, %v3103
  %3155 = vst.msk [vmem:[#allocation2 + $0x8] sm:$0xff] %vm3153, %v3104
  %3156 = vst.msk [vmem:[#allocation2 + $0x10] sm:$0xff] %vm3153, %v3105
  %3157 = vst.msk [vmem:[#allocation2 + $0x18] sm:$0xff] %vm3153, %v3106
  %3158 = vst.msk [vmem:[#allocation2 + $0x20] sm:$0xff] %vm3153, %v3107
  %3159 = vst.msk [vmem:[#allocation2 + $0x28] sm:$0xff] %vm3153, %v3108
  %3160 = vst.msk [vmem:[#allocation2 + $0x30] sm:$0xff] %vm3153, %v3109
  %3161 = vst.msk [vmem:[#allocation2 + $0x38] sm:$0xff] %vm3153, %v3110
  %vm3162 = vcmask 523648
  %3163 = vst.msk [vmem:[#allocation2] sm:$0xff] %vm3162, %v3111
  %3164 = vst.msk [vmem:[#allocation2 + $0x8] sm:$0xff] %vm3162, %v3112
  %3165 = vst.msk [vmem:[#allocation2 + $0x10] sm:$0xff] %vm3162, %v3113
  %3166 = vst.msk [vmem:[#allocation2 + $0x18] sm:$0xff] %vm3162, %v3114
  %3167 = vst.msk [vmem:[#allocation2 + $0x20] sm:$0xff] %vm3162, %v3115
  %3168 = vst.msk [vmem:[#allocation2 + $0x28] sm:$0xff] %vm3162, %v3116
  %3169 = vst.msk [vmem:[#allocation2 + $0x30] sm:$0xff] %vm3162, %v3117
  %3170 = vst.msk [vmem:[#allocation2 + $0x38] sm:$0xff] %vm3162, %v3118
  %vm3171 = vcmask 654848
  %3172 = vst.msk [vmem:[#allocation2] sm:$0xff] %vm3171, %v3119
  %3173 = vst.msk [vmem:[#allocation2 + $0x8] sm:$0xff] %vm3171, %v3120
  %3174 = vst.msk [vmem:[#allocation2 + $0x10] sm:$0xff] %vm3171, %v3121
  %3175 = vst.msk [vmem:[#allocation2 + $0x18] sm:$0xff] %vm3171, %v3122
  %3176 = vst.msk [vmem:[#allocation2 + $0x20] sm:$0xff] %vm3171, %v3123
  %3177 = vst.msk [vmem:[#allocation2 + $0x28] sm:$0xff] %vm3171, %v3124
  %3178 = vst.msk [vmem:[#allocation2 + $0x30] sm:$0xff] %vm3171, %v3125
  %3179 = vst.msk [vmem:[#allocation2 + $0x38] sm:$0xff] %vm3171, %v3126
  %vm3180 = vcmask 786048
  %3181 = vst.msk [vmem:[#allocation2] sm:$0xff] %vm3180, %v3127
  %3182 = vst.msk [vmem:[#allocation2 + $0x8] sm:$0xff] %vm3180, %v3128
  %3183 = vst.msk [vmem:[#allocation2 + $0x10] sm:$0xff] %vm3180, %v3129
  %3184 = vst.msk [vmem:[#allocation2 + $0x18] sm:$0xff] %vm3180, %v3130
  %3185 = vst.msk [vmem:[#allocation2 + $0x20] sm:$0xff] %vm3180, %v3131
  %3186 = vst.msk [vmem:[#allocation2 + $0x28] sm:$0xff] %vm3180, %v3132
  %3187 = vst.msk [vmem:[#allocation2 + $0x30] sm:$0xff] %vm3180, %v3133
  %3188 = vst.msk [vmem:[#allocation2 + $0x38] sm:$0xff] %vm3180, %v3134
  %v3189 = vld [vmem:[#allocation2] sm:$0xff]
  %v3190 = vld [vmem:[#allocation2 + $0x8] sm:$0xff]
  %v3191 = vld [vmem:[#allocation2 + $0x10] sm:$0xff]
  %v3192 = vld [vmem:[#allocation2 + $0x18] sm:$0xff]
  %v3193 = vld [vmem:[#allocation2 + $0x20] sm:$0xff]
  %v3194 = vld [vmem:[#allocation2 + $0x28] sm:$0xff]
  %v3195 = vld [vmem:[#allocation2 + $0x30] sm:$0xff]
  %v3196 = vld [vmem:[#allocation2 + $0x38] sm:$0xff]
  %v3197 = vld [vmem:[%s6] sm:$0x1]
  %v3199 = vlaneseq
  %v3200 = vshrl.u32 %v3199, 7
  %v3201 = vsub.s32 0, %v3200
  %v3202 = vrot.slane %v3197, %v3201
  %v3204 = vadd.f32 %v3189, %v3202
  %v3205 = vadd.f32 %v3190, %v3202
  %v3206 = vadd.f32 %v3191, %v3202
  %v3207 = vadd.f32 %v3192, %v3202
  %v3208 = vadd.f32 %v3193, %v3202
  %v3209 = vadd.f32 %v3194, %v3202
  %v3210 = vadd.f32 %v3195, %v3202
  %v3211 = vadd.f32 %v3196, %v3202
  %vm3212 = vcmp.gt.f32.partialorder %v3204, 0.0
  %vm3213 = vcmp.gt.f32.partialorder %v3205, 0.0
  %vm3214 = vcmp.gt.f32.partialorder %v3206, 0.0
  %vm3215 = vcmp.gt.f32.partialorder %v3207, 0.0
  %vm3216 = vcmp.gt.f32.partialorder %v3208, 0.0
  %vm3217 = vcmp.gt.f32.partialorder %v3209, 0.0
  %vm3218 = vcmp.gt.f32.partialorder %v3210, 0.0
  %vm3219 = vcmp.gt.f32.partialorder %v3211, 0.0
  %v3220 = vmul.f32 %v3204, 0.01
  %v3221 = vmul.f32 %v3205, 0.01
  %v3222 = vmul.f32 %v3206, 0.01
  %v3223 = vmul.f32 %v3207, 0.01
  %v3224 = vmul.f32 %v3208, 0.01
  %v3225 = vmul.f32 %v3209, 0.01
  %v3226 = vmul.f32 %v3210, 0.01
  %v3227 = vmul.f32 %v3211, 0.01
  %v3228 = vsel %vm3212, %v3204, %v3220
  %v3229 = vsel %vm3213, %v3205, %v3221
  %v3230 = vsel %vm3214, %v3206, %v3222
  %v3231 = vsel %vm3215, %v3207, %v3223
  %v3232 = vsel %vm3216, %v3208, %v3224
  %v3233 = vsel %vm3217, %v3209, %v3225
  %v3234 = vsel %vm3218, %v3210, %v3226
  %v3235 = vsel %vm3219, %v3211, %v3227
  %3244 = vrot.lane.b32.xlu0 %v3228, 80
  %v3245 = vpop.permute.xlu0 %3244
  %3246 = vrot.lane.b32.xlu0 %v3229, 80
  %v3247 = vpop.permute.xlu0 %3246
  %3248 = vrot.lane.b32.xlu0 %v3230, 80
  %v3249 = vpop.permute.xlu0 %3248
  %3250 = vrot.lane.b32.xlu0 %v3231, 80
  %v3251 = vpop.permute.xlu0 %3250
  %3252 = vrot.lane.b32.xlu0 %v3232, 80
  %v3253 = vpop.permute.xlu0 %3252
  %3254 = vrot.lane.b32.xlu0 %v3233, 80
  %v3255 = vpop.permute.xlu0 %3254
  %3256 = vrot.lane.b32.xlu0 %v3234, 80
  %v3257 = vpop.permute.xlu0 %3256
  %3258 = vrot.lane.b32.xlu0 %v3235, 80
  %v3259 = vpop.permute.xlu0 %3258
  %v3268 = vadd.f32 %v3228, %v3245
  %v3269 = vadd.f32 %v3229, %v3247
  %v3270 = vadd.f32 %v3230, %v3249
  %v3271 = vadd.f32 %v3231, %v3251
  %v3272 = vadd.f32 %v3232, %v3253
  %v3273 = vadd.f32 %v3233, %v3255
  %v3274 = vadd.f32 %v3234, %v3257
  %v3275 = vadd.f32 %v3235, %v3259
  %v3276 = vmul.f32 %v3268, 0.5
  %v3277 = vmul.f32 %v3269, 0.5
  %v3278 = vmul.f32 %v3270, 0.5
  %v3279 = vmul.f32 %v3271, 0.5
  %v3280 = vmul.f32 %v3272, 0.5
  %v3281 = vmul.f32 %v3273, 0.5
  %v3282 = vmul.f32 %v3274, 0.5
  %v3283 = vmul.f32 %v3275, 0.5
  %v3284 = vld [vmem:[%s9] sm:$0xff]
  %v3285 = vld [vmem:[%s9 + $0x8] sm:$0xff]
  %v3286 = vld [vmem:[%s9 + $0x10] sm:$0xff]
  %v3287 = vld [vmem:[%s9 + $0x18] sm:$0xff]
  %v3288 = vld [vmem:[%s9 + $0x20] sm:$0xff]
  %v3289 = vld [vmem:[%s9 + $0x28] sm:$0xff]
  %vm3290 = vcmask 392192
  %v3292 = vsel %vm3290, %v3276, 0
  %v3295 = vsel %vm3290, %v3277, 0
  %v3298 = vsel %vm3290, %v3278, 0
  %v3301 = vsel %vm3290, %v3279, 0
  %v3304 = vsel %vm3290, %v3280, 0
  %v3307 = vsel %vm3290, %v3281, 0
  %v3310 = vsel %vm3290, %v3282, 0
  %v3313 = vsel %vm3290, %v3283, 0
  %3315 = vmatprep.subr.mxu0 0.0
  %3316 = vmatpush1.msra.mxu0 0.0
  %3317 = vmatprep.subr.mxu0 0.0
  %3318 = vmatpush1.msra.mxu0 0.0
  %3319 = vmatprep.subr.mxu0 0.0
  %3320 = vmatpush1.msra.mxu0 0.0
  %3321 = vmatprep.subr.mxu0 0.0
  %3322 = vmatpush1.msra.mxu0 0.0
  %3323 = vmatprep.subr.mxu0 0.0
  %3324 = vmatpush1.msra.mxu0 0.0
  %3325 = vmatprep.subr.mxu0 0.0
  %3326 = vmatpush1.msra.mxu0 0.0
  %3327 = vmatprep.subr.mxu0 0.0
  %3328 = vmatpush1.msra.mxu0 0.0
  %3329 = vmatprep.subr.mxu0 0.0
  %3330 = vmatpush1.msra.mxu0 0.0
  %3331 = vmatprep.subr.mxu0 0.0
  %3332 = vmatpush1.msra.mxu0 0.0
  %3333 = vmatprep.subr.mxu0 0.0
  %3334 = vmatpush1.msra.mxu0 0.0
  %3335 = vmatprep.subr.mxu0 0.0
  %3336 = vmatpush1.msra.mxu0 %v3289
  %3337 = vmatprep.subr.mxu0 0.0
  %3338 = vmatpush1.msra.mxu0 %v3288
  %3339 = vmatprep.subr.mxu0 0.0
  %3340 = vmatpush1.msra.mxu0 %v3287
  %3341 = vmatprep.subr.mxu0 0.0
  %3342 = vmatpush1.msra.mxu0 %v3286
  %3343 = vmatprep.subr.mxu0 0.0
  %3344 = vmatpush1.msra.mxu0 %v3285
  %3345 = vmatprep.subr.mxu0 0.0
  %3346 = vmatpush1.msra.mxu0 %v3284
  %3347 = vmatprep.subr.mxu0 0.0
  %3348 = vmatpush2.msra.mxu0 0.0
  %3349 = vmatprep.subr.mxu0 0.0
  %3350 = vmatpush2.msra.mxu0 0.0
  %3351 = vmatprep.subr.mxu0 0.0
  %3352 = vmatpush2.msra.mxu0 0.0
  %3353 = vmatprep.subr.mxu0 0.0
  %3354 = vmatpush2.msra.mxu0 0.0
  %3355 = vmatprep.subr.mxu0 0.0
  %3356 = vmatpush2.msra.mxu0 0.0
  %3357 = vmatprep.subr.mxu0 0.0
  %3358 = vmatpush2.msra.mxu0 0.0
  %3359 = vmatprep.subr.mxu0 0.0
  %3360 = vmatpush2.msra.mxu0 0.0
  %3361 = vmatprep.subr.mxu0 0.0
  %3362 = vmatpush2.msra.mxu0 0.0
  %3363 = vmatprep.subr.mxu0 0.0
  %3364 = vmatpush2.msra.mxu0 0.0
  %3365 = vmatprep.subr.mxu0 0.0
  %3366 = vmatpush2.msra.mxu0 0.0
  %3367 = vmatprep.subr.mxu0 0.0
  %3368 = vmatpush2.msra.mxu0 0.0
  %3369 = vmatprep.subr.mxu0 0.0
  %3370 = vmatpush2.msra.mxu0 0.0
  %3371 = vmatprep.subr.mxu0 0.0
  %3372 = vmatpush2.msra.mxu0 0.0
  %3373 = vmatprep.subr.mxu0 0.0
  %3374 = vmatpush2.msra.mxu0 0.0
  %3375 = vmatprep.subr.mxu0 0.0
  %3376 = vmatpush2.msra.mxu0 0.0
  %3377 = vmatprep.subr.mxu0 0.0
  %3378 = vmatpush2.msra.mxu0 0.0
  %3379 = vmatprep.mubr.f32.mxu0 0.0
  %3380 = vmatmul.mubr.f32.gmra.mxu0 %v3292
  %v3381 = vpop.f32.mrf.mxu0
  %v3382 = vadd.f32 0.0, %v3381
  %v3383 = vpop.f32.mrf.mxu0
  %3384 = vmatprep.mubr.f32.mxu0 0.0
  %3385 = vmatmul.mubr.f32.gmra.mxu0 %v3295
  %v3386 = vpop.f32.mrf.mxu0
  %v3387 = vadd.f32 0.0, %v3386
  %v3388 = vpop.f32.mrf.mxu0
  %3389 = vmatprep.mubr.f32.mxu0 0.0
  %3390 = vmatmul.mubr.f32.gmra.mxu0 %v3298
  %v3391 = vpop.f32.mrf.mxu0
  %v3392 = vadd.f32 0.0, %v3391
  %v3393 = vpop.f32.mrf.mxu0
  %3394 = vmatprep.mubr.f32.mxu0 0.0
  %3395 = vmatmul.mubr.f32.gmra.mxu0 %v3301
  %v3396 = vpop.f32.mrf.mxu0
  %v3397 = vadd.f32 0.0, %v3396
  %v3398 = vpop.f32.mrf.mxu0
  %3399 = vmatprep.mubr.f32.mxu0 0.0
  %3400 = vmatmul.mubr.f32.gmra.mxu0 %v3304
  %v3401 = vpop.f32.mrf.mxu0
  %v3402 = vadd.f32 0.0, %v3401
  %v3403 = vpop.f32.mrf.mxu0
  %3404 = vmatprep.mubr.f32.mxu0 0.0
  %3405 = vmatmul.mubr.f32.gmra.mxu0 %v3307
  %v3406 = vpop.f32.mrf.mxu0
  %v3407 = vadd.f32 0.0, %v3406
  %v3408 = vpop.f32.mrf.mxu0
  %3409 = vmatprep.mubr.f32.mxu0 0.0
  %3410 = vmatmul.mubr.f32.gmra.mxu0 %v3310
  %v3411 = vpop.f32.mrf.mxu0
  %v3412 = vadd.f32 0.0, %v3411
  %v3413 = vpop.f32.mrf.mxu0
  %3414 = vmatprep.mubr.f32.mxu0 0.0
  %3415 = vmatmul.mubr.f32.gmra.mxu0 %v3313
  %v3416 = vpop.f32.mrf.mxu0
  %v3417 = vadd.f32 0.0, %v3416
  %v3418 = vpop.f32.mrf.mxu0
  %3419 = vdwg.mxu0
  %v3420 = vld [vmem:[%s10] sm:$0xff]
  %v3421 = vld [vmem:[%s10 + $0x8] sm:$0xff]
  %v3422 = vld [vmem:[%s10 + $0x10] sm:$0xff]
  %v3423 = vld [vmem:[%s10 + $0x18] sm:$0xff]
  %v3424 = vld [vmem:[%s10 + $0x20] sm:$0xff]
  %v3425 = vld [vmem:[%s10 + $0x28] sm:$0xff]
  %v3426 = vld [vmem:[%s10 + $0x30] sm:$0xff]
  %v3427 = vld [vmem:[%s10 + $0x38] sm:$0xff]
  %v3428 = vld [vmem:[%s10 + $0x40] sm:$0xff]
  %v3429 = vld [vmem:[%s10 + $0x48] sm:$0xff]
  %v3430 = vld [vmem:[%s10 + $0x50] sm:$0xff]
  %v3431 = vld [vmem:[%s10 + $0x58] sm:$0xff]
  %v3432 = vld [vmem:[%s10 + $0x60] sm:$0xff]
  %v3433 = vld [vmem:[%s10 + $0x68] sm:$0xff]
  %v3434 = vld [vmem:[%s10 + $0x70] sm:$0xff]
  %v3435 = vld [vmem:[%s10 + $0x78] sm:$0xff]
  %v3436 = vld [vmem:[%s10 + $0x80] sm:$0xff]
  %v3437 = vld [vmem:[%s10 + $0x88] sm:$0xff]
  %v3438 = vld [vmem:[%s10 + $0x90] sm:$0xff]
  %v3439 = vld [vmem:[%s10 + $0x98] sm:$0xff]
  %v3440 = vld [vmem:[%s10 + $0xa0] sm:$0xff]
  %v3441 = vld [vmem:[%s10 + $0xa8] sm:$0xff]
  %v3442 = vld [vmem:[%s10 + $0xb0] sm:$0xff]
  %v3443 = vld [vmem:[%s10 + $0xb8] sm:$0xff]
  %v3444 = vld [vmem:[%s10 + $0xc0] sm:$0xff]
  %v3445 = vld [vmem:[%s10 + $0xc8] sm:$0xff]
  %v3446 = vld [vmem:[%s10 + $0xd0] sm:$0xff]
  %v3447 = vld [vmem:[%s10 + $0xd8] sm:$0xff]
  %v3448 = vld [vmem:[%s10 + $0xe0] sm:$0xff]
  %v3449 = vld [vmem:[%s10 + $0xe8] sm:$0xff]
  %v3450 = vld [vmem:[%s10 + $0xf0] sm:$0xff]
  %v3451 = vld [vmem:[%s10 + $0xf8] sm:$0xff]
  %v3452 = vld [vmem:[%s10 + $0x100] sm:$0xff]
  %v3453 = vld [vmem:[%s10 + $0x108] sm:$0xff]
  %v3454 = vld [vmem:[%s10 + $0x110] sm:$0xff]
  %v3455 = vld [vmem:[%s10 + $0x118] sm:$0xff]
  %v3456 = vld [vmem:[%s10 + $0x120] sm:$0xff]
  %v3457 = vld [vmem:[%s10 + $0x128] sm:$0xff]
  %v3458 = vld [vmem:[%s10 + $0x130] sm:$0xff]
  %v3459 = vld [vmem:[%s10 + $0x138] sm:$0xff]
  %v3460 = vld [vmem:[%s10 + $0x140] sm:$0xff]
  %v3461 = vld [vmem:[%s10 + $0x148] sm:$0xff]
  %v3462 = vld [vmem:[%s10 + $0x150] sm:$0xff]
  %v3463 = vld [vmem:[%s10 + $0x158] sm:$0xff]
  %v3464 = vld [vmem:[%s10 + $0x160] sm:$0xff]
  %v3465 = vld [vmem:[%s10 + $0x168] sm:$0xff]
  %v3466 = vld [vmem:[%s10 + $0x170] sm:$0xff]
  %v3467 = vld [vmem:[%s10 + $0x178] sm:$0xff]
  %3476 = vrot.lane.b32.xlu0 %v3382, 127
  %v3477 = vpop.permute.xlu0 %3476
  %3478 = vrot.lane.b32.xlu0 %v3387, 127
  %v3479 = vpop.permute.xlu0 %3478
  %3480 = vrot.lane.b32.xlu0 %v3392, 127
  %v3481 = vpop.permute.xlu0 %3480
  %3482 = vrot.lane.b32.xlu0 %v3397, 127
  %v3483 = vpop.permute.xlu0 %3482
  %3484 = vrot.lane.b32.xlu0 %v3402, 127
  %v3485 = vpop.permute.xlu0 %3484
  %3486 = vrot.lane.b32.xlu0 %v3407, 127
  %v3487 = vpop.permute.xlu0 %3486
  %3488 = vrot.lane.b32.xlu0 %v3412, 127
  %v3489 = vpop.permute.xlu0 %3488
  %3490 = vrot.lane.b32.xlu0 %v3417, 127
  %v3491 = vpop.permute.xlu0 %3490
  %3492 = vrot.lane.b32.xlu0 %v3382, 126
  %v3493 = vpop.permute.xlu0 %3492
  %3494 = vrot.lane.b32.xlu0 %v3387, 126
  %v3495 = vpop.permute.xlu0 %3494
  %3496 = vrot.lane.b32.xlu0 %v3392, 126
  %v3497 = vpop.permute.xlu0 %3496
  %3498 = vrot.lane.b32.xlu0 %v3397, 126
  %v3499 = vpop.permute.xlu0 %3498
  %3500 = vrot.lane.b32.xlu0 %v3402, 126
  %v3501 = vpop.permute.xlu0 %3500
  %3502 = vrot.lane.b32.xlu0 %v3407, 126
  %v3503 = vpop.permute.xlu0 %3502
  %3504 = vrot.lane.b32.xlu0 %v3412, 126
  %v3505 = vpop.permute.xlu0 %3504
  %3506 = vrot.lane.b32.xlu0 %v3417, 126
  %v3507 = vpop.permute.xlu0 %3506
  %3508 = vrot.lane.b32.xlu0 %v3382, 125
  %v3509 = vpop.permute.xlu0 %3508
  %3510 = vrot.lane.b32.xlu0 %v3387, 125
  %v3511 = vpop.permute.xlu0 %3510
  %3512 = vrot.lane.b32.xlu0 %v3392, 125
  %v3513 = vpop.permute.xlu0 %3512
  %3514 = vrot.lane.b32.xlu0 %v3397, 125
  %v3515 = vpop.permute.xlu0 %3514
  %3516 = vrot.lane.b32.xlu0 %v3402, 125
  %v3517 = vpop.permute.xlu0 %3516
  %3518 = vrot.lane.b32.xlu0 %v3407, 125
  %v3519 = vpop.permute.xlu0 %3518
  %3520 = vrot.lane.b32.xlu0 %v3412, 125
  %v3521 = vpop.permute.xlu0 %3520
  %3522 = vrot.lane.b32.xlu0 %v3417, 125
  %v3523 = vpop.permute.xlu0 %3522
  %3524 = vrot.lane.b32.xlu0 %v3382, 124
  %v3525 = vpop.permute.xlu0 %3524
  %3526 = vrot.lane.b32.xlu0 %v3387, 124
  %v3527 = vpop.permute.xlu0 %3526
  %3528 = vrot.lane.b32.xlu0 %v3392, 124
  %v3529 = vpop.permute.xlu0 %3528
  %3530 = vrot.lane.b32.xlu0 %v3397, 124
  %v3531 = vpop.permute.xlu0 %3530
  %3532 = vrot.lane.b32.xlu0 %v3402, 124
  %v3533 = vpop.permute.xlu0 %3532
  %3534 = vrot.lane.b32.xlu0 %v3407, 124
  %v3535 = vpop.permute.xlu0 %3534
  %3536 = vrot.lane.b32.xlu0 %v3412, 124
  %v3537 = vpop.permute.xlu0 %3536
  %3538 = vrot.lane.b32.xlu0 %v3417, 124
  %v3539 = vpop.permute.xlu0 %3538
  %3540 = vrot.lane.b32.xlu0 %v3382, 123
  %v3541 = vpop.permute.xlu0 %3540
  %3542 = vrot.lane.b32.xlu0 %v3387, 123
  %v3543 = vpop.permute.xlu0 %3542
  %3544 = vrot.lane.b32.xlu0 %v3392, 123
  %v3545 = vpop.permute.xlu0 %3544
  %3546 = vrot.lane.b32.xlu0 %v3397, 123
  %v3547 = vpop.permute.xlu0 %3546
  %3548 = vrot.lane.b32.xlu0 %v3402, 123
  %v3549 = vpop.permute.xlu0 %3548
  %3550 = vrot.lane.b32.xlu0 %v3407, 123
  %v3551 = vpop.permute.xlu0 %3550
  %3552 = vrot.lane.b32.xlu0 %v3412, 123
  %v3553 = vpop.permute.xlu0 %3552
  %3554 = vrot.lane.b32.xlu0 %v3417, 123
  %v3555 = vpop.permute.xlu0 %3554
  %3556 = vset.pattern.permute.xlu0 96
  %3557 = vperm.xlu0 %3556, %v3382
  %v3558 = vpop.permute.xlu0 %3557
  %3560 = vset.pattern.permute.xlu0 96
  %3561 = vperm.xlu0 %3560, %v3387
  %v3562 = vpop.permute.xlu0 %3561
  %3564 = vset.pattern.permute.xlu0 96
  %3565 = vperm.xlu0 %3564, %v3392
  %v3566 = vpop.permute.xlu0 %3565
  %3568 = vset.pattern.permute.xlu0 96
  %3569 = vperm.xlu0 %3568, %v3397
  %v3570 = vpop.permute.xlu0 %3569
  %3572 = vset.pattern.permute.xlu0 96
  %3573 = vperm.xlu0 %3572, %v3402
  %v3574 = vpop.permute.xlu0 %3573
  %3576 = vset.pattern.permute.xlu0 96
  %3577 = vperm.xlu0 %3576, %v3407
  %v3578 = vpop.permute.xlu0 %3577
  %3580 = vset.pattern.permute.xlu0 96
  %3581 = vperm.xlu0 %3580, %v3412
  %v3582 = vpop.permute.xlu0 %3581
  %3584 = vset.pattern.permute.xlu0 96
  %3585 = vperm.xlu0 %3584, %v3417
  %v3586 = vpop.permute.xlu0 %3585
  %3588 = vset.pattern.permute.xlu0 96
  %3589 = vperm.xlu0 %3588, %v3477
  %v3590 = vpop.permute.xlu0 %3589
  %3592 = vset.pattern.permute.xlu0 96
  %3593 = vperm.xlu0 %3592, %v3479
  %v3594 = vpop.permute.xlu0 %3593
  %3596 = vset.pattern.permute.xlu0 96
  %3597 = vperm.xlu0 %3596, %v3481
  %v3598 = vpop.permute.xlu0 %3597
  %3600 = vset.pattern.permute.xlu0 96
  %3601 = vperm.xlu0 %3600, %v3483
  %v3602 = vpop.permute.xlu0 %3601
  %3604 = vset.pattern.permute.xlu0 96
  %3605 = vperm.xlu0 %3604, %v3485
  %v3606 = vpop.permute.xlu0 %3605
  %3608 = vset.pattern.permute.xlu0 96
  %3609 = vperm.xlu0 %3608, %v3487
  %v3610 = vpop.permute.xlu0 %3609
  %3612 = vset.pattern.permute.xlu0 96
  %3613 = vperm.xlu0 %3612, %v3489
  %v3614 = vpop.permute.xlu0 %3613
  %3616 = vset.pattern.permute.xlu0 96
  %3617 = vperm.xlu0 %3616, %v3491
  %v3618 = vpop.permute.xlu0 %3617
  %3620 = vset.pattern.permute.xlu0 96
  %3621 = vperm.xlu0 %3620, %v3493
  %v3622 = vpop.permute.xlu0 %3621
  %3624 = vset.pattern.permute.xlu0 96
  %3625 = vperm.xlu0 %3624, %v3495
  %v3626 = vpop.permute.xlu0 %3625
  %3628 = vset.pattern.permute.xlu0 96
  %3629 = vperm.xlu0 %3628, %v3497
  %v3630 = vpop.permute.xlu0 %3629
  %3632 = vset.pattern.permute.xlu0 96
  %3633 = vperm.xlu0 %3632, %v3499
  %v3634 = vpop.permute.xlu0 %3633
  %3636 = vset.pattern.permute.xlu0 96
  %3637 = vperm.xlu0 %3636, %v3501
  %v3638 = vpop.permute.xlu0 %3637
  %3640 = vset.pattern.permute.xlu0 96
  %3641 = vperm.xlu0 %3640, %v3503
  %v3642 = vpop.permute.xlu0 %3641
  %3644 = vset.pattern.permute.xlu0 96
  %3645 = vperm.xlu0 %3644, %v3505
  %v3646 = vpop.permute.xlu0 %3645
  %3648 = vset.pattern.permute.xlu0 96
  %3649 = vperm.xlu0 %3648, %v3507
  %v3650 = vpop.permute.xlu0 %3649
  %3652 = vset.pattern.permute.xlu0 96
  %3653 = vperm.xlu0 %3652, %v3509
  %v3654 = vpop.permute.xlu0 %3653
  %3656 = vset.pattern.permute.xlu0 96
  %3657 = vperm.xlu0 %3656, %v3511
  %v3658 = vpop.permute.xlu0 %3657
  %3660 = vset.pattern.permute.xlu0 96
  %3661 = vperm.xlu0 %3660, %v3513
  %v3662 = vpop.permute.xlu0 %3661
  %3664 = vset.pattern.permute.xlu0 96
  %3665 = vperm.xlu0 %3664, %v3515
  %v3666 = vpop.permute.xlu0 %3665
  %3668 = vset.pattern.permute.xlu0 96
  %3669 = vperm.xlu0 %3668, %v3517
  %v3670 = vpop.permute.xlu0 %3669
  %3672 = vset.pattern.permute.xlu0 96
  %3673 = vperm.xlu0 %3672, %v3519
  %v3674 = vpop.permute.xlu0 %3673
  %3676 = vset.pattern.permute.xlu0 96
  %3677 = vperm.xlu0 %3676, %v3521
  %v3678 = vpop.permute.xlu0 %3677
  %3680 = vset.pattern.permute.xlu0 96
  %3681 = vperm.xlu0 %3680, %v3523
  %v3682 = vpop.permute.xlu0 %3681
  %3684 = vset.pattern.permute.xlu0 96
  %3685 = vperm.xlu0 %3684, %v3525
  %v3686 = vpop.permute.xlu0 %3685
  %3688 = vset.pattern.permute.xlu0 96
  %3689 = vperm.xlu0 %3688, %v3527
  %v3690 = vpop.permute.xlu0 %3689
  %3692 = vset.pattern.permute.xlu0 96
  %3693 = vperm.xlu0 %3692, %v3529
  %v3694 = vpop.permute.xlu0 %3693
  %3696 = vset.pattern.permute.xlu0 96
  %3697 = vperm.xlu0 %3696, %v3531
  %v3698 = vpop.permute.xlu0 %3697
  %3700 = vset.pattern.permute.xlu0 96
  %3701 = vperm.xlu0 %3700, %v3533
  %v3702 = vpop.permute.xlu0 %3701
  %3704 = vset.pattern.permute.xlu0 96
  %3705 = vperm.xlu0 %3704, %v3535
  %v3706 = vpop.permute.xlu0 %3705
  %3708 = vset.pattern.permute.xlu0 96
  %3709 = vperm.xlu0 %3708, %v3537
  %v3710 = vpop.permute.xlu0 %3709
  %3712 = vset.pattern.permute.xlu0 96
  %3713 = vperm.xlu0 %3712, %v3539
  %v3714 = vpop.permute.xlu0 %3713
  %3716 = vset.pattern.permute.xlu0 96
  %3717 = vperm.xlu0 %3716, %v3541
  %v3718 = vpop.permute.xlu0 %3717
  %3720 = vset.pattern.permute.xlu0 96
  %3721 = vperm.xlu0 %3720, %v3543
  %v3722 = vpop.permute.xlu0 %3721
  %3724 = vset.pattern.permute.xlu0 96
  %3725 = vperm.xlu0 %3724, %v3545
  %v3726 = vpop.permute.xlu0 %3725
  %3728 = vset.pattern.permute.xlu0 96
  %3729 = vperm.xlu0 %3728, %v3547
  %v3730 = vpop.permute.xlu0 %3729
  %3732 = vset.pattern.permute.xlu0 96
  %3733 = vperm.xlu0 %3732, %v3549
  %v3734 = vpop.permute.xlu0 %3733
  %3736 = vset.pattern.permute.xlu0 96
  %3737 = vperm.xlu0 %3736, %v3551
  %v3738 = vpop.permute.xlu0 %3737
  %3740 = vset.pattern.permute.xlu0 96
  %3741 = vperm.xlu0 %3740, %v3553
  %v3742 = vpop.permute.xlu0 %3741
  %3744 = vset.pattern.permute.xlu0 96
  %3745 = vperm.xlu0 %3744, %v3555
  %v3746 = vpop.permute.xlu0 %3745
  %v3749 = vsel %vm3290, %v3420, 0
  %v3752 = vsel %vm3290, %v3421, 0
  %v3755 = vsel %vm3290, %v3422, 0
  %v3758 = vsel %vm3290, %v3423, 0
  %v3761 = vsel %vm3290, %v3424, 0
  %v3764 = vsel %vm3290, %v3425, 0
  %v3767 = vsel %vm3290, %v3426, 0
  %v3770 = vsel %vm3290, %v3427, 0
  %v3773 = vsel %vm3290, %v3428, 0
  %v3776 = vsel %vm3290, %v3429, 0
  %v3779 = vsel %vm3290, %v3430, 0
  %v3782 = vsel %vm3290, %v3431, 0
  %v3785 = vsel %vm3290, %v3432, 0
  %v3788 = vsel %vm3290, %v3433, 0
  %v3791 = vsel %vm3290, %v3434, 0
  %v3794 = vsel %vm3290, %v3435, 0
  %v3797 = vsel %vm3290, %v3436, 0
  %v3800 = vsel %vm3290, %v3437, 0
  %v3803 = vsel %vm3290, %v3438, 0
  %v3806 = vsel %vm3290, %v3439, 0
  %v3809 = vsel %vm3290, %v3440, 0
  %v3812 = vsel %vm3290, %v3441, 0
  %v3815 = vsel %vm3290, %v3442, 0
  %v3818 = vsel %vm3290, %v3443, 0
  %v3821 = vsel %vm3290, %v3444, 0
  %v3824 = vsel %vm3290, %v3445, 0
  %v3827 = vsel %vm3290, %v3446, 0
  %v3830 = vsel %vm3290, %v3447, 0
  %v3833 = vsel %vm3290, %v3448, 0
  %v3836 = vsel %vm3290, %v3449, 0
  %v3839 = vsel %vm3290, %v3450, 0
  %v3842 = vsel %vm3290, %v3451, 0
  %v3845 = vsel %vm3290, %v3452, 0
  %v3848 = vsel %vm3290, %v3453, 0
  %v3851 = vsel %vm3290, %v3454, 0
  %v3854 = vsel %vm3290, %v3455, 0
  %v3857 = vsel %vm3290, %v3456, 0
  %v3860 = vsel %vm3290, %v3457, 0
  %v3863 = vsel %vm3290, %v3458, 0
  %v3866 = vsel %vm3290, %v3459, 0
  %v3869 = vsel %vm3290, %v3460, 0
  %v3872 = vsel %vm3290, %v3461, 0
  %v3875 = vsel %vm3290, %v3462, 0
  %v3878 = vsel %vm3290, %v3463, 0
  %v3881 = vsel %vm3290, %v3464, 0
  %v3884 = vsel %vm3290, %v3465, 0
  %v3887 = vsel %vm3290, %v3466, 0
  %v3890 = vsel %vm3290, %v3467, 0
  %3892 = vmatprep.subr.mxu0 0.0
  %3893 = vmatpush1.xpose.msra.mxu0 0.0
  %3894 = vmatprep.subr.mxu0 0.0
  %3895 = vmatpush1.xpose.msra.mxu0 0.0
  %3896 = vmatprep.subr.mxu0 0.0
  %3897 = vmatpush1.xpose.msra.mxu0 0.0
  %3898 = vmatprep.subr.mxu0 0.0
  %3899 = vmatpush1.xpose.msra.mxu0 0.0
  %3900 = vmatprep.subr.mxu0 0.0
  %3901 = vmatpush1.xpose.msra.mxu0 0.0
  %3902 = vmatprep.subr.mxu0 0.0
  %3903 = vmatpush1.xpose.msra.mxu0 0.0
  %3904 = vmatprep.subr.mxu0 0.0
  %3905 = vmatpush1.xpose.msra.mxu0 0.0
  %3906 = vmatprep.subr.mxu0 0.0
  %3907 = vmatpush1.xpose.msra.mxu0 0.0
  %3908 = vmatprep.subr.mxu0 0.0
  %3909 = vmatpush1.xpose.msra.mxu0 %v3313
  %3910 = vmatprep.subr.mxu0 0.0
  %3911 = vmatpush1.xpose.msra.mxu0 %v3310
  %3912 = vmatprep.subr.mxu0 0.0
  %3913 = vmatpush1.xpose.msra.mxu0 %v3307
  %3914 = vmatprep.subr.mxu0 0.0
  %3915 = vmatpush1.xpose.msra.mxu0 %v3304
  %3916 = vmatprep.subr.mxu0 0.0
  %3917 = vmatpush1.xpose.msra.mxu0 %v3301
  %3918 = vmatprep.subr.mxu0 0.0
  %3919 = vmatpush1.xpose.msra.mxu0 %v3298
  %3920 = vmatprep.subr.mxu0 0.0
  %3921 = vmatpush1.xpose.msra.mxu0 %v3295
  %3922 = vmatprep.subr.mxu0 0.0
  %3923 = vmatpush1.xpose.msra.mxu0 %v3292
  %3924 = vmatprep.subr.mxu0 0.0
  %3925 = vmatpush2.xpose.msra.mxu0 0.0
  %3926 = vmatprep.subr.mxu0 0.0
  %3927 = vmatpush2.xpose.msra.mxu0 0.0
  %3928 = vmatprep.subr.mxu0 0.0
  %3929 = vmatpush2.xpose.msra.mxu0 0.0
  %3930 = vmatprep.subr.mxu0 0.0
  %3931 = vmatpush2.xpose.msra.mxu0 0.0
  %3932 = vmatprep.subr.mxu0 0.0
  %3933 = vmatpush2.xpose.msra.mxu0 0.0
  %3934 = vmatprep.subr.mxu0 0.0
  %3935 = vmatpush2.xpose.msra.mxu0 0.0
  %3936 = vmatprep.subr.mxu0 0.0
  %3937 = vmatpush2.xpose.msra.mxu0 0.0
  %3938 = vmatprep.subr.mxu0 0.0
  %3939 = vmatpush2.xpose.msra.mxu0 0.0
  %3940 = vmatprep.subr.mxu0 0.0
  %3941 = vmatpush2.xpose.msra.mxu0 0.0
  %3942 = vmatprep.subr.mxu0 0.0
  %3943 = vmatpush2.xpose.msra.mxu0 0.0
  %3944 = vmatprep.subr.mxu0 0.0
  %3945 = vmatpush2.xpose.msra.mxu0 0.0
  %3946 = vmatprep.subr.mxu0 0.0
  %3947 = vmatpush2.xpose.msra.mxu0 0.0
  %3948 = vmatprep.subr.mxu0 0.0
  %3949 = vmatpush2.xpose.msra.mxu0 0.0
  %3950 = vmatprep.subr.mxu0 0.0
  %3951 = vmatpush2.xpose.msra.mxu0 0.0
  %3952 = vmatprep.subr.mxu0 0.0
  %3953 = vmatpush2.xpose.msra.mxu0 0.0
  %3954 = vmatprep.subr.mxu0 0.0
  %3955 = vmatpush2.xpose.msra.mxu0 0.0
  %3956 = vmatprep.mubr.f32.mxu0 0.0
  %3957 = vmatmul.mubr.f32.gmra.mxu0 %v3749
  %v3958 = vpop.f32.mrf.mxu0
  %v3959 = vadd.f32 %v3558, %v3958
  %v3960 = vpop.f32.mrf.mxu0
  %3961 = vmatprep.mubr.f32.mxu0 0.0
  %3962 = vmatmul.mubr.f32.gmra.mxu0 %v3752
  %v3963 = vpop.f32.mrf.mxu0
  %v3964 = vadd.f32 %v3562, %v3963
  %v3965 = vpop.f32.mrf.mxu0
  %3966 = vmatprep.mubr.f32.mxu0 0.0
  %3967 = vmatmul.mubr.f32.gmra.mxu0 %v3755
  %v3968 = vpop.f32.mrf.mxu0
  %v3969 = vadd.f32 %v3566, %v3968
  %v3970 = vpop.f32.mrf.mxu0
  %3971 = vmatprep.mubr.f32.mxu0 0.0
  %3972 = vmatmul.mubr.f32.gmra.mxu0 %v3758
  %v3973 = vpop.f32.mrf.mxu0
  %v3974 = vadd.f32 %v3570, %v3973
  %v3975 = vpop.f32.mrf.mxu0
  %3976 = vmatprep.mubr.f32.mxu0 0.0
  %3977 = vmatmul.mubr.f32.gmra.mxu0 %v3761
  %v3978 = vpop.f32.mrf.mxu0
  %v3979 = vadd.f32 %v3574, %v3978
  %v3980 = vpop.f32.mrf.mxu0
  %3981 = vmatprep.mubr.f32.mxu0 0.0
  %3982 = vmatmul.mubr.f32.gmra.mxu0 %v3764
  %v3983 = vpop.f32.mrf.mxu0
  %v3984 = vadd.f32 %v3578, %v3983
  %v3985 = vpop.f32.mrf.mxu0
  %3986 = vmatprep.mubr.f32.mxu0 0.0
  %3987 = vmatmul.mubr.f32.gmra.mxu0 %v3767
  %v3988 = vpop.f32.mrf.mxu0
  %v3989 = vadd.f32 %v3582, %v3988
  %v3990 = vpop.f32.mrf.mxu0
  %3991 = vmatprep.mubr.f32.mxu0 0.0
  %3992 = vmatmul.mubr.f32.gmra.mxu0 %v3770
  %v3993 = vpop.f32.mrf.mxu0
  %v3994 = vadd.f32 %v3586, %v3993
  %v3995 = vpop.f32.mrf.mxu0
  %3996 = vmatprep.mubr.f32.mxu0 0.0
  %3997 = vmatmul.mubr.f32.gmra.mxu0 %v3773
  %v3998 = vpop.f32.mrf.mxu0
  %v3999 = vadd.f32 %v3590, %v3998
  %v4000 = vpop.f32.mrf.mxu0
  %4001 = vmatprep.mubr.f32.mxu0 0.0
  %4002 = vmatmul.mubr.f32.gmra.mxu0 %v3776
  %v4003 = vpop.f32.mrf.mxu0
  %v4004 = vadd.f32 %v3594, %v4003
  %v4005 = vpop.f32.mrf.mxu0
  %4006 = vmatprep.mubr.f32.mxu0 0.0
  %4007 = vmatmul.mubr.f32.gmra.mxu0 %v3779
  %v4008 = vpop.f32.mrf.mxu0
  %v4009 = vadd.f32 %v3598, %v4008
  %v4010 = vpop.f32.mrf.mxu0
  %4011 = vmatprep.mubr.f32.mxu0 0.0
  %4012 = vmatmul.mubr.f32.gmra.mxu0 %v3782
  %v4013 = vpop.f32.mrf.mxu0
  %v4014 = vadd.f32 %v3602, %v4013
  %v4015 = vpop.f32.mrf.mxu0
  %4016 = vmatprep.mubr.f32.mxu0 0.0
  %4017 = vmatmul.mubr.f32.gmra.mxu0 %v3785
  %v4018 = vpop.f32.mrf.mxu0
  %v4019 = vadd.f32 %v3606, %v4018
  %v4020 = vpop.f32.mrf.mxu0
  %4021 = vmatprep.mubr.f32.mxu0 0.0
  %4022 = vmatmul.mubr.f32.gmra.mxu0 %v3788
  %v4023 = vpop.f32.mrf.mxu0
  %v4024 = vadd.f32 %v3610, %v4023
  %v4025 = vpop.f32.mrf.mxu0
  %4026 = vmatprep.mubr.f32.mxu0 0.0
  %4027 = vmatmul.mubr.f32.gmra.mxu0 %v3791
  %v4028 = vpop.f32.mrf.mxu0
  %v4029 = vadd.f32 %v3614, %v4028
  %v4030 = vpop.f32.mrf.mxu0
  %4031 = vmatprep.mubr.f32.mxu0 0.0
  %4032 = vmatmul.mubr.f32.gmra.mxu0 %v3794
  %v4033 = vpop.f32.mrf.mxu0
  %v4034 = vadd.f32 %v3618, %v4033
  %v4035 = vpop.f32.mrf.mxu0
  %4036 = vmatprep.mubr.f32.mxu0 0.0
  %4037 = vmatmul.mubr.f32.gmra.mxu0 %v3797
  %v4038 = vpop.f32.mrf.mxu0
  %v4039 = vadd.f32 %v3622, %v4038
  %v4040 = vpop.f32.mrf.mxu0
  %4041 = vmatprep.mubr.f32.mxu0 0.0
  %4042 = vmatmul.mubr.f32.gmra.mxu0 %v3800
  %v4043 = vpop.f32.mrf.mxu0
  %v4044 = vadd.f32 %v3626, %v4043
  %v4045 = vpop.f32.mrf.mxu0
  %4046 = vmatprep.mubr.f32.mxu0 0.0
  %4047 = vmatmul.mubr.f32.gmra.mxu0 %v3803
  %v4048 = vpop.f32.mrf.mxu0
  %v4049 = vadd.f32 %v3630, %v4048
  %v4050 = vpop.f32.mrf.mxu0
  %4051 = vmatprep.mubr.f32.mxu0 0.0
  %4052 = vmatmul.mubr.f32.gmra.mxu0 %v3806
  %v4053 = vpop.f32.mrf.mxu0
  %v4054 = vadd.f32 %v3634, %v4053
  %v4055 = vpop.f32.mrf.mxu0
  %4056 = vmatprep.mubr.f32.mxu0 0.0
  %4057 = vmatmul.mubr.f32.gmra.mxu0 %v3809
  %v4058 = vpop.f32.mrf.mxu0
  %v4059 = vadd.f32 %v3638, %v4058
  %v4060 = vpop.f32.mrf.mxu0
  %4061 = vmatprep.mubr.f32.mxu0 0.0
  %4062 = vmatmul.mubr.f32.gmra.mxu0 %v3812
  %v4063 = vpop.f32.mrf.mxu0
  %v4064 = vadd.f32 %v3642, %v4063
  %v4065 = vpop.f32.mrf.mxu0
  %4066 = vmatprep.mubr.f32.mxu0 0.0
  %4067 = vmatmul.mubr.f32.gmra.mxu0 %v3815
  %v4068 = vpop.f32.mrf.mxu0
  %v4069 = vadd.f32 %v3646, %v4068
  %v4070 = vpop.f32.mrf.mxu0
  %4071 = vmatprep.mubr.f32.mxu0 0.0
  %4072 = vmatmul.mubr.f32.gmra.mxu0 %v3818
  %v4073 = vpop.f32.mrf.mxu0
  %v4074 = vadd.f32 %v3650, %v4073
  %v4075 = vpop.f32.mrf.mxu0
  %4076 = vmatprep.mubr.f32.mxu0 0.0
  %4077 = vmatmul.mubr.f32.gmra.mxu0 %v3821
  %v4078 = vpop.f32.mrf.mxu0
  %v4079 = vadd.f32 %v3654, %v4078
  %v4080 = vpop.f32.mrf.mxu0
  %4081 = vmatprep.mubr.f32.mxu0 0.0
  %4082 = vmatmul.mubr.f32.gmra.mxu0 %v3824
  %v4083 = vpop.f32.mrf.mxu0
  %v4084 = vadd.f32 %v3658, %v4083
  %v4085 = vpop.f32.mrf.mxu0
  %4086 = vmatprep.mubr.f32.mxu0 0.0
  %4087 = vmatmul.mubr.f32.gmra.mxu0 %v3827
  %v4088 = vpop.f32.mrf.mxu0
  %v4089 = vadd.f32 %v3662, %v4088
  %v4090 = vpop.f32.mrf.mxu0
  %4091 = vmatprep.mubr.f32.mxu0 0.0
  %4092 = vmatmul.mubr.f32.gmra.mxu0 %v3830
  %v4093 = vpop.f32.mrf.mxu0
  %v4094 = vadd.f32 %v3666, %v4093
  %v4095 = vpop.f32.mrf.mxu0
  %4096 = vmatprep.mubr.f32.mxu0 0.0
  %4097 = vmatmul.mubr.f32.gmra.mxu0 %v3833
  %v4098 = vpop.f32.mrf.mxu0
  %v4099 = vadd.f32 %v3670, %v4098
  %v4100 = vpop.f32.mrf.mxu0
  %4101 = vmatprep.mubr.f32.mxu0 0.0
  %4102 = vmatmul.mubr.f32.gmra.mxu0 %v3836
  %v4103 = vpop.f32.mrf.mxu0
  %v4104 = vadd.f32 %v3674, %v4103
  %v4105 = vpop.f32.mrf.mxu0
  %4106 = vmatprep.mubr.f32.mxu0 0.0
  %4107 = vmatmul.mubr.f32.gmra.mxu0 %v3839
  %v4108 = vpop.f32.mrf.mxu0
  %v4109 = vadd.f32 %v3678, %v4108
  %v4110 = vpop.f32.mrf.mxu0
  %4111 = vmatprep.mubr.f32.mxu0 0.0
  %4112 = vmatmul.mubr.f32.gmra.mxu0 %v3842
  %v4113 = vpop.f32.mrf.mxu0
  %v4114 = vadd.f32 %v3682, %v4113
  %v4115 = vpop.f32.mrf.mxu0
  %4116 = vmatprep.mubr.f32.mxu0 0.0
  %4117 = vmatmul.mubr.f32.gmra.mxu0 %v3845
  %v4118 = vpop.f32.mrf.mxu0
  %v4119 = vadd.f32 %v3686, %v4118
  %v4120 = vpop.f32.mrf.mxu0
  %4121 = vmatprep.mubr.f32.mxu0 0.0
  %4122 = vmatmul.mubr.f32.gmra.mxu0 %v3848
  %v4123 = vpop.f32.mrf.mxu0
  %v4124 = vadd.f32 %v3690, %v4123
  %v4125 = vpop.f32.mrf.mxu0
  %4126 = vmatprep.mubr.f32.mxu0 0.0
  %4127 = vmatmul.mubr.f32.gmra.mxu0 %v3851
  %v4128 = vpop.f32.mrf.mxu0
  %v4129 = vadd.f32 %v3694, %v4128
  %v4130 = vpop.f32.mrf.mxu0
  %4131 = vmatprep.mubr.f32.mxu0 0.0
  %4132 = vmatmul.mubr.f32.gmra.mxu0 %v3854
  %v4133 = vpop.f32.mrf.mxu0
  %v4134 = vadd.f32 %v3698, %v4133
  %v4135 = vpop.f32.mrf.mxu0
  %4136 = vmatprep.mubr.f32.mxu0 0.0
  %4137 = vmatmul.mubr.f32.gmra.mxu0 %v3857
  %v4138 = vpop.f32.mrf.mxu0
  %v4139 = vadd.f32 %v3702, %v4138
  %v4140 = vpop.f32.mrf.mxu0
  %4141 = vmatprep.mubr.f32.mxu0 0.0
  %4142 = vmatmul.mubr.f32.gmra.mxu0 %v3860
  %v4143 = vpop.f32.mrf.mxu0
  %v4144 = vadd.f32 %v3706, %v4143
  %v4145 = vpop.f32.mrf.mxu0
  %4146 = vmatprep.mubr.f32.mxu0 0.0
  %4147 = vmatmul.mubr.f32.gmra.mxu0 %v3863
  %v4148 = vpop.f32.mrf.mxu0
  %v4149 = vadd.f32 %v3710, %v4148
  %v4150 = vpop.f32.mrf.mxu0
  %4151 = vmatprep.mubr.f32.mxu0 0.0
  %4152 = vmatmul.mubr.f32.gmra.mxu0 %v3866
  %v4153 = vpop.f32.mrf.mxu0
  %v4154 = vadd.f32 %v3714, %v4153
  %v4155 = vpop.f32.mrf.mxu0
  %4156 = vmatprep.mubr.f32.mxu0 0.0
  %4157 = vmatmul.mubr.f32.gmra.mxu0 %v3869
  %v4158 = vpop.f32.mrf.mxu0
  %v4159 = vadd.f32 %v3718, %v4158
  %v4160 = vpop.f32.mrf.mxu0
  %4161 = vmatprep.mubr.f32.mxu0 0.0
  %4162 = vmatmul.mubr.f32.gmra.mxu0 %v3872
  %v4163 = vpop.f32.mrf.mxu0
  %v4164 = vadd.f32 %v3722, %v4163
  %v4165 = vpop.f32.mrf.mxu0
  %4166 = vmatprep.mubr.f32.mxu0 0.0
  %4167 = vmatmul.mubr.f32.gmra.mxu0 %v3875
  %v4168 = vpop.f32.mrf.mxu0
  %v4169 = vadd.f32 %v3726, %v4168
  %v4170 = vpop.f32.mrf.mxu0
  %4171 = vmatprep.mubr.f32.mxu0 0.0
  %4172 = vmatmul.mubr.f32.gmra.mxu0 %v3878
  %v4173 = vpop.f32.mrf.mxu0
  %v4174 = vadd.f32 %v3730, %v4173
  %v4175 = vpop.f32.mrf.mxu0
  %4176 = vmatprep.mubr.f32.mxu0 0.0
  %4177 = vmatmul.mubr.f32.gmra.mxu0 %v3881
  %v4178 = vpop.f32.mrf.mxu0
  %v4179 = vadd.f32 %v3734, %v4178
  %v4180 = vpop.f32.mrf.mxu0
  %4181 = vmatprep.mubr.f32.mxu0 0.0
  %4182 = vmatmul.mubr.f32.gmra.mxu0 %v3884
  %v4183 = vpop.f32.mrf.mxu0
  %v4184 = vadd.f32 %v3738, %v4183
  %v4185 = vpop.f32.mrf.mxu0
  %4186 = vmatprep.mubr.f32.mxu0 0.0
  %4187 = vmatmul.mubr.f32.gmra.mxu0 %v3887
  %v4188 = vpop.f32.mrf.mxu0
  %v4189 = vadd.f32 %v3742, %v4188
  %v4190 = vpop.f32.mrf.mxu0
  %4191 = vmatprep.mubr.f32.mxu0 0.0
  %4192 = vmatmul.mubr.f32.gmra.mxu0 %v3890
  %v4193 = vpop.f32.mrf.mxu0
  %v4194 = vadd.f32 %v3746, %v4193
  %v4195 = vpop.f32.mrf.mxu0
  %4196 = vdwg.mxu0
  %vm4197 = vcmp.gt.f32.partialorder %v3959, 0.0
  %vm4198 = vcmp.gt.f32.partialorder %v3964, 0.0
  %vm4199 = vcmp.gt.f32.partialorder %v3969, 0.0
  %vm4200 = vcmp.gt.f32.partialorder %v3974, 0.0
  %vm4201 = vcmp.gt.f32.partialorder %v3979, 0.0
  %vm4202 = vcmp.gt.f32.partialorder %v3984, 0.0
  %vm4203 = vcmp.gt.f32.partialorder %v3989, 0.0
  %vm4204 = vcmp.gt.f32.partialorder %v3994, 0.0
  %vm4205 = vcmp.gt.f32.partialorder %v3999, 0.0
  %vm4206 = vcmp.gt.f32.partialorder %v4004, 0.0
  %vm4207 = vcmp.gt.f32.partialorder %v4009, 0.0
  %vm4208 = vcmp.gt.f32.partialorder %v4014, 0.0
  %vm4209 = vcmp.gt.f32.partialorder %v4019, 0.0
  %vm4210 = vcmp.gt.f32.partialorder %v4024, 0.0
  %vm4211 = vcmp.gt.f32.partialorder %v4029, 0.0
  %vm4212 = vcmp.gt.f32.partialorder %v4034, 0.0
  %vm4213 = vcmp.gt.f32.partialorder %v4039, 0.0
  %vm4214 = vcmp.gt.f32.partialorder %v4044, 0.0
  %vm4215 = vcmp.gt.f32.partialorder %v4049, 0.0
  %vm4216 = vcmp.gt.f32.partialorder %v4054, 0.0
  %vm4217 = vcmp.gt.f32.partialorder %v4059, 0.0
  %vm4218 = vcmp.gt.f32.partialorder %v4064, 0.0
  %vm4219 = vcmp.gt.f32.partialorder %v4069, 0.0
  %vm4220 = vcmp.gt.f32.partialorder %v4074, 0.0
  %vm4221 = vcmp.gt.f32.partialorder %v4079, 0.0
  %vm4222 = vcmp.gt.f32.partialorder %v4084, 0.0
  %vm4223 = vcmp.gt.f32.partialorder %v4089, 0.0
  %vm4224 = vcmp.gt.f32.partialorder %v4094, 0.0
  %vm4225 = vcmp.gt.f32.partialorder %v4099, 0.0
  %vm4226 = vcmp.gt.f32.partialorder %v4104, 0.0
  %vm4227 = vcmp.gt.f32.partialorder %v4109, 0.0
  %vm4228 = vcmp.gt.f32.partialorder %v4114, 0.0
  %vm4229 = vcmp.gt.f32.partialorder %v4119, 0.0
  %vm4230 = vcmp.gt.f32.partialorder %v4124, 0.0
  %vm4231 = vcmp.gt.f32.partialorder %v4129, 0.0
  %vm4232 = vcmp.gt.f32.partialorder %v4134, 0.0
  %vm4233 = vcmp.gt.f32.partialorder %v4139, 0.0
  %vm4234 = vcmp.gt.f32.partialorder %v4144, 0.0
  %vm4235 = vcmp.gt.f32.partialorder %v4149, 0.0
  %vm4236 = vcmp.gt.f32.partialorder %v4154, 0.0
  %vm4237 = vcmp.gt.f32.partialorder %v4159, 0.0
  %vm4238 = vcmp.gt.f32.partialorder %v4164, 0.0
  %vm4239 = vcmp.gt.f32.partialorder %v4169, 0.0
  %vm4240 = vcmp.gt.f32.partialorder %v4174, 0.0
  %vm4241 = vcmp.gt.f32.partialorder %v4179, 0.0
  %vm4242 = vcmp.gt.f32.partialorder %v4184, 0.0
  %vm4243 = vcmp.gt.f32.partialorder %v4189, 0.0
  %vm4244 = vcmp.gt.f32.partialorder %v4194, 0.0
  %v4245 = vmul.f32 %v3959, 0.2
  %v4246 = vmul.f32 %v3964, 0.2
  %v4247 = vmul.f32 %v3969, 0.2
  %v4248 = vmul.f32 %v3974, 0.2
  %v4249 = vmul.f32 %v3979, 0.2
  %v4250 = vmul.f32 %v3984, 0.2
  %v4251 = vmul.f32 %v3989, 0.2
  %v4252 = vmul.f32 %v3994, 0.2
  %v4253 = vmul.f32 %v3999, 0.2
  %v4254 = vmul.f32 %v4004, 0.2
  %v4255 = vmul.f32 %v4009, 0.2
  %v4256 = vmul.f32 %v4014, 0.2
  %v4257 = vmul.f32 %v4019, 0.2
  %v4258 = vmul.f32 %v4024, 0.2
  %v4259 = vmul.f32 %v4029, 0.2
  %v4260 = vmul.f32 %v4034, 0.2
  %v4261 = vmul.f32 %v4039, 0.2
  %v4262 = vmul.f32 %v4044, 0.2
  %v4263 = vmul.f32 %v4049, 0.2
  %v4264 = vmul.f32 %v4054, 0.2
  %v4265 = vmul.f32 %v4059, 0.2
  %v4266 = vmul.f32 %v4064, 0.2
  %v4267 = vmul.f32 %v4069, 0.2
  %v4268 = vmul.f32 %v4074, 0.2
  %v4269 = vmul.f32 %v4079, 0.2
  %v4270 = vmul.f32 %v4084, 0.2
  %v4271 = vmul.f32 %v4089, 0.2
  %v4272 = vmul.f32 %v4094, 0.2
  %v4273 = vmul.f32 %v4099, 0.2
  %v4274 = vmul.f32 %v4104, 0.2
  %v4275 = vmul.f32 %v4109, 0.2
  %v4276 = vmul.f32 %v4114, 0.2
  %v4277 = vmul.f32 %v4119, 0.2
  %v4278 = vmul.f32 %v4124, 0.2
  %v4279 = vmul.f32 %v4129, 0.2
  %v4280 = vmul.f32 %v4134, 0.2
  %v4281 = vmul.f32 %v4139, 0.2
  %v4282 = vmul.f32 %v4144, 0.2
  %v4283 = vmul.f32 %v4149, 0.2
  %v4284 = vmul.f32 %v4154, 0.2
  %v4285 = vmul.f32 %v4159, 0.2
  %v4286 = vmul.f32 %v4164, 0.2
  %v4287 = vmul.f32 %v4169, 0.2
  %v4288 = vmul.f32 %v4174, 0.2
  %v4289 = vmul.f32 %v4179, 0.2
  %v4290 = vmul.f32 %v4184, 0.2
  %v4291 = vmul.f32 %v4189, 0.2
  %v4292 = vmul.f32 %v4194, 0.2
  %v4293 = vsel %vm4197, %v3959, %v4245
  %v4294 = vsel %vm4198, %v3964, %v4246
  %v4295 = vsel %vm4199, %v3969, %v4247
  %v4296 = vsel %vm4200, %v3974, %v4248
  %v4297 = vsel %vm4201, %v3979, %v4249
  %v4298 = vsel %vm4202, %v3984, %v4250
  %v4299 = vsel %vm4203, %v3989, %v4251
  %v4300 = vsel %vm4204, %v3994, %v4252
  %v4301 = vsel %vm4205, %v3999, %v4253
  %v4302 = vsel %vm4206, %v4004, %v4254
  %v4303 = vsel %vm4207, %v4009, %v4255
  %v4304 = vsel %vm4208, %v4014, %v4256
  %v4305 = vsel %vm4209, %v4019, %v4257
  %v4306 = vsel %vm4210, %v4024, %v4258
  %v4307 = vsel %vm4211, %v4029, %v4259
  %v4308 = vsel %vm4212, %v4034, %v4260
  %v4309 = vsel %vm4213, %v4039, %v4261
  %v4310 = vsel %vm4214, %v4044, %v4262
  %v4311 = vsel %vm4215, %v4049, %v4263
  %v4312 = vsel %vm4216, %v4054, %v4264
  %v4313 = vsel %vm4217, %v4059, %v4265
  %v4314 = vsel %vm4218, %v4064, %v4266
  %v4315 = vsel %vm4219, %v4069, %v4267
  %v4316 = vsel %vm4220, %v4074, %v4268
  %v4317 = vsel %vm4221, %v4079, %v4269
  %v4318 = vsel %vm4222, %v4084, %v4270
  %v4319 = vsel %vm4223, %v4089, %v4271
  %v4320 = vsel %vm4224, %v4094, %v4272
  %v4321 = vsel %vm4225, %v4099, %v4273
  %v4322 = vsel %vm4226, %v4104, %v4274
  %v4323 = vsel %vm4227, %v4109, %v4275
  %v4324 = vsel %vm4228, %v4114, %v4276
  %v4325 = vsel %vm4229, %v4119, %v4277
  %v4326 = vsel %vm4230, %v4124, %v4278
  %v4327 = vsel %vm4231, %v4129, %v4279
  %v4328 = vsel %vm4232, %v4134, %v4280
  %v4329 = vsel %vm4233, %v4139, %v4281
  %v4330 = vsel %vm4234, %v4144, %v4282
  %v4331 = vsel %vm4235, %v4149, %v4283
  %v4332 = vsel %vm4236, %v4154, %v4284
  %v4333 = vsel %vm4237, %v4159, %v4285
  %v4334 = vsel %vm4238, %v4164, %v4286
  %v4335 = vsel %vm4239, %v4169, %v4287
  %v4336 = vsel %vm4240, %v4174, %v4288
  %v4337 = vsel %vm4241, %v4179, %v4289
  %v4338 = vsel %vm4242, %v4184, %v4290
  %v4339 = vsel %vm4243, %v4189, %v4291
  %v4340 = vsel %vm4244, %v4194, %v4292
  %v4341 = vld [vmem:[%s13] sm:$0xff]
  %v4342 = vld [vmem:[%s13 + $0x8] sm:$0xff]
  %v4343 = vld [vmem:[%s13 + $0x10] sm:$0xff]
  %v4344 = vld [vmem:[%s13 + $0x18] sm:$0xff]
  %v4345 = vld [vmem:[%s13 + $0x20] sm:$0xff]
  %v4346 = vld [vmem:[%s13 + $0x28] sm:$0xff]
  %v4347 = vld [vmem:[%s13 + $0x30] sm:$0xff]
  %v4348 = vld [vmem:[%s13 + $0x38] sm:$0xff]
  %v4349 = vld [vmem:[%s13 + $0x40] sm:$0xff]
  %v4350 = vld [vmem:[%s13 + $0x48] sm:$0xff]
  %v4351 = vld [vmem:[%s13 + $0x50] sm:$0xff]
  %v4352 = vld [vmem:[%s13 + $0x58] sm:$0xff]
  %v4353 = vld [vmem:[%s13 + $0x60] sm:$0xff]
  %v4354 = vld [vmem:[%s13 + $0x68] sm:$0xff]
  %v4355 = vld [vmem:[%s13 + $0x70] sm:$0xff]
  %v4356 = vld [vmem:[%s13 + $0x78] sm:$0xff]
  %v4357 = vld [vmem:[%s13 + $0x80] sm:$0xff]
  %v4358 = vld [vmem:[%s13 + $0x88] sm:$0xff]
  %v4359 = vld [vmem:[%s13 + $0x90] sm:$0xff]
  %v4360 = vld [vmem:[%s13 + $0x98] sm:$0xff]
  %v4361 = vld [vmem:[%s13 + $0xa0] sm:$0xff]
  %v4362 = vld [vmem:[%s13 + $0xa8] sm:$0xff]
  %v4363 = vld [vmem:[%s13 + $0xb0] sm:$0xff]
  %v4364 = vld [vmem:[%s13 + $0xb8] sm:$0xff]
  %v4365 = vld [vmem:[%s13 + $0xc0] sm:$0xff]
  %v4366 = vld [vmem:[%s13 + $0xc8] sm:$0xff]
  %v4367 = vld [vmem:[%s13 + $0xd0] sm:$0xff]
  %v4368 = vld [vmem:[%s13 + $0xd8] sm:$0xff]
  %v4369 = vld [vmem:[%s13 + $0xe0] sm:$0xff]
  %v4370 = vld [vmem:[%s13 + $0xe8] sm:$0xff]
  %v4371 = vld [vmem:[%s13 + $0xf0] sm:$0xff]
  %v4372 = vld [vmem:[%s13 + $0xf8] sm:$0xff]
  %v4373 = vld [vmem:[%s13 + $0x100] sm:$0xff]
  %v4374 = vld [vmem:[%s13 + $0x108] sm:$0xff]
  %v4375 = vld [vmem:[%s13 + $0x110] sm:$0xff]
  %v4376 = vld [vmem:[%s13 + $0x118] sm:$0xff]
  %v4377 = vld [vmem:[%s13 + $0x120] sm:$0xff]
  %v4378 = vld [vmem:[%s13 + $0x128] sm:$0xff]
  %v4379 = vld [vmem:[%s13 + $0x130] sm:$0xff]
  %v4380 = vld [vmem:[%s13 + $0x138] sm:$0xff]
  %v4381 = vld [vmem:[%s13 + $0x140] sm:$0xff]
  %v4382 = vld [vmem:[%s13 + $0x148] sm:$0xff]
  %v4383 = vld [vmem:[%s13 + $0x150] sm:$0xff]
  %v4384 = vld [vmem:[%s13 + $0x158] sm:$0xff]
  %v4385 = vld [vmem:[%s13 + $0x160] sm:$0xff]
  %v4386 = vld [vmem:[%s13 + $0x168] sm:$0xff]
  %v4387 = vld [vmem:[%s13 + $0x170] sm:$0xff]
  %v4388 = vld [vmem:[%s13 + $0x178] sm:$0xff]
  %v4389 = vadd.f32 %v4293, %v4341
  %v4390 = vadd.f32 %v4294, %v4342
  %v4391 = vadd.f32 %v4295, %v4343
  %v4392 = vadd.f32 %v4296, %v4344
  %v4393 = vadd.f32 %v4297, %v4345
  %v4394 = vadd.f32 %v4298, %v4346
  %v4395 = vadd.f32 %v4299, %v4347
  %v4396 = vadd.f32 %v4300, %v4348
  %v4397 = vadd.f32 %v4301, %v4349
  %v4398 = vadd.f32 %v4302, %v4350
  %v4399 = vadd.f32 %v4303, %v4351
  %v4400 = vadd.f32 %v4304, %v4352
  %v4401 = vadd.f32 %v4305, %v4353
  %v4402 = vadd.f32 %v4306, %v4354
  %v4403 = vadd.f32 %v4307, %v4355
  %v4404 = vadd.f32 %v4308, %v4356
  %v4405 = vadd.f32 %v4309, %v4357
  %v4406 = vadd.f32 %v4310, %v4358
  %v4407 = vadd.f32 %v4311, %v4359
  %v4408 = vadd.f32 %v4312, %v4360
  %v4409 = vadd.f32 %v4313, %v4361
  %v4410 = vadd.f32 %v4314, %v4362
  %v4411 = vadd.f32 %v4315, %v4363
  %v4412 = vadd.f32 %v4316, %v4364
  %v4413 = vadd.f32 %v4317, %v4365
  %v4414 = vadd.f32 %v4318, %v4366
  %v4415 = vadd.f32 %v4319, %v4367
  %v4416 = vadd.f32 %v4320, %v4368
  %v4417 = vadd.f32 %v4321, %v4369
  %v4418 = vadd.f32 %v4322, %v4370
  %v4419 = vadd.f32 %v4323, %v4371
  %v4420 = vadd.f32 %v4324, %v4372
  %v4421 = vadd.f32 %v4325, %v4373
  %v4422 = vadd.f32 %v4326, %v4374
  %v4423 = vadd.f32 %v4327, %v4375
  %v4424 = vadd.f32 %v4328, %v4376
  %v4425 = vadd.f32 %v4329, %v4377
  %v4426 = vadd.f32 %v4330, %v4378
  %v4427 = vadd.f32 %v4331, %v4379
  %v4428 = vadd.f32 %v4332, %v4380
  %v4429 = vadd.f32 %v4333, %v4381
  %v4430 = vadd.f32 %v4334, %v4382
  %v4431 = vadd.f32 %v4335, %v4383
  %v4432 = vadd.f32 %v4336, %v4384
  %v4433 = vadd.f32 %v4337, %v4385
  %v4434 = vadd.f32 %v4338, %v4386
  %v4435 = vadd.f32 %v4339, %v4387
  %v4436 = vadd.f32 %v4340, %v4388
  %v4437 = vsel %vm1908, %v4389, -inf
  %4438 = vmax.xlane.f32.xlu0 %v4437
  %v4439 = vpop.xlane.xlu0 %4438
  %v4440 = vsel %vm1908, %v4390, -inf
  %4441 = vmax.xlane.f32.xlu0 %v4440
  %v4442 = vpop.xlane.xlu0 %4441
  %v4443 = vsel %vm1908, %v4391, -inf
  %4444 = vmax.xlane.f32.xlu0 %v4443
  %v4445 = vpop.xlane.xlu0 %4444
  %v4446 = vsel %vm1908, %v4392, -inf
  %4447 = vmax.xlane.f32.xlu0 %v4446
  %v4448 = vpop.xlane.xlu0 %4447
  %v4449 = vsel %vm1908, %v4393, -inf
  %4450 = vmax.xlane.f32.xlu0 %v4449
  %v4451 = vpop.xlane.xlu0 %4450
  %v4452 = vsel %vm1908, %v4394, -inf
  %4453 = vmax.xlane.f32.xlu0 %v4452
  %v4454 = vpop.xlane.xlu0 %4453
  %v4455 = vsel %vm1908, %v4395, -inf
  %4456 = vmax.xlane.f32.xlu0 %v4455
  %v4457 = vpop.xlane.xlu0 %4456
  %v4458 = vsel %vm1908, %v4396, -inf
  %4459 = vmax.xlane.f32.xlu0 %v4458
  %v4460 = vpop.xlane.xlu0 %4459
  %v4461 = vsel %vm1908, %v4397, -inf
  %4462 = vmax.xlane.f32.xlu0 %v4461
  %v4463 = vpop.xlane.xlu0 %4462
  %v4464 = vsel %vm1908, %v4398, -inf
  %4465 = vmax.xlane.f32.xlu0 %v4464
  %v4466 = vpop.xlane.xlu0 %4465
  %v4467 = vsel %vm1908, %v4399, -inf
  %4468 = vmax.xlane.f32.xlu0 %v4467
  %v4469 = vpop.xlane.xlu0 %4468
  %v4470 = vsel %vm1908, %v4400, -inf
  %4471 = vmax.xlane.f32.xlu0 %v4470
  %v4472 = vpop.xlane.xlu0 %4471
  %v4473 = vsel %vm1908, %v4401, -inf
  %4474 = vmax.xlane.f32.xlu0 %v4473
  %v4475 = vpop.xlane.xlu0 %4474
  %v4476 = vsel %vm1908, %v4402, -inf
  %4477 = vmax.xlane.f32.xlu0 %v4476
  %v4478 = vpop.xlane.xlu0 %4477
  %v4479 = vsel %vm1908, %v4403, -inf
  %4480 = vmax.xlane.f32.xlu0 %v4479
  %v4481 = vpop.xlane.xlu0 %4480
  %v4482 = vsel %vm1908, %v4404, -inf
  %4483 = vmax.xlane.f32.xlu0 %v4482
  %v4484 = vpop.xlane.xlu0 %4483
  %v4485 = vsel %vm1908, %v4405, -inf
  %4486 = vmax.xlane.f32.xlu0 %v4485
  %v4487 = vpop.xlane.xlu0 %4486
  %v4488 = vsel %vm1908, %v4406, -inf
  %4489 = vmax.xlane.f32.xlu0 %v4488
  %v4490 = vpop.xlane.xlu0 %4489
  %v4491 = vsel %vm1908, %v4407, -inf
  %4492 = vmax.xlane.f32.xlu0 %v4491
  %v4493 = vpop.xlane.xlu0 %4492
  %v4494 = vsel %vm1908, %v4408, -inf
  %4495 = vmax.xlane.f32.xlu0 %v4494
  %v4496 = vpop.xlane.xlu0 %4495
  %v4497 = vsel %vm1908, %v4409, -inf
  %4498 = vmax.xlane.f32.xlu0 %v4497
  %v4499 = vpop.xlane.xlu0 %4498
  %v4500 = vsel %vm1908, %v4410, -inf
  %4501 = vmax.xlane.f32.xlu0 %v4500
  %v4502 = vpop.xlane.xlu0 %4501
  %v4503 = vsel %vm1908, %v4411, -inf
  %4504 = vmax.xlane.f32.xlu0 %v4503
  %v4505 = vpop.xlane.xlu0 %4504
  %v4506 = vsel %vm1908, %v4412, -inf
  %4507 = vmax.xlane.f32.xlu0 %v4506
  %v4508 = vpop.xlane.xlu0 %4507
  %v4509 = vsel %vm1908, %v4413, -inf
  %4510 = vmax.xlane.f32.xlu0 %v4509
  %v4511 = vpop.xlane.xlu0 %4510
  %v4512 = vsel %vm1908, %v4414, -inf
  %4513 = vmax.xlane.f32.xlu0 %v4512
  %v4514 = vpop.xlane.xlu0 %4513
  %v4515 = vsel %vm1908, %v4415, -inf
  %4516 = vmax.xlane.f32.xlu0 %v4515
  %v4517 = vpop.xlane.xlu0 %4516
  %v4518 = vsel %vm1908, %v4416, -inf
  %4519 = vmax.xlane.f32.xlu0 %v4518
  %v4520 = vpop.xlane.xlu0 %4519
  %v4521 = vsel %vm1908, %v4417, -inf
  %4522 = vmax.xlane.f32.xlu0 %v4521
  %v4523 = vpop.xlane.xlu0 %4522
  %v4524 = vsel %vm1908, %v4418, -inf
  %4525 = vmax.xlane.f32.xlu0 %v4524
  %v4526 = vpop.xlane.xlu0 %4525
  %v4527 = vsel %vm1908, %v4419, -inf
  %4528 = vmax.xlane.f32.xlu0 %v4527
  %v4529 = vpop.xlane.xlu0 %4528
  %v4530 = vsel %vm1908, %v4420, -inf
  %4531 = vmax.xlane.f32.xlu0 %v4530
  %v4532 = vpop.xlane.xlu0 %4531
  %v4533 = vsel %vm1908, %v4421, -inf
  %4534 = vmax.xlane.f32.xlu0 %v4533
  %v4535 = vpop.xlane.xlu0 %4534
  %v4536 = vsel %vm1908, %v4422, -inf
  %4537 = vmax.xlane.f32.xlu0 %v4536
  %v4538 = vpop.xlane.xlu0 %4537
  %v4539 = vsel %vm1908, %v4423, -inf
  %4540 = vmax.xlane.f32.xlu0 %v4539
  %v4541 = vpop.xlane.xlu0 %4540
  %v4542 = vsel %vm1908, %v4424, -inf
  %4543 = vmax.xlane.f32.xlu0 %v4542
  %v4544 = vpop.xlane.xlu0 %4543
  %v4545 = vsel %vm1908, %v4425, -inf
  %4546 = vmax.xlane.f32.xlu0 %v4545
  %v4547 = vpop.xlane.xlu0 %4546
  %v4548 = vsel %vm1908, %v4426, -inf
  %4549 = vmax.xlane.f32.xlu0 %v4548
  %v4550 = vpop.xlane.xlu0 %4549
  %v4551 = vsel %vm1908, %v4427, -inf
  %4552 = vmax.xlane.f32.xlu0 %v4551
  %v4553 = vpop.xlane.xlu0 %4552
  %v4554 = vsel %vm1908, %v4428, -inf
  %4555 = vmax.xlane.f32.xlu0 %v4554
  %v4556 = vpop.xlane.xlu0 %4555
  %v4557 = vsel %vm1908, %v4429, -inf
  %4558 = vmax.xlane.f32.xlu0 %v4557
  %v4559 = vpop.xlane.xlu0 %4558
  %v4560 = vsel %vm1908, %v4430, -inf
  %4561 = vmax.xlane.f32.xlu0 %v4560
  %v4562 = vpop.xlane.xlu0 %4561
  %v4563 = vsel %vm1908, %v4431, -inf
  %4564 = vmax.xlane.f32.xlu0 %v4563
  %v4565 = vpop.xlane.xlu0 %4564
  %v4566 = vsel %vm1908, %v4432, -inf
  %4567 = vmax.xlane.f32.xlu0 %v4566
  %v4568 = vpop.xlane.xlu0 %4567
  %v4569 = vsel %vm1908, %v4433, -inf
  %4570 = vmax.xlane.f32.xlu0 %v4569
  %v4571 = vpop.xlane.xlu0 %4570
  %v4572 = vsel %vm1908, %v4434, -inf
  %4573 = vmax.xlane.f32.xlu0 %v4572
  %v4574 = vpop.xlane.xlu0 %4573
  %v4575 = vsel %vm1908, %v4435, -inf
  %4576 = vmax.xlane.f32.xlu0 %v4575
  %v4577 = vpop.xlane.xlu0 %4576
  %v4578 = vsel %vm1908, %v4436, -inf
  %4579 = vmax.xlane.f32.xlu0 %v4578
  %v4580 = vpop.xlane.xlu0 %4579
  %v4581 = vsub.f32 %v4389, %v4439
  %v4582 = vsub.f32 %v4390, %v4442
  %v4583 = vsub.f32 %v4391, %v4445
  %v4584 = vsub.f32 %v4392, %v4448
  %v4585 = vsub.f32 %v4393, %v4451
  %v4586 = vsub.f32 %v4394, %v4454
  %v4587 = vsub.f32 %v4395, %v4457
  %v4588 = vsub.f32 %v4396, %v4460
  %v4589 = vsub.f32 %v4397, %v4463
  %v4590 = vsub.f32 %v4398, %v4466
  %v4591 = vsub.f32 %v4399, %v4469
  %v4592 = vsub.f32 %v4400, %v4472
  %v4593 = vsub.f32 %v4401, %v4475
  %v4594 = vsub.f32 %v4402, %v4478
  %v4595 = vsub.f32 %v4403, %v4481
  %v4596 = vsub.f32 %v4404, %v4484
  %v4597 = vsub.f32 %v4405, %v4487
  %v4598 = vsub.f32 %v4406, %v4490
  %v4599 = vsub.f32 %v4407, %v4493
  %v4600 = vsub.f32 %v4408, %v4496
  %v4601 = vsub.f32 %v4409, %v4499
  %v4602 = vsub.f32 %v4410, %v4502
  %v4603 = vsub.f32 %v4411, %v4505
  %v4604 = vsub.f32 %v4412, %v4508
  %v4605 = vsub.f32 %v4413, %v4511
  %v4606 = vsub.f32 %v4414, %v4514
  %v4607 = vsub.f32 %v4415, %v4517
  %v4608 = vsub.f32 %v4416, %v4520
  %v4609 = vsub.f32 %v4417, %v4523
  %v4610 = vsub.f32 %v4418, %v4526
  %v4611 = vsub.f32 %v4419, %v4529
  %v4612 = vsub.f32 %v4420, %v4532
  %v4613 = vsub.f32 %v4421, %v4535
  %v4614 = vsub.f32 %v4422, %v4538
  %v4615 = vsub.f32 %v4423, %v4541
  %v4616 = vsub.f32 %v4424, %v4544
  %v4617 = vsub.f32 %v4425, %v4547
  %v4618 = vsub.f32 %v4426, %v4550
  %v4619 = vsub.f32 %v4427, %v4553
  %v4620 = vsub.f32 %v4428, %v4556
  %v4621 = vsub.f32 %v4429, %v4559
  %v4622 = vsub.f32 %v4430, %v4562
  %v4623 = vsub.f32 %v4431, %v4565
  %v4624 = vsub.f32 %v4432, %v4568
  %v4625 = vsub.f32 %v4433, %v4571
  %v4626 = vsub.f32 %v4434, %v4574
  %v4627 = vsub.f32 %v4435, %v4577
  %v4628 = vsub.f32 %v4436, %v4580
  %v4629 = vmul.f32 %v4581, 1.442695
  %v4630 = vpow.pop %v4629
  %v4631 = vmul.f32 %v4582, 1.442695
  %v4632 = vpow.pop %v4631
  %v4633 = vmul.f32 %v4583, 1.442695
  %v4634 = vpow.pop %v4633
  %v4635 = vmul.f32 %v4584, 1.442695
  %v4636 = vpow.pop %v4635
  %v4637 = vmul.f32 %v4585, 1.442695
  %v4638 = vpow.pop %v4637
  %v4639 = vmul.f32 %v4586, 1.442695
  %v4640 = vpow.pop %v4639
  %v4641 = vmul.f32 %v4587, 1.442695
  %v4642 = vpow.pop %v4641
  %v4643 = vmul.f32 %v4588, 1.442695
  %v4644 = vpow.pop %v4643
  %v4645 = vmul.f32 %v4589, 1.442695
  %v4646 = vpow.pop %v4645
  %v4647 = vmul.f32 %v4590, 1.442695
  %v4648 = vpow.pop %v4647
  %v4649 = vmul.f32 %v4591, 1.442695
  %v4650 = vpow.pop %v4649
  %v4651 = vmul.f32 %v4592, 1.442695
  %v4652 = vpow.pop %v4651
  %v4653 = vmul.f32 %v4593, 1.442695
  %v4654 = vpow.pop %v4653
  %v4655 = vmul.f32 %v4594, 1.442695
  %v4656 = vpow.pop %v4655
  %v4657 = vmul.f32 %v4595, 1.442695
  %v4658 = vpow.pop %v4657
  %v4659 = vmul.f32 %v4596, 1.442695
  %v4660 = vpow.pop %v4659
  %v4661 = vmul.f32 %v4597, 1.442695
  %v4662 = vpow.pop %v4661
  %v4663 = vmul.f32 %v4598, 1.442695
  %v4664 = vpow.pop %v4663
  %v4665 = vmul.f32 %v4599, 1.442695
  %v4666 = vpow.pop %v4665
  %v4667 = vmul.f32 %v4600, 1.442695
  %v4668 = vpow.pop %v4667
  %v4669 = vmul.f32 %v4601, 1.442695
  %v4670 = vpow.pop %v4669
  %v4671 = vmul.f32 %v4602, 1.442695
  %v4672 = vpow.pop %v4671
  %v4673 = vmul.f32 %v4603, 1.442695
  %v4674 = vpow.pop %v4673
  %v4675 = vmul.f32 %v4604, 1.442695
  %v4676 = vpow.pop %v4675
  %v4677 = vmul.f32 %v4605, 1.442695
  %v4678 = vpow.pop %v4677
  %v4679 = vmul.f32 %v4606, 1.442695
  %v4680 = vpow.pop %v4679
  %v4681 = vmul.f32 %v4607, 1.442695
  %v4682 = vpow.pop %v4681
  %v4683 = vmul.f32 %v4608, 1.442695
  %v4684 = vpow.pop %v4683
  %v4685 = vmul.f32 %v4609, 1.442695
  %v4686 = vpow.pop %v4685
  %v4687 = vmul.f32 %v4610, 1.442695
  %v4688 = vpow.pop %v4687
  %v4689 = vmul.f32 %v4611, 1.442695
  %v4690 = vpow.pop %v4689
  %v4691 = vmul.f32 %v4612, 1.442695
  %v4692 = vpow.pop %v4691
  %v4693 = vmul.f32 %v4613, 1.442695
  %v4694 = vpow.pop %v4693
  %v4695 = vmul.f32 %v4614, 1.442695
  %v4696 = vpow.pop %v4695
  %v4697 = vmul.f32 %v4615, 1.442695
  %v4698 = vpow.pop %v4697
  %v4699 = vmul.f32 %v4616, 1.442695
  %v4700 = vpow.pop %v4699
  %v4701 = vmul.f32 %v4617, 1.442695
  %v4702 = vpow.pop %v4701
  %v4703 = vmul.f32 %v4618, 1.442695
  %v4704 = vpow.pop %v4703
  %v4705 = vmul.f32 %v4619, 1.442695
  %v4706 = vpow.pop %v4705
  %v4707 = vmul.f32 %v4620, 1.442695
  %v4708 = vpow.pop %v4707
  %v4709 = vmul.f32 %v4621, 1.442695
  %v4710 = vpow.pop %v4709
  %v4711 = vmul.f32 %v4622, 1.442695
  %v4712 = vpow.pop %v4711
  %v4713 = vmul.f32 %v4623, 1.442695
  %v4714 = vpow.pop %v4713
  %v4715 = vmul.f32 %v4624, 1.442695
  %v4716 = vpow.pop %v4715
  %v4717 = vmul.f32 %v4625, 1.442695
  %v4718 = vpow.pop %v4717
  %v4719 = vmul.f32 %v4626, 1.442695
  %v4720 = vpow.pop %v4719
  %v4721 = vmul.f32 %v4627, 1.442695
  %v4722 = vpow.pop %v4721
  %v4723 = vmul.f32 %v4628, 1.442695
  %v4724 = vpow.pop %v4723
  %v4725 = vld [vmem:[%s12] sm:$0xff]
  %v4726 = vld [vmem:[%s12 + $0x8] sm:$0xff]
  %v4727 = vld [vmem:[%s12 + $0x10] sm:$0xff]
  %v4728 = vld [vmem:[%s12 + $0x18] sm:$0xff]
  %v4729 = vld [vmem:[%s12 + $0x20] sm:$0xff]
  %v4730 = vld [vmem:[%s12 + $0x28] sm:$0xff]
  %v4731 = vld [vmem:[%s12 + $0x30] sm:$0xff]
  %v4732 = vld [vmem:[%s12 + $0x38] sm:$0xff]
  %v4733 = vld [vmem:[%s12 + $0x40] sm:$0xff]
  %v4734 = vld [vmem:[%s12 + $0x48] sm:$0xff]
  %v4735 = vld [vmem:[%s12 + $0x50] sm:$0xff]
  %v4736 = vld [vmem:[%s12 + $0x58] sm:$0xff]
  %v4737 = vld [vmem:[%s12 + $0x60] sm:$0xff]
  %v4738 = vld [vmem:[%s12 + $0x68] sm:$0xff]
  %v4739 = vld [vmem:[%s12 + $0x70] sm:$0xff]
  %v4740 = vld [vmem:[%s12 + $0x78] sm:$0xff]
  %v4741 = vld [vmem:[%s12 + $0x80] sm:$0xff]
  %v4742 = vld [vmem:[%s12 + $0x88] sm:$0xff]
  %v4743 = vld [vmem:[%s12 + $0x90] sm:$0xff]
  %v4744 = vld [vmem:[%s12 + $0x98] sm:$0xff]
  %v4745 = vld [vmem:[%s12 + $0xa0] sm:$0xff]
  %v4746 = vld [vmem:[%s12 + $0xa8] sm:$0xff]
  %v4747 = vld [vmem:[%s12 + $0xb0] sm:$0xff]
  %v4748 = vld [vmem:[%s12 + $0xb8] sm:$0xff]
  %v4749 = vld [vmem:[%s12 + $0xc0] sm:$0xff]
  %v4750 = vld [vmem:[%s12 + $0xc8] sm:$0xff]
  %v4751 = vld [vmem:[%s12 + $0xd0] sm:$0xff]
  %v4752 = vld [vmem:[%s12 + $0xd8] sm:$0xff]
  %v4753 = vld [vmem:[%s12 + $0xe0] sm:$0xff]
  %v4754 = vld [vmem:[%s12 + $0xe8] sm:$0xff]
  %v4755 = vld [vmem:[%s12 + $0xf0] sm:$0xff]
  %v4756 = vld [vmem:[%s12 + $0xf8] sm:$0xff]
  %v4757 = vld [vmem:[%s12 + $0x100] sm:$0xff]
  %v4758 = vld [vmem:[%s12 + $0x108] sm:$0xff]
  %v4759 = vld [vmem:[%s12 + $0x110] sm:$0xff]
  %v4760 = vld [vmem:[%s12 + $0x118] sm:$0xff]
  %v4761 = vld [vmem:[%s12 + $0x120] sm:$0xff]
  %v4762 = vld [vmem:[%s12 + $0x128] sm:$0xff]
  %v4763 = vld [vmem:[%s12 + $0x130] sm:$0xff]
  %v4764 = vld [vmem:[%s12 + $0x138] sm:$0xff]
  %v4765 = vld [vmem:[%s12 + $0x140] sm:$0xff]
  %v4766 = vld [vmem:[%s12 + $0x148] sm:$0xff]
  %v4767 = vld [vmem:[%s12 + $0x150] sm:$0xff]
  %v4768 = vld [vmem:[%s12 + $0x158] sm:$0xff]
  %v4769 = vld [vmem:[%s12 + $0x160] sm:$0xff]
  %v4770 = vld [vmem:[%s12 + $0x168] sm:$0xff]
  %v4771 = vld [vmem:[%s12 + $0x170] sm:$0xff]
  %v4772 = vld [vmem:[%s12 + $0x178] sm:$0xff]
  %v4773 = vmul.f32 %v4630, %v4725
  %v4774 = vmul.f32 %v4632, %v4726
  %v4775 = vmul.f32 %v4634, %v4727
  %v4776 = vmul.f32 %v4636, %v4728
  %v4777 = vmul.f32 %v4638, %v4729
  %v4778 = vmul.f32 %v4640, %v4730
  %v4779 = vmul.f32 %v4642, %v4731
  %v4780 = vmul.f32 %v4644, %v4732
  %v4781 = vmul.f32 %v4646, %v4733
  %v4782 = vmul.f32 %v4648, %v4734
  %v4783 = vmul.f32 %v4650, %v4735
  %v4784 = vmul.f32 %v4652, %v4736
  %v4785 = vmul.f32 %v4654, %v4737
  %v4786 = vmul.f32 %v4656, %v4738
  %v4787 = vmul.f32 %v4658, %v4739
  %v4788 = vmul.f32 %v4660, %v4740
  %v4789 = vmul.f32 %v4662, %v4741
  %v4790 = vmul.f32 %v4664, %v4742
  %v4791 = vmul.f32 %v4666, %v4743
  %v4792 = vmul.f32 %v4668, %v4744
  %v4793 = vmul.f32 %v4670, %v4745
  %v4794 = vmul.f32 %v4672, %v4746
  %v4795 = vmul.f32 %v4674, %v4747
  %v4796 = vmul.f32 %v4676, %v4748
  %v4797 = vmul.f32 %v4678, %v4749
  %v4798 = vmul.f32 %v4680, %v4750
  %v4799 = vmul.f32 %v4682, %v4751
  %v4800 = vmul.f32 %v4684, %v4752
  %v4801 = vmul.f32 %v4686, %v4753
  %v4802 = vmul.f32 %v4688, %v4754
  %v4803 = vmul.f32 %v4690, %v4755
  %v4804 = vmul.f32 %v4692, %v4756
  %v4805 = vmul.f32 %v4694, %v4757
  %v4806 = vmul.f32 %v4696, %v4758
  %v4807 = vmul.f32 %v4698, %v4759
  %v4808 = vmul.f32 %v4700, %v4760
  %v4809 = vmul.f32 %v4702, %v4761
  %v4810 = vmul.f32 %v4704, %v4762
  %v4811 = vmul.f32 %v4706, %v4763
  %v4812 = vmul.f32 %v4708, %v4764
  %v4813 = vmul.f32 %v4710, %v4765
  %v4814 = vmul.f32 %v4712, %v4766
  %v4815 = vmul.f32 %v4714, %v4767
  %v4816 = vmul.f32 %v4716, %v4768
  %v4817 = vmul.f32 %v4718, %v4769
  %v4818 = vmul.f32 %v4720, %v4770
  %v4819 = vmul.f32 %v4722, %v4771
  %v4820 = vmul.f32 %v4724, %v4772
  %v4821 = vsel %vm2293, %v3382, 1.0
  %v4822 = vsel %vm2293, %v3387, 1.0
  %v4823 = vsel %vm2293, %v3392, 1.0
  %v4824 = vsel %vm2293, %v3397, 1.0
  %v4825 = vsel %vm2293, %v3402, 1.0
  %v4826 = vsel %vm2293, %v3407, 1.0
  %v4827 = vsel %vm2293, %v3412, 1.0
  %v4828 = vsel %vm2293, %v3417, 1.0
  %v4830 = vsel %vm1908, %v4773, 0
  %v4833 = vsel %vm1908, %v4774, 0
  %v4836 = vsel %vm1908, %v4775, 0
  %v4839 = vsel %vm1908, %v4776, 0
  %v4842 = vsel %vm1908, %v4777, 0
  %v4845 = vsel %vm1908, %v4778, 0
  %v4848 = vsel %vm1908, %v4779, 0
  %v4851 = vsel %vm1908, %v4780, 0
  %v4854 = vsel %vm1908, %v4781, 0
  %v4857 = vsel %vm1908, %v4782, 0
  %v4860 = vsel %vm1908, %v4783, 0
  %v4863 = vsel %vm1908, %v4784, 0
  %v4866 = vsel %vm1908, %v4785, 0
  %v4869 = vsel %vm1908, %v4786, 0
  %v4872 = vsel %vm1908, %v4787, 0
  %v4875 = vsel %vm1908, %v4788, 0
  %v4878 = vsel %vm1908, %v4789, 0
  %v4881 = vsel %vm1908, %v4790, 0
  %v4884 = vsel %vm1908, %v4791, 0
  %v4887 = vsel %vm1908, %v4792, 0
  %v4890 = vsel %vm1908, %v4793, 0
  %v4893 = vsel %vm1908, %v4794, 0
  %v4896 = vsel %vm1908, %v4795, 0
  %v4899 = vsel %vm1908, %v4796, 0
  %v4902 = vsel %vm1908, %v4797, 0
  %v4905 = vsel %vm1908, %v4798, 0
  %v4908 = vsel %vm1908, %v4799, 0
  %v4911 = vsel %vm1908, %v4800, 0
  %v4914 = vsel %vm1908, %v4801, 0
  %v4917 = vsel %vm1908, %v4802, 0
  %v4920 = vsel %vm1908, %v4803, 0
  %v4923 = vsel %vm1908, %v4804, 0
  %v4926 = vsel %vm1908, %v4805, 0
  %v4929 = vsel %vm1908, %v4806, 0
  %v4932 = vsel %vm1908, %v4807, 0
  %v4935 = vsel %vm1908, %v4808, 0
  %v4938 = vsel %vm1908, %v4809, 0
  %v4941 = vsel %vm1908, %v4810, 0
  %v4944 = vsel %vm1908, %v4811, 0
  %v4947 = vsel %vm1908, %v4812, 0
  %v4950 = vsel %vm1908, %v4813, 0
  %v4953 = vsel %vm1908, %v4814, 0
  %v4956 = vsel %vm1908, %v4815, 0
  %v4959 = vsel %vm1908, %v4816, 0
  %v4962 = vsel %vm1908, %v4817, 0
  %v4965 = vsel %vm1908, %v4818, 0
  %v4968 = vsel %vm1908, %v4819, 0
  %v4971 = vsel %vm1908, %v4820, 0
  %4973 = vmatprep.subr.mxu0 0.0
  %4974 = vmatpush1.msra.mxu0 0.0
  %4975 = vmatprep.subr.mxu0 0.0
  %4976 = vmatpush1.msra.mxu0 0.0
  %4977 = vmatprep.subr.mxu0 0.0
  %4978 = vmatpush1.msra.mxu0 0.0
  %4979 = vmatprep.subr.mxu0 0.0
  %4980 = vmatpush1.msra.mxu0 0.0
  %4981 = vmatprep.subr.mxu0 0.0
  %4982 = vmatpush1.msra.mxu0 0.0
  %4983 = vmatprep.subr.mxu0 0.0
  %4984 = vmatpush1.msra.mxu0 0.0
  %4985 = vmatprep.subr.mxu0 0.0
  %4986 = vmatpush1.msra.mxu0 0.0
  %4987 = vmatprep.subr.mxu0 0.0
  %4988 = vmatpush1.msra.mxu0 0.0
  %4989 = vmatprep.subr.mxu0 0.0
  %4990 = vmatpush1.msra.mxu0 %v4828
  %4991 = vmatprep.subr.mxu0 0.0
  %4992 = vmatpush1.msra.mxu0 %v4827
  %4993 = vmatprep.subr.mxu0 0.0
  %4994 = vmatpush1.msra.mxu0 %v4826
  %4995 = vmatprep.subr.mxu0 0.0
  %4996 = vmatpush1.msra.mxu0 %v4825
  %4997 = vmatprep.subr.mxu0 0.0
  %4998 = vmatpush1.msra.mxu0 %v4824
  %4999 = vmatprep.subr.mxu0 0.0
  %5000 = vmatpush1.msra.mxu0 %v4823
  %5001 = vmatprep.subr.mxu0 0.0
  %5002 = vmatpush1.msra.mxu0 %v4822
  %5003 = vmatprep.subr.mxu0 0.0
  %5004 = vmatpush1.msra.mxu0 %v4821
  %5005 = vmatprep.subr.mxu0 0.0
  %5006 = vmatpush2.msra.mxu0 0.0
  %5007 = vmatprep.subr.mxu0 0.0
  %5008 = vmatpush2.msra.mxu0 0.0
  %5009 = vmatprep.subr.mxu0 0.0
  %5010 = vmatpush2.msra.mxu0 0.0
  %5011 = vmatprep.subr.mxu0 0.0
  %5012 = vmatpush2.msra.mxu0 0.0
  %5013 = vmatprep.subr.mxu0 0.0
  %5014 = vmatpush2.msra.mxu0 0.0
  %5015 = vmatprep.subr.mxu0 0.0
  %5016 = vmatpush2.msra.mxu0 0.0
  %5017 = vmatprep.subr.mxu0 0.0
  %5018 = vmatpush2.msra.mxu0 0.0
  %5019 = vmatprep.subr.mxu0 0.0
  %5020 = vmatpush2.msra.mxu0 0.0
  %5021 = vmatprep.subr.mxu0 0.0
  %5022 = vmatpush2.msra.mxu0 0.0
  %5023 = vmatprep.subr.mxu0 0.0
  %5024 = vmatpush2.msra.mxu0 0.0
  %5025 = vmatprep.subr.mxu0 0.0
  %5026 = vmatpush2.msra.mxu0 0.0
  %5027 = vmatprep.subr.mxu0 0.0
  %5028 = vmatpush2.msra.mxu0 0.0
  %5029 = vmatprep.subr.mxu0 0.0
  %5030 = vmatpush2.msra.mxu0 0.0
  %5031 = vmatprep.subr.mxu0 0.0
  %5032 = vmatpush2.msra.mxu0 0.0
  %5033 = vmatprep.subr.mxu0 0.0
  %5034 = vmatpush2.msra.mxu0 0.0
  %5035 = vmatprep.subr.mxu0 0.0
  %5036 = vmatpush2.msra.mxu0 0.0
  %5037 = vmatprep.mubr.f32.mxu0 0.0
  %5038 = vmatmul.mubr.f32.gmra.mxu0 %v4830
  %v5039 = vpop.f32.mrf.mxu0
  %v5040 = vadd.f32 0.0, %v5039
  %v5041 = vpop.f32.mrf.mxu0
  %5042 = vmatprep.mubr.f32.mxu0 0.0
  %5043 = vmatmul.mubr.f32.gmra.mxu0 %v4833
  %v5044 = vpop.f32.mrf.mxu0
  %v5045 = vadd.f32 0.0, %v5044
  %v5046 = vpop.f32.mrf.mxu0
  %5047 = vmatprep.mubr.f32.mxu0 0.0
  %5048 = vmatmul.mubr.f32.gmra.mxu0 %v4836
  %v5049 = vpop.f32.mrf.mxu0
  %v5050 = vadd.f32 0.0, %v5049
  %v5051 = vpop.f32.mrf.mxu0
  %5052 = vmatprep.mubr.f32.mxu0 0.0
  %5053 = vmatmul.mubr.f32.gmra.mxu0 %v4839
  %v5054 = vpop.f32.mrf.mxu0
  %v5055 = vadd.f32 0.0, %v5054
  %v5056 = vpop.f32.mrf.mxu0
  %5057 = vmatprep.mubr.f32.mxu0 0.0
  %5058 = vmatmul.mubr.f32.gmra.mxu0 %v4842
  %v5059 = vpop.f32.mrf.mxu0
  %v5060 = vadd.f32 0.0, %v5059
  %v5061 = vpop.f32.mrf.mxu0
  %5062 = vmatprep.mubr.f32.mxu0 0.0
  %5063 = vmatmul.mubr.f32.gmra.mxu0 %v4845
  %v5064 = vpop.f32.mrf.mxu0
  %v5065 = vadd.f32 0.0, %v5064
  %v5066 = vpop.f32.mrf.mxu0
  %5067 = vmatprep.mubr.f32.mxu0 0.0
  %5068 = vmatmul.mubr.f32.gmra.mxu0 %v4848
  %v5069 = vpop.f32.mrf.mxu0
  %v5070 = vadd.f32 0.0, %v5069
  %v5071 = vpop.f32.mrf.mxu0
  %5072 = vmatprep.mubr.f32.mxu0 0.0
  %5073 = vmatmul.mubr.f32.gmra.mxu0 %v4851
  %v5074 = vpop.f32.mrf.mxu0
  %v5075 = vadd.f32 0.0, %v5074
  %v5076 = vpop.f32.mrf.mxu0
  %5077 = vmatprep.mubr.f32.mxu0 0.0
  %5078 = vmatmul.mubr.f32.gmra.mxu0 %v4854
  %v5079 = vpop.f32.mrf.mxu0
  %v5080 = vadd.f32 0.0, %v5079
  %v5081 = vpop.f32.mrf.mxu0
  %5082 = vmatprep.mubr.f32.mxu0 0.0
  %5083 = vmatmul.mubr.f32.gmra.mxu0 %v4857
  %v5084 = vpop.f32.mrf.mxu0
  %v5085 = vadd.f32 0.0, %v5084
  %v5086 = vpop.f32.mrf.mxu0
  %5087 = vmatprep.mubr.f32.mxu0 0.0
  %5088 = vmatmul.mubr.f32.gmra.mxu0 %v4860
  %v5089 = vpop.f32.mrf.mxu0
  %v5090 = vadd.f32 0.0, %v5089
  %v5091 = vpop.f32.mrf.mxu0
  %5092 = vmatprep.mubr.f32.mxu0 0.0
  %5093 = vmatmul.mubr.f32.gmra.mxu0 %v4863
  %v5094 = vpop.f32.mrf.mxu0
  %v5095 = vadd.f32 0.0, %v5094
  %v5096 = vpop.f32.mrf.mxu0
  %5097 = vmatprep.mubr.f32.mxu0 0.0
  %5098 = vmatmul.mubr.f32.gmra.mxu0 %v4866
  %v5099 = vpop.f32.mrf.mxu0
  %v5100 = vadd.f32 0.0, %v5099
  %v5101 = vpop.f32.mrf.mxu0
  %5102 = vmatprep.mubr.f32.mxu0 0.0
  %5103 = vmatmul.mubr.f32.gmra.mxu0 %v4869
  %v5104 = vpop.f32.mrf.mxu0
  %v5105 = vadd.f32 0.0, %v5104
  %v5106 = vpop.f32.mrf.mxu0
  %5107 = vmatprep.mubr.f32.mxu0 0.0
  %5108 = vmatmul.mubr.f32.gmra.mxu0 %v4872
  %v5109 = vpop.f32.mrf.mxu0
  %v5110 = vadd.f32 0.0, %v5109
  %v5111 = vpop.f32.mrf.mxu0
  %5112 = vmatprep.mubr.f32.mxu0 0.0
  %5113 = vmatmul.mubr.f32.gmra.mxu0 %v4875
  %v5114 = vpop.f32.mrf.mxu0
  %v5115 = vadd.f32 0.0, %v5114
  %v5116 = vpop.f32.mrf.mxu0
  %5117 = vmatprep.mubr.f32.mxu0 0.0
  %5118 = vmatmul.mubr.f32.gmra.mxu0 %v4878
  %v5119 = vpop.f32.mrf.mxu0
  %v5120 = vadd.f32 0.0, %v5119
  %v5121 = vpop.f32.mrf.mxu0
  %5122 = vmatprep.mubr.f32.mxu0 0.0
  %5123 = vmatmul.mubr.f32.gmra.mxu0 %v4881
  %v5124 = vpop.f32.mrf.mxu0
  %v5125 = vadd.f32 0.0, %v5124
  %v5126 = vpop.f32.mrf.mxu0
  %5127 = vmatprep.mubr.f32.mxu0 0.0
  %5128 = vmatmul.mubr.f32.gmra.mxu0 %v4884
  %v5129 = vpop.f32.mrf.mxu0
  %v5130 = vadd.f32 0.0, %v5129
  %v5131 = vpop.f32.mrf.mxu0
  %5132 = vmatprep.mubr.f32.mxu0 0.0
  %5133 = vmatmul.mubr.f32.gmra.mxu0 %v4887
  %v5134 = vpop.f32.mrf.mxu0
  %v5135 = vadd.f32 0.0, %v5134
  %v5136 = vpop.f32.mrf.mxu0
  %5137 = vmatprep.mubr.f32.mxu0 0.0
  %5138 = vmatmul.mubr.f32.gmra.mxu0 %v4890
  %v5139 = vpop.f32.mrf.mxu0
  %v5140 = vadd.f32 0.0, %v5139
  %v5141 = vpop.f32.mrf.mxu0
  %5142 = vmatprep.mubr.f32.mxu0 0.0
  %5143 = vmatmul.mubr.f32.gmra.mxu0 %v4893
  %v5144 = vpop.f32.mrf.mxu0
  %v5145 = vadd.f32 0.0, %v5144
  %v5146 = vpop.f32.mrf.mxu0
  %5147 = vmatprep.mubr.f32.mxu0 0.0
  %5148 = vmatmul.mubr.f32.gmra.mxu0 %v4896
  %v5149 = vpop.f32.mrf.mxu0
  %v5150 = vadd.f32 0.0, %v5149
  %v5151 = vpop.f32.mrf.mxu0
  %5152 = vmatprep.mubr.f32.mxu0 0.0
  %5153 = vmatmul.mubr.f32.gmra.mxu0 %v4899
  %v5154 = vpop.f32.mrf.mxu0
  %v5155 = vadd.f32 0.0, %v5154
  %v5156 = vpop.f32.mrf.mxu0
  %5157 = vmatprep.mubr.f32.mxu0 0.0
  %5158 = vmatmul.mubr.f32.gmra.mxu0 %v4902
  %v5159 = vpop.f32.mrf.mxu0
  %v5160 = vadd.f32 0.0, %v5159
  %v5161 = vpop.f32.mrf.mxu0
  %5162 = vmatprep.mubr.f32.mxu0 0.0
  %5163 = vmatmul.mubr.f32.gmra.mxu0 %v4905
  %v5164 = vpop.f32.mrf.mxu0
  %v5165 = vadd.f32 0.0, %v5164
  %v5166 = vpop.f32.mrf.mxu0
  %5167 = vmatprep.mubr.f32.mxu0 0.0
  %5168 = vmatmul.mubr.f32.gmra.mxu0 %v4908
  %v5169 = vpop.f32.mrf.mxu0
  %v5170 = vadd.f32 0.0, %v5169
  %v5171 = vpop.f32.mrf.mxu0
  %5172 = vmatprep.mubr.f32.mxu0 0.0
  %5173 = vmatmul.mubr.f32.gmra.mxu0 %v4911
  %v5174 = vpop.f32.mrf.mxu0
  %v5175 = vadd.f32 0.0, %v5174
  %v5176 = vpop.f32.mrf.mxu0
  %5177 = vmatprep.mubr.f32.mxu0 0.0
  %5178 = vmatmul.mubr.f32.gmra.mxu0 %v4914
  %v5179 = vpop.f32.mrf.mxu0
  %v5180 = vadd.f32 0.0, %v5179
  %v5181 = vpop.f32.mrf.mxu0
  %5182 = vmatprep.mubr.f32.mxu0 0.0
  %5183 = vmatmul.mubr.f32.gmra.mxu0 %v4917
  %v5184 = vpop.f32.mrf.mxu0
  %v5185 = vadd.f32 0.0, %v5184
  %v5186 = vpop.f32.mrf.mxu0
  %5187 = vmatprep.mubr.f32.mxu0 0.0
  %5188 = vmatmul.mubr.f32.gmra.mxu0 %v4920
  %v5189 = vpop.f32.mrf.mxu0
  %v5190 = vadd.f32 0.0, %v5189
  %v5191 = vpop.f32.mrf.mxu0
  %5192 = vmatprep.mubr.f32.mxu0 0.0
  %5193 = vmatmul.mubr.f32.gmra.mxu0 %v4923
  %v5194 = vpop.f32.mrf.mxu0
  %v5195 = vadd.f32 0.0, %v5194
  %v5196 = vpop.f32.mrf.mxu0
  %5197 = vmatprep.mubr.f32.mxu0 0.0
  %5198 = vmatmul.mubr.f32.gmra.mxu0 %v4926
  %v5199 = vpop.f32.mrf.mxu0
  %v5200 = vadd.f32 0.0, %v5199
  %v5201 = vpop.f32.mrf.mxu0
  %5202 = vmatprep.mubr.f32.mxu0 0.0
  %5203 = vmatmul.mubr.f32.gmra.mxu0 %v4929
  %v5204 = vpop.f32.mrf.mxu0
  %v5205 = vadd.f32 0.0, %v5204
  %v5206 = vpop.f32.mrf.mxu0
  %5207 = vmatprep.mubr.f32.mxu0 0.0
  %5208 = vmatmul.mubr.f32.gmra.mxu0 %v4932
  %v5209 = vpop.f32.mrf.mxu0
  %v5210 = vadd.f32 0.0, %v5209
  %v5211 = vpop.f32.mrf.mxu0
  %5212 = vmatprep.mubr.f32.mxu0 0.0
  %5213 = vmatmul.mubr.f32.gmra.mxu0 %v4935
  %v5214 = vpop.f32.mrf.mxu0
  %v5215 = vadd.f32 0.0, %v5214
  %v5216 = vpop.f32.mrf.mxu0
  %5217 = vmatprep.mubr.f32.mxu0 0.0
  %5218 = vmatmul.mubr.f32.gmra.mxu0 %v4938
  %v5219 = vpop.f32.mrf.mxu0
  %v5220 = vadd.f32 0.0, %v5219
  %v5221 = vpop.f32.mrf.mxu0
  %5222 = vmatprep.mubr.f32.mxu0 0.0
  %5223 = vmatmul.mubr.f32.gmra.mxu0 %v4941
  %v5224 = vpop.f32.mrf.mxu0
  %v5225 = vadd.f32 0.0, %v5224
  %v5226 = vpop.f32.mrf.mxu0
  %5227 = vmatprep.mubr.f32.mxu0 0.0
  %5228 = vmatmul.mubr.f32.gmra.mxu0 %v4944
  %v5229 = vpop.f32.mrf.mxu0
  %v5230 = vadd.f32 0.0, %v5229
  %v5231 = vpop.f32.mrf.mxu0
  %5232 = vmatprep.mubr.f32.mxu0 0.0
  %5233 = vmatmul.mubr.f32.gmra.mxu0 %v4947
  %v5234 = vpop.f32.mrf.mxu0
  %v5235 = vadd.f32 0.0, %v5234
  %v5236 = vpop.f32.mrf.mxu0
  %5237 = vmatprep.mubr.f32.mxu0 0.0
  %5238 = vmatmul.mubr.f32.gmra.mxu0 %v4950
  %v5239 = vpop.f32.mrf.mxu0
  %v5240 = vadd.f32 0.0, %v5239
  %v5241 = vpop.f32.mrf.mxu0
  %5242 = vmatprep.mubr.f32.mxu0 0.0
  %5243 = vmatmul.mubr.f32.gmra.mxu0 %v4953
  %v5244 = vpop.f32.mrf.mxu0
  %v5245 = vadd.f32 0.0, %v5244
  %v5246 = vpop.f32.mrf.mxu0
  %5247 = vmatprep.mubr.f32.mxu0 0.0
  %5248 = vmatmul.mubr.f32.gmra.mxu0 %v4956
  %v5249 = vpop.f32.mrf.mxu0
  %v5250 = vadd.f32 0.0, %v5249
  %v5251 = vpop.f32.mrf.mxu0
  %5252 = vmatprep.mubr.f32.mxu0 0.0
  %5253 = vmatmul.mubr.f32.gmra.mxu0 %v4959
  %v5254 = vpop.f32.mrf.mxu0
  %v5255 = vadd.f32 0.0, %v5254
  %v5256 = vpop.f32.mrf.mxu0
  %5257 = vmatprep.mubr.f32.mxu0 0.0
  %5258 = vmatmul.mubr.f32.gmra.mxu0 %v4962
  %v5259 = vpop.f32.mrf.mxu0
  %v5260 = vadd.f32 0.0, %v5259
  %v5261 = vpop.f32.mrf.mxu0
  %5262 = vmatprep.mubr.f32.mxu0 0.0
  %5263 = vmatmul.mubr.f32.gmra.mxu0 %v4965
  %v5264 = vpop.f32.mrf.mxu0
  %v5265 = vadd.f32 0.0, %v5264
  %v5266 = vpop.f32.mrf.mxu0
  %5267 = vmatprep.mubr.f32.mxu0 0.0
  %5268 = vmatmul.mubr.f32.gmra.mxu0 %v4968
  %v5269 = vpop.f32.mrf.mxu0
  %v5270 = vadd.f32 0.0, %v5269
  %v5271 = vpop.f32.mrf.mxu0
  %5272 = vmatprep.mubr.f32.mxu0 0.0
  %5273 = vmatmul.mubr.f32.gmra.mxu0 %v4971
  %v5274 = vpop.f32.mrf.mxu0
  %v5275 = vadd.f32 0.0, %v5274
  %v5276 = vpop.f32.mrf.mxu0
  %5277 = vdwg.mxu0
  %v5278 = vmax.f32 %v5040, 1e-20
  %v5279 = vmax.f32 %v5045, 1e-20
  %v5280 = vmax.f32 %v5050, 1e-20
  %v5281 = vmax.f32 %v5055, 1e-20
  %v5282 = vmax.f32 %v5060, 1e-20
  %v5283 = vmax.f32 %v5065, 1e-20
  %v5284 = vmax.f32 %v5070, 1e-20
  %v5285 = vmax.f32 %v5075, 1e-20
  %v5286 = vmax.f32 %v5080, 1e-20
  %v5287 = vmax.f32 %v5085, 1e-20
  %v5288 = vmax.f32 %v5090, 1e-20
  %v5289 = vmax.f32 %v5095, 1e-20
  %v5290 = vmax.f32 %v5100, 1e-20
  %v5291 = vmax.f32 %v5105, 1e-20
  %v5292 = vmax.f32 %v5110, 1e-20
  %v5293 = vmax.f32 %v5115, 1e-20
  %v5294 = vmax.f32 %v5120, 1e-20
  %v5295 = vmax.f32 %v5125, 1e-20
  %v5296 = vmax.f32 %v5130, 1e-20
  %v5297 = vmax.f32 %v5135, 1e-20
  %v5298 = vmax.f32 %v5140, 1e-20
  %v5299 = vmax.f32 %v5145, 1e-20
  %v5300 = vmax.f32 %v5150, 1e-20
  %v5301 = vmax.f32 %v5155, 1e-20
  %v5302 = vmax.f32 %v5160, 1e-20
  %v5303 = vmax.f32 %v5165, 1e-20
  %v5304 = vmax.f32 %v5170, 1e-20
  %v5305 = vmax.f32 %v5175, 1e-20
  %v5306 = vmax.f32 %v5180, 1e-20
  %v5307 = vmax.f32 %v5185, 1e-20
  %v5308 = vmax.f32 %v5190, 1e-20
  %v5309 = vmax.f32 %v5195, 1e-20
  %v5310 = vmax.f32 %v5200, 1e-20
  %v5311 = vmax.f32 %v5205, 1e-20
  %v5312 = vmax.f32 %v5210, 1e-20
  %v5313 = vmax.f32 %v5215, 1e-20
  %v5314 = vmax.f32 %v5220, 1e-20
  %v5315 = vmax.f32 %v5225, 1e-20
  %v5316 = vmax.f32 %v5230, 1e-20
  %v5317 = vmax.f32 %v5235, 1e-20
  %v5318 = vmax.f32 %v5240, 1e-20
  %v5319 = vmax.f32 %v5245, 1e-20
  %v5320 = vmax.f32 %v5250, 1e-20
  %v5321 = vmax.f32 %v5255, 1e-20
  %v5322 = vmax.f32 %v5260, 1e-20
  %v5323 = vmax.f32 %v5265, 1e-20
  %v5324 = vmax.f32 %v5270, 1e-20
  %v5325 = vmax.f32 %v5275, 1e-20
  %v5326 = vrcp.pop %v5278
  %v5327 = vrcp.pop %v5279
  %v5328 = vrcp.pop %v5280
  %v5329 = vrcp.pop %v5281
  %v5330 = vrcp.pop %v5282
  %v5331 = vrcp.pop %v5283
  %v5332 = vrcp.pop %v5284
  %v5333 = vrcp.pop %v5285
  %v5334 = vrcp.pop %v5286
  %v5335 = vrcp.pop %v5287
  %v5336 = vrcp.pop %v5288
  %v5337 = vrcp.pop %v5289
  %v5338 = vrcp.pop %v5290
  %v5339 = vrcp.pop %v5291
  %v5340 = vrcp.pop %v5292
  %v5341 = vrcp.pop %v5293
  %v5342 = vrcp.pop %v5294
  %v5343 = vrcp.pop %v5295
  %v5344 = vrcp.pop %v5296
  %v5345 = vrcp.pop %v5297
  %v5346 = vrcp.pop %v5298
  %v5347 = vrcp.pop %v5299
  %v5348 = vrcp.pop %v5300
  %v5349 = vrcp.pop %v5301
  %v5350 = vrcp.pop %v5302
  %v5351 = vrcp.pop %v5303
  %v5352 = vrcp.pop %v5304
  %v5353 = vrcp.pop %v5305
  %v5354 = vrcp.pop %v5306
  %v5355 = vrcp.pop %v5307
  %v5356 = vrcp.pop %v5308
  %v5357 = vrcp.pop %v5309
  %v5358 = vrcp.pop %v5310
  %v5359 = vrcp.pop %v5311
  %v5360 = vrcp.pop %v5312
  %v5361 = vrcp.pop %v5313
  %v5362 = vrcp.pop %v5314
  %v5363 = vrcp.pop %v5315
  %v5364 = vrcp.pop %v5316
  %v5365 = vrcp.pop %v5317
  %v5366 = vrcp.pop %v5318
  %v5367 = vrcp.pop %v5319
  %v5368 = vrcp.pop %v5320
  %v5369 = vrcp.pop %v5321
  %v5370 = vrcp.pop %v5322
  %v5371 = vrcp.pop %v5323
  %v5372 = vrcp.pop %v5324
  %v5373 = vrcp.pop %v5325
  %5375 = vset.pattern.permute.xlu0 96
  %5376 = vperm.xlu0 %5375, %v5326
  %v5377 = vpop.permute.xlu0 %5376
  %5380 = vset.pattern.permute.xlu0 96
  %5381 = vperm.xlu0 %5380, %v5327
  %v5382 = vpop.permute.xlu0 %5381
  %5385 = vset.pattern.permute.xlu0 96
  %5386 = vperm.xlu0 %5385, %v5328
  %v5387 = vpop.permute.xlu0 %5386
  %5390 = vset.pattern.permute.xlu0 96
  %5391 = vperm.xlu0 %5390, %v5329
  %v5392 = vpop.permute.xlu0 %5391
  %5395 = vset.pattern.permute.xlu0 96
  %5396 = vperm.xlu0 %5395, %v5330
  %v5397 = vpop.permute.xlu0 %5396
  %5400 = vset.pattern.permute.xlu0 96
  %5401 = vperm.xlu0 %5400, %v5331
  %v5402 = vpop.permute.xlu0 %5401
  %5405 = vset.pattern.permute.xlu0 96
  %5406 = vperm.xlu0 %5405, %v5332
  %v5407 = vpop.permute.xlu0 %5406
  %5410 = vset.pattern.permute.xlu0 96
  %5411 = vperm.xlu0 %5410, %v5333
  %v5412 = vpop.permute.xlu0 %5411
  %5415 = vset.pattern.permute.xlu0 96
  %5416 = vperm.xlu0 %5415, %v5334
  %v5417 = vpop.permute.xlu0 %5416
  %5420 = vset.pattern.permute.xlu0 96
  %5421 = vperm.xlu0 %5420, %v5335
  %v5422 = vpop.permute.xlu0 %5421
  %5425 = vset.pattern.permute.xlu0 96
  %5426 = vperm.xlu0 %5425, %v5336
  %v5427 = vpop.permute.xlu0 %5426
  %5430 = vset.pattern.permute.xlu0 96
  %5431 = vperm.xlu0 %5430, %v5337
  %v5432 = vpop.permute.xlu0 %5431
  %5435 = vset.pattern.permute.xlu0 96
  %5436 = vperm.xlu0 %5435, %v5338
  %v5437 = vpop.permute.xlu0 %5436
  %5440 = vset.pattern.permute.xlu0 96
  %5441 = vperm.xlu0 %5440, %v5339
  %v5442 = vpop.permute.xlu0 %5441
  %5445 = vset.pattern.permute.xlu0 96
  %5446 = vperm.xlu0 %5445, %v5340
  %v5447 = vpop.permute.xlu0 %5446
  %5450 = vset.pattern.permute.xlu0 96
  %5451 = vperm.xlu0 %5450, %v5341
  %v5452 = vpop.permute.xlu0 %5451
  %5455 = vset.pattern.permute.xlu0 96
  %5456 = vperm.xlu0 %5455, %v5342
  %v5457 = vpop.permute.xlu0 %5456
  %5460 = vset.pattern.permute.xlu0 96
  %5461 = vperm.xlu0 %5460, %v5343
  %v5462 = vpop.permute.xlu0 %5461
  %5465 = vset.pattern.permute.xlu0 96
  %5466 = vperm.xlu0 %5465, %v5344
  %v5467 = vpop.permute.xlu0 %5466
  %5470 = vset.pattern.permute.xlu0 96
  %5471 = vperm.xlu0 %5470, %v5345
  %v5472 = vpop.permute.xlu0 %5471
  %5475 = vset.pattern.permute.xlu0 96
  %5476 = vperm.xlu0 %5475, %v5346
  %v5477 = vpop.permute.xlu0 %5476
  %5480 = vset.pattern.permute.xlu0 96
  %5481 = vperm.xlu0 %5480, %v5347
  %v5482 = vpop.permute.xlu0 %5481
  %5485 = vset.pattern.permute.xlu0 96
  %5486 = vperm.xlu0 %5485, %v5348
  %v5487 = vpop.permute.xlu0 %5486
  %5490 = vset.pattern.permute.xlu0 96
  %5491 = vperm.xlu0 %5490, %v5349
  %v5492 = vpop.permute.xlu0 %5491
  %5495 = vset.pattern.permute.xlu0 96
  %5496 = vperm.xlu0 %5495, %v5350
  %v5497 = vpop.permute.xlu0 %5496
  %5500 = vset.pattern.permute.xlu0 96
  %5501 = vperm.xlu0 %5500, %v5351
  %v5502 = vpop.permute.xlu0 %5501
  %5505 = vset.pattern.permute.xlu0 96
  %5506 = vperm.xlu0 %5505, %v5352
  %v5507 = vpop.permute.xlu0 %5506
  %5510 = vset.pattern.permute.xlu0 96
  %5511 = vperm.xlu0 %5510, %v5353
  %v5512 = vpop.permute.xlu0 %5511
  %5515 = vset.pattern.permute.xlu0 96
  %5516 = vperm.xlu0 %5515, %v5354
  %v5517 = vpop.permute.xlu0 %5516
  %5520 = vset.pattern.permute.xlu0 96
  %5521 = vperm.xlu0 %5520, %v5355
  %v5522 = vpop.permute.xlu0 %5521
  %5525 = vset.pattern.permute.xlu0 96
  %5526 = vperm.xlu0 %5525, %v5356
  %v5527 = vpop.permute.xlu0 %5526
  %5530 = vset.pattern.permute.xlu0 96
  %5531 = vperm.xlu0 %5530, %v5357
  %v5532 = vpop.permute.xlu0 %5531
  %5535 = vset.pattern.permute.xlu0 96
  %5536 = vperm.xlu0 %5535, %v5358
  %v5537 = vpop.permute.xlu0 %5536
  %5540 = vset.pattern.permute.xlu0 96
  %5541 = vperm.xlu0 %5540, %v5359
  %v5542 = vpop.permute.xlu0 %5541
  %5545 = vset.pattern.permute.xlu0 96
  %5546 = vperm.xlu0 %5545, %v5360
  %v5547 = vpop.permute.xlu0 %5546
  %5550 = vset.pattern.permute.xlu0 96
  %5551 = vperm.xlu0 %5550, %v5361
  %v5552 = vpop.permute.xlu0 %5551
  %5555 = vset.pattern.permute.xlu0 96
  %5556 = vperm.xlu0 %5555, %v5362
  %v5557 = vpop.permute.xlu0 %5556
  %5560 = vset.pattern.permute.xlu0 96
  %5561 = vperm.xlu0 %5560, %v5363
  %v5562 = vpop.permute.xlu0 %5561
  %5565 = vset.pattern.permute.xlu0 96
  %5566 = vperm.xlu0 %5565, %v5364
  %v5567 = vpop.permute.xlu0 %5566
  %5570 = vset.pattern.permute.xlu0 96
  %5571 = vperm.xlu0 %5570, %v5365
  %v5572 = vpop.permute.xlu0 %5571
  %5575 = vset.pattern.permute.xlu0 96
  %5576 = vperm.xlu0 %5575, %v5366
  %v5577 = vpop.permute.xlu0 %5576
  %5580 = vset.pattern.permute.xlu0 96
  %5581 = vperm.xlu0 %5580, %v5367
  %v5582 = vpop.permute.xlu0 %5581
  %5585 = vset.pattern.permute.xlu0 96
  %5586 = vperm.xlu0 %5585, %v5368
  %v5587 = vpop.permute.xlu0 %5586
  %5590 = vset.pattern.permute.xlu0 96
  %5591 = vperm.xlu0 %5590, %v5369
  %v5592 = vpop.permute.xlu0 %5591
  %5595 = vset.pattern.permute.xlu0 96
  %5596 = vperm.xlu0 %5595, %v5370
  %v5597 = vpop.permute.xlu0 %5596
  %5600 = vset.pattern.permute.xlu0 96
  %5601 = vperm.xlu0 %5600, %v5371
  %v5602 = vpop.permute.xlu0 %5601
  %5605 = vset.pattern.permute.xlu0 96
  %5606 = vperm.xlu0 %5605, %v5372
  %v5607 = vpop.permute.xlu0 %5606
  %5610 = vset.pattern.permute.xlu0 96
  %5611 = vperm.xlu0 %5610, %v5373
  %v5612 = vpop.permute.xlu0 %5611
  %v5614 = vmul.f32 %v5040, %v5377
  %v5615 = vmul.f32 %v5045, %v5382
  %v5616 = vmul.f32 %v5050, %v5387
  %v5617 = vmul.f32 %v5055, %v5392
  %v5618 = vmul.f32 %v5060, %v5397
  %v5619 = vmul.f32 %v5065, %v5402
  %v5620 = vmul.f32 %v5070, %v5407
  %v5621 = vmul.f32 %v5075, %v5412
  %v5622 = vmul.f32 %v5080, %v5417
  %v5623 = vmul.f32 %v5085, %v5422
  %v5624 = vmul.f32 %v5090, %v5427
  %v5625 = vmul.f32 %v5095, %v5432
  %v5626 = vmul.f32 %v5100, %v5437
  %v5627 = vmul.f32 %v5105, %v5442
  %v5628 = vmul.f32 %v5110, %v5447
  %v5629 = vmul.f32 %v5115, %v5452
  %v5630 = vmul.f32 %v5120, %v5457
  %v5631 = vmul.f32 %v5125, %v5462
  %v5632 = vmul.f32 %v5130, %v5467
  %v5633 = vmul.f32 %v5135, %v5472
  %v5634 = vmul.f32 %v5140, %v5477
  %v5635 = vmul.f32 %v5145, %v5482
  %v5636 = vmul.f32 %v5150, %v5487
  %v5637 = vmul.f32 %v5155, %v5492
  %v5638 = vmul.f32 %v5160, %v5497
  %v5639 = vmul.f32 %v5165, %v5502
  %v5640 = vmul.f32 %v5170, %v5507
  %v5641 = vmul.f32 %v5175, %v5512
  %v5642 = vmul.f32 %v5180, %v5517
  %v5643 = vmul.f32 %v5185, %v5522
  %v5644 = vmul.f32 %v5190, %v5527
  %v5645 = vmul.f32 %v5195, %v5532
  %v5646 = vmul.f32 %v5200, %v5537
  %v5647 = vmul.f32 %v5205, %v5542
  %v5648 = vmul.f32 %v5210, %v5547
  %v5649 = vmul.f32 %v5215, %v5552
  %v5650 = vmul.f32 %v5220, %v5557
  %v5651 = vmul.f32 %v5225, %v5562
  %v5652 = vmul.f32 %v5230, %v5567
  %v5653 = vmul.f32 %v5235, %v5572
  %v5654 = vmul.f32 %v5240, %v5577
  %v5655 = vmul.f32 %v5245, %v5582
  %v5656 = vmul.f32 %v5250, %v5587
  %v5657 = vmul.f32 %v5255, %v5592
  %v5658 = vmul.f32 %v5260, %v5597
  %v5659 = vmul.f32 %v5265, %v5602
  %v5660 = vmul.f32 %v5270, %v5607
  %v5661 = vmul.f32 %v5275, %v5612
  %5662 = vst.msk [vmem:[#allocation2] sm:$0xff] %vm3135, %v5614
  %5663 = vst.msk [vmem:[#allocation2 + $0x8] sm:$0xff] %vm3135, %v5615
  %5664 = vst.msk [vmem:[#allocation2 + $0x10] sm:$0xff] %vm3135, %v5616
  %5665 = vst.msk [vmem:[#allocation2 + $0x18] sm:$0xff] %vm3135, %v5617
  %5666 = vst.msk [vmem:[#allocation2 + $0x20] sm:$0xff] %vm3135, %v5618
  %5667 = vst.msk [vmem:[#allocation2 + $0x28] sm:$0xff] %vm3135, %v5619
  %5668 = vst.msk [vmem:[#allocation2 + $0x30] sm:$0xff] %vm3135, %v5620
  %5669 = vst.msk [vmem:[#allocation2 + $0x38] sm:$0xff] %vm3135, %v5621
  %5670 = vst.msk [vmem:[#allocation2] sm:$0xff] %vm3144, %v5622
  %5671 = vst.msk [vmem:[#allocation2 + $0x8] sm:$0xff] %vm3144, %v5623
  %5672 = vst.msk [vmem:[#allocation2 + $0x10] sm:$0xff] %vm3144, %v5624
  %5673 = vst.msk [vmem:[#allocation2 + $0x18] sm:$0xff] %vm3144, %v5625
  %5674 = vst.msk [vmem:[#allocation2 + $0x20] sm:$0xff] %vm3144, %v5626
  %5675 = vst.msk [vmem:[#allocation2 + $0x28] sm:$0xff] %vm3144, %v5627
  %5676 = vst.msk [vmem:[#allocation2 + $0x30] sm:$0xff] %vm3144, %v5628
  %5677 = vst.msk [vmem:[#allocation2 + $0x38] sm:$0xff] %vm3144, %v5629
  %5678 = vst.msk [vmem:[#allocation2] sm:$0xff] %vm3153, %v5630
  %5679 = vst.msk [vmem:[#allocation2 + $0x8] sm:$0xff] %vm3153, %v5631
  %5680 = vst.msk [vmem:[#allocation2 + $0x10] sm:$0xff] %vm3153, %v5632
  %5681 = vst.msk [vmem:[#allocation2 + $0x18] sm:$0xff] %vm3153, %v5633
  %5682 = vst.msk [vmem:[#allocation2 + $0x20] sm:$0xff] %vm3153, %v5634
  %5683 = vst.msk [vmem:[#allocation2 + $0x28] sm:$0xff] %vm3153, %v5635
  %5684 = vst.msk [vmem:[#allocation2 + $0x30] sm:$0xff] %vm3153, %v5636
  %5685 = vst.msk [vmem:[#allocation2 + $0x38] sm:$0xff] %vm3153, %v5637
  %5686 = vst.msk [vmem:[#allocation2] sm:$0xff] %vm3162, %v5638
  %5687 = vst.msk [vmem:[#allocation2 + $0x8] sm:$0xff] %vm3162, %v5639
  %5688 = vst.msk [vmem:[#allocation2 + $0x10] sm:$0xff] %vm3162, %v5640
  %5689 = vst.msk [vmem:[#allocation2 + $0x18] sm:$0xff] %vm3162, %v5641
  %5690 = vst.msk [vmem:[#allocation2 + $0x20] sm:$0xff] %vm3162, %v5642
  %5691 = vst.msk [vmem:[#allocation2 + $0x28] sm:$0xff] %vm3162, %v5643
  %5692 = vst.msk [vmem:[#allocation2 + $0x30] sm:$0xff] %vm3162, %v5644
  %5693 = vst.msk [vmem:[#allocation2 + $0x38] sm:$0xff] %vm3162, %v5645
  %5694 = vst.msk [vmem:[#allocation2] sm:$0xff] %vm3171, %v5646
  %5695 = vst.msk [vmem:[#allocation2 + $0x8] sm:$0xff] %vm3171, %v5647
  %5696 = vst.msk [vmem:[#allocation2 + $0x10] sm:$0xff] %vm3171, %v5648
  %5697 = vst.msk [vmem:[#allocation2 + $0x18] sm:$0xff] %vm3171, %v5649
  %5698 = vst.msk [vmem:[#allocation2 + $0x20] sm:$0xff] %vm3171, %v5650
  %5699 = vst.msk [vmem:[#allocation2 + $0x28] sm:$0xff] %vm3171, %v5651
  %5700 = vst.msk [vmem:[#allocation2 + $0x30] sm:$0xff] %vm3171, %v5652
  %5701 = vst.msk [vmem:[#allocation2 + $0x38] sm:$0xff] %vm3171, %v5653
  %5702 = vst.msk [vmem:[#allocation2] sm:$0xff] %vm3180, %v5654
  %5703 = vst.msk [vmem:[#allocation2 + $0x8] sm:$0xff] %vm3180, %v5655
  %5704 = vst.msk [vmem:[#allocation2 + $0x10] sm:$0xff] %vm3180, %v5656
  %5705 = vst.msk [vmem:[#allocation2 + $0x18] sm:$0xff] %vm3180, %v5657
  %5706 = vst.msk [vmem:[#allocation2 + $0x20] sm:$0xff] %vm3180, %v5658
  %5707 = vst.msk [vmem:[#allocation2 + $0x28] sm:$0xff] %vm3180, %v5659
  %5708 = vst.msk [vmem:[#allocation2 + $0x30] sm:$0xff] %vm3180, %v5660
  %5709 = vst.msk [vmem:[#allocation2 + $0x38] sm:$0xff] %vm3180, %v5661
  %v5710 = vld [vmem:[#allocation2] sm:$0xff]
  %v5711 = vld [vmem:[#allocation2 + $0x8] sm:$0xff]
  %v5712 = vld [vmem:[#allocation2 + $0x10] sm:$0xff]
  %v5713 = vld [vmem:[#allocation2 + $0x18] sm:$0xff]
  %v5714 = vld [vmem:[#allocation2 + $0x20] sm:$0xff]
  %v5715 = vld [vmem:[#allocation2 + $0x28] sm:$0xff]
  %v5716 = vld [vmem:[#allocation2 + $0x30] sm:$0xff]
  %v5717 = vld [vmem:[#allocation2 + $0x38] sm:$0xff]
  %v5718 = vld [vmem:[%s11] sm:$0x1]
  %v5720 = vlaneseq
  %v5721 = vshrl.u32 %v5720, 7
  %v5722 = vsub.s32 0, %v5721
  %v5723 = vrot.slane %v5718, %v5722
  %v5725 = vadd.f32 %v5710, %v5723
  %v5726 = vadd.f32 %v5711, %v5723
  %v5727 = vadd.f32 %v5712, %v5723
  %v5728 = vadd.f32 %v5713, %v5723
  %v5729 = vadd.f32 %v5714, %v5723
  %v5730 = vadd.f32 %v5715, %v5723
  %v5731 = vadd.f32 %v5716, %v5723
  %v5732 = vadd.f32 %v5717, %v5723
  %vm5733 = vcmp.gt.f32.partialorder %v5725, 0.0
  %vm5734 = vcmp.gt.f32.partialorder %v5726, 0.0
  %vm5735 = vcmp.gt.f32.partialorder %v5727, 0.0
  %vm5736 = vcmp.gt.f32.partialorder %v5728, 0.0
  %vm5737 = vcmp.gt.f32.partialorder %v5729, 0.0
  %vm5738 = vcmp.gt.f32.partialorder %v5730, 0.0
  %vm5739 = vcmp.gt.f32.partialorder %v5731, 0.0
  %vm5740 = vcmp.gt.f32.partialorder %v5732, 0.0
  %v5741 = vmul.f32 %v5725, 0.01
  %v5742 = vmul.f32 %v5726, 0.01
  %v5743 = vmul.f32 %v5727, 0.01
  %v5744 = vmul.f32 %v5728, 0.01
  %v5745 = vmul.f32 %v5729, 0.01
  %v5746 = vmul.f32 %v5730, 0.01
  %v5747 = vmul.f32 %v5731, 0.01
  %v5748 = vmul.f32 %v5732, 0.01
  %v5749 = vsel %vm5733, %v5725, %v5741
  %v5750 = vsel %vm5734, %v5726, %v5742
  %v5751 = vsel %vm5735, %v5727, %v5743
  %v5752 = vsel %vm5736, %v5728, %v5744
  %v5753 = vsel %vm5737, %v5729, %v5745
  %v5754 = vsel %vm5738, %v5730, %v5746
  %v5755 = vsel %vm5739, %v5731, %v5747
  %v5756 = vsel %vm5740, %v5732, %v5748
  %5765 = vrot.lane.b32.xlu0 %v5749, 80
  %v5766 = vpop.permute.xlu0 %5765
  %5767 = vrot.lane.b32.xlu0 %v5750, 80
  %v5768 = vpop.permute.xlu0 %5767
  %5769 = vrot.lane.b32.xlu0 %v5751, 80
  %v5770 = vpop.permute.xlu0 %5769
  %5771 = vrot.lane.b32.xlu0 %v5752, 80
  %v5772 = vpop.permute.xlu0 %5771
  %5773 = vrot.lane.b32.xlu0 %v5753, 80
  %v5774 = vpop.permute.xlu0 %5773
  %5775 = vrot.lane.b32.xlu0 %v5754, 80
  %v5776 = vpop.permute.xlu0 %5775
  %5777 = vrot.lane.b32.xlu0 %v5755, 80
  %v5778 = vpop.permute.xlu0 %5777
  %5779 = vrot.lane.b32.xlu0 %v5756, 80
  %v5780 = vpop.permute.xlu0 %5779
  %v5789 = vadd.f32 %v5749, %v5766
  %v5790 = vadd.f32 %v5750, %v5768
  %v5791 = vadd.f32 %v5751, %v5770
  %v5792 = vadd.f32 %v5752, %v5772
  %v5793 = vadd.f32 %v5753, %v5774
  %v5794 = vadd.f32 %v5754, %v5776
  %v5795 = vadd.f32 %v5755, %v5778
  %v5796 = vadd.f32 %v5756, %v5780
  %v5797 = vmul.f32 %v5789, 0.5
  %v5798 = vmul.f32 %v5790, 0.5
  %v5799 = vmul.f32 %v5791, 0.5
  %v5800 = vmul.f32 %v5792, 0.5
  %v5801 = vmul.f32 %v5793, 0.5
  %v5802 = vmul.f32 %v5794, 0.5
  %v5803 = vmul.f32 %v5795, 0.5
  %v5804 = vmul.f32 %v5796, 0.5
  %v5805 = vld [vmem:[%s14] sm:$0xff]
  %v5806 = vld [vmem:[%s14 + $0x8] sm:$0xff]
  %v5807 = vld [vmem:[%s14 + $0x10] sm:$0xff]
  %v5808 = vld [vmem:[%s14 + $0x18] sm:$0xff]
  %v5809 = vld [vmem:[%s14 + $0x20] sm:$0xff]
  %v5810 = vld [vmem:[%s14 + $0x28] sm:$0xff]
  %v5812 = vsel %vm3290, %v5797, 0
  %v5815 = vsel %vm3290, %v5798, 0
  %v5818 = vsel %vm3290, %v5799, 0
  %v5821 = vsel %vm3290, %v5800, 0
  %v5824 = vsel %vm3290, %v5801, 0
  %v5827 = vsel %vm3290, %v5802, 0
  %v5830 = vsel %vm3290, %v5803, 0
  %v5833 = vsel %vm3290, %v5804, 0
  %5835 = vmatprep.subr.mxu0 0.0
  %5836 = vmatpush1.msra.mxu0 0.0
  %5837 = vmatprep.subr.mxu0 0.0
  %5838 = vmatpush1.msra.mxu0 0.0
  %5839 = vmatprep.subr.mxu0 0.0
  %5840 = vmatpush1.msra.mxu0 0.0
  %5841 = vmatprep.subr.mxu0 0.0
  %5842 = vmatpush1.msra.mxu0 0.0
  %5843 = vmatprep.subr.mxu0 0.0
  %5844 = vmatpush1.msra.mxu0 0.0
  %5845 = vmatprep.subr.mxu0 0.0
  %5846 = vmatpush1.msra.mxu0 0.0
  %5847 = vmatprep.subr.mxu0 0.0
  %5848 = vmatpush1.msra.mxu0 0.0
  %5849 = vmatprep.subr.mxu0 0.0
  %5850 = vmatpush1.msra.mxu0 0.0
  %5851 = vmatprep.subr.mxu0 0.0
  %5852 = vmatpush1.msra.mxu0 0.0
  %5853 = vmatprep.subr.mxu0 0.0
  %5854 = vmatpush1.msra.mxu0 0.0
  %5855 = vmatprep.subr.mxu0 0.0
  %5856 = vmatpush1.msra.mxu0 %v5810
  %5857 = vmatprep.subr.mxu0 0.0
  %5858 = vmatpush1.msra.mxu0 %v5809
  %5859 = vmatprep.subr.mxu0 0.0
  %5860 = vmatpush1.msra.mxu0 %v5808
  %5861 = vmatprep.subr.mxu0 0.0
  %5862 = vmatpush1.msra.mxu0 %v5807
  %5863 = vmatprep.subr.mxu0 0.0
  %5864 = vmatpush1.msra.mxu0 %v5806
  %5865 = vmatprep.subr.mxu0 0.0
  %5866 = vmatpush1.msra.mxu0 %v5805
  %5867 = vmatprep.subr.mxu0 0.0
  %5868 = vmatpush2.msra.mxu0 0.0
  %5869 = vmatprep.subr.mxu0 0.0
  %5870 = vmatpush2.msra.mxu0 0.0
  %5871 = vmatprep.subr.mxu0 0.0
  %5872 = vmatpush2.msra.mxu0 0.0
  %5873 = vmatprep.subr.mxu0 0.0
  %5874 = vmatpush2.msra.mxu0 0.0
  %5875 = vmatprep.subr.mxu0 0.0
  %5876 = vmatpush2.msra.mxu0 0.0
  %5877 = vmatprep.subr.mxu0 0.0
  %5878 = vmatpush2.msra.mxu0 0.0
  %5879 = vmatprep.subr.mxu0 0.0
  %5880 = vmatpush2.msra.mxu0 0.0
  %5881 = vmatprep.subr.mxu0 0.0
  %5882 = vmatpush2.msra.mxu0 0.0
  %5883 = vmatprep.subr.mxu0 0.0
  %5884 = vmatpush2.msra.mxu0 0.0
  %5885 = vmatprep.subr.mxu0 0.0
  %5886 = vmatpush2.msra.mxu0 0.0
  %5887 = vmatprep.subr.mxu0 0.0
  %5888 = vmatpush2.msra.mxu0 0.0
  %5889 = vmatprep.subr.mxu0 0.0
  %5890 = vmatpush2.msra.mxu0 0.0
  %5891 = vmatprep.subr.mxu0 0.0
  %5892 = vmatpush2.msra.mxu0 0.0
  %5893 = vmatprep.subr.mxu0 0.0
  %5894 = vmatpush2.msra.mxu0 0.0
  %5895 = vmatprep.subr.mxu0 0.0
  %5896 = vmatpush2.msra.mxu0 0.0
  %5897 = vmatprep.subr.mxu0 0.0
  %5898 = vmatpush2.msra.mxu0 0.0
  %5899 = vmatprep.mubr.f32.mxu0 0.0
  %5900 = vmatmul.mubr.f32.gmra.mxu0 %v5812
  %v5901 = vpop.f32.mrf.mxu0
  %v5902 = vadd.f32 0.0, %v5901
  %v5903 = vpop.f32.mrf.mxu0
  %5904 = vmatprep.mubr.f32.mxu0 0.0
  %5905 = vmatmul.mubr.f32.gmra.mxu0 %v5815
  %v5906 = vpop.f32.mrf.mxu0
  %v5907 = vadd.f32 0.0, %v5906
  %v5908 = vpop.f32.mrf.mxu0
  %5909 = vmatprep.mubr.f32.mxu0 0.0
  %5910 = vmatmul.mubr.f32.gmra.mxu0 %v5818
  %v5911 = vpop.f32.mrf.mxu0
  %v5912 = vadd.f32 0.0, %v5911
  %v5913 = vpop.f32.mrf.mxu0
  %5914 = vmatprep.mubr.f32.mxu0 0.0
  %5915 = vmatmul.mubr.f32.gmra.mxu0 %v5821
  %v5916 = vpop.f32.mrf.mxu0
  %v5917 = vadd.f32 0.0, %v5916
  %v5918 = vpop.f32.mrf.mxu0
  %5919 = vmatprep.mubr.f32.mxu0 0.0
  %5920 = vmatmul.mubr.f32.gmra.mxu0 %v5824
  %v5921 = vpop.f32.mrf.mxu0
  %v5922 = vadd.f32 0.0, %v5921
  %v5923 = vpop.f32.mrf.mxu0
  %5924 = vmatprep.mubr.f32.mxu0 0.0
  %5925 = vmatmul.mubr.f32.gmra.mxu0 %v5827
  %v5926 = vpop.f32.mrf.mxu0
  %v5927 = vadd.f32 0.0, %v5926
  %v5928 = vpop.f32.mrf.mxu0
  %5929 = vmatprep.mubr.f32.mxu0 0.0
  %5930 = vmatmul.mubr.f32.gmra.mxu0 %v5830
  %v5931 = vpop.f32.mrf.mxu0
  %v5932 = vadd.f32 0.0, %v5931
  %v5933 = vpop.f32.mrf.mxu0
  %5934 = vmatprep.mubr.f32.mxu0 0.0
  %5935 = vmatmul.mubr.f32.gmra.mxu0 %v5833
  %v5936 = vpop.f32.mrf.mxu0
  %v5937 = vadd.f32 0.0, %v5936
  %v5938 = vpop.f32.mrf.mxu0
  %5939 = vdwg.mxu0
  %v5940 = vld [vmem:[%s15] sm:$0xff]
  %v5941 = vld [vmem:[%s15 + $0x8] sm:$0xff]
  %v5942 = vld [vmem:[%s15 + $0x10] sm:$0xff]
  %v5943 = vld [vmem:[%s15 + $0x18] sm:$0xff]
  %v5944 = vld [vmem:[%s15 + $0x20] sm:$0xff]
  %v5945 = vld [vmem:[%s15 + $0x28] sm:$0xff]
  %v5946 = vld [vmem:[%s15 + $0x30] sm:$0xff]
  %v5947 = vld [vmem:[%s15 + $0x38] sm:$0xff]
  %v5948 = vld [vmem:[%s15 + $0x40] sm:$0xff]
  %v5949 = vld [vmem:[%s15 + $0x48] sm:$0xff]
  %v5950 = vld [vmem:[%s15 + $0x50] sm:$0xff]
  %v5951 = vld [vmem:[%s15 + $0x58] sm:$0xff]
  %v5952 = vld [vmem:[%s15 + $0x60] sm:$0xff]
  %v5953 = vld [vmem:[%s15 + $0x68] sm:$0xff]
  %v5954 = vld [vmem:[%s15 + $0x70] sm:$0xff]
  %v5955 = vld [vmem:[%s15 + $0x78] sm:$0xff]
  %5964 = vrot.lane.b32.xlu0 %v5902, 127
  %v5965 = vpop.permute.xlu0 %5964
  %5966 = vrot.lane.b32.xlu0 %v5907, 127
  %v5967 = vpop.permute.xlu0 %5966
  %5968 = vrot.lane.b32.xlu0 %v5912, 127
  %v5969 = vpop.permute.xlu0 %5968
  %5970 = vrot.lane.b32.xlu0 %v5917, 127
  %v5971 = vpop.permute.xlu0 %5970
  %5972 = vrot.lane.b32.xlu0 %v5922, 127
  %v5973 = vpop.permute.xlu0 %5972
  %5974 = vrot.lane.b32.xlu0 %v5927, 127
  %v5975 = vpop.permute.xlu0 %5974
  %5976 = vrot.lane.b32.xlu0 %v5932, 127
  %v5977 = vpop.permute.xlu0 %5976
  %5978 = vrot.lane.b32.xlu0 %v5937, 127
  %v5979 = vpop.permute.xlu0 %5978
  %5980 = vset.pattern.permute.xlu0 16
  %5981 = vperm.xlu0 %5980, %v5902
  %v5982 = vpop.permute.xlu0 %5981
  %5984 = vset.pattern.permute.xlu0 16
  %5985 = vperm.xlu0 %5984, %v5907
  %v5986 = vpop.permute.xlu0 %5985
  %5988 = vset.pattern.permute.xlu0 16
  %5989 = vperm.xlu0 %5988, %v5912
  %v5990 = vpop.permute.xlu0 %5989
  %5992 = vset.pattern.permute.xlu0 16
  %5993 = vperm.xlu0 %5992, %v5917
  %v5994 = vpop.permute.xlu0 %5993
  %5996 = vset.pattern.permute.xlu0 16
  %5997 = vperm.xlu0 %5996, %v5922
  %v5998 = vpop.permute.xlu0 %5997
  %6000 = vset.pattern.permute.xlu0 16
  %6001 = vperm.xlu0 %6000, %v5927
  %v6002 = vpop.permute.xlu0 %6001
  %6004 = vset.pattern.permute.xlu0 16
  %6005 = vperm.xlu0 %6004, %v5932
  %v6006 = vpop.permute.xlu0 %6005
  %6008 = vset.pattern.permute.xlu0 16
  %6009 = vperm.xlu0 %6008, %v5937
  %v6010 = vpop.permute.xlu0 %6009
  %6012 = vset.pattern.permute.xlu0 16
  %6013 = vperm.xlu0 %6012, %v5965
  %v6014 = vpop.permute.xlu0 %6013
  %6016 = vset.pattern.permute.xlu0 16
  %6017 = vperm.xlu0 %6016, %v5967
  %v6018 = vpop.permute.xlu0 %6017
  %6020 = vset.pattern.permute.xlu0 16
  %6021 = vperm.xlu0 %6020, %v5969
  %v6022 = vpop.permute.xlu0 %6021
  %6024 = vset.pattern.permute.xlu0 16
  %6025 = vperm.xlu0 %6024, %v5971
  %v6026 = vpop.permute.xlu0 %6025
  %6028 = vset.pattern.permute.xlu0 16
  %6029 = vperm.xlu0 %6028, %v5973
  %v6030 = vpop.permute.xlu0 %6029
  %6032 = vset.pattern.permute.xlu0 16
  %6033 = vperm.xlu0 %6032, %v5975
  %v6034 = vpop.permute.xlu0 %6033
  %6036 = vset.pattern.permute.xlu0 16
  %6037 = vperm.xlu0 %6036, %v5977
  %v6038 = vpop.permute.xlu0 %6037
  %6040 = vset.pattern.permute.xlu0 16
  %6041 = vperm.xlu0 %6040, %v5979
  %v6042 = vpop.permute.xlu0 %6041
  %v6045 = vsel %vm3290, %v5940, 0
  %v6048 = vsel %vm3290, %v5941, 0
  %v6051 = vsel %vm3290, %v5942, 0
  %v6054 = vsel %vm3290, %v5943, 0
  %v6057 = vsel %vm3290, %v5944, 0
  %v6060 = vsel %vm3290, %v5945, 0
  %v6063 = vsel %vm3290, %v5946, 0
  %v6066 = vsel %vm3290, %v5947, 0
  %v6069 = vsel %vm3290, %v5948, 0
  %v6072 = vsel %vm3290, %v5949, 0
  %v6075 = vsel %vm3290, %v5950, 0
  %v6078 = vsel %vm3290, %v5951, 0
  %v6081 = vsel %vm3290, %v5952, 0
  %v6084 = vsel %vm3290, %v5953, 0
  %v6087 = vsel %vm3290, %v5954, 0
  %v6090 = vsel %vm3290, %v5955, 0
  %6092 = vmatprep.subr.mxu0 0.0
  %6093 = vmatpush1.xpose.msra.mxu0 0.0
  %6094 = vmatprep.subr.mxu0 0.0
  %6095 = vmatpush1.xpose.msra.mxu0 0.0
  %6096 = vmatprep.subr.mxu0 0.0
  %6097 = vmatpush1.xpose.msra.mxu0 0.0
  %6098 = vmatprep.subr.mxu0 0.0
  %6099 = vmatpush1.xpose.msra.mxu0 0.0
  %6100 = vmatprep.subr.mxu0 0.0
  %6101 = vmatpush1.xpose.msra.mxu0 0.0
  %6102 = vmatprep.subr.mxu0 0.0
  %6103 = vmatpush1.xpose.msra.mxu0 0.0
  %6104 = vmatprep.subr.mxu0 0.0
  %6105 = vmatpush1.xpose.msra.mxu0 0.0
  %6106 = vmatprep.subr.mxu0 0.0
  %6107 = vmatpush1.xpose.msra.mxu0 0.0
  %6108 = vmatprep.subr.mxu0 0.0
  %6109 = vmatpush1.xpose.msra.mxu0 %v5833
  %6110 = vmatprep.subr.mxu0 0.0
  %6111 = vmatpush1.xpose.msra.mxu0 %v5830
  %6112 = vmatprep.subr.mxu0 0.0
  %6113 = vmatpush1.xpose.msra.mxu0 %v5827
  %6114 = vmatprep.subr.mxu0 0.0
  %6115 = vmatpush1.xpose.msra.mxu0 %v5824
  %6116 = vmatprep.subr.mxu0 0.0
  %6117 = vmatpush1.xpose.msra.mxu0 %v5821
  %6118 = vmatprep.subr.mxu0 0.0
  %6119 = vmatpush1.xpose.msra.mxu0 %v5818
  %6120 = vmatprep.subr.mxu0 0.0
  %6121 = vmatpush1.xpose.msra.mxu0 %v5815
  %6122 = vmatprep.subr.mxu0 0.0
  %6123 = vmatpush1.xpose.msra.mxu0 %v5812
  %6124 = vmatprep.subr.mxu0 0.0
  %6125 = vmatpush2.xpose.msra.mxu0 0.0
  %6126 = vmatprep.subr.mxu0 0.0
  %6127 = vmatpush2.xpose.msra.mxu0 0.0
  %6128 = vmatprep.subr.mxu0 0.0
  %6129 = vmatpush2.xpose.msra.mxu0 0.0
  %6130 = vmatprep.subr.mxu0 0.0
  %6131 = vmatpush2.xpose.msra.mxu0 0.0
  %6132 = vmatprep.subr.mxu0 0.0
  %6133 = vmatpush2.xpose.msra.mxu0 0.0
  %6134 = vmatprep.subr.mxu0 0.0
  %6135 = vmatpush2.xpose.msra.mxu0 0.0
  %6136 = vmatprep.subr.mxu0 0.0
  %6137 = vmatpush2.xpose.msra.mxu0 0.0
  %6138 = vmatprep.subr.mxu0 0.0
  %6139 = vmatpush2.xpose.msra.mxu0 0.0
  %6140 = vmatprep.subr.mxu0 0.0
  %6141 = vmatpush2.xpose.msra.mxu0 0.0
  %6142 = vmatprep.subr.mxu0 0.0
  %6143 = vmatpush2.xpose.msra.mxu0 0.0
  %6144 = vmatprep.subr.mxu0 0.0
  %6145 = vmatpush2.xpose.msra.mxu0 0.0
  %6146 = vmatprep.subr.mxu0 0.0
  %6147 = vmatpush2.xpose.msra.mxu0 0.0
  %6148 = vmatprep.subr.mxu0 0.0
  %6149 = vmatpush2.xpose.msra.mxu0 0.0
  %6150 = vmatprep.subr.mxu0 0.0
  %6151 = vmatpush2.xpose.msra.mxu0 0.0
  %6152 = vmatprep.subr.mxu0 0.0
  %6153 = vmatpush2.xpose.msra.mxu0 0.0
  %6154 = vmatprep.subr.mxu0 0.0
  %6155 = vmatpush2.xpose.msra.mxu0 0.0
  %6156 = vmatprep.mubr.f32.mxu0 0.0
  %6157 = vmatmul.mubr.f32.gmra.mxu0 %v6045
  %v6158 = vpop.f32.mrf.mxu0
  %v6159 = vadd.f32 %v5982, %v6158
  %v6160 = vpop.f32.mrf.mxu0
  %6161 = vmatprep.mubr.f32.mxu0 0.0
  %6162 = vmatmul.mubr.f32.gmra.mxu0 %v6048
  %v6163 = vpop.f32.mrf.mxu0
  %v6164 = vadd.f32 %v5986, %v6163
  %v6165 = vpop.f32.mrf.mxu0
  %6166 = vmatprep.mubr.f32.mxu0 0.0
  %6167 = vmatmul.mubr.f32.gmra.mxu0 %v6051
  %v6168 = vpop.f32.mrf.mxu0
  %v6169 = vadd.f32 %v5990, %v6168
  %v6170 = vpop.f32.mrf.mxu0
  %6171 = vmatprep.mubr.f32.mxu0 0.0
  %6172 = vmatmul.mubr.f32.gmra.mxu0 %v6054
  %v6173 = vpop.f32.mrf.mxu0
  %v6174 = vadd.f32 %v5994, %v6173
  %v6175 = vpop.f32.mrf.mxu0
  %6176 = vmatprep.mubr.f32.mxu0 0.0
  %6177 = vmatmul.mubr.f32.gmra.mxu0 %v6057
  %v6178 = vpop.f32.mrf.mxu0
  %v6179 = vadd.f32 %v5998, %v6178
  %v6180 = vpop.f32.mrf.mxu0
  %6181 = vmatprep.mubr.f32.mxu0 0.0
  %6182 = vmatmul.mubr.f32.gmra.mxu0 %v6060
  %v6183 = vpop.f32.mrf.mxu0
  %v6184 = vadd.f32 %v6002, %v6183
  %v6185 = vpop.f32.mrf.mxu0
  %6186 = vmatprep.mubr.f32.mxu0 0.0
  %6187 = vmatmul.mubr.f32.gmra.mxu0 %v6063
  %v6188 = vpop.f32.mrf.mxu0
  %v6189 = vadd.f32 %v6006, %v6188
  %v6190 = vpop.f32.mrf.mxu0
  %6191 = vmatprep.mubr.f32.mxu0 0.0
  %6192 = vmatmul.mubr.f32.gmra.mxu0 %v6066
  %v6193 = vpop.f32.mrf.mxu0
  %v6194 = vadd.f32 %v6010, %v6193
  %v6195 = vpop.f32.mrf.mxu0
  %6196 = vmatprep.mubr.f32.mxu0 0.0
  %6197 = vmatmul.mubr.f32.gmra.mxu0 %v6069
  %v6198 = vpop.f32.mrf.mxu0
  %v6199 = vadd.f32 %v6014, %v6198
  %v6200 = vpop.f32.mrf.mxu0
  %6201 = vmatprep.mubr.f32.mxu0 0.0
  %6202 = vmatmul.mubr.f32.gmra.mxu0 %v6072
  %v6203 = vpop.f32.mrf.mxu0
  %v6204 = vadd.f32 %v6018, %v6203
  %v6205 = vpop.f32.mrf.mxu0
  %6206 = vmatprep.mubr.f32.mxu0 0.0
  %6207 = vmatmul.mubr.f32.gmra.mxu0 %v6075
  %v6208 = vpop.f32.mrf.mxu0
  %v6209 = vadd.f32 %v6022, %v6208
  %v6210 = vpop.f32.mrf.mxu0
  %6211 = vmatprep.mubr.f32.mxu0 0.0
  %6212 = vmatmul.mubr.f32.gmra.mxu0 %v6078
  %v6213 = vpop.f32.mrf.mxu0
  %v6214 = vadd.f32 %v6026, %v6213
  %v6215 = vpop.f32.mrf.mxu0
  %6216 = vmatprep.mubr.f32.mxu0 0.0
  %6217 = vmatmul.mubr.f32.gmra.mxu0 %v6081
  %v6218 = vpop.f32.mrf.mxu0
  %v6219 = vadd.f32 %v6030, %v6218
  %v6220 = vpop.f32.mrf.mxu0
  %6221 = vmatprep.mubr.f32.mxu0 0.0
  %6222 = vmatmul.mubr.f32.gmra.mxu0 %v6084
  %v6223 = vpop.f32.mrf.mxu0
  %v6224 = vadd.f32 %v6034, %v6223
  %v6225 = vpop.f32.mrf.mxu0
  %6226 = vmatprep.mubr.f32.mxu0 0.0
  %6227 = vmatmul.mubr.f32.gmra.mxu0 %v6087
  %v6228 = vpop.f32.mrf.mxu0
  %v6229 = vadd.f32 %v6038, %v6228
  %v6230 = vpop.f32.mrf.mxu0
  %6231 = vmatprep.mubr.f32.mxu0 0.0
  %6232 = vmatmul.mubr.f32.gmra.mxu0 %v6090
  %v6233 = vpop.f32.mrf.mxu0
  %v6234 = vadd.f32 %v6042, %v6233
  %v6235 = vpop.f32.mrf.mxu0
  %6236 = vdwg.mxu0
  %vm6237 = vcmp.gt.f32.partialorder %v6159, 0.0
  %vm6238 = vcmp.gt.f32.partialorder %v6164, 0.0
  %vm6239 = vcmp.gt.f32.partialorder %v6169, 0.0
  %vm6240 = vcmp.gt.f32.partialorder %v6174, 0.0
  %vm6241 = vcmp.gt.f32.partialorder %v6179, 0.0
  %vm6242 = vcmp.gt.f32.partialorder %v6184, 0.0
  %vm6243 = vcmp.gt.f32.partialorder %v6189, 0.0
  %vm6244 = vcmp.gt.f32.partialorder %v6194, 0.0
  %vm6245 = vcmp.gt.f32.partialorder %v6199, 0.0
  %vm6246 = vcmp.gt.f32.partialorder %v6204, 0.0
  %vm6247 = vcmp.gt.f32.partialorder %v6209, 0.0
  %vm6248 = vcmp.gt.f32.partialorder %v6214, 0.0
  %vm6249 = vcmp.gt.f32.partialorder %v6219, 0.0
  %vm6250 = vcmp.gt.f32.partialorder %v6224, 0.0
  %vm6251 = vcmp.gt.f32.partialorder %v6229, 0.0
  %vm6252 = vcmp.gt.f32.partialorder %v6234, 0.0
  %v6253 = vmul.f32 %v6159, 0.2
  %v6254 = vmul.f32 %v6164, 0.2
  %v6255 = vmul.f32 %v6169, 0.2
  %v6256 = vmul.f32 %v6174, 0.2
  %v6257 = vmul.f32 %v6179, 0.2
  %v6258 = vmul.f32 %v6184, 0.2
  %v6259 = vmul.f32 %v6189, 0.2
  %v6260 = vmul.f32 %v6194, 0.2
  %v6261 = vmul.f32 %v6199, 0.2
  %v6262 = vmul.f32 %v6204, 0.2
  %v6263 = vmul.f32 %v6209, 0.2
  %v6264 = vmul.f32 %v6214, 0.2
  %v6265 = vmul.f32 %v6219, 0.2
  %v6266 = vmul.f32 %v6224, 0.2
  %v6267 = vmul.f32 %v6229, 0.2
  %v6268 = vmul.f32 %v6234, 0.2
  %v6269 = vsel %vm6237, %v6159, %v6253
  %v6270 = vsel %vm6238, %v6164, %v6254
  %v6271 = vsel %vm6239, %v6169, %v6255
  %v6272 = vsel %vm6240, %v6174, %v6256
  %v6273 = vsel %vm6241, %v6179, %v6257
  %v6274 = vsel %vm6242, %v6184, %v6258
  %v6275 = vsel %vm6243, %v6189, %v6259
  %v6276 = vsel %vm6244, %v6194, %v6260
  %v6277 = vsel %vm6245, %v6199, %v6261
  %v6278 = vsel %vm6246, %v6204, %v6262
  %v6279 = vsel %vm6247, %v6209, %v6263
  %v6280 = vsel %vm6248, %v6214, %v6264
  %v6281 = vsel %vm6249, %v6219, %v6265
  %v6282 = vsel %vm6250, %v6224, %v6266
  %v6283 = vsel %vm6251, %v6229, %v6267
  %v6284 = vsel %vm6252, %v6234, %v6268
  %v6285 = vld [vmem:[%s18] sm:$0xff]
  %v6286 = vld [vmem:[%s18 + $0x8] sm:$0xff]
  %v6287 = vld [vmem:[%s18 + $0x10] sm:$0xff]
  %v6288 = vld [vmem:[%s18 + $0x18] sm:$0xff]
  %v6289 = vld [vmem:[%s18 + $0x20] sm:$0xff]
  %v6290 = vld [vmem:[%s18 + $0x28] sm:$0xff]
  %v6291 = vld [vmem:[%s18 + $0x30] sm:$0xff]
  %v6292 = vld [vmem:[%s18 + $0x38] sm:$0xff]
  %v6293 = vld [vmem:[%s18 + $0x40] sm:$0xff]
  %v6294 = vld [vmem:[%s18 + $0x48] sm:$0xff]
  %v6295 = vld [vmem:[%s18 + $0x50] sm:$0xff]
  %v6296 = vld [vmem:[%s18 + $0x58] sm:$0xff]
  %v6297 = vld [vmem:[%s18 + $0x60] sm:$0xff]
  %v6298 = vld [vmem:[%s18 + $0x68] sm:$0xff]
  %v6299 = vld [vmem:[%s18 + $0x70] sm:$0xff]
  %v6300 = vld [vmem:[%s18 + $0x78] sm:$0xff]
  %v6301 = vadd.f32 %v6269, %v6285
  %v6302 = vadd.f32 %v6270, %v6286
  %v6303 = vadd.f32 %v6271, %v6287
  %v6304 = vadd.f32 %v6272, %v6288
  %v6305 = vadd.f32 %v6273, %v6289
  %v6306 = vadd.f32 %v6274, %v6290
  %v6307 = vadd.f32 %v6275, %v6291
  %v6308 = vadd.f32 %v6276, %v6292
  %v6309 = vadd.f32 %v6277, %v6293
  %v6310 = vadd.f32 %v6278, %v6294
  %v6311 = vadd.f32 %v6279, %v6295
  %v6312 = vadd.f32 %v6280, %v6296
  %v6313 = vadd.f32 %v6281, %v6297
  %v6314 = vadd.f32 %v6282, %v6298
  %v6315 = vadd.f32 %v6283, %v6299
  %v6316 = vadd.f32 %v6284, %v6300
  %v6317 = vsel %vm1908, %v6301, -inf
  %6318 = vmax.xlane.f32.xlu0 %v6317
  %v6319 = vpop.xlane.xlu0 %6318
  %v6320 = vsel %vm1908, %v6302, -inf
  %6321 = vmax.xlane.f32.xlu0 %v6320
  %v6322 = vpop.xlane.xlu0 %6321
  %v6323 = vsel %vm1908, %v6303, -inf
  %6324 = vmax.xlane.f32.xlu0 %v6323
  %v6325 = vpop.xlane.xlu0 %6324
  %v6326 = vsel %vm1908, %v6304, -inf
  %6327 = vmax.xlane.f32.xlu0 %v6326
  %v6328 = vpop.xlane.xlu0 %6327
  %v6329 = vsel %vm1908, %v6305, -inf
  %6330 = vmax.xlane.f32.xlu0 %v6329
  %v6331 = vpop.xlane.xlu0 %6330
  %v6332 = vsel %vm1908, %v6306, -inf
  %6333 = vmax.xlane.f32.xlu0 %v6332
  %v6334 = vpop.xlane.xlu0 %6333
  %v6335 = vsel %vm1908, %v6307, -inf
  %6336 = vmax.xlane.f32.xlu0 %v6335
  %v6337 = vpop.xlane.xlu0 %6336
  %v6338 = vsel %vm1908, %v6308, -inf
  %6339 = vmax.xlane.f32.xlu0 %v6338
  %v6340 = vpop.xlane.xlu0 %6339
  %v6341 = vsel %vm1908, %v6309, -inf
  %6342 = vmax.xlane.f32.xlu0 %v6341
  %v6343 = vpop.xlane.xlu0 %6342
  %v6344 = vsel %vm1908, %v6310, -inf
  %6345 = vmax.xlane.f32.xlu0 %v6344
  %v6346 = vpop.xlane.xlu0 %6345
  %v6347 = vsel %vm1908, %v6311, -inf
  %6348 = vmax.xlane.f32.xlu0 %v6347
  %v6349 = vpop.xlane.xlu0 %6348
  %v6350 = vsel %vm1908, %v6312, -inf
  %6351 = vmax.xlane.f32.xlu0 %v6350
  %v6352 = vpop.xlane.xlu0 %6351
  %v6353 = vsel %vm1908, %v6313, -inf
  %6354 = vmax.xlane.f32.xlu0 %v6353
  %v6355 = vpop.xlane.xlu0 %6354
  %v6356 = vsel %vm1908, %v6314, -inf
  %6357 = vmax.xlane.f32.xlu0 %v6356
  %v6358 = vpop.xlane.xlu0 %6357
  %v6359 = vsel %vm1908, %v6315, -inf
  %6360 = vmax.xlane.f32.xlu0 %v6359
  %v6361 = vpop.xlane.xlu0 %6360
  %v6362 = vsel %vm1908, %v6316, -inf
  %6363 = vmax.xlane.f32.xlu0 %v6362
  %v6364 = vpop.xlane.xlu0 %6363
  %v6365 = vsub.f32 %v6301, %v6319
  %v6366 = vsub.f32 %v6302, %v6322
  %v6367 = vsub.f32 %v6303, %v6325
  %v6368 = vsub.f32 %v6304, %v6328
  %v6369 = vsub.f32 %v6305, %v6331
  %v6370 = vsub.f32 %v6306, %v6334
  %v6371 = vsub.f32 %v6307, %v6337
  %v6372 = vsub.f32 %v6308, %v6340
  %v6373 = vsub.f32 %v6309, %v6343
  %v6374 = vsub.f32 %v6310, %v6346
  %v6375 = vsub.f32 %v6311, %v6349
  %v6376 = vsub.f32 %v6312, %v6352
  %v6377 = vsub.f32 %v6313, %v6355
  %v6378 = vsub.f32 %v6314, %v6358
  %v6379 = vsub.f32 %v6315, %v6361
  %v6380 = vsub.f32 %v6316, %v6364
  %v6381 = vmul.f32 %v6365, 1.442695
  %v6382 = vpow.pop %v6381
  %v6383 = vmul.f32 %v6366, 1.442695
  %v6384 = vpow.pop %v6383
  %v6385 = vmul.f32 %v6367, 1.442695
  %v6386 = vpow.pop %v6385
  %v6387 = vmul.f32 %v6368, 1.442695
  %v6388 = vpow.pop %v6387
  %v6389 = vmul.f32 %v6369, 1.442695
  %v6390 = vpow.pop %v6389
  %v6391 = vmul.f32 %v6370, 1.442695
  %v6392 = vpow.pop %v6391
  %v6393 = vmul.f32 %v6371, 1.442695
  %v6394 = vpow.pop %v6393
  %v6395 = vmul.f32 %v6372, 1.442695
  %v6396 = vpow.pop %v6395
  %v6397 = vmul.f32 %v6373, 1.442695
  %v6398 = vpow.pop %v6397
  %v6399 = vmul.f32 %v6374, 1.442695
  %v6400 = vpow.pop %v6399
  %v6401 = vmul.f32 %v6375, 1.442695
  %v6402 = vpow.pop %v6401
  %v6403 = vmul.f32 %v6376, 1.442695
  %v6404 = vpow.pop %v6403
  %v6405 = vmul.f32 %v6377, 1.442695
  %v6406 = vpow.pop %v6405
  %v6407 = vmul.f32 %v6378, 1.442695
  %v6408 = vpow.pop %v6407
  %v6409 = vmul.f32 %v6379, 1.442695
  %v6410 = vpow.pop %v6409
  %v6411 = vmul.f32 %v6380, 1.442695
  %v6412 = vpow.pop %v6411
  %v6413 = vld [vmem:[%s17] sm:$0xff]
  %v6414 = vld [vmem:[%s17 + $0x8] sm:$0xff]
  %v6415 = vld [vmem:[%s17 + $0x10] sm:$0xff]
  %v6416 = vld [vmem:[%s17 + $0x18] sm:$0xff]
  %v6417 = vld [vmem:[%s17 + $0x20] sm:$0xff]
  %v6418 = vld [vmem:[%s17 + $0x28] sm:$0xff]
  %v6419 = vld [vmem:[%s17 + $0x30] sm:$0xff]
  %v6420 = vld [vmem:[%s17 + $0x38] sm:$0xff]
  %v6421 = vld [vmem:[%s17 + $0x40] sm:$0xff]
  %v6422 = vld [vmem:[%s17 + $0x48] sm:$0xff]
  %v6423 = vld [vmem:[%s17 + $0x50] sm:$0xff]
  %v6424 = vld [vmem:[%s17 + $0x58] sm:$0xff]
  %v6425 = vld [vmem:[%s17 + $0x60] sm:$0xff]
  %v6426 = vld [vmem:[%s17 + $0x68] sm:$0xff]
  %v6427 = vld [vmem:[%s17 + $0x70] sm:$0xff]
  %v6428 = vld [vmem:[%s17 + $0x78] sm:$0xff]
  %v6429 = vmul.f32 %v6382, %v6413
  %v6430 = vmul.f32 %v6384, %v6414
  %v6431 = vmul.f32 %v6386, %v6415
  %v6432 = vmul.f32 %v6388, %v6416
  %v6433 = vmul.f32 %v6390, %v6417
  %v6434 = vmul.f32 %v6392, %v6418
  %v6435 = vmul.f32 %v6394, %v6419
  %v6436 = vmul.f32 %v6396, %v6420
  %v6437 = vmul.f32 %v6398, %v6421
  %v6438 = vmul.f32 %v6400, %v6422
  %v6439 = vmul.f32 %v6402, %v6423
  %v6440 = vmul.f32 %v6404, %v6424
  %v6441 = vmul.f32 %v6406, %v6425
  %v6442 = vmul.f32 %v6408, %v6426
  %v6443 = vmul.f32 %v6410, %v6427
  %v6444 = vmul.f32 %v6412, %v6428
  %v6445 = vsel %vm3135, %v5902, 1.0
  %v6446 = vsel %vm3135, %v5907, 1.0
  %v6447 = vsel %vm3135, %v5912, 1.0
  %v6448 = vsel %vm3135, %v5917, 1.0
  %v6449 = vsel %vm3135, %v5922, 1.0
  %v6450 = vsel %vm3135, %v5927, 1.0
  %v6451 = vsel %vm3135, %v5932, 1.0
  %v6452 = vsel %vm3135, %v5937, 1.0
  %v6454 = vsel %vm1908, %v6429, 0
  %v6457 = vsel %vm1908, %v6430, 0
  %v6460 = vsel %vm1908, %v6431, 0
  %v6463 = vsel %vm1908, %v6432, 0
  %v6466 = vsel %vm1908, %v6433, 0
  %v6469 = vsel %vm1908, %v6434, 0
  %v6472 = vsel %vm1908, %v6435, 0
  %v6475 = vsel %vm1908, %v6436, 0
  %v6478 = vsel %vm1908, %v6437, 0
  %v6481 = vsel %vm1908, %v6438, 0
  %v6484 = vsel %vm1908, %v6439, 0
  %v6487 = vsel %vm1908, %v6440, 0
  %v6490 = vsel %vm1908, %v6441, 0
  %v6493 = vsel %vm1908, %v6442, 0
  %v6496 = vsel %vm1908, %v6443, 0
  %v6499 = vsel %vm1908, %v6444, 0
  %6501 = vmatprep.subr.mxu0 0.0
  %6502 = vmatpush1.msra.mxu0 0.0
  %6503 = vmatprep.subr.mxu0 0.0
  %6504 = vmatpush1.msra.mxu0 0.0
  %6505 = vmatprep.subr.mxu0 0.0
  %6506 = vmatpush1.msra.mxu0 0.0
  %6507 = vmatprep.subr.mxu0 0.0
  %6508 = vmatpush1.msra.mxu0 0.0
  %6509 = vmatprep.subr.mxu0 0.0
  %6510 = vmatpush1.msra.mxu0 0.0
  %6511 = vmatprep.subr.mxu0 0.0
  %6512 = vmatpush1.msra.mxu0 0.0
  %6513 = vmatprep.subr.mxu0 0.0
  %6514 = vmatpush1.msra.mxu0 0.0
  %6515 = vmatprep.subr.mxu0 0.0
  %6516 = vmatpush1.msra.mxu0 0.0
  %6517 = vmatprep.subr.mxu0 0.0
  %6518 = vmatpush1.msra.mxu0 %v6452
  %6519 = vmatprep.subr.mxu0 0.0
  %6520 = vmatpush1.msra.mxu0 %v6451
  %6521 = vmatprep.subr.mxu0 0.0
  %6522 = vmatpush1.msra.mxu0 %v6450
  %6523 = vmatprep.subr.mxu0 0.0
  %6524 = vmatpush1.msra.mxu0 %v6449
  %6525 = vmatprep.subr.mxu0 0.0
  %6526 = vmatpush1.msra.mxu0 %v6448
  %6527 = vmatprep.subr.mxu0 0.0
  %6528 = vmatpush1.msra.mxu0 %v6447
  %6529 = vmatprep.subr.mxu0 0.0
  %6530 = vmatpush1.msra.mxu0 %v6446
  %6531 = vmatprep.subr.mxu0 0.0
  %6532 = vmatpush1.msra.mxu0 %v6445
  %6533 = vmatprep.subr.mxu0 0.0
  %6534 = vmatpush2.msra.mxu0 0.0
  %6535 = vmatprep.subr.mxu0 0.0
  %6536 = vmatpush2.msra.mxu0 0.0
  %6537 = vmatprep.subr.mxu0 0.0
  %6538 = vmatpush2.msra.mxu0 0.0
  %6539 = vmatprep.subr.mxu0 0.0
  %6540 = vmatpush2.msra.mxu0 0.0
  %6541 = vmatprep.subr.mxu0 0.0
  %6542 = vmatpush2.msra.mxu0 0.0
  %6543 = vmatprep.subr.mxu0 0.0
  %6544 = vmatpush2.msra.mxu0 0.0
  %6545 = vmatprep.subr.mxu0 0.0
  %6546 = vmatpush2.msra.mxu0 0.0
  %6547 = vmatprep.subr.mxu0 0.0
  %6548 = vmatpush2.msra.mxu0 0.0
  %6549 = vmatprep.subr.mxu0 0.0
  %6550 = vmatpush2.msra.mxu0 0.0
  %6551 = vmatprep.subr.mxu0 0.0
  %6552 = vmatpush2.msra.mxu0 0.0
  %6553 = vmatprep.subr.mxu0 0.0
  %6554 = vmatpush2.msra.mxu0 0.0
  %6555 = vmatprep.subr.mxu0 0.0
  %6556 = vmatpush2.msra.mxu0 0.0
  %6557 = vmatprep.subr.mxu0 0.0
  %6558 = vmatpush2.msra.mxu0 0.0
  %6559 = vmatprep.subr.mxu0 0.0
  %6560 = vmatpush2.msra.mxu0 0.0
  %6561 = vmatprep.subr.mxu0 0.0
  %6562 = vmatpush2.msra.mxu0 0.0
  %6563 = vmatprep.subr.mxu0 0.0
  %6564 = vmatpush2.msra.mxu0 0.0
  %6565 = vmatprep.mubr.f32.mxu0 0.0
  %6566 = vmatmul.mubr.f32.gmra.mxu0 %v6454
  %v6567 = vpop.f32.mrf.mxu0
  %v6568 = vadd.f32 0.0, %v6567
  %v6569 = vpop.f32.mrf.mxu0
  %6570 = vmatprep.mubr.f32.mxu0 0.0
  %6571 = vmatmul.mubr.f32.gmra.mxu0 %v6457
  %v6572 = vpop.f32.mrf.mxu0
  %v6573 = vadd.f32 0.0, %v6572
  %v6574 = vpop.f32.mrf.mxu0
  %6575 = vmatprep.mubr.f32.mxu0 0.0
  %6576 = vmatmul.mubr.f32.gmra.mxu0 %v6460
  %v6577 = vpop.f32.mrf.mxu0
  %v6578 = vadd.f32 0.0, %v6577
  %v6579 = vpop.f32.mrf.mxu0
  %6580 = vmatprep.mubr.f32.mxu0 0.0
  %6581 = vmatmul.mubr.f32.gmra.mxu0 %v6463
  %v6582 = vpop.f32.mrf.mxu0
  %v6583 = vadd.f32 0.0, %v6582
  %v6584 = vpop.f32.mrf.mxu0
  %6585 = vmatprep.mubr.f32.mxu0 0.0
  %6586 = vmatmul.mubr.f32.gmra.mxu0 %v6466
  %v6587 = vpop.f32.mrf.mxu0
  %v6588 = vadd.f32 0.0, %v6587
  %v6589 = vpop.f32.mrf.mxu0
  %6590 = vmatprep.mubr.f32.mxu0 0.0
  %6591 = vmatmul.mubr.f32.gmra.mxu0 %v6469
  %v6592 = vpop.f32.mrf.mxu0
  %v6593 = vadd.f32 0.0, %v6592
  %v6594 = vpop.f32.mrf.mxu0
  %6595 = vmatprep.mubr.f32.mxu0 0.0
  %6596 = vmatmul.mubr.f32.gmra.mxu0 %v6472
  %v6597 = vpop.f32.mrf.mxu0
  %v6598 = vadd.f32 0.0, %v6597
  %v6599 = vpop.f32.mrf.mxu0
  %6600 = vmatprep.mubr.f32.mxu0 0.0
  %6601 = vmatmul.mubr.f32.gmra.mxu0 %v6475
  %v6602 = vpop.f32.mrf.mxu0
  %v6603 = vadd.f32 0.0, %v6602
  %v6604 = vpop.f32.mrf.mxu0
  %6605 = vmatprep.mubr.f32.mxu0 0.0
  %6606 = vmatmul.mubr.f32.gmra.mxu0 %v6478
  %v6607 = vpop.f32.mrf.mxu0
  %v6608 = vadd.f32 0.0, %v6607
  %v6609 = vpop.f32.mrf.mxu0
  %6610 = vmatprep.mubr.f32.mxu0 0.0
  %6611 = vmatmul.mubr.f32.gmra.mxu0 %v6481
  %v6612 = vpop.f32.mrf.mxu0
  %v6613 = vadd.f32 0.0, %v6612
  %v6614 = vpop.f32.mrf.mxu0
  %6615 = vmatprep.mubr.f32.mxu0 0.0
  %6616 = vmatmul.mubr.f32.gmra.mxu0 %v6484
  %v6617 = vpop.f32.mrf.mxu0
  %v6618 = vadd.f32 0.0, %v6617
  %v6619 = vpop.f32.mrf.mxu0
  %6620 = vmatprep.mubr.f32.mxu0 0.0
  %6621 = vmatmul.mubr.f32.gmra.mxu0 %v6487
  %v6622 = vpop.f32.mrf.mxu0
  %v6623 = vadd.f32 0.0, %v6622
  %v6624 = vpop.f32.mrf.mxu0
  %6625 = vmatprep.mubr.f32.mxu0 0.0
  %6626 = vmatmul.mubr.f32.gmra.mxu0 %v6490
  %v6627 = vpop.f32.mrf.mxu0
  %v6628 = vadd.f32 0.0, %v6627
  %v6629 = vpop.f32.mrf.mxu0
  %6630 = vmatprep.mubr.f32.mxu0 0.0
  %6631 = vmatmul.mubr.f32.gmra.mxu0 %v6493
  %v6632 = vpop.f32.mrf.mxu0
  %v6633 = vadd.f32 0.0, %v6632
  %v6634 = vpop.f32.mrf.mxu0
  %6635 = vmatprep.mubr.f32.mxu0 0.0
  %6636 = vmatmul.mubr.f32.gmra.mxu0 %v6496
  %v6637 = vpop.f32.mrf.mxu0
  %v6638 = vadd.f32 0.0, %v6637
  %v6639 = vpop.f32.mrf.mxu0
  %6640 = vmatprep.mubr.f32.mxu0 0.0
  %6641 = vmatmul.mubr.f32.gmra.mxu0 %v6499
  %v6642 = vpop.f32.mrf.mxu0
  %v6643 = vadd.f32 0.0, %v6642
  %v6644 = vpop.f32.mrf.mxu0
  %6645 = vdwg.mxu0
  %v6646 = vmax.f32 %v6568, 1e-20
  %v6647 = vmax.f32 %v6573, 1e-20
  %v6648 = vmax.f32 %v6578, 1e-20
  %v6649 = vmax.f32 %v6583, 1e-20
  %v6650 = vmax.f32 %v6588, 1e-20
  %v6651 = vmax.f32 %v6593, 1e-20
  %v6652 = vmax.f32 %v6598, 1e-20
  %v6653 = vmax.f32 %v6603, 1e-20
  %v6654 = vmax.f32 %v6608, 1e-20
  %v6655 = vmax.f32 %v6613, 1e-20
  %v6656 = vmax.f32 %v6618, 1e-20
  %v6657 = vmax.f32 %v6623, 1e-20
  %v6658 = vmax.f32 %v6628, 1e-20
  %v6659 = vmax.f32 %v6633, 1e-20
  %v6660 = vmax.f32 %v6638, 1e-20
  %v6661 = vmax.f32 %v6643, 1e-20
  %v6662 = vrcp.pop %v6646
  %v6663 = vrcp.pop %v6647
  %v6664 = vrcp.pop %v6648
  %v6665 = vrcp.pop %v6649
  %v6666 = vrcp.pop %v6650
  %v6667 = vrcp.pop %v6651
  %v6668 = vrcp.pop %v6652
  %v6669 = vrcp.pop %v6653
  %v6670 = vrcp.pop %v6654
  %v6671 = vrcp.pop %v6655
  %v6672 = vrcp.pop %v6656
  %v6673 = vrcp.pop %v6657
  %v6674 = vrcp.pop %v6658
  %v6675 = vrcp.pop %v6659
  %v6676 = vrcp.pop %v6660
  %v6677 = vrcp.pop %v6661
  %6679 = vset.pattern.permute.xlu0 16
  %6680 = vperm.xlu0 %6679, %v6662
  %v6681 = vpop.permute.xlu0 %6680
  %6684 = vset.pattern.permute.xlu0 16
  %6685 = vperm.xlu0 %6684, %v6663
  %v6686 = vpop.permute.xlu0 %6685
  %6689 = vset.pattern.permute.xlu0 16
  %6690 = vperm.xlu0 %6689, %v6664
  %v6691 = vpop.permute.xlu0 %6690
  %6694 = vset.pattern.permute.xlu0 16
  %6695 = vperm.xlu0 %6694, %v6665
  %v6696 = vpop.permute.xlu0 %6695
  %6699 = vset.pattern.permute.xlu0 16
  %6700 = vperm.xlu0 %6699, %v6666
  %v6701 = vpop.permute.xlu0 %6700
  %6704 = vset.pattern.permute.xlu0 16
  %6705 = vperm.xlu0 %6704, %v6667
  %v6706 = vpop.permute.xlu0 %6705
  %6709 = vset.pattern.permute.xlu0 16
  %6710 = vperm.xlu0 %6709, %v6668
  %v6711 = vpop.permute.xlu0 %6710
  %6714 = vset.pattern.permute.xlu0 16
  %6715 = vperm.xlu0 %6714, %v6669
  %v6716 = vpop.permute.xlu0 %6715
  %6719 = vset.pattern.permute.xlu0 16
  %6720 = vperm.xlu0 %6719, %v6670
  %v6721 = vpop.permute.xlu0 %6720
  %6724 = vset.pattern.permute.xlu0 16
  %6725 = vperm.xlu0 %6724, %v6671
  %v6726 = vpop.permute.xlu0 %6725
  %6729 = vset.pattern.permute.xlu0 16
  %6730 = vperm.xlu0 %6729, %v6672
  %v6731 = vpop.permute.xlu0 %6730
  %6734 = vset.pattern.permute.xlu0 16
  %6735 = vperm.xlu0 %6734, %v6673
  %v6736 = vpop.permute.xlu0 %6735
  %6739 = vset.pattern.permute.xlu0 16
  %6740 = vperm.xlu0 %6739, %v6674
  %v6741 = vpop.permute.xlu0 %6740
  %6744 = vset.pattern.permute.xlu0 16
  %6745 = vperm.xlu0 %6744, %v6675
  %v6746 = vpop.permute.xlu0 %6745
  %6749 = vset.pattern.permute.xlu0 16
  %6750 = vperm.xlu0 %6749, %v6676
  %v6751 = vpop.permute.xlu0 %6750
  %6754 = vset.pattern.permute.xlu0 16
  %6755 = vperm.xlu0 %6754, %v6677
  %v6756 = vpop.permute.xlu0 %6755
  %v6758 = vmul.f32 %v6568, %v6681
  %v6759 = vmul.f32 %v6573, %v6686
  %v6760 = vmul.f32 %v6578, %v6691
  %v6761 = vmul.f32 %v6583, %v6696
  %v6762 = vmul.f32 %v6588, %v6701
  %v6763 = vmul.f32 %v6593, %v6706
  %v6764 = vmul.f32 %v6598, %v6711
  %v6765 = vmul.f32 %v6603, %v6716
  %v6766 = vmul.f32 %v6608, %v6721
  %v6767 = vmul.f32 %v6613, %v6726
  %v6768 = vmul.f32 %v6618, %v6731
  %v6769 = vmul.f32 %v6623, %v6736
  %v6770 = vmul.f32 %v6628, %v6741
  %v6771 = vmul.f32 %v6633, %v6746
  %v6772 = vmul.f32 %v6638, %v6751
  %v6773 = vmul.f32 %v6643, %v6756
  %6774 = vst.msk [vmem:[#allocation2] sm:$0xff] %vm727, %v6758
  %6775 = vst.msk [vmem:[#allocation2 + $0x8] sm:$0xff] %vm727, %v6759
  %6776 = vst.msk [vmem:[#allocation2 + $0x10] sm:$0xff] %vm727, %v6760
  %6777 = vst.msk [vmem:[#allocation2 + $0x18] sm:$0xff] %vm727, %v6761
  %6778 = vst.msk [vmem:[#allocation2 + $0x20] sm:$0xff] %vm727, %v6762
  %6779 = vst.msk [vmem:[#allocation2 + $0x28] sm:$0xff] %vm727, %v6763
  %6780 = vst.msk [vmem:[#allocation2 + $0x30] sm:$0xff] %vm727, %v6764
  %6781 = vst.msk [vmem:[#allocation2 + $0x38] sm:$0xff] %vm727, %v6765
  %vm6782 = vcmask 130112
  %6783 = vst.msk [vmem:[#allocation2] sm:$0xff] %vm6782, %v6766
  %6784 = vst.msk [vmem:[#allocation2 + $0x8] sm:$0xff] %vm6782, %v6767
  %6785 = vst.msk [vmem:[#allocation2 + $0x10] sm:$0xff] %vm6782, %v6768
  %6786 = vst.msk [vmem:[#allocation2 + $0x18] sm:$0xff] %vm6782, %v6769
  %6787 = vst.msk [vmem:[#allocation2 + $0x20] sm:$0xff] %vm6782, %v6770
  %6788 = vst.msk [vmem:[#allocation2 + $0x28] sm:$0xff] %vm6782, %v6771
  %6789 = vst.msk [vmem:[#allocation2 + $0x30] sm:$0xff] %vm6782, %v6772
  %6790 = vst.msk [vmem:[#allocation2 + $0x38] sm:$0xff] %vm6782, %v6773
  %v6791 = vld [vmem:[#allocation2] sm:$0xff]
  %v6792 = vld [vmem:[#allocation2 + $0x8] sm:$0xff]
  %v6793 = vld [vmem:[#allocation2 + $0x10] sm:$0xff]
  %v6794 = vld [vmem:[#allocation2 + $0x18] sm:$0xff]
  %v6795 = vld [vmem:[#allocation2 + $0x20] sm:$0xff]
  %v6796 = vld [vmem:[#allocation2 + $0x28] sm:$0xff]
  %v6797 = vld [vmem:[#allocation2 + $0x30] sm:$0xff]
  %v6798 = vld [vmem:[#allocation2 + $0x38] sm:$0xff]
  %v6799 = vld [vmem:[%s16] sm:$0x1]
  %v6801 = vlaneseq
  %v6802 = vshrl.u32 %v6801, 7
  %v6803 = vsub.s32 0, %v6802
  %v6804 = vrot.slane %v6799, %v6803
  %v6806 = vadd.f32 %v6791, %v6804
  %v6807 = vadd.f32 %v6792, %v6804
  %v6808 = vadd.f32 %v6793, %v6804
  %v6809 = vadd.f32 %v6794, %v6804
  %v6810 = vadd.f32 %v6795, %v6804
  %v6811 = vadd.f32 %v6796, %v6804
  %v6812 = vadd.f32 %v6797, %v6804
  %v6813 = vadd.f32 %v6798, %v6804
  %vm6814 = vcmp.gt.f32.partialorder %v6806, 0.0
  %vm6815 = vcmp.gt.f32.partialorder %v6807, 0.0
  %vm6816 = vcmp.gt.f32.partialorder %v6808, 0.0
  %vm6817 = vcmp.gt.f32.partialorder %v6809, 0.0
  %vm6818 = vcmp.gt.f32.partialorder %v6810, 0.0
  %vm6819 = vcmp.gt.f32.partialorder %v6811, 0.0
  %vm6820 = vcmp.gt.f32.partialorder %v6812, 0.0
  %vm6821 = vcmp.gt.f32.partialorder %v6813, 0.0
  %v6822 = vmul.f32 %v6806, 0.01
  %v6823 = vmul.f32 %v6807, 0.01
  %v6824 = vmul.f32 %v6808, 0.01
  %v6825 = vmul.f32 %v6809, 0.01
  %v6826 = vmul.f32 %v6810, 0.01
  %v6827 = vmul.f32 %v6811, 0.01
  %v6828 = vmul.f32 %v6812, 0.01
  %v6829 = vmul.f32 %v6813, 0.01
  %v6830 = vsel %vm6814, %v6806, %v6822
  %v6831 = vsel %vm6815, %v6807, %v6823
  %v6832 = vsel %vm6816, %v6808, %v6824
  %v6833 = vsel %vm6817, %v6809, %v6825
  %v6834 = vsel %vm6818, %v6810, %v6826
  %v6835 = vsel %vm6819, %v6811, %v6827
  %v6836 = vsel %vm6820, %v6812, %v6828
  %v6837 = vsel %vm6821, %v6813, %v6829
  %6846 = vrot.lane.b32.xlu0 %v6830, 120
  %v6847 = vpop.permute.xlu0 %6846
  %6848 = vrot.lane.b32.xlu0 %v6831, 120
  %v6849 = vpop.permute.xlu0 %6848
  %6850 = vrot.lane.b32.xlu0 %v6832, 120
  %v6851 = vpop.permute.xlu0 %6850
  %6852 = vrot.lane.b32.xlu0 %v6833, 120
  %v6853 = vpop.permute.xlu0 %6852
  %6854 = vrot.lane.b32.xlu0 %v6834, 120
  %v6855 = vpop.permute.xlu0 %6854
  %6856 = vrot.lane.b32.xlu0 %v6835, 120
  %v6857 = vpop.permute.xlu0 %6856
  %6858 = vrot.lane.b32.xlu0 %v6836, 120
  %v6859 = vpop.permute.xlu0 %6858
  %6860 = vrot.lane.b32.xlu0 %v6837, 120
  %v6861 = vpop.permute.xlu0 %6860
  %v6870 = vadd.f32 %v6830, %v6847
  %v6871 = vadd.f32 %v6831, %v6849
  %v6872 = vadd.f32 %v6832, %v6851
  %v6873 = vadd.f32 %v6833, %v6853
  %v6874 = vadd.f32 %v6834, %v6855
  %v6875 = vadd.f32 %v6835, %v6857
  %v6876 = vadd.f32 %v6836, %v6859
  %v6877 = vadd.f32 %v6837, %v6861
  %v6878 = vmul.f32 %v6870, 0.5
  %v6879 = vmul.f32 %v6871, 0.5
  %v6880 = vmul.f32 %v6872, 0.5
  %v6881 = vmul.f32 %v6873, 0.5
  %v6882 = vmul.f32 %v6874, 0.5
  %v6883 = vmul.f32 %v6875, 0.5
  %v6884 = vmul.f32 %v6876, 0.5
  %v6885 = vmul.f32 %v6877, 0.5
  %6886 = vst.msk [vmem:[%s19] sm:$0xff] %vm727, %v6878
  %6887 = vst.msk [vmem:[%s19 + $0x8] sm:$0xff] %vm727, %v6879
  %6888 = vst.msk [vmem:[%s19 + $0x10] sm:$0xff] %vm727, %v6880
  %6889 = vst.msk [vmem:[%s19 + $0x18] sm:$0xff] %vm727, %v6881
  %6890 = vst.msk [vmem:[%s19 + $0x20] sm:$0xff] %vm727, %v6882
  %6891 = vst.msk [vmem:[%s19 + $0x28] sm:$0xff] %vm727, %v6883
  %6892 = vst.msk [vmem:[%s19 + $0x30] sm:$0xff] %vm727, %v6884
  %6893 = vst.msk [vmem:[%s19 + $0x38] sm:$0xff] %vm727, %v6885
  // Predicated region
  $region78: #{m_gat_forward.1} parent=0 // pred_check
    _
  $region79: #{m_gat_forward.1} parent=0 // pred_check_branch
    %6895 = sbr.rel (0) target = $region81
  $region80: #{m_gat_forward.1} parent=0 // pred_region
    _
  $region81: #{m_gat_forward.1} parent=0 // pred_fallthru
    _
  // Predicated region
  $region82: #{m_gat_forward.1} parent=0 // pred_check
    _
  $region83: #{m_gat_forward.1} parent=0 // pred_check_branch
    %6897 = sbr.rel (0) target = $region85
  $region84: #{m_gat_forward.1} parent=0 // pred_region
    _
  $region85: #{m_gat_forward.1} parent=0 // pred_fallthru
    _

</llo_original>
